<compile_context>
chip_gen: v6e
topology: v6e:2x2x1
jax: 0.10.0
libtpu: 0.0.40
codegen_flags: <defaults>
</compile_context>

<pallas_src>
import functools

import jax
import jax.numpy as jnp
from jax.experimental import pallas as pl
from jax.experimental.pallas import tpu as pltpu


def _dwconv_bn_kernel(x_ref, w_ref, g_ref, b_ref, o_ref, xpad_ref, acc_ref, *, eps):
    # x_ref   : (N, H, W, C)    raw NHWC input block (C on lanes)
    # w_ref   : (9, C)          depthwise taps, row index = dh*3 + dw
    # g_ref   : (1, C)          BN gamma
    # b_ref   : (1, C)          BN beta
    # o_ref   : (N, H, W, C)    output block
    # xpad_ref: (N, H, W+2, C)  f32 scratch: input with two zero columns appended
    # acc_ref : (N, H, W+2, C)  f32 scratch: conv result (cols >= W are don't-care)
    N, H, W, C = x_ref.shape
    Wp = W + 2

    # ---- stage 0: width-pad the input inside VMEM (no HBM-side jnp.pad) ---------
    xpad_ref[...] = jnp.zeros((N, H, Wp, C), jnp.float32)
    xpad_ref[:, :, :W, :] = x_ref[...].astype(jnp.float32)   # one full-tensor cast

    # ---- stage 1: 3x3 depthwise conv, one register-resident output row slab -----
    w9 = w_ref[...].astype(jnp.float32)                      # single ref read
    wt = [w9[j:j + 1, :] for j in range(9)]                  # nine (1, C) rows, hoisted

    for h in range(H):                                       # static loop: LLO visibility
        acc_row = jnp.zeros((N, 1, Wp, C), jnp.float32)      # ~14 vregs
        for dh in range(3):
            r = h + dh - 1
            if r < 0 or r >= H:                              # zero halo row: skip
                continue
            xr = xpad_ref[:, r:r + 1, :, :]                  # (N,1,Wp,C), cols >= W are 0
            # Width shifts via pltpu.roll (XLU slot, co-issues with the VPU MACs);
            # the zero pad columns wrap in exactly where the halo needs zeros.
            acc_row = acc_row + pltpu.roll(xr, shift=1, axis=2) * wt[dh * 3 + 0]
            acc_row = acc_row + xr * wt[dh * 3 + 1]
            acc_row = acc_row + pltpu.roll(xr, shift=Wp - 1, axis=2) * wt[dh * 3 + 2]
        acc_ref[:, h:h + 1, :, :] = acc_row                  # one store per output row

    # ---- stage 2: BatchNorm2d (training-mode batch stats) + fused scale/shift ---
    acc = acc_ref[...]                                       # (N, H, Wp, C) f32
    col = jax.lax.broadcasted_iota(jnp.int32, (1, 1, Wp, C), 2)
    am = jnp.where(col < W, acc, 0.0)                        # mask wrap columns for stats
    inv_cnt = 1.0 / float(N * H * W)
    s1 = jnp.sum(am, axis=(0, 1, 2), keepdims=True)          # (1,1,1,C)
    s2 = jnp.sum(am * am, axis=(0, 1, 2), keepdims=True)     # (1,1,1,C)
    mean = s1 * inv_cnt
    var = jnp.maximum(s2 * inv_cnt - mean * mean, 0.0)
    gamma = g_ref[...].astype(jnp.float32).reshape(1, 1, 1, C)
    beta = b_ref[...].astype(jnp.float32).reshape(1, 1, 1, C)
    scale = jax.lax.rsqrt(var + eps) * gamma
    shift = beta - mean * scale
    y = acc * scale + shift
    o_ref[...] = y[:, :, :W, :].astype(o_ref.dtype)          # narrow only at the store


def depthwise_conv_bn_nhwc(x_nhwc, weight, gamma, beta, eps=1e-3):
    """Fused depthwise 3x3 conv (stride 1, pad 1) + training-mode BN.

    x_nhwc: (N, H, W, C);  weight: (C, 1, 3, 3) depthwise OIHW;  gamma/beta: (C,).
    """
    N, H, W, C = x_nhwc.shape
    assert weight.shape == (C, 1, 3, 3), "expected depthwise 3x3 kernel"

    # Tiny parameter re-layouts (a few KB), no activation-sized HBM round trips.
    w9 = jnp.transpose(weight.reshape(C, 9), (1, 0)).astype(jnp.float32)  # (9, C)
    g = gamma.astype(jnp.float32).reshape(1, C)
    b = beta.astype(jnp.float32).reshape(1, C)

    itemsize = jnp.dtype(x_nhwc.dtype).itemsize
    cost = pl.CostEstimate(
        flops=(2 * 9 + 4) * N * H * W * C,
        transcendentals=C,
        bytes_accessed=2 * N * H * W * C * itemsize + (9 + 2) * C * 4,
    )

    kernel = functools.partial(_dwconv_bn_kernel, eps=eps)
    return pl.pallas_call(
        kernel,
        out_shape=jax.ShapeDtypeStruct((N, H, W, C), x_nhwc.dtype),
        grid=(1,),
        in_specs=[
            pl.BlockSpec((N, H, W, C), lambda i: (0, 0, 0, 0)),
            pl.BlockSpec((9, C), lambda i: (0, 0)),
            pl.BlockSpec((1, C), lambda i: (0, 0)),
            pl.BlockSpec((1, C), lambda i: (0, 0)),
        ],
        out_specs=pl.BlockSpec((N, H, W, C), lambda i: (0, 0, 0, 0)),
        scratch_shapes=[
            pltpu.VMEM((N, H, W + 2, C), jnp.float32),   # width-padded input
            pltpu.VMEM((N, H, W + 2, C), jnp.float32),   # conv accumulator
        ],
        compiler_params=pltpu.CompilerParams(dimension_semantics=("arbitrary",)),
        cost_estimate=cost,
    )(x_nhwc, w9, g, b)


def depthwise_conv_bn(x_nchw, weight, gamma, beta, eps=1e-3):
    """NCHW wrapper matching the PyTorch module's convention."""
    x_nhwc = jnp.transpose(x_nchw, (0, 2, 3, 1))           # NCHW -> NHWC
    y_nhwc = depthwise_conv_bn_nhwc(x_nhwc, weight, gamma, beta, eps=eps)
    return jnp.transpose(y_nhwc, (0, 3, 1, 2))             # NHWC -> NCHW


def _reference(x_nchw, weight, gamma, beta, eps=1e-3):
    """Pure-JAX reference: depthwise conv + training-mode BN (batch statistics)."""
    C = x_nchw.shape[1]
    y = jax.lax.conv_general_dilated(
        x_nchw, weight,
        window_strides=(1, 1), padding=((1, 1), (1, 1)),
        feature_group_count=C,
        dimension_numbers=("NCHW", "OIHW", "NCHW"),
    )
    mean = jnp.mean(y, axis=(0, 2, 3), keepdims=True)
    var = jnp.mean(jnp.square(y - mean), axis=(0, 2, 3), keepdims=True)
    return ((y - mean) * jax.lax.rsqrt(var + eps) * gamma.reshape(1, C, 1, 1)
            + beta.reshape(1, C, 1, 1))


if __name__ == "__main__":
    # Module's actual shape ([1, 864, 14, 14]); small, and exercises the
    # non-128-multiple channel count via the full-last-dim block.
    N, C, H, W = 1, 864, 14, 14
    key = jax.random.PRNGKey(0)
    kx, kw, kg, kb = jax.random.split(key, 4)

    x = jax.random.normal(kx, (N, C, H, W), dtype=jnp.float32)
    weight = jax.random.normal(kw, (C, 1, 3, 3), dtype=jnp.float32) * 0.1
    gamma = 1.0 + 0.1 * jax.random.normal(kg, (C,), dtype=jnp.float32)
    beta = 0.1 * jax.random.normal(kb, (C,), dtype=jnp.float32)

    fused = jax.jit(lambda xx, ww, gg, bb: depthwise_conv_bn(xx, ww, gg, bb, eps=1e-3))
    out = jax.block_until_ready(fused(x, weight, gamma, beta))

    ref = _reference(x, weight, gamma, beta, eps=1e-3)
    assert out.shape == (N, C, H, W)
    assert jnp.allclose(out, ref, atol=2e-4, rtol=2e-4), "mismatch vs JAX reference"

    print("KERNEL_OK")
</pallas_src>

<mosaic_0001>
module attributes {stable_mosaic.version = 11 : i64} {
  func.func @_dwconv_bn_kernel(%arg0: i32, %arg1: memref<1x14x14x864xf32, #tpu.memory_space<vmem>>, %arg2: memref<9x864xf32, #tpu.memory_space<vmem>>, %arg3: memref<1x864xf32, #tpu.memory_space<vmem>>, %arg4: memref<1x864xf32, #tpu.memory_space<vmem>>, %arg5: memref<1x14x14x864xf32, #tpu.memory_space<vmem>>, %arg6: memref<1x14x16x864xf32, #tpu.memory_space<vmem>>, %arg7: memref<1x14x16x864xf32, #tpu.memory_space<vmem>>) attributes {dimension_semantics = [#tpu.dimension_semantics<arbitrary>], iteration_bounds = array<i64: 1>, scalar_prefetch = 0 : i64, scratch_operands = 2 : i64, tpu.core_type = #tpu.core_type<tc>, window_params = [{pipeline_mode = #tpu.pipeline_mode<synchronous>, transform_indices = @transform_0, window_bounds = array<i64: 1, 14, 14, 864>}, {pipeline_mode = #tpu.pipeline_mode<synchronous>, transform_indices = @transform_1, window_bounds = array<i64: 9, 864>}, {pipeline_mode = #tpu.pipeline_mode<synchronous>, transform_indices = @transform_2, window_bounds = array<i64: 1, 864>}, {pipeline_mode = #tpu.pipeline_mode<synchronous>, transform_indices = @transform_3, window_bounds = array<i64: 1, 864>}, {pipeline_mode = #tpu.pipeline_mode<synchronous>, transform_indices = @transform_4, window_bounds = array<i64: 1, 14, 14, 864>}]} {
    %cst = arith.constant 0.000000e+00 : f32
    %0 = vector.broadcast %cst : f32 to vector<1x14x16x864xf32>
    %c0 = arith.constant 0 : index
    %c0_0 = arith.constant 0 : index
    %c0_1 = arith.constant 0 : index
    %c0_2 = arith.constant 0 : index
    %1 = vector.load %arg6[%c0, %c0_0, %c0_1, %c0_2] : memref<1x14x16x864xf32, #tpu.memory_space<vmem>>, vector<1x14x16x864xf32>
    tpu.vector_store %arg6[%c0, %c0_0, %c0_1, %c0_2], %0 {strides = array<i32>} : memref<1x14x16x864xf32, #tpu.memory_space<vmem>>, vector<1x14x16x864xf32>,
    %c0_3 = arith.constant 0 : index
    %c0_4 = arith.constant 0 : index
    %c0_5 = arith.constant 0 : index
    %c0_6 = arith.constant 0 : index
    %2 = vector.load %arg1[%c0_3, %c0_4, %c0_5, %c0_6] : memref<1x14x14x864xf32, #tpu.memory_space<vmem>>, vector<1x14x14x864xf32>
    %c0_7 = arith.constant 0 : index
    %c0_8 = arith.constant 0 : index
    %c0_9 = arith.constant 0 : index
    %c0_10 = arith.constant 0 : index
    %3 = vector.load %arg6[%c0_7, %c0_8, %c0_9, %c0_10] : memref<1x14x16x864xf32, #tpu.memory_space<vmem>>, vector<1x14x14x864xf32>
    tpu.vector_store %arg6[%c0_7, %c0_8, %c0_9, %c0_10], %2 {strides = array<i32>} : memref<1x14x16x864xf32, #tpu.memory_space<vmem>>, vector<1x14x14x864xf32>,
    %c0_11 = arith.constant 0 : index
    %c0_12 = arith.constant 0 : index
    %4 = vector.load %arg2[%c0_11, %c0_12] : memref<9x864xf32, #tpu.memory_space<vmem>>, vector<9x864xf32>
    %5 = vector.extract_strided_slice %4 {offsets = [0, 0], sizes = [1, 864], strides = [1, 1]} : vector<9x864xf32> to vector<1x864xf32>
    %6 = vector.extract_strided_slice %4 {offsets = [1, 0], sizes = [1, 864], strides = [1, 1]} : vector<9x864xf32> to vector<1x864xf32>
    %7 = vector.extract_strided_slice %4 {offsets = [2, 0], sizes = [1, 864], strides = [1, 1]} : vector<9x864xf32> to vector<1x864xf32>
    %8 = vector.extract_strided_slice %4 {offsets = [3, 0], sizes = [1, 864], strides = [1, 1]} : vector<9x864xf32> to vector<1x864xf32>
    %9 = vector.extract_strided_slice %4 {offsets = [4, 0], sizes = [1, 864], strides = [1, 1]} : vector<9x864xf32> to vector<1x864xf32>
    %10 = vector.extract_strided_slice %4 {offsets = [5, 0], sizes = [1, 864], strides = [1, 1]} : vector<9x864xf32> to vector<1x864xf32>
    %11 = vector.extract_strided_slice %4 {offsets = [6, 0], sizes = [1, 864], strides = [1, 1]} : vector<9x864xf32> to vector<1x864xf32>
    %12 = vector.extract_strided_slice %4 {offsets = [7, 0], sizes = [1, 864], strides = [1, 1]} : vector<9x864xf32> to vector<1x864xf32>
    %13 = vector.extract_strided_slice %4 {offsets = [8, 0], sizes = [1, 864], strides = [1, 1]} : vector<9x864xf32> to vector<1x864xf32>
    %cst_13 = arith.constant 0.000000e+00 : f32
    %14 = vector.broadcast %cst_13 : f32 to vector<1x1x16x864xf32>
    %c0_14 = arith.constant 0 : index
    %c0_15 = arith.constant 0 : index
    %c0_16 = arith.constant 0 : index
    %c0_17 = arith.constant 0 : index
    %15 = vector.load %arg6[%c0_14, %c0_15, %c0_16, %c0_17] : memref<1x14x16x864xf32, #tpu.memory_space<vmem>>, vector<1x1x16x864xf32>
    %c1_i32 = arith.constant 1 : i32
    %16 = tpu.dynamic_rotate %15 by %c1_i32 dim 2 : vector<1x1x16x864xf32>, i32 -> vector<1x1x16x864xf32>
    %17 = vector.shape_cast %8 : vector<1x864xf32> to vector<1x1x1x864xf32>
    %18 = vector.broadcast %17 : vector<1x1x1x864xf32> to vector<1x1x16x864xf32>
    %19 = arith.mulf %16, %18 : vector<1x1x16x864xf32>
    %20 = arith.addf %14, %19 : vector<1x1x16x864xf32>
    %21 = vector.shape_cast %9 : vector<1x864xf32> to vector<1x1x1x864xf32>
    %22 = vector.broadcast %21 : vector<1x1x1x864xf32> to vector<1x1x16x864xf32>
    %23 = arith.mulf %15, %22 : vector<1x1x16x864xf32>
    %24 = arith.addf %20, %23 : vector<1x1x16x864xf32>
    %c15_i32 = arith.constant 15 : i32
    %25 = tpu.dynamic_rotate %15 by %c15_i32 dim 2 : vector<1x1x16x864xf32>, i32 -> vector<1x1x16x864xf32>
    %26 = vector.shape_cast %10 : vector<1x864xf32> to vector<1x1x1x864xf32>
    %27 = vector.broadcast %26 : vector<1x1x1x864xf32> to vector<1x1x16x864xf32>
    %28 = arith.mulf %25, %27 : vector<1x1x16x864xf32>
    %29 = arith.addf %24, %28 : vector<1x1x16x864xf32>
    %c0_18 = arith.constant 0 : index
    %c1 = arith.constant 1 : index
    %c0_19 = arith.constant 0 : index
    %c0_20 = arith.constant 0 : index
    %30 = vector.load %arg6[%c0_18, %c1, %c0_19, %c0_20] : memref<1x14x16x864xf32, #tpu.memory_space<vmem>>, vector<1x1x16x864xf32>
    %c1_i32_21 = arith.constant 1 : i32
    %31 = tpu.dynamic_rotate %30 by %c1_i32_21 dim 2 : vector<1x1x16x864xf32>, i32 -> vector<1x1x16x864xf32>
    %32 = vector.shape_cast %11 : vector<1x864xf32> to vector<1x1x1x864xf32>
    %33 = vector.broadcast %32 : vector<1x1x1x864xf32> to vector<1x1x16x864xf32>
    %34 = arith.mulf %31, %33 : vector<1x1x16x864xf32>
    %35 = arith.addf %29, %34 : vector<1x1x16x864xf32>
    %36 = vector.shape_cast %12 : vector<1x864xf32> to vector<1x1x1x864xf32>
    %37 = vector.broadcast %36 : vector<1x1x1x864xf32> to vector<1x1x16x864xf32>
    %38 = arith.mulf %30, %37 : vector<1x1x16x864xf32>
    %39 = arith.addf %35, %38 : vector<1x1x16x864xf32>
    %c15_i32_22 = arith.constant 15 : i32
    %40 = tpu.dynamic_rotate %30 by %c15_i32_22 dim 2 : vector<1x1x16x864xf32>, i32 -> vector<1x1x16x864xf32>
    %41 = vector.shape_cast %13 : vector<1x864xf32> to vector<1x1x1x864xf32>
    %42 = vector.broadcast %41 : vector<1x1x1x864xf32> to vector<1x1x16x864xf32>
    %43 = arith.mulf %40, %42 : vector<1x1x16x864xf32>
    %44 = arith.addf %39, %43 : vector<1x1x16x864xf32>
    %c0_23 = arith.constant 0 : index
    %c0_24 = arith.constant 0 : index
    %c0_25 = arith.constant 0 : index
    %c0_26 = arith.constant 0 : index
    %45 = vector.load %arg7[%c0_23, %c0_24, %c0_25, %c0_26] : memref<1x14x16x864xf32, #tpu.memory_space<vmem>>, vector<1x1x16x864xf32>
    tpu.vector_store %arg7[%c0_23, %c0_24, %c0_25, %c0_26], %44 {strides = array<i32>} : memref<1x14x16x864xf32, #tpu.memory_space<vmem>>, vector<1x1x16x864xf32>,
    %cst_27 = arith.constant 0.000000e+00 : f32
    %46 = vector.broadcast %cst_27 : f32 to vector<1x1x16x864xf32>
    %c0_28 = arith.constant 0 : index
    %c0_29 = arith.constant 0 : index
    %c0_30 = arith.constant 0 : index
    %c0_31 = arith.constant 0 : index
    %47 = vector.load %arg6[%c0_28, %c0_29, %c0_30, %c0_31] : memref<1x14x16x864xf32, #tpu.memory_space<vmem>>, vector<1x1x16x864xf32>
    %c1_i32_32 = arith.constant 1 : i32
    %48 = tpu.dynamic_rotate %47 by %c1_i32_32 dim 2 : vector<1x1x16x864xf32>, i32 -> vector<1x1x16x864xf32>
    %49 = vector.shape_cast %5 : vector<1x864xf32> to vector<1x1x1x864xf32>
    %50 = vector.broadcast %49 : vector<1x1x1x864xf32> to vector<1x1x16x864xf32>
    %51 = arith.mulf %48, %50 : vector<1x1x16x864xf32>
    %52 = arith.addf %46, %51 : vector<1x1x16x864xf32>
    %53 = vector.shape_cast %6 : vector<1x864xf32> to vector<1x1x1x864xf32>
    %54 = vector.broadcast %53 : vector<1x1x1x864xf32> to vector<1x1x16x864xf32>
    %55 = arith.mulf %47, %54 : vector<1x1x16x864xf32>
    %56 = arith.addf %52, %55 : vector<1x1x16x864xf32>
    %c15_i32_33 = arith.constant 15 : i32
    %57 = tpu.dynamic_rotate %47 by %c15_i32_33 dim 2 : vector<1x1x16x864xf32>, i32 -> vector<1x1x16x864xf32>
    %58 = vector.shape_cast %7 : vector<1x864xf32> to vector<1x1x1x864xf32>
    %59 = vector.broadcast %58 : vector<1x1x1x864xf32> to vector<1x1x16x864xf32>
    %60 = arith.mulf %57, %59 : vector<1x1x16x864xf32>
    %61 = arith.addf %56, %60 : vector<1x1x16x864xf32>
    %c0_34 = arith.constant 0 : index
    %c1_35 = arith.constant 1 : index
    %c0_36 = arith.constant 0 : index
    %c0_37 = arith.constant 0 : index
    %62 = vector.load %arg6[%c0_34, %c1_35, %c0_36, %c0_37] : memref<1x14x16x864xf32, #tpu.memory_space<vmem>>, vector<1x1x16x864xf32>
    %c1_i32_38 = arith.constant 1 : i32
    %63 = tpu.dynamic_rotate %62 by %c1_i32_38 dim 2 : vector<1x1x16x864xf32>, i32 -> vector<1x1x16x864xf32>
    %64 = vector.shape_cast %8 : vector<1x864xf32> to vector<1x1x1x864xf32>
    %65 = vector.broadcast %64 : vector<1x1x1x864xf32> to vector<1x1x16x864xf32>
    %66 = arith.mulf %63, %65 : vector<1x1x16x864xf32>
    %67 = arith.addf %61, %66 : vector<1x1x16x864xf32>
    %68 = vector.shape_cast %9 : vector<1x864xf32> to vector<1x1x1x864xf32>
    %69 = vector.broadcast %68 : vector<1x1x1x864xf32> to vector<1x1x16x864xf32>
    %70 = arith.mulf %62, %69 : vector<1x1x16x864xf32>
    %71 = arith.addf %67, %70 : vector<1x1x16x864xf32>
    %c15_i32_39 = arith.constant 15 : i32
    %72 = tpu.dynamic_rotate %62 by %c15_i32_39 dim 2 : vector<1x1x16x864xf32>, i32 -> vector<1x1x16x864xf32>
    %73 = vector.shape_cast %10 : vector<1x864xf32> to vector<1x1x1x864xf32>
    %74 = vector.broadcast %73 : vector<1x1x1x864xf32> to vector<1x1x16x864xf32>
    %75 = arith.mulf %72, %74 : vector<1x1x16x864xf32>
    %76 = arith.addf %71, %75 : vector<1x1x16x864xf32>
    %c0_40 = arith.constant 0 : index
    %c2 = arith.constant 2 : index
    %c0_41 = arith.constant 0 : index
    %c0_42 = arith.constant 0 : index
    %77 = vector.load %arg6[%c0_40, %c2, %c0_41, %c0_42] : memref<1x14x16x864xf32, #tpu.memory_space<vmem>>, vector<1x1x16x864xf32>
    %c1_i32_43 = arith.constant 1 : i32
    %78 = tpu.dynamic_rotate %77 by %c1_i32_43 dim 2 : vector<1x1x16x864xf32>, i32 -> vector<1x1x16x864xf32>
    %79 = vector.shape_cast %11 : vector<1x864xf32> to vector<1x1x1x864xf32>
    %80 = vector.broadcast %79 : vector<1x1x1x864xf32> to vector<1x1x16x864xf32>
    %81 = arith.mulf %78, %80 : vector<1x1x16x864xf32>
    %82 = arith.addf %76, %81 : vector<1x1x16x864xf32>
    %83 = vector.shape_cast %12 : vector<1x864xf32> to vector<1x1x1x864xf32>
    %84 = vector.broadcast %83 : vector<1x1x1x864xf32> to vector<1x1x16x864xf32>
    %85 = arith.mulf %77, %84 : vector<1x1x16x864xf32>
    %86 = arith.addf %82, %85 : vector<1x1x16x864xf32>
    %c15_i32_44 = arith.constant 15 : i32
    %87 = tpu.dynamic_rotate %77 by %c15_i32_44 dim 2 : vector<1x1x16x864xf32>, i32 -> vector<1x1x16x864xf32>
    %88 = vector.shape_cast %13 : vector<1x864xf32> to vector<1x1x1x864xf32>
    %89 = vector.broadcast %88 : vector<1x1x1x864xf32> to vector<1x1x16x864xf32>
    %90 = arith.mulf %87, %89 : vector<1x1x16x864xf32>
    %91 = arith.addf %86, %90 : vector<1x1x16x864xf32>
    %c0_45 = arith.constant 0 : index
    %c1_46 = arith.constant 1 : index
    %c0_47 = arith.constant 0 : index
    %c0_48 = arith.constant 0 : index
    %92 = vector.load %arg7[%c0_45, %c1_46, %c0_47, %c0_48] : memref<1x14x16x864xf32, #tpu.memory_space<vmem>>, vector<1x1x16x864xf32>
    tpu.vector_store %arg7[%c0_45, %c1_46, %c0_47, %c0_48], %91 {strides = array<i32>} : memref<1x14x16x864xf32, #tpu.memory_space<vmem>>, vector<1x1x16x864xf32>,
    %cst_49 = arith.constant 0.000000e+00 : f32
    %93 = vector.broadcast %cst_49 : f32 to vector<1x1x16x864xf32>
    %c0_50 = arith.constant 0 : index
    %c1_51 = arith.constant 1 : index
    %c0_52 = arith.constant 0 : index
    %c0_53 = arith.constant 0 : index
    %94 = vector.load %arg6[%c0_50, %c1_51, %c0_52, %c0_53] : memref<1x14x16x864xf32, #tpu.memory_space<vmem>>, vector<1x1x16x864xf32>
    %c1_i32_54 = arith.constant 1 : i32
    %95 = tpu.dynamic_rotate %94 by %c1_i32_54 dim 2 : vector<1x1x16x864xf32>, i32 -> vector<1x1x16x864xf32>
    %96 = vector.shape_cast %5 : vector<1x864xf32> to vector<1x1x1x864xf32>
    %97 = vector.broadcast %96 : vector<1x1x1x864xf32> to vector<1x1x16x864xf32>
    %98 = arith.mulf %95, %97 : vector<1x1x16x864xf32>
    %99 = arith.addf %93, %98 : vector<1x1x16x864xf32>
    %100 = vector.shape_cast %6 : vector<1x864xf32> to vector<1x1x1x864xf32>
    %101 = vector.broadcast %100 : vector<1x1x1x864xf32> to vector<1x1x16x864xf32>
    %102 = arith.mulf %94, %101 : vector<1x1x16x864xf32>
    %103 = arith.addf %99, %102 : vector<1x1x16x864xf32>
    %c15_i32_55 = arith.constant 15 : i32
    %104 = tpu.dynamic_rotate %94 by %c15_i32_55 dim 2 : vector<1x1x16x864xf32>, i32 -> vector<1x1x16x864xf32>
    %105 = vector.shape_cast %7 : vector<1x864xf32> to vector<1x1x1x864xf32>
    %106 = vector.broadcast %105 : vector<1x1x1x864xf32> to vector<1x1x16x864xf32>
    %107 = arith.mulf %104, %106 : vector<1x1x16x864xf32>
    %108 = arith.addf %103, %107 : vector<1x1x16x864xf32>
    %c0_56 = arith.constant 0 : index
    %c2_57 = arith.constant 2 : index
    %c0_58 = arith.constant 0 : index
    %c0_59 = arith.constant 0 : index
    %109 = vector.load %arg6[%c0_56, %c2_57, %c0_58, %c0_59] : memref<1x14x16x864xf32, #tpu.memory_space<vmem>>, vector<1x1x16x864xf32>
    %c1_i32_60 = arith.constant 1 : i32
    %110 = tpu.dynamic_rotate %109 by %c1_i32_60 dim 2 : vector<1x1x16x864xf32>, i32 -> vector<1x1x16x864xf32>
    %111 = vector.shape_cast %8 : vector<1x864xf32> to vector<1x1x1x864xf32>
    %112 = vector.broadcast %111 : vector<1x1x1x864xf32> to vector<1x1x16x864xf32>
    %113 = arith.mulf %110, %112 : vector<1x1x16x864xf32>
    %114 = arith.addf %108, %113 : vector<1x1x16x864xf32>
    %115 = vector.shape_cast %9 : vector<1x864xf32> to vector<1x1x1x864xf32>
    %116 = vector.broadcast %115 : vector<1x1x1x864xf32> to vector<1x1x16x864xf32>
    %117 = arith.mulf %109, %116 : vector<1x1x16x864xf32>
    %118 = arith.addf %114, %117 : vector<1x1x16x864xf32>
    %c15_i32_61 = arith.constant 15 : i32
    %119 = tpu.dynamic_rotate %109 by %c15_i32_61 dim 2 : vector<1x1x16x864xf32>, i32 -> vector<1x1x16x864xf32>
    %120 = vector.shape_cast %10 : vector<1x864xf32> to vector<1x1x1x864xf32>
    %121 = vector.broadcast %120 : vector<1x1x1x864xf32> to vector<1x1x16x864xf32>
    %122 = arith.mulf %119, %121 : vector<1x1x16x864xf32>
    %123 = arith.addf %118, %122 : vector<1x1x16x864xf32>
    %c0_62 = arith.constant 0 : index
    %c3 = arith.constant 3 : index
    %c0_63 = arith.constant 0 : index
    %c0_64 = arith.constant 0 : index
    %124 = vector.load %arg6[%c0_62, %c3, %c0_63, %c0_64] : memref<1x14x16x864xf32, #tpu.memory_space<vmem>>, vector<1x1x16x864xf32>
    %c1_i32_65 = arith.constant 1 : i32
    %125 = tpu.dynamic_rotate %124 by %c1_i32_65 dim 2 : vector<1x1x16x864xf32>, i32 -> vector<1x1x16x864xf32>
    %126 = vector.shape_cast %11 : vector<1x864xf32> to vector<1x1x1x864xf32>
    %127 = vector.broadcast %126 : vector<1x1x1x864xf32> to vector<1x1x16x864xf32>
    %128 = arith.mulf %125, %127 : vector<1x1x16x864xf32>
    %129 = arith.addf %123, %128 : vector<1x1x16x864xf32>
    %130 = vector.shape_cast %12 : vector<1x864xf32> to vector<1x1x1x864xf32>
    %131 = vector.broadcast %130 : vector<1x1x1x864xf32> to vector<1x1x16x864xf32>
    %132 = arith.mulf %124, %131 : vector<1x1x16x864xf32>
    %133 = arith.addf %129, %132 : vector<1x1x16x864xf32>
    %c15_i32_66 = arith.constant 15 : i32
    %134 = tpu.dynamic_rotate %124 by %c15_i32_66 dim 2 : vector<1x1x16x864xf32>, i32 -> vector<1x1x16x864xf32>
    %135 = vector.shape_cast %13 : vector<1x864xf32> to vector<1x1x1x864xf32>
    %136 = vector.broadcast %135 : vector<1x1x1x864xf32> to vector<1x1x16x864xf32>
    %137 = arith.mulf %134, %136 : vector<1x1x16x864xf32>
    %138 = arith.addf %133, %137 : vector<1x1x16x864xf32>
    %c0_67 = arith.constant 0 : index
    %c2_68 = arith.constant 2 : index
    %c0_69 = arith.constant 0 : index
    %c0_70 = arith.constant 0 : index
    %139 = vector.load %arg7[%c0_67, %c2_68, %c0_69, %c0_70] : memref<1x14x16x864xf32, #tpu.memory_space<vmem>>, vector<1x1x16x864xf32>
    tpu.vector_store %arg7[%c0_67, %c2_68, %c0_69, %c0_70], %138 {strides = array<i32>} : memref<1x14x16x864xf32, #tpu.memory_space<vmem>>, vector<1x1x16x864xf32>,
    %cst_71 = arith.constant 0.000000e+00 : f32
    %140 = vector.broadcast %cst_71 : f32 to vector<1x1x16x864xf32>
    %c0_72 = arith.constant 0 : index
    %c2_73 = arith.constant 2 : index
    %c0_74 = arith.constant 0 : index
    %c0_75 = arith.constant 0 : index
    %141 = vector.load %arg6[%c0_72, %c2_73, %c0_74, %c0_75] : memref<1x14x16x864xf32, #tpu.memory_space<vmem>>, vector<1x1x16x864xf32>
    %c1_i32_76 = arith.constant 1 : i32
    %142 = tpu.dynamic_rotate %141 by %c1_i32_76 dim 2 : vector<1x1x16x864xf32>, i32 -> vector<1x1x16x864xf32>
    %143 = vector.shape_cast %5 : vector<1x864xf32> to vector<1x1x1x864xf32>
    %144 = vector.broadcast %143 : vector<1x1x1x864xf32> to vector<1x1x16x864xf32>
    %145 = arith.mulf %142, %144 : vector<1x1x16x864xf32>
    %146 = arith.addf %140, %145 : vector<1x1x16x864xf32>
    %147 = vector.shape_cast %6 : vector<1x864xf32> to vector<1x1x1x864xf32>
    %148 = vector.broadcast %147 : vector<1x1x1x864xf32> to vector<1x1x16x864xf32>
    %149 = arith.mulf %141, %148 : vector<1x1x16x864xf32>
    %150 = arith.addf %146, %149 : vector<1x1x16x864xf32>
    %c15_i32_77 = arith.constant 15 : i32
    %151 = tpu.dynamic_rotate %141 by %c15_i32_77 dim 2 : vector<1x1x16x864xf32>, i32 -> vector<1x1x16x864xf32>
    %152 = vector.shape_cast %7 : vector<1x864xf32> to vector<1x1x1x864xf32>
    %153 = vector.broadcast %152 : vector<1x1x1x864xf32> to vector<1x1x16x864xf32>
    %154 = arith.mulf %151, %153 : vector<1x1x16x864xf32>
    %155 = arith.addf %150, %154 : vector<1x1x16x864xf32>
    %c0_78 = arith.constant 0 : index
    %c3_79 = arith.constant 3 : index
    %c0_80 = arith.constant 0 : index
    %c0_81 = arith.constant 0 : index
    %156 = vector.load %arg6[%c0_78, %c3_79, %c0_80, %c0_81] : memref<1x14x16x864xf32, #tpu.memory_space<vmem>>, vector<1x1x16x864xf32>
    %c1_i32_82 = arith.constant 1 : i32
    %157 = tpu.dynamic_rotate %156 by %c1_i32_82 dim 2 : vector<1x1x16x864xf32>, i32 -> vector<1x1x16x864xf32>
    %158 = vector.shape_cast %8 : vector<1x864xf32> to vector<1x1x1x864xf32>
    %159 = vector.broadcast %158 : vector<1x1x1x864xf32> to vector<1x1x16x864xf32>
    %160 = arith.mulf %157, %159 : vector<1x1x16x864xf32>
    %161 = arith.addf %155, %160 : vector<1x1x16x864xf32>
    %162 = vector.shape_cast %9 : vector<1x864xf32> to vector<1x1x1x864xf32>
    %163 = vector.broadcast %162 : vector<1x1x1x864xf32> to vector<1x1x16x864xf32>
    %164 = arith.mulf %156, %163 : vector<1x1x16x864xf32>
    %165 = arith.addf %161, %164 : vector<1x1x16x864xf32>
    %c15_i32_83 = arith.constant 15 : i32
    %166 = tpu.dynamic_rotate %156 by %c15_i32_83 dim 2 : vector<1x1x16x864xf32>, i32 -> vector<1x1x16x864xf32>
    %167 = vector.shape_cast %10 : vector<1x864xf32> to vector<1x1x1x864xf32>
    %168 = vector.broadcast %167 : vector<1x1x1x864xf32> to vector<1x1x16x864xf32>
    %169 = arith.mulf %166, %168 : vector<1x1x16x864xf32>
    %170 = arith.addf %165, %169 : vector<1x1x16x864xf32>
    %c0_84 = arith.constant 0 : index
    %c4 = arith.constant 4 : index
    %c0_85 = arith.constant 0 : index
    %c0_86 = arith.constant 0 : index
    %171 = vector.load %arg6[%c0_84, %c4, %c0_85, %c0_86] : memref<1x14x16x864xf32, #tpu.memory_space<vmem>>, vector<1x1x16x864xf32>
    %c1_i32_87 = arith.constant 1 : i32
    %172 = tpu.dynamic_rotate %171 by %c1_i32_87 dim 2 : vector<1x1x16x864xf32>, i32 -> vector<1x1x16x864xf32>
    %173 = vector.shape_cast %11 : vector<1x864xf32> to vector<1x1x1x864xf32>
    %174 = vector.broadcast %173 : vector<1x1x1x864xf32> to vector<1x1x16x864xf32>
    %175 = arith.mulf %172, %174 : vector<1x1x16x864xf32>
    %176 = arith.addf %170, %175 : vector<1x1x16x864xf32>
    %177 = vector.shape_cast %12 : vector<1x864xf32> to vector<1x1x1x864xf32>
    %178 = vector.broadcast %177 : vector<1x1x1x864xf32> to vector<1x1x16x864xf32>
    %179 = arith.mulf %171, %178 : vector<1x1x16x864xf32>
    %180 = arith.addf %176, %179 : vector<1x1x16x864xf32>
    %c15_i32_88 = arith.constant 15 : i32
    %181 = tpu.dynamic_rotate %171 by %c15_i32_88 dim 2 : vector<1x1x16x864xf32>, i32 -> vector<1x1x16x864xf32>
    %182 = vector.shape_cast %13 : vector<1x864xf32> to vector<1x1x1x864xf32>
    %183 = vector.broadcast %182 : vector<1x1x1x864xf32> to vector<1x1x16x864xf32>
    %184 = arith.mulf %181, %183 : vector<1x1x16x864xf32>
    %185 = arith.addf %180, %184 : vector<1x1x16x864xf32>
    %c0_89 = arith.constant 0 : index
    %c3_90 = arith.constant 3 : index
    %c0_91 = arith.constant 0 : index
    %c0_92 = arith.constant 0 : index
    %186 = vector.load %arg7[%c0_89, %c3_90, %c0_91, %c0_92] : memref<1x14x16x864xf32, #tpu.memory_space<vmem>>, vector<1x1x16x864xf32>
    tpu.vector_store %arg7[%c0_89, %c3_90, %c0_91, %c0_92], %185 {strides = array<i32>} : memref<1x14x16x864xf32, #tpu.memory_space<vmem>>, vector<1x1x16x864xf32>,
    %cst_93 = arith.constant 0.000000e+00 : f32
    %187 = vector.broadcast %cst_93 : f32 to vector<1x1x16x864xf32>
    %c0_94 = arith.constant 0 : index
    %c3_95 = arith.constant 3 : index
    %c0_96 = arith.constant 0 : index
    %c0_97 = arith.constant 0 : index
    %188 = vector.load %arg6[%c0_94, %c3_95, %c0_96, %c0_97] : memref<1x14x16x864xf32, #tpu.memory_space<vmem>>, vector<1x1x16x864xf32>
    %c1_i32_98 = arith.constant 1 : i32
    %189 = tpu.dynamic_rotate %188 by %c1_i32_98 dim 2 : vector<1x1x16x864xf32>, i32 -> vector<1x1x16x864xf32>
    %190 = vector.shape_cast %5 : vector<1x864xf32> to vector<1x1x1x864xf32>
    %191 = vector.broadcast %190 : vector<1x1x1x864xf32> to vector<1x1x16x864xf32>
    %192 = arith.mulf %189, %191 : vector<1x1x16x864xf32>
    %193 = arith.addf %187, %192 : vector<1x1x16x864xf32>
    %194 = vector.shape_cast %6 : vector<1x864xf32> to vector<1x1x1x864xf32>
    %195 = vector.broadcast %194 : vector<1x1x1x864xf32> to vector<1x1x16x864xf32>
    %196 = arith.mulf %188, %195 : vector<1x1x16x864xf32>
    %197 = arith.addf %193, %196 : vector<1x1x16x864xf32>
    %c15_i32_99 = arith.constant 15 : i32
    %198 = tpu.dynamic_rotate %188 by %c15_i32_99 dim 2 : vector<1x1x16x864xf32>, i32 -> vector<1x1x16x864xf32>
    %199 = vector.shape_cast %7 : vector<1x864xf32> to vector<1x1x1x864xf32>
    %200 = vector.broadcast %199 : vector<1x1x1x864xf32> to vector<1x1x16x864xf32>
    %201 = arith.mulf %198, %200 : vector<1x1x16x864xf32>
    %202 = arith.addf %197, %201 : vector<1x1x16x864xf32>
    %c0_100 = arith.constant 0 : index
    %c4_101 = arith.constant 4 : index
    %c0_102 = arith.constant 0 : index
    %c0_103 = arith.constant 0 : index
    %203 = vector.load %arg6[%c0_100, %c4_101, %c0_102, %c0_103] : memref<1x14x16x864xf32, #tpu.memory_space<vmem>>, vector<1x1x16x864xf32>
    %c1_i32_104 = arith.constant 1 : i32
    %204 = tpu.dynamic_rotate %203 by %c1_i32_104 dim 2 : vector<1x1x16x864xf32>, i32 -> vector<1x1x16x864xf32>
    %205 = vector.shape_cast %8 : vector<1x864xf32> to vector<1x1x1x864xf32>
    %206 = vector.broadcast %205 : vector<1x1x1x864xf32> to vector<1x1x16x864xf32>
    %207 = arith.mulf %204, %206 : vector<1x1x16x864xf32>
    %208 = arith.addf %202, %207 : vector<1x1x16x864xf32>
    %209 = vector.shape_cast %9 : vector<1x864xf32> to vector<1x1x1x864xf32>
    %210 = vector.broadcast %209 : vector<1x1x1x864xf32> to vector<1x1x16x864xf32>
    %211 = arith.mulf %203, %210 : vector<1x1x16x864xf32>
    %212 = arith.addf %208, %211 : vector<1x1x16x864xf32>
    %c15_i32_105 = arith.constant 15 : i32
    %213 = tpu.dynamic_rotate %203 by %c15_i32_105 dim 2 : vector<1x1x16x864xf32>, i32 -> vector<1x1x16x864xf32>
    %214 = vector.shape_cast %10 : vector<1x864xf32> to vector<1x1x1x864xf32>
    %215 = vector.broadcast %214 : vector<1x1x1x864xf32> to vector<1x1x16x864xf32>
    %216 = arith.mulf %213, %215 : vector<1x1x16x864xf32>
    %217 = arith.addf %212, %216 : vector<1x1x16x864xf32>
    %c0_106 = arith.constant 0 : index
    %c5 = arith.constant 5 : index
    %c0_107 = arith.constant 0 : index
    %c0_108 = arith.constant 0 : index
    %218 = vector.load %arg6[%c0_106, %c5, %c0_107, %c0_108] : memref<1x14x16x864xf32, #tpu.memory_space<vmem>>, vector<1x1x16x864xf32>
    %c1_i32_109 = arith.constant 1 : i32
    %219 = tpu.dynamic_rotate %218 by %c1_i32_109 dim 2 : vector<1x1x16x864xf32>, i32 -> vector<1x1x16x864xf32>
    %220 = vector.shape_cast %11 : vector<1x864xf32> to vector<1x1x1x864xf32>
    %221 = vector.broadcast %220 : vector<1x1x1x864xf32> to vector<1x1x16x864xf32>
    %222 = arith.mulf %219, %221 : vector<1x1x16x864xf32>
    %223 = arith.addf %217, %222 : vector<1x1x16x864xf32>
    %224 = vector.shape_cast %12 : vector<1x864xf32> to vector<1x1x1x864xf32>
    %225 = vector.broadcast %224 : vector<1x1x1x864xf32> to vector<1x1x16x864xf32>
    %226 = arith.mulf %218, %225 : vector<1x1x16x864xf32>
    %227 = arith.addf %223, %226 : vector<1x1x16x864xf32>
    %c15_i32_110 = arith.constant 15 : i32
    %228 = tpu.dynamic_rotate %218 by %c15_i32_110 dim 2 : vector<1x1x16x864xf32>, i32 -> vector<1x1x16x864xf32>
    %229 = vector.shape_cast %13 : vector<1x864xf32> to vector<1x1x1x864xf32>
    %230 = vector.broadcast %229 : vector<1x1x1x864xf32> to vector<1x1x16x864xf32>
    %231 = arith.mulf %228, %230 : vector<1x1x16x864xf32>
    %232 = arith.addf %227, %231 : vector<1x1x16x864xf32>
    %c0_111 = arith.constant 0 : index
    %c4_112 = arith.constant 4 : index
    %c0_113 = arith.constant 0 : index
    %c0_114 = arith.constant 0 : index
    %233 = vector.load %arg7[%c0_111, %c4_112, %c0_113, %c0_114] : memref<1x14x16x864xf32, #tpu.memory_space<vmem>>, vector<1x1x16x864xf32>
    tpu.vector_store %arg7[%c0_111, %c4_112, %c0_113, %c0_114], %232 {strides = array<i32>} : memref<1x14x16x864xf32, #tpu.memory_space<vmem>>, vector<1x1x16x864xf32>,
    %cst_115 = arith.constant 0.000000e+00 : f32
    %234 = vector.broadcast %cst_115 : f32 to vector<1x1x16x864xf32>
    %c0_116 = arith.constant 0 : index
    %c4_117 = arith.constant 4 : index
    %c0_118 = arith.constant 0 : index
    %c0_119 = arith.constant 0 : index
    %235 = vector.load %arg6[%c0_116, %c4_117, %c0_118, %c0_119] : memref<1x14x16x864xf32, #tpu.memory_space<vmem>>, vector<1x1x16x864xf32>
    %c1_i32_120 = arith.constant 1 : i32
    %236 = tpu.dynamic_rotate %235 by %c1_i32_120 dim 2 : vector<1x1x16x864xf32>, i32 -> vector<1x1x16x864xf32>
    %237 = vector.shape_cast %5 : vector<1x864xf32> to vector<1x1x1x864xf32>
    %238 = vector.broadcast %237 : vector<1x1x1x864xf32> to vector<1x1x16x864xf32>
    %239 = arith.mulf %236, %238 : vector<1x1x16x864xf32>
    %240 = arith.addf %234, %239 : vector<1x1x16x864xf32>
    %241 = vector.shape_cast %6 : vector<1x864xf32> to vector<1x1x1x864xf32>
    %242 = vector.broadcast %241 : vector<1x1x1x864xf32> to vector<1x1x16x864xf32>
    %243 = arith.mulf %235, %242 : vector<1x1x16x864xf32>
    %244 = arith.addf %240, %243 : vector<1x1x16x864xf32>
    %c15_i32_121 = arith.constant 15 : i32
    %245 = tpu.dynamic_rotate %235 by %c15_i32_121 dim 2 : vector<1x1x16x864xf32>, i32 -> vector<1x1x16x864xf32>
    %246 = vector.shape_cast %7 : vector<1x864xf32> to vector<1x1x1x864xf32>
    %247 = vector.broadcast %246 : vector<1x1x1x864xf32> to vector<1x1x16x864xf32>
    %248 = arith.mulf %245, %247 : vector<1x1x16x864xf32>
    %249 = arith.addf %244, %248 : vector<1x1x16x864xf32>
    %c0_122 = arith.constant 0 : index
    %c5_123 = arith.constant 5 : index
    %c0_124 = arith.constant 0 : index
    %c0_125 = arith.constant 0 : index
    %250 = vector.load %arg6[%c0_122, %c5_123, %c0_124, %c0_125] : memref<1x14x16x864xf32, #tpu.memory_space<vmem>>, vector<1x1x16x864xf32>
    %c1_i32_126 = arith.constant 1 : i32
    %251 = tpu.dynamic_rotate %250 by %c1_i32_126 dim 2 : vector<1x1x16x864xf32>, i32 -> vector<1x1x16x864xf32>
    %252 = vector.shape_cast %8 : vector<1x864xf32> to vector<1x1x1x864xf32>
    %253 = vector.broadcast %252 : vector<1x1x1x864xf32> to vector<1x1x16x864xf32>
    %254 = arith.mulf %251, %253 : vector<1x1x16x864xf32>
    %255 = arith.addf %249, %254 : vector<1x1x16x864xf32>
    %256 = vector.shape_cast %9 : vector<1x864xf32> to vector<1x1x1x864xf32>
    %257 = vector.broadcast %256 : vector<1x1x1x864xf32> to vector<1x1x16x864xf32>
    %258 = arith.mulf %250, %257 : vector<1x1x16x864xf32>
    %259 = arith.addf %255, %258 : vector<1x1x16x864xf32>
    %c15_i32_127 = arith.constant 15 : i32
    %260 = tpu.dynamic_rotate %250 by %c15_i32_127 dim 2 : vector<1x1x16x864xf32>, i32 -> vector<1x1x16x864xf32>
    %261 = vector.shape_cast %10 : vector<1x864xf32> to vector<1x1x1x864xf32>
    %262 = vector.broadcast %261 : vector<1x1x1x864xf32> to vector<1x1x16x864xf32>
    %263 = arith.mulf %260, %262 : vector<1x1x16x864xf32>
    %264 = arith.addf %259, %263 : vector<1x1x16x864xf32>
    %c0_128 = arith.constant 0 : index
    %c6 = arith.constant 6 : index
    %c0_129 = arith.constant 0 : index
    %c0_130 = arith.constant 0 : index
    %265 = vector.load %arg6[%c0_128, %c6, %c0_129, %c0_130] : memref<1x14x16x864xf32, #tpu.memory_space<vmem>>, vector<1x1x16x864xf32>
    %c1_i32_131 = arith.constant 1 : i32
    %266 = tpu.dynamic_rotate %265 by %c1_i32_131 dim 2 : vector<1x1x16x864xf32>, i32 -> vector<1x1x16x864xf32>
    %267 = vector.shape_cast %11 : vector<1x864xf32> to vector<1x1x1x864xf32>
    %268 = vector.broadcast %267 : vector<1x1x1x864xf32> to vector<1x1x16x864xf32>
    %269 = arith.mulf %266, %268 : vector<1x1x16x864xf32>
    %270 = arith.addf %264, %269 : vector<1x1x16x864xf32>
    %271 = vector.shape_cast %12 : vector<1x864xf32> to vector<1x1x1x864xf32>
    %272 = vector.broadcast %271 : vector<1x1x1x864xf32> to vector<1x1x16x864xf32>
    %273 = arith.mulf %265, %272 : vector<1x1x16x864xf32>
    %274 = arith.addf %270, %273 : vector<1x1x16x864xf32>
    %c15_i32_132 = arith.constant 15 : i32
    %275 = tpu.dynamic_rotate %265 by %c15_i32_132 dim 2 : vector<1x1x16x864xf32>, i32 -> vector<1x1x16x864xf32>
    %276 = vector.shape_cast %13 : vector<1x864xf32> to vector<1x1x1x864xf32>
    %277 = vector.broadcast %276 : vector<1x1x1x864xf32> to vector<1x1x16x864xf32>
    %278 = arith.mulf %275, %277 : vector<1x1x16x864xf32>
    %279 = arith.addf %274, %278 : vector<1x1x16x864xf32>
    %c0_133 = arith.constant 0 : index
    %c5_134 = arith.constant 5 : index
    %c0_135 = arith.constant 0 : index
    %c0_136 = arith.constant 0 : index
    %280 = vector.load %arg7[%c0_133, %c5_134, %c0_135, %c0_136] : memref<1x14x16x864xf32, #tpu.memory_space<vmem>>, vector<1x1x16x864xf32>
    tpu.vector_store %arg7[%c0_133, %c5_134, %c0_135, %c0_136], %279 {strides = array<i32>} : memref<1x14x16x864xf32, #tpu.memory_space<vmem>>, vector<1x1x16x864xf32>,
    %cst_137 = arith.constant 0.000000e+00 : f32
    %281 = vector.broadcast %cst_137 : f32 to vector<1x1x16x864xf32>
    %c0_138 = arith.constant 0 : index
    %c5_139 = arith.constant 5 : index
    %c0_140 = arith.constant 0 : index
    %c0_141 = arith.constant 0 : index
    %282 = vector.load %arg6[%c0_138, %c5_139, %c0_140, %c0_141] : memref<1x14x16x864xf32, #tpu.memory_space<vmem>>, vector<1x1x16x864xf32>
    %c1_i32_142 = arith.constant 1 : i32
    %283 = tpu.dynamic_rotate %282 by %c1_i32_142 dim 2 : vector<1x1x16x864xf32>, i32 -> vector<1x1x16x864xf32>
    %284 = vector.shape_cast %5 : vector<1x864xf32> to vector<1x1x1x864xf32>
    %285 = vector.broadcast %284 : vector<1x1x1x864xf32> to vector<1x1x16x864xf32>
    %286 = arith.mulf %283, %285 : vector<1x1x16x864xf32>
    %287 = arith.addf %281, %286 : vector<1x1x16x864xf32>
    %288 = vector.shape_cast %6 : vector<1x864xf32> to vector<1x1x1x864xf32>
    %289 = vector.broadcast %288 : vector<1x1x1x864xf32> to vector<1x1x16x864xf32>
    %290 = arith.mulf %282, %289 : vector<1x1x16x864xf32>
    %291 = arith.addf %287, %290 : vector<1x1x16x864xf32>
    %c15_i32_143 = arith.constant 15 : i32
    %292 = tpu.dynamic_rotate %282 by %c15_i32_143 dim 2 : vector<1x1x16x864xf32>, i32 -> vector<1x1x16x864xf32>
    %293 = vector.shape_cast %7 : vector<1x864xf32> to vector<1x1x1x864xf32>
    %294 = vector.broadcast %293 : vector<1x1x1x864xf32> to vector<1x1x16x864xf32>
    %295 = arith.mulf %292, %294 : vector<1x1x16x864xf32>
    %296 = arith.addf %291, %295 : vector<1x1x16x864xf32>
    %c0_144 = arith.constant 0 : index
    %c6_145 = arith.constant 6 : index
    %c0_146 = arith.constant 0 : index
    %c0_147 = arith.constant 0 : index
    %297 = vector.load %arg6[%c0_144, %c6_145, %c0_146, %c0_147] : memref<1x14x16x864xf32, #tpu.memory_space<vmem>>, vector<1x1x16x864xf32>
    %c1_i32_148 = arith.constant 1 : i32
    %298 = tpu.dynamic_rotate %297 by %c1_i32_148 dim 2 : vector<1x1x16x864xf32>, i32 -> vector<1x1x16x864xf32>
    %299 = vector.shape_cast %8 : vector<1x864xf32> to vector<1x1x1x864xf32>
    %300 = vector.broadcast %299 : vector<1x1x1x864xf32> to vector<1x1x16x864xf32>
    %301 = arith.mulf %298, %300 : vector<1x1x16x864xf32>
    %302 = arith.addf %296, %301 : vector<1x1x16x864xf32>
    %303 = vector.shape_cast %9 : vector<1x864xf32> to vector<1x1x1x864xf32>
    %304 = vector.broadcast %303 : vector<1x1x1x864xf32> to vector<1x1x16x864xf32>
    %305 = arith.mulf %297, %304 : vector<1x1x16x864xf32>
    %306 = arith.addf %302, %305 : vector<1x1x16x864xf32>
    %c15_i32_149 = arith.constant 15 : i32
    %307 = tpu.dynamic_rotate %297 by %c15_i32_149 dim 2 : vector<1x1x16x864xf32>, i32 -> vector<1x1x16x864xf32>
    %308 = vector.shape_cast %10 : vector<1x864xf32> to vector<1x1x1x864xf32>
    %309 = vector.broadcast %308 : vector<1x1x1x864xf32> to vector<1x1x16x864xf32>
    %310 = arith.mulf %307, %309 : vector<1x1x16x864xf32>
    %311 = arith.addf %306, %310 : vector<1x1x16x864xf32>
    %c0_150 = arith.constant 0 : index
    %c7 = arith.constant 7 : index
    %c0_151 = arith.constant 0 : index
    %c0_152 = arith.constant 0 : index
    %312 = vector.load %arg6[%c0_150, %c7, %c0_151, %c0_152] : memref<1x14x16x864xf32, #tpu.memory_space<vmem>>, vector<1x1x16x864xf32>
    %c1_i32_153 = arith.constant 1 : i32
    %313 = tpu.dynamic_rotate %312 by %c1_i32_153 dim 2 : vector<1x1x16x864xf32>, i32 -> vector<1x1x16x864xf32>
    %314 = vector.shape_cast %11 : vector<1x864xf32> to vector<1x1x1x864xf32>
    %315 = vector.broadcast %314 : vector<1x1x1x864xf32> to vector<1x1x16x864xf32>
    %316 = arith.mulf %313, %315 : vector<1x1x16x864xf32>
    %317 = arith.addf %311, %316 : vector<1x1x16x864xf32>
    %318 = vector.shape_cast %12 : vector<1x864xf32> to vector<1x1x1x864xf32>
    %319 = vector.broadcast %318 : vector<1x1x1x864xf32> to vector<1x1x16x864xf32>
    %320 = arith.mulf %312, %319 : vector<1x1x16x864xf32>
    %321 = arith.addf %317, %320 : vector<1x1x16x864xf32>
    %c15_i32_154 = arith.constant 15 : i32
    %322 = tpu.dynamic_rotate %312 by %c15_i32_154 dim 2 : vector<1x1x16x864xf32>, i32 -> vector<1x1x16x864xf32>
    %323 = vector.shape_cast %13 : vector<1x864xf32> to vector<1x1x1x864xf32>
    %324 = vector.broadcast %323 : vector<1x1x1x864xf32> to vector<1x1x16x864xf32>
    %325 = arith.mulf %322, %324 : vector<1x1x16x864xf32>
    %326 = arith.addf %321, %325 : vector<1x1x16x864xf32>
    %c0_155 = arith.constant 0 : index
    %c6_156 = arith.constant 6 : index
    %c0_157 = arith.constant 0 : index
    %c0_158 = arith.constant 0 : index
    %327 = vector.load %arg7[%c0_155, %c6_156, %c0_157, %c0_158] : memref<1x14x16x864xf32, #tpu.memory_space<vmem>>, vector<1x1x16x864xf32>
    tpu.vector_store %arg7[%c0_155, %c6_156, %c0_157, %c0_158], %326 {strides = array<i32>} : memref<1x14x16x864xf32, #tpu.memory_space<vmem>>, vector<1x1x16x864xf32>,
    %cst_159 = arith.constant 0.000000e+00 : f32
    %328 = vector.broadcast %cst_159 : f32 to vector<1x1x16x864xf32>
    %c0_160 = arith.constant 0 : index
    %c6_161 = arith.constant 6 : index
    %c0_162 = arith.constant 0 : index
    %c0_163 = arith.constant 0 : index
    %329 = vector.load %arg6[%c0_160, %c6_161, %c0_162, %c0_163] : memref<1x14x16x864xf32, #tpu.memory_space<vmem>>, vector<1x1x16x864xf32>
    %c1_i32_164 = arith.constant 1 : i32
    %330 = tpu.dynamic_rotate %329 by %c1_i32_164 dim 2 : vector<1x1x16x864xf32>, i32 -> vector<1x1x16x864xf32>
    %331 = vector.shape_cast %5 : vector<1x864xf32> to vector<1x1x1x864xf32>
    %332 = vector.broadcast %331 : vector<1x1x1x864xf32> to vector<1x1x16x864xf32>
    %333 = arith.mulf %330, %332 : vector<1x1x16x864xf32>
    %334 = arith.addf %328, %333 : vector<1x1x16x864xf32>
    %335 = vector.shape_cast %6 : vector<1x864xf32> to vector<1x1x1x864xf32>
    %336 = vector.broadcast %335 : vector<1x1x1x864xf32> to vector<1x1x16x864xf32>
    %337 = arith.mulf %329, %336 : vector<1x1x16x864xf32>
    %338 = arith.addf %334, %337 : vector<1x1x16x864xf32>
    %c15_i32_165 = arith.constant 15 : i32
    %339 = tpu.dynamic_rotate %329 by %c15_i32_165 dim 2 : vector<1x1x16x864xf32>, i32 -> vector<1x1x16x864xf32>
    %340 = vector.shape_cast %7 : vector<1x864xf32> to vector<1x1x1x864xf32>
    %341 = vector.broadcast %340 : vector<1x1x1x864xf32> to vector<1x1x16x864xf32>
    %342 = arith.mulf %339, %341 : vector<1x1x16x864xf32>
    %343 = arith.addf %338, %342 : vector<1x1x16x864xf32>
    %c0_166 = arith.constant 0 : index
    %c7_167 = arith.constant 7 : index
    %c0_168 = arith.constant 0 : index
    %c0_169 = arith.constant 0 : index
    %344 = vector.load %arg6[%c0_166, %c7_167, %c0_168, %c0_169] : memref<1x14x16x864xf32, #tpu.memory_space<vmem>>, vector<1x1x16x864xf32>
    %c1_i32_170 = arith.constant 1 : i32
    %345 = tpu.dynamic_rotate %344 by %c1_i32_170 dim 2 : vector<1x1x16x864xf32>, i32 -> vector<1x1x16x864xf32>
    %346 = vector.shape_cast %8 : vector<1x864xf32> to vector<1x1x1x864xf32>
    %347 = vector.broadcast %346 : vector<1x1x1x864xf32> to vector<1x1x16x864xf32>
    %348 = arith.mulf %345, %347 : vector<1x1x16x864xf32>
    %349 = arith.addf %343, %348 : vector<1x1x16x864xf32>
    %350 = vector.shape_cast %9 : vector<1x864xf32> to vector<1x1x1x864xf32>
    %351 = vector.broadcast %350 : vector<1x1x1x864xf32> to vector<1x1x16x864xf32>
    %352 = arith.mulf %344, %351 : vector<1x1x16x864xf32>
    %353 = arith.addf %349, %352 : vector<1x1x16x864xf32>
    %c15_i32_171 = arith.constant 15 : i32
    %354 = tpu.dynamic_rotate %344 by %c15_i32_171 dim 2 : vector<1x1x16x864xf32>, i32 -> vector<1x1x16x864xf32>
    %355 = vector.shape_cast %10 : vector<1x864xf32> to vector<1x1x1x864xf32>
    %356 = vector.broadcast %355 : vector<1x1x1x864xf32> to vector<1x1x16x864xf32>
    %357 = arith.mulf %354, %356 : vector<1x1x16x864xf32>
    %358 = arith.addf %353, %357 : vector<1x1x16x864xf32>
    %c0_172 = arith.constant 0 : index
    %c8 = arith.constant 8 : index
    %c0_173 = arith.constant 0 : index
    %c0_174 = arith.constant 0 : index
    %359 = vector.load %arg6[%c0_172, %c8, %c0_173, %c0_174] : memref<1x14x16x864xf32, #tpu.memory_space<vmem>>, vector<1x1x16x864xf32>
    %c1_i32_175 = arith.constant 1 : i32
    %360 = tpu.dynamic_rotate %359 by %c1_i32_175 dim 2 : vector<1x1x16x864xf32>, i32 -> vector<1x1x16x864xf32>
    %361 = vector.shape_cast %11 : vector<1x864xf32> to vector<1x1x1x864xf32>
    %362 = vector.broadcast %361 : vector<1x1x1x864xf32> to vector<1x1x16x864xf32>
    %363 = arith.mulf %360, %362 : vector<1x1x16x864xf32>
    %364 = arith.addf %358, %363 : vector<1x1x16x864xf32>
    %365 = vector.shape_cast %12 : vector<1x864xf32> to vector<1x1x1x864xf32>
    %366 = vector.broadcast %365 : vector<1x1x1x864xf32> to vector<1x1x16x864xf32>
    %367 = arith.mulf %359, %366 : vector<1x1x16x864xf32>
    %368 = arith.addf %364, %367 : vector<1x1x16x864xf32>
    %c15_i32_176 = arith.constant 15 : i32
    %369 = tpu.dynamic_rotate %359 by %c15_i32_176 dim 2 : vector<1x1x16x864xf32>, i32 -> vector<1x1x16x864xf32>
    %370 = vector.shape_cast %13 : vector<1x864xf32> to vector<1x1x1x864xf32>
    %371 = vector.broadcast %370 : vector<1x1x1x864xf32> to vector<1x1x16x864xf32>
    %372 = arith.mulf %369, %371 : vector<1x1x16x864xf32>
    %373 = arith.addf %368, %372 : vector<1x1x16x864xf32>
    %c0_177 = arith.constant 0 : index
    %c7_178 = arith.constant 7 : index
    %c0_179 = arith.constant 0 : index
    %c0_180 = arith.constant 0 : index
    %374 = vector.load %arg7[%c0_177, %c7_178, %c0_179, %c0_180] : memref<1x14x16x864xf32, #tpu.memory_space<vmem>>, vector<1x1x16x864xf32>
    tpu.vector_store %arg7[%c0_177, %c7_178, %c0_179, %c0_180], %373 {strides = array<i32>} : memref<1x14x16x864xf32, #tpu.memory_space<vmem>>, vector<1x1x16x864xf32>,
    %cst_181 = arith.constant 0.000000e+00 : f32
    %375 = vector.broadcast %cst_181 : f32 to vector<1x1x16x864xf32>
    %c0_182 = arith.constant 0 : index
    %c7_183 = arith.constant 7 : index
    %c0_184 = arith.constant 0 : index
    %c0_185 = arith.constant 0 : index
    %376 = vector.load %arg6[%c0_182, %c7_183, %c0_184, %c0_185] : memref<1x14x16x864xf32, #tpu.memory_space<vmem>>, vector<1x1x16x864xf32>
    %c1_i32_186 = arith.constant 1 : i32
    %377 = tpu.dynamic_rotate %376 by %c1_i32_186 dim 2 : vector<1x1x16x864xf32>, i32 -> vector<1x1x16x864xf32>
    %378 = vector.shape_cast %5 : vector<1x864xf32> to vector<1x1x1x864xf32>
    %379 = vector.broadcast %378 : vector<1x1x1x864xf32> to vector<1x1x16x864xf32>
    %380 = arith.mulf %377, %379 : vector<1x1x16x864xf32>
    %381 = arith.addf %375, %380 : vector<1x1x16x864xf32>
    %382 = vector.shape_cast %6 : vector<1x864xf32> to vector<1x1x1x864xf32>
    %383 = vector.broadcast %382 : vector<1x1x1x864xf32> to vector<1x1x16x864xf32>
    %384 = arith.mulf %376, %383 : vector<1x1x16x864xf32>
    %385 = arith.addf %381, %384 : vector<1x1x16x864xf32>
    %c15_i32_187 = arith.constant 15 : i32
    %386 = tpu.dynamic_rotate %376 by %c15_i32_187 dim 2 : vector<1x1x16x864xf32>, i32 -> vector<1x1x16x864xf32>
    %387 = vector.shape_cast %7 : vector<1x864xf32> to vector<1x1x1x864xf32>
    %388 = vector.broadcast %387 : vector<1x1x1x864xf32> to vector<1x1x16x864xf32>
    %389 = arith.mulf %386, %388 : vector<1x1x16x864xf32>
    %390 = arith.addf %385, %389 : vector<1x1x16x864xf32>
    %c0_188 = arith.constant 0 : index
    %c8_189 = arith.constant 8 : index
    %c0_190 = arith.constant 0 : index
    %c0_191 = arith.constant 0 : index
    %391 = vector.load %arg6[%c0_188, %c8_189, %c0_190, %c0_191] : memref<1x14x16x864xf32, #tpu.memory_space<vmem>>, vector<1x1x16x864xf32>
    %c1_i32_192 = arith.constant 1 : i32
    %392 = tpu.dynamic_rotate %391 by %c1_i32_192 dim 2 : vector<1x1x16x864xf32>, i32 -> vector<1x1x16x864xf32>
    %393 = vector.shape_cast %8 : vector<1x864xf32> to vector<1x1x1x864xf32>
    %394 = vector.broadcast %393 : vector<1x1x1x864xf32> to vector<1x1x16x864xf32>
    %395 = arith.mulf %392, %394 : vector<1x1x16x864xf32>
    %396 = arith.addf %390, %395 : vector<1x1x16x864xf32>
    %397 = vector.shape_cast %9 : vector<1x864xf32> to vector<1x1x1x864xf32>
    %398 = vector.broadcast %397 : vector<1x1x1x864xf32> to vector<1x1x16x864xf32>
    %399 = arith.mulf %391, %398 : vector<1x1x16x864xf32>
    %400 = arith.addf %396, %399 : vector<1x1x16x864xf32>
    %c15_i32_193 = arith.constant 15 : i32
    %401 = tpu.dynamic_rotate %391 by %c15_i32_193 dim 2 : vector<1x1x16x864xf32>, i32 -> vector<1x1x16x864xf32>
    %402 = vector.shape_cast %10 : vector<1x864xf32> to vector<1x1x1x864xf32>
    %403 = vector.broadcast %402 : vector<1x1x1x864xf32> to vector<1x1x16x864xf32>
    %404 = arith.mulf %401, %403 : vector<1x1x16x864xf32>
    %405 = arith.addf %400, %404 : vector<1x1x16x864xf32>
    %c0_194 = arith.constant 0 : index
    %c9 = arith.constant 9 : index
    %c0_195 = arith.constant 0 : index
    %c0_196 = arith.constant 0 : index
    %406 = vector.load %arg6[%c0_194, %c9, %c0_195, %c0_196] : memref<1x14x16x864xf32, #tpu.memory_space<vmem>>, vector<1x1x16x864xf32>
    %c1_i32_197 = arith.constant 1 : i32
    %407 = tpu.dynamic_rotate %406 by %c1_i32_197 dim 2 : vector<1x1x16x864xf32>, i32 -> vector<1x1x16x864xf32>
    %408 = vector.shape_cast %11 : vector<1x864xf32> to vector<1x1x1x864xf32>
    %409 = vector.broadcast %408 : vector<1x1x1x864xf32> to vector<1x1x16x864xf32>
    %410 = arith.mulf %407, %409 : vector<1x1x16x864xf32>
    %411 = arith.addf %405, %410 : vector<1x1x16x864xf32>
    %412 = vector.shape_cast %12 : vector<1x864xf32> to vector<1x1x1x864xf32>
    %413 = vector.broadcast %412 : vector<1x1x1x864xf32> to vector<1x1x16x864xf32>
    %414 = arith.mulf %406, %413 : vector<1x1x16x864xf32>
    %415 = arith.addf %411, %414 : vector<1x1x16x864xf32>
    %c15_i32_198 = arith.constant 15 : i32
    %416 = tpu.dynamic_rotate %406 by %c15_i32_198 dim 2 : vector<1x1x16x864xf32>, i32 -> vector<1x1x16x864xf32>
    %417 = vector.shape_cast %13 : vector<1x864xf32> to vector<1x1x1x864xf32>
    %418 = vector.broadcast %417 : vector<1x1x1x864xf32> to vector<1x1x16x864xf32>
    %419 = arith.mulf %416, %418 : vector<1x1x16x864xf32>
    %420 = arith.addf %415, %419 : vector<1x1x16x864xf32>
    %c0_199 = arith.constant 0 : index
    %c8_200 = arith.constant 8 : index
    %c0_201 = arith.constant 0 : index
    %c0_202 = arith.constant 0 : index
    %421 = vector.load %arg7[%c0_199, %c8_200, %c0_201, %c0_202] : memref<1x14x16x864xf32, #tpu.memory_space<vmem>>, vector<1x1x16x864xf32>
    tpu.vector_store %arg7[%c0_199, %c8_200, %c0_201, %c0_202], %420 {strides = array<i32>} : memref<1x14x16x864xf32, #tpu.memory_space<vmem>>, vector<1x1x16x864xf32>,
    %cst_203 = arith.constant 0.000000e+00 : f32
    %422 = vector.broadcast %cst_203 : f32 to vector<1x1x16x864xf32>
    %c0_204 = arith.constant 0 : index
    %c8_205 = arith.constant 8 : index
    %c0_206 = arith.constant 0 : index
    %c0_207 = arith.constant 0 : index
    %423 = vector.load %arg6[%c0_204, %c8_205, %c0_206, %c0_207] : memref<1x14x16x864xf32, #tpu.memory_space<vmem>>, vector<1x1x16x864xf32>
    %c1_i32_208 = arith.constant 1 : i32
    %424 = tpu.dynamic_rotate %423 by %c1_i32_208 dim 2 : vector<1x1x16x864xf32>, i32 -> vector<1x1x16x864xf32>
    %425 = vector.shape_cast %5 : vector<1x864xf32> to vector<1x1x1x864xf32>
    %426 = vector.broadcast %425 : vector<1x1x1x864xf32> to vector<1x1x16x864xf32>
    %427 = arith.mulf %424, %426 : vector<1x1x16x864xf32>
    %428 = arith.addf %422, %427 : vector<1x1x16x864xf32>
    %429 = vector.shape_cast %6 : vector<1x864xf32> to vector<1x1x1x864xf32>
    %430 = vector.broadcast %429 : vector<1x1x1x864xf32> to vector<1x1x16x864xf32>
    %431 = arith.mulf %423, %430 : vector<1x1x16x864xf32>
    %432 = arith.addf %428, %431 : vector<1x1x16x864xf32>
    %c15_i32_209 = arith.constant 15 : i32
    %433 = tpu.dynamic_rotate %423 by %c15_i32_209 dim 2 : vector<1x1x16x864xf32>, i32 -> vector<1x1x16x864xf32>
    %434 = vector.shape_cast %7 : vector<1x864xf32> to vector<1x1x1x864xf32>
    %435 = vector.broadcast %434 : vector<1x1x1x864xf32> to vector<1x1x16x864xf32>
    %436 = arith.mulf %433, %435 : vector<1x1x16x864xf32>
    %437 = arith.addf %432, %436 : vector<1x1x16x864xf32>
    %c0_210 = arith.constant 0 : index
    %c9_211 = arith.constant 9 : index
    %c0_212 = arith.constant 0 : index
    %c0_213 = arith.constant 0 : index
    %438 = vector.load %arg6[%c0_210, %c9_211, %c0_212, %c0_213] : memref<1x14x16x864xf32, #tpu.memory_space<vmem>>, vector<1x1x16x864xf32>
    %c1_i32_214 = arith.constant 1 : i32
    %439 = tpu.dynamic_rotate %438 by %c1_i32_214 dim 2 : vector<1x1x16x864xf32>, i32 -> vector<1x1x16x864xf32>
    %440 = vector.shape_cast %8 : vector<1x864xf32> to vector<1x1x1x864xf32>
    %441 = vector.broadcast %440 : vector<1x1x1x864xf32> to vector<1x1x16x864xf32>
    %442 = arith.mulf %439, %441 : vector<1x1x16x864xf32>
    %443 = arith.addf %437, %442 : vector<1x1x16x864xf32>
    %444 = vector.shape_cast %9 : vector<1x864xf32> to vector<1x1x1x864xf32>
    %445 = vector.broadcast %444 : vector<1x1x1x864xf32> to vector<1x1x16x864xf32>
    %446 = arith.mulf %438, %445 : vector<1x1x16x864xf32>
    %447 = arith.addf %443, %446 : vector<1x1x16x864xf32>
    %c15_i32_215 = arith.constant 15 : i32
    %448 = tpu.dynamic_rotate %438 by %c15_i32_215 dim 2 : vector<1x1x16x864xf32>, i32 -> vector<1x1x16x864xf32>
    %449 = vector.shape_cast %10 : vector<1x864xf32> to vector<1x1x1x864xf32>
    %450 = vector.broadcast %449 : vector<1x1x1x864xf32> to vector<1x1x16x864xf32>
    %451 = arith.mulf %448, %450 : vector<1x1x16x864xf32>
    %452 = arith.addf %447, %451 : vector<1x1x16x864xf32>
    %c0_216 = arith.constant 0 : index
    %c10 = arith.constant 10 : index
    %c0_217 = arith.constant 0 : index
    %c0_218 = arith.constant 0 : index
    %453 = vector.load %arg6[%c0_216, %c10, %c0_217, %c0_218] : memref<1x14x16x864xf32, #tpu.memory_space<vmem>>, vector<1x1x16x864xf32>
    %c1_i32_219 = arith.constant 1 : i32
    %454 = tpu.dynamic_rotate %453 by %c1_i32_219 dim 2 : vector<1x1x16x864xf32>, i32 -> vector<1x1x16x864xf32>
    %455 = vector.shape_cast %11 : vector<1x864xf32> to vector<1x1x1x864xf32>
    %456 = vector.broadcast %455 : vector<1x1x1x864xf32> to vector<1x1x16x864xf32>
    %457 = arith.mulf %454, %456 : vector<1x1x16x864xf32>
    %458 = arith.addf %452, %457 : vector<1x1x16x864xf32>
    %459 = vector.shape_cast %12 : vector<1x864xf32> to vector<1x1x1x864xf32>
    %460 = vector.broadcast %459 : vector<1x1x1x864xf32> to vector<1x1x16x864xf32>
    %461 = arith.mulf %453, %460 : vector<1x1x16x864xf32>
    %462 = arith.addf %458, %461 : vector<1x1x16x864xf32>
    %c15_i32_220 = arith.constant 15 : i32
    %463 = tpu.dynamic_rotate %453 by %c15_i32_220 dim 2 : vector<1x1x16x864xf32>, i32 -> vector<1x1x16x864xf32>
    %464 = vector.shape_cast %13 : vector<1x864xf32> to vector<1x1x1x864xf32>
    %465 = vector.broadcast %464 : vector<1x1x1x864xf32> to vector<1x1x16x864xf32>
    %466 = arith.mulf %463, %465 : vector<1x1x16x864xf32>
    %467 = arith.addf %462, %466 : vector<1x1x16x864xf32>
    %c0_221 = arith.constant 0 : index
    %c9_222 = arith.constant 9 : index
    %c0_223 = arith.constant 0 : index
    %c0_224 = arith.constant 0 : index
    %468 = vector.load %arg7[%c0_221, %c9_222, %c0_223, %c0_224] : memref<1x14x16x864xf32, #tpu.memory_space<vmem>>, vector<1x1x16x864xf32>
    tpu.vector_store %arg7[%c0_221, %c9_222, %c0_223, %c0_224], %467 {strides = array<i32>} : memref<1x14x16x864xf32, #tpu.memory_space<vmem>>, vector<1x1x16x864xf32>,
    %cst_225 = arith.constant 0.000000e+00 : f32
    %469 = vector.broadcast %cst_225 : f32 to vector<1x1x16x864xf32>
    %c0_226 = arith.constant 0 : index
    %c9_227 = arith.constant 9 : index
    %c0_228 = arith.constant 0 : index
    %c0_229 = arith.constant 0 : index
    %470 = vector.load %arg6[%c0_226, %c9_227, %c0_228, %c0_229] : memref<1x14x16x864xf32, #tpu.memory_space<vmem>>, vector<1x1x16x864xf32>
    %c1_i32_230 = arith.constant 1 : i32
    %471 = tpu.dynamic_rotate %470 by %c1_i32_230 dim 2 : vector<1x1x16x864xf32>, i32 -> vector<1x1x16x864xf32>
    %472 = vector.shape_cast %5 : vector<1x864xf32> to vector<1x1x1x864xf32>
    %473 = vector.broadcast %472 : vector<1x1x1x864xf32> to vector<1x1x16x864xf32>
    %474 = arith.mulf %471, %473 : vector<1x1x16x864xf32>
    %475 = arith.addf %469, %474 : vector<1x1x16x864xf32>
    %476 = vector.shape_cast %6 : vector<1x864xf32> to vector<1x1x1x864xf32>
    %477 = vector.broadcast %476 : vector<1x1x1x864xf32> to vector<1x1x16x864xf32>
    %478 = arith.mulf %470, %477 : vector<1x1x16x864xf32>
    %479 = arith.addf %475, %478 : vector<1x1x16x864xf32>
    %c15_i32_231 = arith.constant 15 : i32
    %480 = tpu.dynamic_rotate %470 by %c15_i32_231 dim 2 : vector<1x1x16x864xf32>, i32 -> vector<1x1x16x864xf32>
    %481 = vector.shape_cast %7 : vector<1x864xf32> to vector<1x1x1x864xf32>
    %482 = vector.broadcast %481 : vector<1x1x1x864xf32> to vector<1x1x16x864xf32>
    %483 = arith.mulf %480, %482 : vector<1x1x16x864xf32>
    %484 = arith.addf %479, %483 : vector<1x1x16x864xf32>
    %c0_232 = arith.constant 0 : index
    %c10_233 = arith.constant 10 : index
    %c0_234 = arith.constant 0 : index
    %c0_235 = arith.constant 0 : index
    %485 = vector.load %arg6[%c0_232, %c10_233, %c0_234, %c0_235] : memref<1x14x16x864xf32, #tpu.memory_space<vmem>>, vector<1x1x16x864xf32>
    %c1_i32_236 = arith.constant 1 : i32
    %486 = tpu.dynamic_rotate %485 by %c1_i32_236 dim 2 : vector<1x1x16x864xf32>, i32 -> vector<1x1x16x864xf32>
    %487 = vector.shape_cast %8 : vector<1x864xf32> to vector<1x1x1x864xf32>
    %488 = vector.broadcast %487 : vector<1x1x1x864xf32> to vector<1x1x16x864xf32>
    %489 = arith.mulf %486, %488 : vector<1x1x16x864xf32>
    %490 = arith.addf %484, %489 : vector<1x1x16x864xf32>
    %491 = vector.shape_cast %9 : vector<1x864xf32> to vector<1x1x1x864xf32>
    %492 = vector.broadcast %491 : vector<1x1x1x864xf32> to vector<1x1x16x864xf32>
    %493 = arith.mulf %485, %492 : vector<1x1x16x864xf32>
    %494 = arith.addf %490, %493 : vector<1x1x16x864xf32>
    %c15_i32_237 = arith.constant 15 : i32
    %495 = tpu.dynamic_rotate %485 by %c15_i32_237 dim 2 : vector<1x1x16x864xf32>, i32 -> vector<1x1x16x864xf32>
    %496 = vector.shape_cast %10 : vector<1x864xf32> to vector<1x1x1x864xf32>
    %497 = vector.broadcast %496 : vector<1x1x1x864xf32> to vector<1x1x16x864xf32>
    %498 = arith.mulf %495, %497 : vector<1x1x16x864xf32>
    %499 = arith.addf %494, %498 : vector<1x1x16x864xf32>
    %c0_238 = arith.constant 0 : index
    %c11 = arith.constant 11 : index
    %c0_239 = arith.constant 0 : index
    %c0_240 = arith.constant 0 : index
    %500 = vector.load %arg6[%c0_238, %c11, %c0_239, %c0_240] : memref<1x14x16x864xf32, #tpu.memory_space<vmem>>, vector<1x1x16x864xf32>
    %c1_i32_241 = arith.constant 1 : i32
    %501 = tpu.dynamic_rotate %500 by %c1_i32_241 dim 2 : vector<1x1x16x864xf32>, i32 -> vector<1x1x16x864xf32>
    %502 = vector.shape_cast %11 : vector<1x864xf32> to vector<1x1x1x864xf32>
    %503 = vector.broadcast %502 : vector<1x1x1x864xf32> to vector<1x1x16x864xf32>
    %504 = arith.mulf %501, %503 : vector<1x1x16x864xf32>
    %505 = arith.addf %499, %504 : vector<1x1x16x864xf32>
    %506 = vector.shape_cast %12 : vector<1x864xf32> to vector<1x1x1x864xf32>
    %507 = vector.broadcast %506 : vector<1x1x1x864xf32> to vector<1x1x16x864xf32>
    %508 = arith.mulf %500, %507 : vector<1x1x16x864xf32>
    %509 = arith.addf %505, %508 : vector<1x1x16x864xf32>
    %c15_i32_242 = arith.constant 15 : i32
    %510 = tpu.dynamic_rotate %500 by %c15_i32_242 dim 2 : vector<1x1x16x864xf32>, i32 -> vector<1x1x16x864xf32>
    %511 = vector.shape_cast %13 : vector<1x864xf32> to vector<1x1x1x864xf32>
    %512 = vector.broadcast %511 : vector<1x1x1x864xf32> to vector<1x1x16x864xf32>
    %513 = arith.mulf %510, %512 : vector<1x1x16x864xf32>
    %514 = arith.addf %509, %513 : vector<1x1x16x864xf32>
    %c0_243 = arith.constant 0 : index
    %c10_244 = arith.constant 10 : index
    %c0_245 = arith.constant 0 : index
    %c0_246 = arith.constant 0 : index
    %515 = vector.load %arg7[%c0_243, %c10_244, %c0_245, %c0_246] : memref<1x14x16x864xf32, #tpu.memory_space<vmem>>, vector<1x1x16x864xf32>
    tpu.vector_store %arg7[%c0_243, %c10_244, %c0_245, %c0_246], %514 {strides = array<i32>} : memref<1x14x16x864xf32, #tpu.memory_space<vmem>>, vector<1x1x16x864xf32>,
    %cst_247 = arith.constant 0.000000e+00 : f32
    %516 = vector.broadcast %cst_247 : f32 to vector<1x1x16x864xf32>
    %c0_248 = arith.constant 0 : index
    %c10_249 = arith.constant 10 : index
    %c0_250 = arith.constant 0 : index
    %c0_251 = arith.constant 0 : index
    %517 = vector.load %arg6[%c0_248, %c10_249, %c0_250, %c0_251] : memref<1x14x16x864xf32, #tpu.memory_space<vmem>>, vector<1x1x16x864xf32>
    %c1_i32_252 = arith.constant 1 : i32
    %518 = tpu.dynamic_rotate %517 by %c1_i32_252 dim 2 : vector<1x1x16x864xf32>, i32 -> vector<1x1x16x864xf32>
    %519 = vector.shape_cast %5 : vector<1x864xf32> to vector<1x1x1x864xf32>
    %520 = vector.broadcast %519 : vector<1x1x1x864xf32> to vector<1x1x16x864xf32>
    %521 = arith.mulf %518, %520 : vector<1x1x16x864xf32>
    %522 = arith.addf %516, %521 : vector<1x1x16x864xf32>
    %523 = vector.shape_cast %6 : vector<1x864xf32> to vector<1x1x1x864xf32>
    %524 = vector.broadcast %523 : vector<1x1x1x864xf32> to vector<1x1x16x864xf32>
    %525 = arith.mulf %517, %524 : vector<1x1x16x864xf32>
    %526 = arith.addf %522, %525 : vector<1x1x16x864xf32>
    %c15_i32_253 = arith.constant 15 : i32
    %527 = tpu.dynamic_rotate %517 by %c15_i32_253 dim 2 : vector<1x1x16x864xf32>, i32 -> vector<1x1x16x864xf32>
    %528 = vector.shape_cast %7 : vector<1x864xf32> to vector<1x1x1x864xf32>
    %529 = vector.broadcast %528 : vector<1x1x1x864xf32> to vector<1x1x16x864xf32>
    %530 = arith.mulf %527, %529 : vector<1x1x16x864xf32>
    %531 = arith.addf %526, %530 : vector<1x1x16x864xf32>
    %c0_254 = arith.constant 0 : index
    %c11_255 = arith.constant 11 : index
    %c0_256 = arith.constant 0 : index
    %c0_257 = arith.constant 0 : index
    %532 = vector.load %arg6[%c0_254, %c11_255, %c0_256, %c0_257] : memref<1x14x16x864xf32, #tpu.memory_space<vmem>>, vector<1x1x16x864xf32>
    %c1_i32_258 = arith.constant 1 : i32
    %533 = tpu.dynamic_rotate %532 by %c1_i32_258 dim 2 : vector<1x1x16x864xf32>, i32 -> vector<1x1x16x864xf32>
    %534 = vector.shape_cast %8 : vector<1x864xf32> to vector<1x1x1x864xf32>
    %535 = vector.broadcast %534 : vector<1x1x1x864xf32> to vector<1x1x16x864xf32>
    %536 = arith.mulf %533, %535 : vector<1x1x16x864xf32>
    %537 = arith.addf %531, %536 : vector<1x1x16x864xf32>
    %538 = vector.shape_cast %9 : vector<1x864xf32> to vector<1x1x1x864xf32>
    %539 = vector.broadcast %538 : vector<1x1x1x864xf32> to vector<1x1x16x864xf32>
    %540 = arith.mulf %532, %539 : vector<1x1x16x864xf32>
    %541 = arith.addf %537, %540 : vector<1x1x16x864xf32>
    %c15_i32_259 = arith.constant 15 : i32
    %542 = tpu.dynamic_rotate %532 by %c15_i32_259 dim 2 : vector<1x1x16x864xf32>, i32 -> vector<1x1x16x864xf32>
    %543 = vector.shape_cast %10 : vector<1x864xf32> to vector<1x1x1x864xf32>
    %544 = vector.broadcast %543 : vector<1x1x1x864xf32> to vector<1x1x16x864xf32>
    %545 = arith.mulf %542, %544 : vector<1x1x16x864xf32>
    %546 = arith.addf %541, %545 : vector<1x1x16x864xf32>
    %c0_260 = arith.constant 0 : index
    %c12 = arith.constant 12 : index
    %c0_261 = arith.constant 0 : index
    %c0_262 = arith.constant 0 : index
    %547 = vector.load %arg6[%c0_260, %c12, %c0_261, %c0_262] : memref<1x14x16x864xf32, #tpu.memory_space<vmem>>, vector<1x1x16x864xf32>
    %c1_i32_263 = arith.constant 1 : i32
    %548 = tpu.dynamic_rotate %547 by %c1_i32_263 dim 2 : vector<1x1x16x864xf32>, i32 -> vector<1x1x16x864xf32>
    %549 = vector.shape_cast %11 : vector<1x864xf32> to vector<1x1x1x864xf32>
    %550 = vector.broadcast %549 : vector<1x1x1x864xf32> to vector<1x1x16x864xf32>
    %551 = arith.mulf %548, %550 : vector<1x1x16x864xf32>
    %552 = arith.addf %546, %551 : vector<1x1x16x864xf32>
    %553 = vector.shape_cast %12 : vector<1x864xf32> to vector<1x1x1x864xf32>
    %554 = vector.broadcast %553 : vector<1x1x1x864xf32> to vector<1x1x16x864xf32>
    %555 = arith.mulf %547, %554 : vector<1x1x16x864xf32>
    %556 = arith.addf %552, %555 : vector<1x1x16x864xf32>
    %c15_i32_264 = arith.constant 15 : i32
    %557 = tpu.dynamic_rotate %547 by %c15_i32_264 dim 2 : vector<1x1x16x864xf32>, i32 -> vector<1x1x16x864xf32>
    %558 = vector.shape_cast %13 : vector<1x864xf32> to vector<1x1x1x864xf32>
    %559 = vector.broadcast %558 : vector<1x1x1x864xf32> to vector<1x1x16x864xf32>
    %560 = arith.mulf %557, %559 : vector<1x1x16x864xf32>
    %561 = arith.addf %556, %560 : vector<1x1x16x864xf32>
    %c0_265 = arith.constant 0 : index
    %c11_266 = arith.constant 11 : index
    %c0_267 = arith.constant 0 : index
    %c0_268 = arith.constant 0 : index
    %562 = vector.load %arg7[%c0_265, %c11_266, %c0_267, %c0_268] : memref<1x14x16x864xf32, #tpu.memory_space<vmem>>, vector<1x1x16x864xf32>
    tpu.vector_store %arg7[%c0_265, %c11_266, %c0_267, %c0_268], %561 {strides = array<i32>} : memref<1x14x16x864xf32, #tpu.memory_space<vmem>>, vector<1x1x16x864xf32>,
    %cst_269 = arith.constant 0.000000e+00 : f32
    %563 = vector.broadcast %cst_269 : f32 to vector<1x1x16x864xf32>
    %c0_270 = arith.constant 0 : index
    %c11_271 = arith.constant 11 : index
    %c0_272 = arith.constant 0 : index
    %c0_273 = arith.constant 0 : index
    %564 = vector.load %arg6[%c0_270, %c11_271, %c0_272, %c0_273] : memref<1x14x16x864xf32, #tpu.memory_space<vmem>>, vector<1x1x16x864xf32>
    %c1_i32_274 = arith.constant 1 : i32
    %565 = tpu.dynamic_rotate %564 by %c1_i32_274 dim 2 : vector<1x1x16x864xf32>, i32 -> vector<1x1x16x864xf32>
    %566 = vector.shape_cast %5 : vector<1x864xf32> to vector<1x1x1x864xf32>
    %567 = vector.broadcast %566 : vector<1x1x1x864xf32> to vector<1x1x16x864xf32>
    %568 = arith.mulf %565, %567 : vector<1x1x16x864xf32>
    %569 = arith.addf %563, %568 : vector<1x1x16x864xf32>
    %570 = vector.shape_cast %6 : vector<1x864xf32> to vector<1x1x1x864xf32>
    %571 = vector.broadcast %570 : vector<1x1x1x864xf32> to vector<1x1x16x864xf32>
    %572 = arith.mulf %564, %571 : vector<1x1x16x864xf32>
    %573 = arith.addf %569, %572 : vector<1x1x16x864xf32>
    %c15_i32_275 = arith.constant 15 : i32
    %574 = tpu.dynamic_rotate %564 by %c15_i32_275 dim 2 : vector<1x1x16x864xf32>, i32 -> vector<1x1x16x864xf32>
    %575 = vector.shape_cast %7 : vector<1x864xf32> to vector<1x1x1x864xf32>
    %576 = vector.broadcast %575 : vector<1x1x1x864xf32> to vector<1x1x16x864xf32>
    %577 = arith.mulf %574, %576 : vector<1x1x16x864xf32>
    %578 = arith.addf %573, %577 : vector<1x1x16x864xf32>
    %c0_276 = arith.constant 0 : index
    %c12_277 = arith.constant 12 : index
    %c0_278 = arith.constant 0 : index
    %c0_279 = arith.constant 0 : index
    %579 = vector.load %arg6[%c0_276, %c12_277, %c0_278, %c0_279] : memref<1x14x16x864xf32, #tpu.memory_space<vmem>>, vector<1x1x16x864xf32>
    %c1_i32_280 = arith.constant 1 : i32
    %580 = tpu.dynamic_rotate %579 by %c1_i32_280 dim 2 : vector<1x1x16x864xf32>, i32 -> vector<1x1x16x864xf32>
    %581 = vector.shape_cast %8 : vector<1x864xf32> to vector<1x1x1x864xf32>
    %582 = vector.broadcast %581 : vector<1x1x1x864xf32> to vector<1x1x16x864xf32>
    %583 = arith.mulf %580, %582 : vector<1x1x16x864xf32>
    %584 = arith.addf %578, %583 : vector<1x1x16x864xf32>
    %585 = vector.shape_cast %9 : vector<1x864xf32> to vector<1x1x1x864xf32>
    %586 = vector.broadcast %585 : vector<1x1x1x864xf32> to vector<1x1x16x864xf32>
    %587 = arith.mulf %579, %586 : vector<1x1x16x864xf32>
    %588 = arith.addf %584, %587 : vector<1x1x16x864xf32>
    %c15_i32_281 = arith.constant 15 : i32
    %589 = tpu.dynamic_rotate %579 by %c15_i32_281 dim 2 : vector<1x1x16x864xf32>, i32 -> vector<1x1x16x864xf32>
    %590 = vector.shape_cast %10 : vector<1x864xf32> to vector<1x1x1x864xf32>
    %591 = vector.broadcast %590 : vector<1x1x1x864xf32> to vector<1x1x16x864xf32>
    %592 = arith.mulf %589, %591 : vector<1x1x16x864xf32>
    %593 = arith.addf %588, %592 : vector<1x1x16x864xf32>
    %c0_282 = arith.constant 0 : index
    %c13 = arith.constant 13 : index
    %c0_283 = arith.constant 0 : index
    %c0_284 = arith.constant 0 : index
    %594 = vector.load %arg6[%c0_282, %c13, %c0_283, %c0_284] : memref<1x14x16x864xf32, #tpu.memory_space<vmem>>, vector<1x1x16x864xf32>
    %c1_i32_285 = arith.constant 1 : i32
    %595 = tpu.dynamic_rotate %594 by %c1_i32_285 dim 2 : vector<1x1x16x864xf32>, i32 -> vector<1x1x16x864xf32>
    %596 = vector.shape_cast %11 : vector<1x864xf32> to vector<1x1x1x864xf32>
    %597 = vector.broadcast %596 : vector<1x1x1x864xf32> to vector<1x1x16x864xf32>
    %598 = arith.mulf %595, %597 : vector<1x1x16x864xf32>
    %599 = arith.addf %593, %598 : vector<1x1x16x864xf32>
    %600 = vector.shape_cast %12 : vector<1x864xf32> to vector<1x1x1x864xf32>
    %601 = vector.broadcast %600 : vector<1x1x1x864xf32> to vector<1x1x16x864xf32>
    %602 = arith.mulf %594, %601 : vector<1x1x16x864xf32>
    %603 = arith.addf %599, %602 : vector<1x1x16x864xf32>
    %c15_i32_286 = arith.constant 15 : i32
    %604 = tpu.dynamic_rotate %594 by %c15_i32_286 dim 2 : vector<1x1x16x864xf32>, i32 -> vector<1x1x16x864xf32>
    %605 = vector.shape_cast %13 : vector<1x864xf32> to vector<1x1x1x864xf32>
    %606 = vector.broadcast %605 : vector<1x1x1x864xf32> to vector<1x1x16x864xf32>
    %607 = arith.mulf %604, %606 : vector<1x1x16x864xf32>
    %608 = arith.addf %603, %607 : vector<1x1x16x864xf32>
    %c0_287 = arith.constant 0 : index
    %c12_288 = arith.constant 12 : index
    %c0_289 = arith.constant 0 : index
    %c0_290 = arith.constant 0 : index
    %609 = vector.load %arg7[%c0_287, %c12_288, %c0_289, %c0_290] : memref<1x14x16x864xf32, #tpu.memory_space<vmem>>, vector<1x1x16x864xf32>
    tpu.vector_store %arg7[%c0_287, %c12_288, %c0_289, %c0_290], %608 {strides = array<i32>} : memref<1x14x16x864xf32, #tpu.memory_space<vmem>>, vector<1x1x16x864xf32>,
    %cst_291 = arith.constant 0.000000e+00 : f32
    %610 = vector.broadcast %cst_291 : f32 to vector<1x1x16x864xf32>
    %c0_292 = arith.constant 0 : index
    %c12_293 = arith.constant 12 : index
    %c0_294 = arith.constant 0 : index
    %c0_295 = arith.constant 0 : index
    %611 = vector.load %arg6[%c0_292, %c12_293, %c0_294, %c0_295] : memref<1x14x16x864xf32, #tpu.memory_space<vmem>>, vector<1x1x16x864xf32>
    %c1_i32_296 = arith.constant 1 : i32
    %612 = tpu.dynamic_rotate %611 by %c1_i32_296 dim 2 : vector<1x1x16x864xf32>, i32 -> vector<1x1x16x864xf32>
    %613 = vector.shape_cast %5 : vector<1x864xf32> to vector<1x1x1x864xf32>
    %614 = vector.broadcast %613 : vector<1x1x1x864xf32> to vector<1x1x16x864xf32>
    %615 = arith.mulf %612, %614 : vector<1x1x16x864xf32>
    %616 = arith.addf %610, %615 : vector<1x1x16x864xf32>
    %617 = vector.shape_cast %6 : vector<1x864xf32> to vector<1x1x1x864xf32>
    %618 = vector.broadcast %617 : vector<1x1x1x864xf32> to vector<1x1x16x864xf32>
    %619 = arith.mulf %611, %618 : vector<1x1x16x864xf32>
    %620 = arith.addf %616, %619 : vector<1x1x16x864xf32>
    %c15_i32_297 = arith.constant 15 : i32
    %621 = tpu.dynamic_rotate %611 by %c15_i32_297 dim 2 : vector<1x1x16x864xf32>, i32 -> vector<1x1x16x864xf32>
    %622 = vector.shape_cast %7 : vector<1x864xf32> to vector<1x1x1x864xf32>
    %623 = vector.broadcast %622 : vector<1x1x1x864xf32> to vector<1x1x16x864xf32>
    %624 = arith.mulf %621, %623 : vector<1x1x16x864xf32>
    %625 = arith.addf %620, %624 : vector<1x1x16x864xf32>
    %c0_298 = arith.constant 0 : index
    %c13_299 = arith.constant 13 : index
    %c0_300 = arith.constant 0 : index
    %c0_301 = arith.constant 0 : index
    %626 = vector.load %arg6[%c0_298, %c13_299, %c0_300, %c0_301] : memref<1x14x16x864xf32, #tpu.memory_space<vmem>>, vector<1x1x16x864xf32>
    %c1_i32_302 = arith.constant 1 : i32
    %627 = tpu.dynamic_rotate %626 by %c1_i32_302 dim 2 : vector<1x1x16x864xf32>, i32 -> vector<1x1x16x864xf32>
    %628 = vector.shape_cast %8 : vector<1x864xf32> to vector<1x1x1x864xf32>
    %629 = vector.broadcast %628 : vector<1x1x1x864xf32> to vector<1x1x16x864xf32>
    %630 = arith.mulf %627, %629 : vector<1x1x16x864xf32>
    %631 = arith.addf %625, %630 : vector<1x1x16x864xf32>
    %632 = vector.shape_cast %9 : vector<1x864xf32> to vector<1x1x1x864xf32>
    %633 = vector.broadcast %632 : vector<1x1x1x864xf32> to vector<1x1x16x864xf32>
    %634 = arith.mulf %626, %633 : vector<1x1x16x864xf32>
    %635 = arith.addf %631, %634 : vector<1x1x16x864xf32>
    %c15_i32_303 = arith.constant 15 : i32
    %636 = tpu.dynamic_rotate %626 by %c15_i32_303 dim 2 : vector<1x1x16x864xf32>, i32 -> vector<1x1x16x864xf32>
    %637 = vector.shape_cast %10 : vector<1x864xf32> to vector<1x1x1x864xf32>
    %638 = vector.broadcast %637 : vector<1x1x1x864xf32> to vector<1x1x16x864xf32>
    %639 = arith.mulf %636, %638 : vector<1x1x16x864xf32>
    %640 = arith.addf %635, %639 : vector<1x1x16x864xf32>
    %c0_304 = arith.constant 0 : index
    %c13_305 = arith.constant 13 : index
    %c0_306 = arith.constant 0 : index
    %c0_307 = arith.constant 0 : index
    %641 = vector.load %arg7[%c0_304, %c13_305, %c0_306, %c0_307] : memref<1x14x16x864xf32, #tpu.memory_space<vmem>>, vector<1x1x16x864xf32>
    tpu.vector_store %arg7[%c0_304, %c13_305, %c0_306, %c0_307], %640 {strides = array<i32>} : memref<1x14x16x864xf32, #tpu.memory_space<vmem>>, vector<1x1x16x864xf32>,
    %c0_308 = arith.constant 0 : index
    %c0_309 = arith.constant 0 : index
    %c0_310 = arith.constant 0 : index
    %c0_311 = arith.constant 0 : index
    %642 = vector.load %arg7[%c0_308, %c0_309, %c0_310, %c0_311] : memref<1x14x16x864xf32, #tpu.memory_space<vmem>>, vector<1x14x16x864xf32>
    %643 = tpu.iota {dimensions = array<i32: 2>} : vector<1x1x16x864xi32>
    %c14_i32 = arith.constant 14 : i32
    %644 = vector.broadcast %c14_i32 : i32 to vector<1x1x16x864xi32>
    %645 = arith.cmpi slt, %643, %644 : vector<1x1x16x864xi32>
    %cst_312 = arith.constant 0.000000e+00 : f32
    %646 = vector.shape_cast %645 : vector<1x1x16x864xi1> to vector<1x1x16x864xi1>
    %647 = vector.broadcast %646 : vector<1x1x16x864xi1> to vector<1x14x16x864xi1>
    %648 = vector.broadcast %cst_312 : f32 to vector<1x14x16x864xf32>
    %649 = arith.select %647, %642, %648 : vector<1x14x16x864xi1>, vector<1x14x16x864xf32>
    %cst_313 = arith.constant dense<0.000000e+00> : vector<864xf32>
    %650 = vector.multi_reduction <add>, %649, %cst_313 [0, 1, 2] : vector<1x14x16x864xf32> to vector<864xf32>
    %651 = vector.shape_cast %650 : vector<864xf32> to vector<1x1x1x864xf32>
    %652 = arith.mulf %649, %649 : vector<1x14x16x864xf32>
    %cst_314 = arith.constant dense<0.000000e+00> : vector<864xf32>
    %653 = vector.multi_reduction <add>, %652, %cst_314 [0, 1, 2] : vector<1x14x16x864xf32> to vector<864xf32>
    %654 = vector.shape_cast %653 : vector<864xf32> to vector<1x1x1x864xf32>
    %cst_315 = arith.constant 0.00510204071 : f32
    %655 = vector.broadcast %cst_315 : f32 to vector<1x1x1x864xf32>
    %656 = arith.mulf %651, %655 : vector<1x1x1x864xf32>
    %cst_316 = arith.constant 0.00510204071 : f32
    %657 = vector.broadcast %cst_316 : f32 to vector<1x1x1x864xf32>
    %658 = arith.mulf %654, %657 : vector<1x1x1x864xf32>
    %659 = arith.mulf %656, %656 : vector<1x1x1x864xf32>
    %660 = arith.subf %658, %659 : vector<1x1x1x864xf32>
    %cst_317 = arith.constant 0.000000e+00 : f32
    %661 = vector.broadcast %cst_317 : f32 to vector<1x1x1x864xf32>
    %662 = arith.maximumf %660, %661 : vector<1x1x1x864xf32>
    %c0_318 = arith.constant 0 : index
    %c0_319 = arith.constant 0 : index
    %663 = vector.load %arg3[%c0_318, %c0_319] : memref<1x864xf32, #tpu.memory_space<vmem>>, vector<1x864xf32>
    %664 = vector.shape_cast %663 : vector<1x864xf32> to vector<1x1x1x864xf32>
    %c0_320 = arith.constant 0 : index
    %c0_321 = arith.constant 0 : index
    %665 = vector.load %arg4[%c0_320, %c0_321] : memref<1x864xf32, #tpu.memory_space<vmem>>, vector<1x864xf32>
    %666 = vector.shape_cast %665 : vector<1x864xf32> to vector<1x1x1x864xf32>
    %cst_322 = arith.constant 1.000000e-03 : f32
    %667 = vector.broadcast %cst_322 : f32 to vector<1x1x1x864xf32>
    %668 = arith.addf %662, %667 : vector<1x1x1x864xf32>
    %669 = math.rsqrt %668 : vector<1x1x1x864xf32>
    %670 = arith.mulf %669, %664 : vector<1x1x1x864xf32>
    %671 = arith.mulf %656, %670 : vector<1x1x1x864xf32>
    %672 = arith.subf %666, %671 : vector<1x1x1x864xf32>
    %673 = vector.broadcast %670 : vector<1x1x1x864xf32> to vector<1x14x16x864xf32>
    %674 = arith.mulf %642, %673 : vector<1x14x16x864xf32>
    %675 = vector.broadcast %672 : vector<1x1x1x864xf32> to vector<1x14x16x864xf32>
    %676 = arith.addf %674, %675 : vector<1x14x16x864xf32>
    %677 = vector.extract_strided_slice %676 {offsets = [0, 0, 0, 0], sizes = [1, 14, 14, 864], strides = [1, 1, 1, 1]} : vector<1x14x16x864xf32> to vector<1x14x14x864xf32>
    %c0_323 = arith.constant 0 : index
    %c0_324 = arith.constant 0 : index
    %c0_325 = arith.constant 0 : index
    %c0_326 = arith.constant 0 : index
    %678 = vector.load %arg5[%c0_323, %c0_324, %c0_325, %c0_326] : memref<1x14x14x864xf32, #tpu.memory_space<vmem>>, vector<1x14x14x864xf32>
    tpu.vector_store %arg5[%c0_323, %c0_324, %c0_325, %c0_326], %677 {strides = array<i32>} : memref<1x14x14x864xf32, #tpu.memory_space<vmem>>, vector<1x14x14x864xf32>,
    return
  }
  func.func @transform_0(%arg0: i32) -> (i32, i32, i32, i32) {
    %c0_i32 = arith.constant 0 : i32
    %c0_i32_0 = arith.constant 0 : i32
    %c0_i32_1 = arith.constant 0 : i32
    %c0_i32_2 = arith.constant 0 : i32
    %c0_i32_3 = arith.constant 0 : i32
    return %c0_i32, %c0_i32_0, %c0_i32_1, %c0_i32_2 : i32, i32, i32, i32
  }
  func.func @transform_1(%arg0: i32) -> (i32, i32) {
    %c0_i32 = arith.constant 0 : i32
    %c0_i32_0 = arith.constant 0 : i32
    %c0_i32_1 = arith.constant 0 : i32
    return %c0_i32, %c0_i32_0 : i32, i32
  }
  func.func @transform_2(%arg0: i32) -> (i32, i32) {
    %c0_i32 = arith.constant 0 : i32
    %c0_i32_0 = arith.constant 0 : i32
    %c0_i32_1 = arith.constant 0 : i32
    return %c0_i32, %c0_i32_0 : i32, i32
  }
  func.func @transform_3(%arg0: i32) -> (i32, i32) {
    %c0_i32 = arith.constant 0 : i32
    %c0_i32_0 = arith.constant 0 : i32
    %c0_i32_1 = arith.constant 0 : i32
    return %c0_i32, %c0_i32_0 : i32, i32
  }
  func.func @transform_4(%arg0: i32) -> (i32, i32, i32, i32) {
    %c0_i32 = arith.constant 0 : i32
    %c0_i32_0 = arith.constant 0 : i32
    %c0_i32_1 = arith.constant 0 : i32
    %c0_i32_2 = arith.constant 0 : i32
    %c0_i32_3 = arith.constant 0 : i32
    return %c0_i32, %c0_i32_0, %c0_i32_1, %c0_i32_2 : i32, i32, i32, i32
  }
}

</mosaic_0001>

<llo_original>
// kernel: _lambda_.1
$region0: #{_lambda_.1}
  #allocation0 [shape = 'u32[]', space=smem, size = 0x4, offset = 0x4, fixed_abs, tag = 'smem constant byte address 0x4 - core index']
  #allocation1 [shape = 'u32[144,128]{1,0:T(1,128)}', space=vmem, size = 0x12000, scoped, tag = 'internal scratch']
  #allocation2 [shape = 'f32[1,14,16,864]{3,2,1,0:T(8,128)}', space=vmem, size = 0xc4000, scoped, tag = 'scratch operand']
  #allocation3 [shape = 'f32[1,14,16,864]{3,2,1,0:T(8,128)}', space=vmem, size = 0xc4000, scoped, tag = 'scratch operand']
  %s0 = inlined_call_operand.vmem [shape: f32[1,14,14,864], index: 0, kind: input, shape index: {}]
  %s1 = inlined_call_operand.vmem [shape: f32[9,864], index: 1, kind: input, shape index: {}]
  %s2 = inlined_call_operand.vmem [shape: f32[1,864], index: 2, kind: input, shape index: {}]
  %s3 = inlined_call_operand.vmem [shape: f32[1,864], index: 3, kind: input, shape index: {}]
  %s4 = inlined_call_operand.vmem [shape: f32[1,14,14,864], index: 4, kind: output, shape index: {}]
  %s5 = sld [smem:[#allocation0]]
  $region26: #{_lambda_.1} parent=0
    _
  %s7 = ssub.s32 1, %s5
  %s8 = scalar_select 0, %s7, %s5
  // Predicated region
  $region2: #{_lambda_.1} parent=0 // pred_check
    _
  $region3: #{_lambda_.1} parent=0 // pred_check_branch
    %10 = sbr.rel (0) target = $region5
  $region4: #{_lambda_.1} parent=0 // pred_region
    _
  $region5: #{_lambda_.1} parent=0 // pred_fallthru
    _
  // Predicated region
  $region6: #{_lambda_.1} parent=0 // pred_check
    _
  $region7: #{_lambda_.1} parent=0 // pred_check_branch
    %12 = sbr.rel (0) target = $region9
  $region8: #{_lambda_.1} parent=0 // pred_region
    _
  $region9: #{_lambda_.1} parent=0 // pred_fallthru
    _
  // Predicated region
  $region10: #{_lambda_.1} parent=0 // pred_check
    _
  $region11: #{_lambda_.1} parent=0 // pred_check_branch
    %14 = sbr.rel (0) target = $region13
  $region12: #{_lambda_.1} parent=0 // pred_region
    _
  $region13: #{_lambda_.1} parent=0 // pred_fallthru
    _
  // Predicated region
  $region14: #{_lambda_.1} parent=0 // pred_check
    _
  $region15: #{_lambda_.1} parent=0 // pred_check_branch
    %16 = sbr.rel (0) target = $region17
  $region16: #{_lambda_.1} parent=0 // pred_region
    _
  $region17: #{_lambda_.1} parent=0 // pred_fallthru
    _
  %17 = vst [vmem:[#allocation2] sm:$0xff] 0.0
  %18 = vst [vmem:[#allocation2 + $0x8] sm:$0xff] 0.0
  %19 = vst [vmem:[#allocation2 + $0x10] sm:$0xff] 0.0
  %20 = vst [vmem:[#allocation2 + $0x18] sm:$0xff] 0.0
  %21 = vst [vmem:[#allocation2 + $0x20] sm:$0xff] 0.0
  %22 = vst [vmem:[#allocation2 + $0x28] sm:$0xff] 0.0
  %vm23 = vcmask 785408
  %24 = vst.msk [vmem:[#allocation2 + $0x30] sm:$0xff] %vm23, 0.0
  %25 = vst [vmem:[#allocation2 + $0x38] sm:$0xff] 0.0
  %26 = vst [vmem:[#allocation2 + $0x40] sm:$0xff] 0.0
  %27 = vst [vmem:[#allocation2 + $0x48] sm:$0xff] 0.0
  %28 = vst [vmem:[#allocation2 + $0x50] sm:$0xff] 0.0
  %29 = vst [vmem:[#allocation2 + $0x58] sm:$0xff] 0.0
  %30 = vst [vmem:[#allocation2 + $0x60] sm:$0xff] 0.0
  %31 = vst.msk [vmem:[#allocation2 + $0x68] sm:$0xff] %vm23, 0.0
  %32 = vst [vmem:[#allocation2 + $0x70] sm:$0xff] 0.0
  %33 = vst [vmem:[#allocation2 + $0x78] sm:$0xff] 0.0
  %34 = vst [vmem:[#allocation2 + $0x80] sm:$0xff] 0.0
  %35 = vst [vmem:[#allocation2 + $0x88] sm:$0xff] 0.0
  %36 = vst [vmem:[#allocation2 + $0x90] sm:$0xff] 0.0
  %37 = vst [vmem:[#allocation2 + $0x98] sm:$0xff] 0.0
  %38 = vst.msk [vmem:[#allocation2 + $0xa0] sm:$0xff] %vm23, 0.0
  %39 = vst [vmem:[#allocation2 + $0xa8] sm:$0xff] 0.0
  %40 = vst [vmem:[#allocation2 + $0xb0] sm:$0xff] 0.0
  %41 = vst [vmem:[#allocation2 + $0xb8] sm:$0xff] 0.0
  %42 = vst [vmem:[#allocation2 + $0xc0] sm:$0xff] 0.0
  %43 = vst [vmem:[#allocation2 + $0xc8] sm:$0xff] 0.0
  %44 = vst [vmem:[#allocation2 + $0xd0] sm:$0xff] 0.0
  %45 = vst.msk [vmem:[#allocation2 + $0xd8] sm:$0xff] %vm23, 0.0
  %46 = vst [vmem:[#allocation2 + $0xe0] sm:$0xff] 0.0
  %47 = vst [vmem:[#allocation2 + $0xe8] sm:$0xff] 0.0
  %48 = vst [vmem:[#allocation2 + $0xf0] sm:$0xff] 0.0
  %49 = vst [vmem:[#allocation2 + $0xf8] sm:$0xff] 0.0
  %50 = vst [vmem:[#allocation2 + $0x100] sm:$0xff] 0.0
  %51 = vst [vmem:[#allocation2 + $0x108] sm:$0xff] 0.0
  %52 = vst.msk [vmem:[#allocation2 + $0x110] sm:$0xff] %vm23, 0.0
  %53 = vst [vmem:[#allocation2 + $0x118] sm:$0xff] 0.0
  %54 = vst [vmem:[#allocation2 + $0x120] sm:$0xff] 0.0
  %55 = vst [vmem:[#allocation2 + $0x128] sm:$0xff] 0.0
  %56 = vst [vmem:[#allocation2 + $0x130] sm:$0xff] 0.0
  %57 = vst [vmem:[#allocation2 + $0x138] sm:$0xff] 0.0
  %58 = vst [vmem:[#allocation2 + $0x140] sm:$0xff] 0.0
  %59 = vst.msk [vmem:[#allocation2 + $0x148] sm:$0xff] %vm23, 0.0
  %60 = vst [vmem:[#allocation2 + $0x150] sm:$0xff] 0.0
  %61 = vst [vmem:[#allocation2 + $0x158] sm:$0xff] 0.0
  %62 = vst [vmem:[#allocation2 + $0x160] sm:$0xff] 0.0
  %63 = vst [vmem:[#allocation2 + $0x168] sm:$0xff] 0.0
  %64 = vst [vmem:[#allocation2 + $0x170] sm:$0xff] 0.0
  %65 = vst [vmem:[#allocation2 + $0x178] sm:$0xff] 0.0
  %66 = vst.msk [vmem:[#allocation2 + $0x180] sm:$0xff] %vm23, 0.0
  %67 = vst [vmem:[#allocation2 + $0x188] sm:$0xff] 0.0
  %68 = vst [vmem:[#allocation2 + $0x190] sm:$0xff] 0.0
  %69 = vst [vmem:[#allocation2 + $0x198] sm:$0xff] 0.0
  %70 = vst [vmem:[#allocation2 + $0x1a0] sm:$0xff] 0.0
  %71 = vst [vmem:[#allocation2 + $0x1a8] sm:$0xff] 0.0
  %72 = vst [vmem:[#allocation2 + $0x1b0] sm:$0xff] 0.0
  %73 = vst.msk [vmem:[#allocation2 + $0x1b8] sm:$0xff] %vm23, 0.0
  %74 = vst [vmem:[#allocation2 + $0x1c0] sm:$0xff] 0.0
  %75 = vst [vmem:[#allocation2 + $0x1c8] sm:$0xff] 0.0
  %76 = vst [vmem:[#allocation2 + $0x1d0] sm:$0xff] 0.0
  %77 = vst [vmem:[#allocation2 + $0x1d8] sm:$0xff] 0.0
  %78 = vst [vmem:[#allocation2 + $0x1e0] sm:$0xff] 0.0
  %79 = vst [vmem:[#allocation2 + $0x1e8] sm:$0xff] 0.0
  %80 = vst.msk [vmem:[#allocation2 + $0x1f0] sm:$0xff] %vm23, 0.0
  %81 = vst [vmem:[#allocation2 + $0x1f8] sm:$0xff] 0.0
  %82 = vst [vmem:[#allocation2 + $0x200] sm:$0xff] 0.0
  %83 = vst [vmem:[#allocation2 + $0x208] sm:$0xff] 0.0
  %84 = vst [vmem:[#allocation2 + $0x210] sm:$0xff] 0.0
  %85 = vst [vmem:[#allocation2 + $0x218] sm:$0xff] 0.0
  %86 = vst [vmem:[#allocation2 + $0x220] sm:$0xff] 0.0
  %87 = vst.msk [vmem:[#allocation2 + $0x228] sm:$0xff] %vm23, 0.0
  %88 = vst [vmem:[#allocation2 + $0x230] sm:$0xff] 0.0
  %89 = vst [vmem:[#allocation2 + $0x238] sm:$0xff] 0.0
  %90 = vst [vmem:[#allocation2 + $0x240] sm:$0xff] 0.0
  %91 = vst [vmem:[#allocation2 + $0x248] sm:$0xff] 0.0
  %92 = vst [vmem:[#allocation2 + $0x250] sm:$0xff] 0.0
  %93 = vst [vmem:[#allocation2 + $0x258] sm:$0xff] 0.0
  %94 = vst.msk [vmem:[#allocation2 + $0x260] sm:$0xff] %vm23, 0.0
  %95 = vst [vmem:[#allocation2 + $0x268] sm:$0xff] 0.0
  %96 = vst [vmem:[#allocation2 + $0x270] sm:$0xff] 0.0
  %97 = vst [vmem:[#allocation2 + $0x278] sm:$0xff] 0.0
  %98 = vst [vmem:[#allocation2 + $0x280] sm:$0xff] 0.0
  %99 = vst [vmem:[#allocation2 + $0x288] sm:$0xff] 0.0
  %100 = vst [vmem:[#allocation2 + $0x290] sm:$0xff] 0.0
  %101 = vst.msk [vmem:[#allocation2 + $0x298] sm:$0xff] %vm23, 0.0
  %102 = vst [vmem:[#allocation2 + $0x2a0] sm:$0xff] 0.0
  %103 = vst [vmem:[#allocation2 + $0x2a8] sm:$0xff] 0.0
  %104 = vst [vmem:[#allocation2 + $0x2b0] sm:$0xff] 0.0
  %105 = vst [vmem:[#allocation2 + $0x2b8] sm:$0xff] 0.0
  %106 = vst [vmem:[#allocation2 + $0x2c0] sm:$0xff] 0.0
  %107 = vst [vmem:[#allocation2 + $0x2c8] sm:$0xff] 0.0
  %108 = vst.msk [vmem:[#allocation2 + $0x2d0] sm:$0xff] %vm23, 0.0
  %109 = vst [vmem:[#allocation2 + $0x2d8] sm:$0xff] 0.0
  %110 = vst [vmem:[#allocation2 + $0x2e0] sm:$0xff] 0.0
  %111 = vst [vmem:[#allocation2 + $0x2e8] sm:$0xff] 0.0
  %112 = vst [vmem:[#allocation2 + $0x2f0] sm:$0xff] 0.0
  %113 = vst [vmem:[#allocation2 + $0x2f8] sm:$0xff] 0.0
  %114 = vst [vmem:[#allocation2 + $0x300] sm:$0xff] 0.0
  %115 = vst.msk [vmem:[#allocation2 + $0x308] sm:$0xff] %vm23, 0.0
  %116 = vst [vmem:[#allocation2 + $0x310] sm:$0xff] 0.0
  %117 = vst [vmem:[#allocation2 + $0x318] sm:$0xff] 0.0
  %118 = vst [vmem:[#allocation2 + $0x320] sm:$0xff] 0.0
  %119 = vst [vmem:[#allocation2 + $0x328] sm:$0xff] 0.0
  %120 = vst [vmem:[#allocation2 + $0x330] sm:$0xff] 0.0
  %121 = vst [vmem:[#allocation2 + $0x338] sm:$0xff] 0.0
  %122 = vst.msk [vmem:[#allocation2 + $0x340] sm:$0xff] %vm23, 0.0
  %123 = vst [vmem:[#allocation2 + $0x348] sm:$0xff] 0.0
  %124 = vst [vmem:[#allocation2 + $0x350] sm:$0xff] 0.0
  %125 = vst [vmem:[#allocation2 + $0x358] sm:$0xff] 0.0
  %126 = vst [vmem:[#allocation2 + $0x360] sm:$0xff] 0.0
  %127 = vst [vmem:[#allocation2 + $0x368] sm:$0xff] 0.0
  %128 = vst [vmem:[#allocation2 + $0x370] sm:$0xff] 0.0
  %129 = vst.msk [vmem:[#allocation2 + $0x378] sm:$0xff] %vm23, 0.0
  %130 = vst [vmem:[#allocation2 + $0x380] sm:$0xff] 0.0
  %131 = vst [vmem:[#allocation2 + $0x388] sm:$0xff] 0.0
  %132 = vst [vmem:[#allocation2 + $0x390] sm:$0xff] 0.0
  %133 = vst [vmem:[#allocation2 + $0x398] sm:$0xff] 0.0
  %134 = vst [vmem:[#allocation2 + $0x3a0] sm:$0xff] 0.0
  %135 = vst [vmem:[#allocation2 + $0x3a8] sm:$0xff] 0.0
  %136 = vst.msk [vmem:[#allocation2 + $0x3b0] sm:$0xff] %vm23, 0.0
  %137 = vst [vmem:[#allocation2 + $0x3b8] sm:$0xff] 0.0
  %138 = vst [vmem:[#allocation2 + $0x3c0] sm:$0xff] 0.0
  %139 = vst [vmem:[#allocation2 + $0x3c8] sm:$0xff] 0.0
  %140 = vst [vmem:[#allocation2 + $0x3d0] sm:$0xff] 0.0
  %141 = vst [vmem:[#allocation2 + $0x3d8] sm:$0xff] 0.0
  %142 = vst [vmem:[#allocation2 + $0x3e0] sm:$0xff] 0.0
  %143 = vst.msk [vmem:[#allocation2 + $0x3e8] sm:$0xff] %vm23, 0.0
  %144 = vst [vmem:[#allocation2 + $0x3f0] sm:$0xff] 0.0
  %145 = vst [vmem:[#allocation2 + $0x3f8] sm:$0xff] 0.0
  %146 = vst [vmem:[#allocation2 + $0x400] sm:$0xff] 0.0
  %147 = vst [vmem:[#allocation2 + $0x408] sm:$0xff] 0.0
  %148 = vst [vmem:[#allocation2 + $0x410] sm:$0xff] 0.0
  %149 = vst [vmem:[#allocation2 + $0x418] sm:$0xff] 0.0
  %150 = vst.msk [vmem:[#allocation2 + $0x420] sm:$0xff] %vm23, 0.0
  %151 = vst [vmem:[#allocation2 + $0x428] sm:$0xff] 0.0
  %152 = vst [vmem:[#allocation2 + $0x430] sm:$0xff] 0.0
  %153 = vst [vmem:[#allocation2 + $0x438] sm:$0xff] 0.0
  %154 = vst [vmem:[#allocation2 + $0x440] sm:$0xff] 0.0
  %155 = vst [vmem:[#allocation2 + $0x448] sm:$0xff] 0.0
  %156 = vst [vmem:[#allocation2 + $0x450] sm:$0xff] 0.0
  %157 = vst.msk [vmem:[#allocation2 + $0x458] sm:$0xff] %vm23, 0.0
  %158 = vst [vmem:[#allocation2 + $0x460] sm:$0xff] 0.0
  %159 = vst [vmem:[#allocation2 + $0x468] sm:$0xff] 0.0
  %160 = vst [vmem:[#allocation2 + $0x470] sm:$0xff] 0.0
  %161 = vst [vmem:[#allocation2 + $0x478] sm:$0xff] 0.0
  %162 = vst [vmem:[#allocation2 + $0x480] sm:$0xff] 0.0
  %163 = vst [vmem:[#allocation2 + $0x488] sm:$0xff] 0.0
  %164 = vst.msk [vmem:[#allocation2 + $0x490] sm:$0xff] %vm23, 0.0
  %165 = vst [vmem:[#allocation2 + $0x498] sm:$0xff] 0.0
  %166 = vst [vmem:[#allocation2 + $0x4a0] sm:$0xff] 0.0
  %167 = vst [vmem:[#allocation2 + $0x4a8] sm:$0xff] 0.0
  %168 = vst [vmem:[#allocation2 + $0x4b0] sm:$0xff] 0.0
  %169 = vst [vmem:[#allocation2 + $0x4b8] sm:$0xff] 0.0
  %170 = vst [vmem:[#allocation2 + $0x4c0] sm:$0xff] 0.0
  %171 = vst.msk [vmem:[#allocation2 + $0x4c8] sm:$0xff] %vm23, 0.0
  %172 = vst [vmem:[#allocation2 + $0x4d0] sm:$0xff] 0.0
  %173 = vst [vmem:[#allocation2 + $0x4d8] sm:$0xff] 0.0
  %174 = vst [vmem:[#allocation2 + $0x4e0] sm:$0xff] 0.0
  %175 = vst [vmem:[#allocation2 + $0x4e8] sm:$0xff] 0.0
  %176 = vst [vmem:[#allocation2 + $0x4f0] sm:$0xff] 0.0
  %177 = vst [vmem:[#allocation2 + $0x4f8] sm:$0xff] 0.0
  %178 = vst.msk [vmem:[#allocation2 + $0x500] sm:$0xff] %vm23, 0.0
  %179 = vst [vmem:[#allocation2 + $0x508] sm:$0xff] 0.0
  %180 = vst [vmem:[#allocation2 + $0x510] sm:$0xff] 0.0
  %181 = vst [vmem:[#allocation2 + $0x518] sm:$0xff] 0.0
  %182 = vst [vmem:[#allocation2 + $0x520] sm:$0xff] 0.0
  %183 = vst [vmem:[#allocation2 + $0x528] sm:$0xff] 0.0
  %184 = vst [vmem:[#allocation2 + $0x530] sm:$0xff] 0.0
  %185 = vst.msk [vmem:[#allocation2 + $0x538] sm:$0xff] %vm23, 0.0
  %186 = vst [vmem:[#allocation2 + $0x540] sm:$0xff] 0.0
  %187 = vst [vmem:[#allocation2 + $0x548] sm:$0xff] 0.0
  %188 = vst [vmem:[#allocation2 + $0x550] sm:$0xff] 0.0
  %189 = vst [vmem:[#allocation2 + $0x558] sm:$0xff] 0.0
  %190 = vst [vmem:[#allocation2 + $0x560] sm:$0xff] 0.0
  %191 = vst [vmem:[#allocation2 + $0x568] sm:$0xff] 0.0
  %192 = vst.msk [vmem:[#allocation2 + $0x570] sm:$0xff] %vm23, 0.0
  %193 = vst [vmem:[#allocation2 + $0x578] sm:$0xff] 0.0
  %194 = vst [vmem:[#allocation2 + $0x580] sm:$0xff] 0.0
  %195 = vst [vmem:[#allocation2 + $0x588] sm:$0xff] 0.0
  %196 = vst [vmem:[#allocation2 + $0x590] sm:$0xff] 0.0
  %197 = vst [vmem:[#allocation2 + $0x598] sm:$0xff] 0.0
  %198 = vst [vmem:[#allocation2 + $0x5a0] sm:$0xff] 0.0
  %199 = vst.msk [vmem:[#allocation2 + $0x5a8] sm:$0xff] %vm23, 0.0
  %200 = vst [vmem:[#allocation2 + $0x5b0] sm:$0xff] 0.0
  %201 = vst [vmem:[#allocation2 + $0x5b8] sm:$0xff] 0.0
  %202 = vst [vmem:[#allocation2 + $0x5c0] sm:$0xff] 0.0
  %203 = vst [vmem:[#allocation2 + $0x5c8] sm:$0xff] 0.0
  %204 = vst [vmem:[#allocation2 + $0x5d0] sm:$0xff] 0.0
  %205 = vst [vmem:[#allocation2 + $0x5d8] sm:$0xff] 0.0
  %206 = vst.msk [vmem:[#allocation2 + $0x5e0] sm:$0xff] %vm23, 0.0
  %207 = vst [vmem:[#allocation2 + $0x5e8] sm:$0xff] 0.0
  %208 = vst [vmem:[#allocation2 + $0x5f0] sm:$0xff] 0.0
  %209 = vst [vmem:[#allocation2 + $0x5f8] sm:$0xff] 0.0
  %210 = vst [vmem:[#allocation2 + $0x600] sm:$0xff] 0.0
  %211 = vst [vmem:[#allocation2 + $0x608] sm:$0xff] 0.0
  %212 = vst [vmem:[#allocation2 + $0x610] sm:$0xff] 0.0
  %213 = vst.msk [vmem:[#allocation2 + $0x618] sm:$0xff] %vm23, 0.0
  %v214 = vld [vmem:[%s0] sm:$0xff]
  %v215 = vld [vmem:[%s0 + $0x8] sm:$0xff]
  %v216 = vld [vmem:[%s0 + $0x10] sm:$0xff]
  %v217 = vld [vmem:[%s0 + $0x18] sm:$0xff]
  %v218 = vld [vmem:[%s0 + $0x20] sm:$0xff]
  %v219 = vld [vmem:[%s0 + $0x28] sm:$0xff]
  %v220 = vld [vmem:[%s0 + $0x30] sm:$0xff]
  %v221 = vld [vmem:[%s0 + $0x38] sm:$0x3f]
  %v222 = vld [vmem:[%s0 + $0x40] sm:$0x3f]
  %v223 = vld [vmem:[%s0 + $0x48] sm:$0x3f]
  %v224 = vld [vmem:[%s0 + $0x50] sm:$0x3f]
  %v225 = vld [vmem:[%s0 + $0x58] sm:$0x3f]
  %v226 = vld [vmem:[%s0 + $0x60] sm:$0x3f]
  %v227 = vld [vmem:[%s0 + $0x68] sm:$0x3f]
  %v228 = vld [vmem:[%s0 + $0x70] sm:$0xff]
  %v229 = vld [vmem:[%s0 + $0x78] sm:$0xff]
  %v230 = vld [vmem:[%s0 + $0x80] sm:$0xff]
  %v231 = vld [vmem:[%s0 + $0x88] sm:$0xff]
  %v232 = vld [vmem:[%s0 + $0x90] sm:$0xff]
  %v233 = vld [vmem:[%s0 + $0x98] sm:$0xff]
  %v234 = vld [vmem:[%s0 + $0xa0] sm:$0xff]
  %v235 = vld [vmem:[%s0 + $0xa8] sm:$0x3f]
  %v236 = vld [vmem:[%s0 + $0xb0] sm:$0x3f]
  %v237 = vld [vmem:[%s0 + $0xb8] sm:$0x3f]
  %v238 = vld [vmem:[%s0 + $0xc0] sm:$0x3f]
  %v239 = vld [vmem:[%s0 + $0xc8] sm:$0x3f]
  %v240 = vld [vmem:[%s0 + $0xd0] sm:$0x3f]
  %v241 = vld [vmem:[%s0 + $0xd8] sm:$0x3f]
  %v242 = vld [vmem:[%s0 + $0xe0] sm:$0xff]
  %v243 = vld [vmem:[%s0 + $0xe8] sm:$0xff]
  %v244 = vld [vmem:[%s0 + $0xf0] sm:$0xff]
  %v245 = vld [vmem:[%s0 + $0xf8] sm:$0xff]
  %v246 = vld [vmem:[%s0 + $0x100] sm:$0xff]
  %v247 = vld [vmem:[%s0 + $0x108] sm:$0xff]
  %v248 = vld [vmem:[%s0 + $0x110] sm:$0xff]
  %v249 = vld [vmem:[%s0 + $0x118] sm:$0x3f]
  %v250 = vld [vmem:[%s0 + $0x120] sm:$0x3f]
  %v251 = vld [vmem:[%s0 + $0x128] sm:$0x3f]
  %v252 = vld [vmem:[%s0 + $0x130] sm:$0x3f]
  %v253 = vld [vmem:[%s0 + $0x138] sm:$0x3f]
  %v254 = vld [vmem:[%s0 + $0x140] sm:$0x3f]
  %v255 = vld [vmem:[%s0 + $0x148] sm:$0x3f]
  %v256 = vld [vmem:[%s0 + $0x150] sm:$0xff]
  %v257 = vld [vmem:[%s0 + $0x158] sm:$0xff]
  %v258 = vld [vmem:[%s0 + $0x160] sm:$0xff]
  %v259 = vld [vmem:[%s0 + $0x168] sm:$0xff]
  %v260 = vld [vmem:[%s0 + $0x170] sm:$0xff]
  %v261 = vld [vmem:[%s0 + $0x178] sm:$0xff]
  %v262 = vld [vmem:[%s0 + $0x180] sm:$0xff]
  %v263 = vld [vmem:[%s0 + $0x188] sm:$0x3f]
  %v264 = vld [vmem:[%s0 + $0x190] sm:$0x3f]
  %v265 = vld [vmem:[%s0 + $0x198] sm:$0x3f]
  %v266 = vld [vmem:[%s0 + $0x1a0] sm:$0x3f]
  %v267 = vld [vmem:[%s0 + $0x1a8] sm:$0x3f]
  %v268 = vld [vmem:[%s0 + $0x1b0] sm:$0x3f]
  %v269 = vld [vmem:[%s0 + $0x1b8] sm:$0x3f]
  %v270 = vld [vmem:[%s0 + $0x1c0] sm:$0xff]
  %v271 = vld [vmem:[%s0 + $0x1c8] sm:$0xff]
  %v272 = vld [vmem:[%s0 + $0x1d0] sm:$0xff]
  %v273 = vld [vmem:[%s0 + $0x1d8] sm:$0xff]
  %v274 = vld [vmem:[%s0 + $0x1e0] sm:$0xff]
  %v275 = vld [vmem:[%s0 + $0x1e8] sm:$0xff]
  %v276 = vld [vmem:[%s0 + $0x1f0] sm:$0xff]
  %v277 = vld [vmem:[%s0 + $0x1f8] sm:$0x3f]
  %v278 = vld [vmem:[%s0 + $0x200] sm:$0x3f]
  %v279 = vld [vmem:[%s0 + $0x208] sm:$0x3f]
  %v280 = vld [vmem:[%s0 + $0x210] sm:$0x3f]
  %v281 = vld [vmem:[%s0 + $0x218] sm:$0x3f]
  %v282 = vld [vmem:[%s0 + $0x220] sm:$0x3f]
  %v283 = vld [vmem:[%s0 + $0x228] sm:$0x3f]
  %v284 = vld [vmem:[%s0 + $0x230] sm:$0xff]
  %v285 = vld [vmem:[%s0 + $0x238] sm:$0xff]
  %v286 = vld [vmem:[%s0 + $0x240] sm:$0xff]
  %v287 = vld [vmem:[%s0 + $0x248] sm:$0xff]
  %v288 = vld [vmem:[%s0 + $0x250] sm:$0xff]
  %v289 = vld [vmem:[%s0 + $0x258] sm:$0xff]
  %v290 = vld [vmem:[%s0 + $0x260] sm:$0xff]
  %v291 = vld [vmem:[%s0 + $0x268] sm:$0x3f]
  %v292 = vld [vmem:[%s0 + $0x270] sm:$0x3f]
  %v293 = vld [vmem:[%s0 + $0x278] sm:$0x3f]
  %v294 = vld [vmem:[%s0 + $0x280] sm:$0x3f]
  %v295 = vld [vmem:[%s0 + $0x288] sm:$0x3f]
  %v296 = vld [vmem:[%s0 + $0x290] sm:$0x3f]
  %v297 = vld [vmem:[%s0 + $0x298] sm:$0x3f]
  %v298 = vld [vmem:[%s0 + $0x2a0] sm:$0xff]
  %v299 = vld [vmem:[%s0 + $0x2a8] sm:$0xff]
  %v300 = vld [vmem:[%s0 + $0x2b0] sm:$0xff]
  %v301 = vld [vmem:[%s0 + $0x2b8] sm:$0xff]
  %v302 = vld [vmem:[%s0 + $0x2c0] sm:$0xff]
  %v303 = vld [vmem:[%s0 + $0x2c8] sm:$0xff]
  %v304 = vld [vmem:[%s0 + $0x2d0] sm:$0xff]
  %v305 = vld [vmem:[%s0 + $0x2d8] sm:$0x3f]
  %v306 = vld [vmem:[%s0 + $0x2e0] sm:$0x3f]
  %v307 = vld [vmem:[%s0 + $0x2e8] sm:$0x3f]
  %v308 = vld [vmem:[%s0 + $0x2f0] sm:$0x3f]
  %v309 = vld [vmem:[%s0 + $0x2f8] sm:$0x3f]
  %v310 = vld [vmem:[%s0 + $0x300] sm:$0x3f]
  %v311 = vld [vmem:[%s0 + $0x308] sm:$0x3f]
  %v312 = vld [vmem:[%s0 + $0x310] sm:$0xff]
  %v313 = vld [vmem:[%s0 + $0x318] sm:$0xff]
  %v314 = vld [vmem:[%s0 + $0x320] sm:$0xff]
  %v315 = vld [vmem:[%s0 + $0x328] sm:$0xff]
  %v316 = vld [vmem:[%s0 + $0x330] sm:$0xff]
  %v317 = vld [vmem:[%s0 + $0x338] sm:$0xff]
  %v318 = vld [vmem:[%s0 + $0x340] sm:$0xff]
  %v319 = vld [vmem:[%s0 + $0x348] sm:$0x3f]
  %v320 = vld [vmem:[%s0 + $0x350] sm:$0x3f]
  %v321 = vld [vmem:[%s0 + $0x358] sm:$0x3f]
  %v322 = vld [vmem:[%s0 + $0x360] sm:$0x3f]
  %v323 = vld [vmem:[%s0 + $0x368] sm:$0x3f]
  %v324 = vld [vmem:[%s0 + $0x370] sm:$0x3f]
  %v325 = vld [vmem:[%s0 + $0x378] sm:$0x3f]
  %v326 = vld [vmem:[%s0 + $0x380] sm:$0xff]
  %v327 = vld [vmem:[%s0 + $0x388] sm:$0xff]
  %v328 = vld [vmem:[%s0 + $0x390] sm:$0xff]
  %v329 = vld [vmem:[%s0 + $0x398] sm:$0xff]
  %v330 = vld [vmem:[%s0 + $0x3a0] sm:$0xff]
  %v331 = vld [vmem:[%s0 + $0x3a8] sm:$0xff]
  %v332 = vld [vmem:[%s0 + $0x3b0] sm:$0xff]
  %v333 = vld [vmem:[%s0 + $0x3b8] sm:$0x3f]
  %v334 = vld [vmem:[%s0 + $0x3c0] sm:$0x3f]
  %v335 = vld [vmem:[%s0 + $0x3c8] sm:$0x3f]
  %v336 = vld [vmem:[%s0 + $0x3d0] sm:$0x3f]
  %v337 = vld [vmem:[%s0 + $0x3d8] sm:$0x3f]
  %v338 = vld [vmem:[%s0 + $0x3e0] sm:$0x3f]
  %v339 = vld [vmem:[%s0 + $0x3e8] sm:$0x3f]
  %v340 = vld [vmem:[%s0 + $0x3f0] sm:$0xff]
  %v341 = vld [vmem:[%s0 + $0x3f8] sm:$0xff]
  %v342 = vld [vmem:[%s0 + $0x400] sm:$0xff]
  %v343 = vld [vmem:[%s0 + $0x408] sm:$0xff]
  %v344 = vld [vmem:[%s0 + $0x410] sm:$0xff]
  %v345 = vld [vmem:[%s0 + $0x418] sm:$0xff]
  %v346 = vld [vmem:[%s0 + $0x420] sm:$0xff]
  %v347 = vld [vmem:[%s0 + $0x428] sm:$0x3f]
  %v348 = vld [vmem:[%s0 + $0x430] sm:$0x3f]
  %v349 = vld [vmem:[%s0 + $0x438] sm:$0x3f]
  %v350 = vld [vmem:[%s0 + $0x440] sm:$0x3f]
  %v351 = vld [vmem:[%s0 + $0x448] sm:$0x3f]
  %v352 = vld [vmem:[%s0 + $0x450] sm:$0x3f]
  %v353 = vld [vmem:[%s0 + $0x458] sm:$0x3f]
  %v354 = vld [vmem:[%s0 + $0x460] sm:$0xff]
  %v355 = vld [vmem:[%s0 + $0x468] sm:$0xff]
  %v356 = vld [vmem:[%s0 + $0x470] sm:$0xff]
  %v357 = vld [vmem:[%s0 + $0x478] sm:$0xff]
  %v358 = vld [vmem:[%s0 + $0x480] sm:$0xff]
  %v359 = vld [vmem:[%s0 + $0x488] sm:$0xff]
  %v360 = vld [vmem:[%s0 + $0x490] sm:$0xff]
  %v361 = vld [vmem:[%s0 + $0x498] sm:$0x3f]
  %v362 = vld [vmem:[%s0 + $0x4a0] sm:$0x3f]
  %v363 = vld [vmem:[%s0 + $0x4a8] sm:$0x3f]
  %v364 = vld [vmem:[%s0 + $0x4b0] sm:$0x3f]
  %v365 = vld [vmem:[%s0 + $0x4b8] sm:$0x3f]
  %v366 = vld [vmem:[%s0 + $0x4c0] sm:$0x3f]
  %v367 = vld [vmem:[%s0 + $0x4c8] sm:$0x3f]
  %v368 = vld [vmem:[%s0 + $0x4d0] sm:$0xff]
  %v369 = vld [vmem:[%s0 + $0x4d8] sm:$0xff]
  %v370 = vld [vmem:[%s0 + $0x4e0] sm:$0xff]
  %v371 = vld [vmem:[%s0 + $0x4e8] sm:$0xff]
  %v372 = vld [vmem:[%s0 + $0x4f0] sm:$0xff]
  %v373 = vld [vmem:[%s0 + $0x4f8] sm:$0xff]
  %v374 = vld [vmem:[%s0 + $0x500] sm:$0xff]
  %v375 = vld [vmem:[%s0 + $0x508] sm:$0x3f]
  %v376 = vld [vmem:[%s0 + $0x510] sm:$0x3f]
  %v377 = vld [vmem:[%s0 + $0x518] sm:$0x3f]
  %v378 = vld [vmem:[%s0 + $0x520] sm:$0x3f]
  %v379 = vld [vmem:[%s0 + $0x528] sm:$0x3f]
  %v380 = vld [vmem:[%s0 + $0x530] sm:$0x3f]
  %v381 = vld [vmem:[%s0 + $0x538] sm:$0x3f]
  %v382 = vld [vmem:[%s0 + $0x540] sm:$0xff]
  %v383 = vld [vmem:[%s0 + $0x548] sm:$0xff]
  %v384 = vld [vmem:[%s0 + $0x550] sm:$0xff]
  %v385 = vld [vmem:[%s0 + $0x558] sm:$0xff]
  %v386 = vld [vmem:[%s0 + $0x560] sm:$0xff]
  %v387 = vld [vmem:[%s0 + $0x568] sm:$0xff]
  %v388 = vld [vmem:[%s0 + $0x570] sm:$0xff]
  %v389 = vld [vmem:[%s0 + $0x578] sm:$0x3f]
  %v390 = vld [vmem:[%s0 + $0x580] sm:$0x3f]
  %v391 = vld [vmem:[%s0 + $0x588] sm:$0x3f]
  %v392 = vld [vmem:[%s0 + $0x590] sm:$0x3f]
  %v393 = vld [vmem:[%s0 + $0x598] sm:$0x3f]
  %v394 = vld [vmem:[%s0 + $0x5a0] sm:$0x3f]
  %v395 = vld [vmem:[%s0 + $0x5a8] sm:$0x3f]
  %v396 = vld [vmem:[%s0 + $0x5b0] sm:$0xff]
  %v397 = vld [vmem:[%s0 + $0x5b8] sm:$0xff]
  %v398 = vld [vmem:[%s0 + $0x5c0] sm:$0xff]
  %v399 = vld [vmem:[%s0 + $0x5c8] sm:$0xff]
  %v400 = vld [vmem:[%s0 + $0x5d0] sm:$0xff]
  %v401 = vld [vmem:[%s0 + $0x5d8] sm:$0xff]
  %v402 = vld [vmem:[%s0 + $0x5e0] sm:$0xff]
  %v403 = vld [vmem:[%s0 + $0x5e8] sm:$0x3f]
  %v404 = vld [vmem:[%s0 + $0x5f0] sm:$0x3f]
  %v405 = vld [vmem:[%s0 + $0x5f8] sm:$0x3f]
  %v406 = vld [vmem:[%s0 + $0x600] sm:$0x3f]
  %v407 = vld [vmem:[%s0 + $0x608] sm:$0x3f]
  %v408 = vld [vmem:[%s0 + $0x610] sm:$0x3f]
  %v409 = vld [vmem:[%s0 + $0x618] sm:$0x3f]
  %410 = vst [vmem:[#allocation2] sm:$0xff] %v214
  %411 = vst [vmem:[#allocation2 + $0x8] sm:$0xff] %v215
  %412 = vst [vmem:[#allocation2 + $0x10] sm:$0xff] %v216
  %413 = vst [vmem:[#allocation2 + $0x18] sm:$0xff] %v217
  %414 = vst [vmem:[#allocation2 + $0x20] sm:$0xff] %v218
  %415 = vst [vmem:[#allocation2 + $0x28] sm:$0xff] %v219
  %416 = vst.msk [vmem:[#allocation2 + $0x30] sm:$0xff] %vm23, %v220
  %417 = vst [vmem:[#allocation2 + $0x38] sm:$0x3f] %v221
  %418 = vst [vmem:[#allocation2 + $0x40] sm:$0x3f] %v222
  %419 = vst [vmem:[#allocation2 + $0x48] sm:$0x3f] %v223
  %420 = vst [vmem:[#allocation2 + $0x50] sm:$0x3f] %v224
  %421 = vst [vmem:[#allocation2 + $0x58] sm:$0x3f] %v225
  %422 = vst [vmem:[#allocation2 + $0x60] sm:$0x3f] %v226
  %vm423 = vcmask 783360
  %424 = vst.msk [vmem:[#allocation2 + $0x68] sm:$0x3f] %vm423, %v227
  %425 = vst [vmem:[#allocation2 + $0x70] sm:$0xff] %v228
  %426 = vst [vmem:[#allocation2 + $0x78] sm:$0xff] %v229
  %427 = vst [vmem:[#allocation2 + $0x80] sm:$0xff] %v230
  %428 = vst [vmem:[#allocation2 + $0x88] sm:$0xff] %v231
  %429 = vst [vmem:[#allocation2 + $0x90] sm:$0xff] %v232
  %430 = vst [vmem:[#allocation2 + $0x98] sm:$0xff] %v233
  %431 = vst.msk [vmem:[#allocation2 + $0xa0] sm:$0xff] %vm23, %v234
  %432 = vst [vmem:[#allocation2 + $0xa8] sm:$0x3f] %v235
  %433 = vst [vmem:[#allocation2 + $0xb0] sm:$0x3f] %v236
  %434 = vst [vmem:[#allocation2 + $0xb8] sm:$0x3f] %v237
  %435 = vst [vmem:[#allocation2 + $0xc0] sm:$0x3f] %v238
  %436 = vst [vmem:[#allocation2 + $0xc8] sm:$0x3f] %v239
  %437 = vst [vmem:[#allocation2 + $0xd0] sm:$0x3f] %v240
  %438 = vst.msk [vmem:[#allocation2 + $0xd8] sm:$0x3f] %vm423, %v241
  %439 = vst [vmem:[#allocation2 + $0xe0] sm:$0xff] %v242
  %440 = vst [vmem:[#allocation2 + $0xe8] sm:$0xff] %v243
  %441 = vst [vmem:[#allocation2 + $0xf0] sm:$0xff] %v244
  %442 = vst [vmem:[#allocation2 + $0xf8] sm:$0xff] %v245
  %443 = vst [vmem:[#allocation2 + $0x100] sm:$0xff] %v246
  %444 = vst [vmem:[#allocation2 + $0x108] sm:$0xff] %v247
  %445 = vst.msk [vmem:[#allocation2 + $0x110] sm:$0xff] %vm23, %v248
  %446 = vst [vmem:[#allocation2 + $0x118] sm:$0x3f] %v249
  %447 = vst [vmem:[#allocation2 + $0x120] sm:$0x3f] %v250
  %448 = vst [vmem:[#allocation2 + $0x128] sm:$0x3f] %v251
  %449 = vst [vmem:[#allocation2 + $0x130] sm:$0x3f] %v252
  %450 = vst [vmem:[#allocation2 + $0x138] sm:$0x3f] %v253
  %451 = vst [vmem:[#allocation2 + $0x140] sm:$0x3f] %v254
  %452 = vst.msk [vmem:[#allocation2 + $0x148] sm:$0x3f] %vm423, %v255
  %453 = vst [vmem:[#allocation2 + $0x150] sm:$0xff] %v256
  %454 = vst [vmem:[#allocation2 + $0x158] sm:$0xff] %v257
  %455 = vst [vmem:[#allocation2 + $0x160] sm:$0xff] %v258
  %456 = vst [vmem:[#allocation2 + $0x168] sm:$0xff] %v259
  %457 = vst [vmem:[#allocation2 + $0x170] sm:$0xff] %v260
  %458 = vst [vmem:[#allocation2 + $0x178] sm:$0xff] %v261
  %459 = vst.msk [vmem:[#allocation2 + $0x180] sm:$0xff] %vm23, %v262
  %460 = vst [vmem:[#allocation2 + $0x188] sm:$0x3f] %v263
  %461 = vst [vmem:[#allocation2 + $0x190] sm:$0x3f] %v264
  %462 = vst [vmem:[#allocation2 + $0x198] sm:$0x3f] %v265
  %463 = vst [vmem:[#allocation2 + $0x1a0] sm:$0x3f] %v266
  %464 = vst [vmem:[#allocation2 + $0x1a8] sm:$0x3f] %v267
  %465 = vst [vmem:[#allocation2 + $0x1b0] sm:$0x3f] %v268
  %466 = vst.msk [vmem:[#allocation2 + $0x1b8] sm:$0x3f] %vm423, %v269
  %467 = vst [vmem:[#allocation2 + $0x1c0] sm:$0xff] %v270
  %468 = vst [vmem:[#allocation2 + $0x1c8] sm:$0xff] %v271
  %469 = vst [vmem:[#allocation2 + $0x1d0] sm:$0xff] %v272
  %470 = vst [vmem:[#allocation2 + $0x1d8] sm:$0xff] %v273
  %471 = vst [vmem:[#allocation2 + $0x1e0] sm:$0xff] %v274
  %472 = vst [vmem:[#allocation2 + $0x1e8] sm:$0xff] %v275
  %473 = vst.msk [vmem:[#allocation2 + $0x1f0] sm:$0xff] %vm23, %v276
  %474 = vst [vmem:[#allocation2 + $0x1f8] sm:$0x3f] %v277
  %475 = vst [vmem:[#allocation2 + $0x200] sm:$0x3f] %v278
  %476 = vst [vmem:[#allocation2 + $0x208] sm:$0x3f] %v279
  %477 = vst [vmem:[#allocation2 + $0x210] sm:$0x3f] %v280
  %478 = vst [vmem:[#allocation2 + $0x218] sm:$0x3f] %v281
  %479 = vst [vmem:[#allocation2 + $0x220] sm:$0x3f] %v282
  %480 = vst.msk [vmem:[#allocation2 + $0x228] sm:$0x3f] %vm423, %v283
  %481 = vst [vmem:[#allocation2 + $0x230] sm:$0xff] %v284
  %482 = vst [vmem:[#allocation2 + $0x238] sm:$0xff] %v285
  %483 = vst [vmem:[#allocation2 + $0x240] sm:$0xff] %v286
  %484 = vst [vmem:[#allocation2 + $0x248] sm:$0xff] %v287
  %485 = vst [vmem:[#allocation2 + $0x250] sm:$0xff] %v288
  %486 = vst [vmem:[#allocation2 + $0x258] sm:$0xff] %v289
  %487 = vst.msk [vmem:[#allocation2 + $0x260] sm:$0xff] %vm23, %v290
  %488 = vst [vmem:[#allocation2 + $0x268] sm:$0x3f] %v291
  %489 = vst [vmem:[#allocation2 + $0x270] sm:$0x3f] %v292
  %490 = vst [vmem:[#allocation2 + $0x278] sm:$0x3f] %v293
  %491 = vst [vmem:[#allocation2 + $0x280] sm:$0x3f] %v294
  %492 = vst [vmem:[#allocation2 + $0x288] sm:$0x3f] %v295
  %493 = vst [vmem:[#allocation2 + $0x290] sm:$0x3f] %v296
  %494 = vst.msk [vmem:[#allocation2 + $0x298] sm:$0x3f] %vm423, %v297
  %495 = vst [vmem:[#allocation2 + $0x2a0] sm:$0xff] %v298
  %496 = vst [vmem:[#allocation2 + $0x2a8] sm:$0xff] %v299
  %497 = vst [vmem:[#allocation2 + $0x2b0] sm:$0xff] %v300
  %498 = vst [vmem:[#allocation2 + $0x2b8] sm:$0xff] %v301
  %499 = vst [vmem:[#allocation2 + $0x2c0] sm:$0xff] %v302
  %500 = vst [vmem:[#allocation2 + $0x2c8] sm:$0xff] %v303
  %501 = vst.msk [vmem:[#allocation2 + $0x2d0] sm:$0xff] %vm23, %v304
  %502 = vst [vmem:[#allocation2 + $0x2d8] sm:$0x3f] %v305
  %503 = vst [vmem:[#allocation2 + $0x2e0] sm:$0x3f] %v306
  %504 = vst [vmem:[#allocation2 + $0x2e8] sm:$0x3f] %v307
  %505 = vst [vmem:[#allocation2 + $0x2f0] sm:$0x3f] %v308
  %506 = vst [vmem:[#allocation2 + $0x2f8] sm:$0x3f] %v309
  %507 = vst [vmem:[#allocation2 + $0x300] sm:$0x3f] %v310
  %508 = vst.msk [vmem:[#allocation2 + $0x308] sm:$0x3f] %vm423, %v311
  %509 = vst [vmem:[#allocation2 + $0x310] sm:$0xff] %v312
  %510 = vst [vmem:[#allocation2 + $0x318] sm:$0xff] %v313
  %511 = vst [vmem:[#allocation2 + $0x320] sm:$0xff] %v314
  %512 = vst [vmem:[#allocation2 + $0x328] sm:$0xff] %v315
  %513 = vst [vmem:[#allocation2 + $0x330] sm:$0xff] %v316
  %514 = vst [vmem:[#allocation2 + $0x338] sm:$0xff] %v317
  %515 = vst.msk [vmem:[#allocation2 + $0x340] sm:$0xff] %vm23, %v318
  %516 = vst [vmem:[#allocation2 + $0x348] sm:$0x3f] %v319
  %517 = vst [vmem:[#allocation2 + $0x350] sm:$0x3f] %v320
  %518 = vst [vmem:[#allocation2 + $0x358] sm:$0x3f] %v321
  %519 = vst [vmem:[#allocation2 + $0x360] sm:$0x3f] %v322
  %520 = vst [vmem:[#allocation2 + $0x368] sm:$0x3f] %v323
  %521 = vst [vmem:[#allocation2 + $0x370] sm:$0x3f] %v324
  %522 = vst.msk [vmem:[#allocation2 + $0x378] sm:$0x3f] %vm423, %v325
  %523 = vst [vmem:[#allocation2 + $0x380] sm:$0xff] %v326
  %524 = vst [vmem:[#allocation2 + $0x388] sm:$0xff] %v327
  %525 = vst [vmem:[#allocation2 + $0x390] sm:$0xff] %v328
  %526 = vst [vmem:[#allocation2 + $0x398] sm:$0xff] %v329
  %527 = vst [vmem:[#allocation2 + $0x3a0] sm:$0xff] %v330
  %528 = vst [vmem:[#allocation2 + $0x3a8] sm:$0xff] %v331
  %529 = vst.msk [vmem:[#allocation2 + $0x3b0] sm:$0xff] %vm23, %v332
  %530 = vst [vmem:[#allocation2 + $0x3b8] sm:$0x3f] %v333
  %531 = vst [vmem:[#allocation2 + $0x3c0] sm:$0x3f] %v334
  %532 = vst [vmem:[#allocation2 + $0x3c8] sm:$0x3f] %v335
  %533 = vst [vmem:[#allocation2 + $0x3d0] sm:$0x3f] %v336
  %534 = vst [vmem:[#allocation2 + $0x3d8] sm:$0x3f] %v337
  %535 = vst [vmem:[#allocation2 + $0x3e0] sm:$0x3f] %v338
  %536 = vst.msk [vmem:[#allocation2 + $0x3e8] sm:$0x3f] %vm423, %v339
  %537 = vst [vmem:[#allocation2 + $0x3f0] sm:$0xff] %v340
  %538 = vst [vmem:[#allocation2 + $0x3f8] sm:$0xff] %v341
  %539 = vst [vmem:[#allocation2 + $0x400] sm:$0xff] %v342
  %540 = vst [vmem:[#allocation2 + $0x408] sm:$0xff] %v343
  %541 = vst [vmem:[#allocation2 + $0x410] sm:$0xff] %v344
  %542 = vst [vmem:[#allocation2 + $0x418] sm:$0xff] %v345
  %543 = vst.msk [vmem:[#allocation2 + $0x420] sm:$0xff] %vm23, %v346
  %544 = vst [vmem:[#allocation2 + $0x428] sm:$0x3f] %v347
  %545 = vst [vmem:[#allocation2 + $0x430] sm:$0x3f] %v348
  %546 = vst [vmem:[#allocation2 + $0x438] sm:$0x3f] %v349
  %547 = vst [vmem:[#allocation2 + $0x440] sm:$0x3f] %v350
  %548 = vst [vmem:[#allocation2 + $0x448] sm:$0x3f] %v351
  %549 = vst [vmem:[#allocation2 + $0x450] sm:$0x3f] %v352
  %550 = vst.msk [vmem:[#allocation2 + $0x458] sm:$0x3f] %vm423, %v353
  %551 = vst [vmem:[#allocation2 + $0x460] sm:$0xff] %v354
  %552 = vst [vmem:[#allocation2 + $0x468] sm:$0xff] %v355
  %553 = vst [vmem:[#allocation2 + $0x470] sm:$0xff] %v356
  %554 = vst [vmem:[#allocation2 + $0x478] sm:$0xff] %v357
  %555 = vst [vmem:[#allocation2 + $0x480] sm:$0xff] %v358
  %556 = vst [vmem:[#allocation2 + $0x488] sm:$0xff] %v359
  %557 = vst.msk [vmem:[#allocation2 + $0x490] sm:$0xff] %vm23, %v360
  %558 = vst [vmem:[#allocation2 + $0x498] sm:$0x3f] %v361
  %559 = vst [vmem:[#allocation2 + $0x4a0] sm:$0x3f] %v362
  %560 = vst [vmem:[#allocation2 + $0x4a8] sm:$0x3f] %v363
  %561 = vst [vmem:[#allocation2 + $0x4b0] sm:$0x3f] %v364
  %562 = vst [vmem:[#allocation2 + $0x4b8] sm:$0x3f] %v365
  %563 = vst [vmem:[#allocation2 + $0x4c0] sm:$0x3f] %v366
  %564 = vst.msk [vmem:[#allocation2 + $0x4c8] sm:$0x3f] %vm423, %v367
  %565 = vst [vmem:[#allocation2 + $0x4d0] sm:$0xff] %v368
  %566 = vst [vmem:[#allocation2 + $0x4d8] sm:$0xff] %v369
  %567 = vst [vmem:[#allocation2 + $0x4e0] sm:$0xff] %v370
  %568 = vst [vmem:[#allocation2 + $0x4e8] sm:$0xff] %v371
  %569 = vst [vmem:[#allocation2 + $0x4f0] sm:$0xff] %v372
  %570 = vst [vmem:[#allocation2 + $0x4f8] sm:$0xff] %v373
  %571 = vst.msk [vmem:[#allocation2 + $0x500] sm:$0xff] %vm23, %v374
  %572 = vst [vmem:[#allocation2 + $0x508] sm:$0x3f] %v375
  %573 = vst [vmem:[#allocation2 + $0x510] sm:$0x3f] %v376
  %574 = vst [vmem:[#allocation2 + $0x518] sm:$0x3f] %v377
  %575 = vst [vmem:[#allocation2 + $0x520] sm:$0x3f] %v378
  %576 = vst [vmem:[#allocation2 + $0x528] sm:$0x3f] %v379
  %577 = vst [vmem:[#allocation2 + $0x530] sm:$0x3f] %v380
  %578 = vst.msk [vmem:[#allocation2 + $0x538] sm:$0x3f] %vm423, %v381
  %579 = vst [vmem:[#allocation2 + $0x540] sm:$0xff] %v382
  %580 = vst [vmem:[#allocation2 + $0x548] sm:$0xff] %v383
  %581 = vst [vmem:[#allocation2 + $0x550] sm:$0xff] %v384
  %582 = vst [vmem:[#allocation2 + $0x558] sm:$0xff] %v385
  %583 = vst [vmem:[#allocation2 + $0x560] sm:$0xff] %v386
  %584 = vst [vmem:[#allocation2 + $0x568] sm:$0xff] %v387
  %585 = vst.msk [vmem:[#allocation2 + $0x570] sm:$0xff] %vm23, %v388
  %586 = vst [vmem:[#allocation2 + $0x578] sm:$0x3f] %v389
  %587 = vst [vmem:[#allocation2 + $0x580] sm:$0x3f] %v390
  %588 = vst [vmem:[#allocation2 + $0x588] sm:$0x3f] %v391
  %589 = vst [vmem:[#allocation2 + $0x590] sm:$0x3f] %v392
  %590 = vst [vmem:[#allocation2 + $0x598] sm:$0x3f] %v393
  %591 = vst [vmem:[#allocation2 + $0x5a0] sm:$0x3f] %v394
  %592 = vst.msk [vmem:[#allocation2 + $0x5a8] sm:$0x3f] %vm423, %v395
  %593 = vst [vmem:[#allocation2 + $0x5b0] sm:$0xff] %v396
  %594 = vst [vmem:[#allocation2 + $0x5b8] sm:$0xff] %v397
  %595 = vst [vmem:[#allocation2 + $0x5c0] sm:$0xff] %v398
  %596 = vst [vmem:[#allocation2 + $0x5c8] sm:$0xff] %v399
  %597 = vst [vmem:[#allocation2 + $0x5d0] sm:$0xff] %v400
  %598 = vst [vmem:[#allocation2 + $0x5d8] sm:$0xff] %v401
  %599 = vst.msk [vmem:[#allocation2 + $0x5e0] sm:$0xff] %vm23, %v402
  %600 = vst [vmem:[#allocation2 + $0x5e8] sm:$0x3f] %v403
  %601 = vst [vmem:[#allocation2 + $0x5f0] sm:$0x3f] %v404
  %602 = vst [vmem:[#allocation2 + $0x5f8] sm:$0x3f] %v405
  %603 = vst [vmem:[#allocation2 + $0x600] sm:$0x3f] %v406
  %604 = vst [vmem:[#allocation2 + $0x608] sm:$0x3f] %v407
  %605 = vst [vmem:[#allocation2 + $0x610] sm:$0x3f] %v408
  %606 = vst.msk [vmem:[#allocation2 + $0x618] sm:$0x3f] %vm423, %v409
  %v607 = vld [vmem:[%s1] sm:$0xff]
  %v608 = vld [vmem:[%s1 + $0x8] sm:$0xff]
  %v609 = vld [vmem:[%s1 + $0x10] sm:$0xff]
  %v610 = vld [vmem:[%s1 + $0x18] sm:$0xff]
  %v611 = vld [vmem:[%s1 + $0x20] sm:$0xff]
  %v612 = vld [vmem:[%s1 + $0x28] sm:$0xff]
  %v613 = vld [vmem:[%s1 + $0x30] sm:$0xff]
  %v614 = vld [vmem:[%s1 + $0x38] sm:$0x1]
  %v615 = vld [vmem:[%s1 + $0x40] sm:$0x1]
  %v616 = vld [vmem:[%s1 + $0x48] sm:$0x1]
  %v617 = vld [vmem:[%s1 + $0x50] sm:$0x1]
  %v618 = vld [vmem:[%s1 + $0x58] sm:$0x1]
  %v619 = vld [vmem:[%s1 + $0x60] sm:$0x1]
  %v620 = vld [vmem:[%s1 + $0x68] sm:$0x1]
  %v621 = vld [vmem:[#allocation2] sm:$0xff]
  %v622 = vld [vmem:[#allocation2 + $0x8] sm:$0xff]
  %v623 = vld [vmem:[#allocation2 + $0x10] sm:$0xff]
  %v624 = vld [vmem:[#allocation2 + $0x18] sm:$0xff]
  %v625 = vld [vmem:[#allocation2 + $0x20] sm:$0xff]
  %v626 = vld [vmem:[#allocation2 + $0x28] sm:$0xff]
  %v627 = vld [vmem:[#allocation2 + $0x30] sm:$0xff]
  %v628 = vld [vmem:[#allocation2 + $0x38] sm:$0xff]
  %v629 = vld [vmem:[#allocation2 + $0x40] sm:$0xff]
  %v630 = vld [vmem:[#allocation2 + $0x48] sm:$0xff]
  %v631 = vld [vmem:[#allocation2 + $0x50] sm:$0xff]
  %v632 = vld [vmem:[#allocation2 + $0x58] sm:$0xff]
  %v633 = vld [vmem:[#allocation2 + $0x60] sm:$0xff]
  %v634 = vld [vmem:[#allocation2 + $0x68] sm:$0xff]
  %v635 = vrot.slane %v621, 7
  %v636 = vrot.slane %v622, 7
  %v637 = vrot.slane %v623, 7
  %v638 = vrot.slane %v624, 7
  %v639 = vrot.slane %v625, 7
  %v640 = vrot.slane %v626, 7
  %v641 = vrot.slane %v627, 7
  %v642 = vrot.slane %v628, 7
  %v643 = vrot.slane %v629, 7
  %v644 = vrot.slane %v630, 7
  %v645 = vrot.slane %v631, 7
  %v646 = vrot.slane %v632, 7
  %v647 = vrot.slane %v633, 7
  %v648 = vrot.slane %v634, 7
  %v649 = vlaneseq
  %v650 = vshrl.u32 %v649, 7
  %vm651 = vcmp.lt.s32.totalorder %v650, 1
  %v652 = vsel %vm651, %v635, %v642
  %v653 = vsel %vm651, %v636, %v643
  %v654 = vsel %vm651, %v637, %v644
  %v655 = vsel %vm651, %v638, %v645
  %v656 = vsel %vm651, %v639, %v646
  %v657 = vsel %vm651, %v640, %v647
  %v658 = vsel %vm651, %v641, %v648
  %v659 = vsel %vm651, %v642, %v635
  %v660 = vsel %vm651, %v643, %v636
  %v661 = vsel %vm651, %v644, %v637
  %v662 = vsel %vm651, %v645, %v638
  %v663 = vsel %vm651, %v646, %v639
  %v664 = vsel %vm651, %v647, %v640
  %v665 = vsel %vm651, %v648, %v641
  %v666 = vlaneseq
  %v667 = vshrl.u32 %v666, 7
  %v668 = vsub.s32 3, %v667
  %v669 = vrot.slane %v607, %v668
  %v670 = vlaneseq
  %v671 = vshrl.u32 %v670, 7
  %v672 = vsub.s32 3, %v671
  %v673 = vrot.slane %v608, %v672
  %v674 = vlaneseq
  %v675 = vshrl.u32 %v674, 7
  %v676 = vsub.s32 3, %v675
  %v677 = vrot.slane %v609, %v676
  %v678 = vlaneseq
  %v679 = vshrl.u32 %v678, 7
  %v680 = vsub.s32 3, %v679
  %v681 = vrot.slane %v610, %v680
  %v682 = vlaneseq
  %v683 = vshrl.u32 %v682, 7
  %v684 = vsub.s32 3, %v683
  %v685 = vrot.slane %v611, %v684
  %v686 = vlaneseq
  %v687 = vshrl.u32 %v686, 7
  %v688 = vsub.s32 3, %v687
  %v689 = vrot.slane %v612, %v688
  %v690 = vlaneseq
  %v691 = vshrl.u32 %v690, 7
  %v692 = vsub.s32 3, %v691
  %v693 = vrot.slane %v613, %v692
  %v694 = vmul.f32 %v659, %v669
  %v695 = vmul.f32 %v660, %v673
  %v696 = vmul.f32 %v661, %v677
  %v697 = vmul.f32 %v662, %v681
  %v698 = vmul.f32 %v663, %v685
  %v699 = vmul.f32 %v664, %v689
  %v700 = vmul.f32 %v665, %v693
  %v701 = vmul.f32 %v652, %v669
  %v702 = vmul.f32 %v653, %v673
  %v703 = vmul.f32 %v654, %v677
  %v704 = vmul.f32 %v655, %v681
  %v705 = vmul.f32 %v656, %v685
  %v706 = vmul.f32 %v657, %v689
  %v707 = vmul.f32 %v658, %v693
  %v708 = vadd.f32 %v694, 0.0
  %v709 = vadd.f32 %v695, 0.0
  %v710 = vadd.f32 %v696, 0.0
  %v711 = vadd.f32 %v697, 0.0
  %v712 = vadd.f32 %v698, 0.0
  %v713 = vadd.f32 %v699, 0.0
  %v714 = vadd.f32 %v700, 0.0
  %v715 = vadd.f32 %v701, 0.0
  %v716 = vadd.f32 %v702, 0.0
  %v717 = vadd.f32 %v703, 0.0
  %v718 = vadd.f32 %v704, 0.0
  %v719 = vadd.f32 %v705, 0.0
  %v720 = vadd.f32 %v706, 0.0
  %v721 = vadd.f32 %v707, 0.0
  %v722 = vlaneseq
  %v723 = vshrl.u32 %v722, 7
  %v724 = vsub.s32 4, %v723
  %v725 = vrot.slane %v607, %v724
  %v726 = vlaneseq
  %v727 = vshrl.u32 %v726, 7
  %v728 = vsub.s32 4, %v727
  %v729 = vrot.slane %v608, %v728
  %v730 = vlaneseq
  %v731 = vshrl.u32 %v730, 7
  %v732 = vsub.s32 4, %v731
  %v733 = vrot.slane %v609, %v732
  %v734 = vlaneseq
  %v735 = vshrl.u32 %v734, 7
  %v736 = vsub.s32 4, %v735
  %v737 = vrot.slane %v610, %v736
  %v738 = vlaneseq
  %v739 = vshrl.u32 %v738, 7
  %v740 = vsub.s32 4, %v739
  %v741 = vrot.slane %v611, %v740
  %v742 = vlaneseq
  %v743 = vshrl.u32 %v742, 7
  %v744 = vsub.s32 4, %v743
  %v745 = vrot.slane %v612, %v744
  %v746 = vlaneseq
  %v747 = vshrl.u32 %v746, 7
  %v748 = vsub.s32 4, %v747
  %v749 = vrot.slane %v613, %v748
  %v750 = vmul.f32 %v621, %v725
  %v751 = vmul.f32 %v622, %v729
  %v752 = vmul.f32 %v623, %v733
  %v753 = vmul.f32 %v624, %v737
  %v754 = vmul.f32 %v625, %v741
  %v755 = vmul.f32 %v626, %v745
  %v756 = vmul.f32 %v627, %v749
  %v757 = vmul.f32 %v628, %v725
  %v758 = vmul.f32 %v629, %v729
  %v759 = vmul.f32 %v630, %v733
  %v760 = vmul.f32 %v631, %v737
  %v761 = vmul.f32 %v632, %v741
  %v762 = vmul.f32 %v633, %v745
  %v763 = vmul.f32 %v634, %v749
  %v764 = vadd.f32 %v708, %v750
  %v765 = vadd.f32 %v709, %v751
  %v766 = vadd.f32 %v710, %v752
  %v767 = vadd.f32 %v711, %v753
  %v768 = vadd.f32 %v712, %v754
  %v769 = vadd.f32 %v713, %v755
  %v770 = vadd.f32 %v714, %v756
  %v771 = vadd.f32 %v715, %v757
  %v772 = vadd.f32 %v716, %v758
  %v773 = vadd.f32 %v717, %v759
  %v774 = vadd.f32 %v718, %v760
  %v775 = vadd.f32 %v719, %v761
  %v776 = vadd.f32 %v720, %v762
  %v777 = vadd.f32 %v721, %v763
  %v778 = vrot.slane %v621, 1
  %v779 = vrot.slane %v622, 1
  %v780 = vrot.slane %v623, 1
  %v781 = vrot.slane %v624, 1
  %v782 = vrot.slane %v625, 1
  %v783 = vrot.slane %v626, 1
  %v784 = vrot.slane %v627, 1
  %v785 = vrot.slane %v628, 1
  %v786 = vrot.slane %v629, 1
  %v787 = vrot.slane %v630, 1
  %v788 = vrot.slane %v631, 1
  %v789 = vrot.slane %v632, 1
  %v790 = vrot.slane %v633, 1
  %v791 = vrot.slane %v634, 1
  %vm792 = vcmp.lt.s32.totalorder %v650, 7
  %v793 = vsel %vm792, %v778, %v785
  %v794 = vsel %vm792, %v779, %v786
  %v795 = vsel %vm792, %v780, %v787
  %v796 = vsel %vm792, %v781, %v788
  %v797 = vsel %vm792, %v782, %v789
  %v798 = vsel %vm792, %v783, %v790
  %v799 = vsel %vm792, %v784, %v791
  %v800 = vsel %vm792, %v785, %v778
  %v801 = vsel %vm792, %v786, %v779
  %v802 = vsel %vm792, %v787, %v780
  %v803 = vsel %vm792, %v788, %v781
  %v804 = vsel %vm792, %v789, %v782
  %v805 = vsel %vm792, %v790, %v783
  %v806 = vsel %vm792, %v791, %v784
  %v807 = vlaneseq
  %v808 = vshrl.u32 %v807, 7
  %v809 = vsub.s32 5, %v808
  %v810 = vrot.slane %v607, %v809
  %v811 = vlaneseq
  %v812 = vshrl.u32 %v811, 7
  %v813 = vsub.s32 5, %v812
  %v814 = vrot.slane %v608, %v813
  %v815 = vlaneseq
  %v816 = vshrl.u32 %v815, 7
  %v817 = vsub.s32 5, %v816
  %v818 = vrot.slane %v609, %v817
  %v819 = vlaneseq
  %v820 = vshrl.u32 %v819, 7
  %v821 = vsub.s32 5, %v820
  %v822 = vrot.slane %v610, %v821
  %v823 = vlaneseq
  %v824 = vshrl.u32 %v823, 7
  %v825 = vsub.s32 5, %v824
  %v826 = vrot.slane %v611, %v825
  %v827 = vlaneseq
  %v828 = vshrl.u32 %v827, 7
  %v829 = vsub.s32 5, %v828
  %v830 = vrot.slane %v612, %v829
  %v831 = vlaneseq
  %v832 = vshrl.u32 %v831, 7
  %v833 = vsub.s32 5, %v832
  %v834 = vrot.slane %v613, %v833
  %v835 = vmul.f32 %v793, %v810
  %v836 = vmul.f32 %v794, %v814
  %v837 = vmul.f32 %v795, %v818
  %v838 = vmul.f32 %v796, %v822
  %v839 = vmul.f32 %v797, %v826
  %v840 = vmul.f32 %v798, %v830
  %v841 = vmul.f32 %v799, %v834
  %v842 = vmul.f32 %v800, %v810
  %v843 = vmul.f32 %v801, %v814
  %v844 = vmul.f32 %v802, %v818
  %v845 = vmul.f32 %v803, %v822
  %v846 = vmul.f32 %v804, %v826
  %v847 = vmul.f32 %v805, %v830
  %v848 = vmul.f32 %v806, %v834
  %v849 = vadd.f32 %v764, %v835
  %v850 = vadd.f32 %v765, %v836
  %v851 = vadd.f32 %v766, %v837
  %v852 = vadd.f32 %v767, %v838
  %v853 = vadd.f32 %v768, %v839
  %v854 = vadd.f32 %v769, %v840
  %v855 = vadd.f32 %v770, %v841
  %v856 = vadd.f32 %v771, %v842
  %v857 = vadd.f32 %v772, %v843
  %v858 = vadd.f32 %v773, %v844
  %v859 = vadd.f32 %v774, %v845
  %v860 = vadd.f32 %v775, %v846
  %v861 = vadd.f32 %v776, %v847
  %v862 = vadd.f32 %v777, %v848
  %s863 = scalar_lea.vmem [#allocation2], 112
  %v864 = vld [vmem:[%s863] sm:$0xff]
  %v865 = vld [vmem:[%s863 + $0x8] sm:$0xff]
  %v866 = vld [vmem:[%s863 + $0x10] sm:$0xff]
  %v867 = vld [vmem:[%s863 + $0x18] sm:$0xff]
  %v868 = vld [vmem:[%s863 + $0x20] sm:$0xff]
  %v869 = vld [vmem:[%s863 + $0x28] sm:$0xff]
  %v870 = vld [vmem:[%s863 + $0x30] sm:$0xff]
  %v871 = vld [vmem:[%s863 + $0x38] sm:$0xff]
  %v872 = vld [vmem:[%s863 + $0x40] sm:$0xff]
  %v873 = vld [vmem:[%s863 + $0x48] sm:$0xff]
  %v874 = vld [vmem:[%s863 + $0x50] sm:$0xff]
  %v875 = vld [vmem:[%s863 + $0x58] sm:$0xff]
  %v876 = vld [vmem:[%s863 + $0x60] sm:$0xff]
  %v877 = vld [vmem:[%s863 + $0x68] sm:$0xff]
  %v878 = vrot.slane %v864, 7
  %v879 = vrot.slane %v865, 7
  %v880 = vrot.slane %v866, 7
  %v881 = vrot.slane %v867, 7
  %v882 = vrot.slane %v868, 7
  %v883 = vrot.slane %v869, 7
  %v884 = vrot.slane %v870, 7
  %v885 = vrot.slane %v871, 7
  %v886 = vrot.slane %v872, 7
  %v887 = vrot.slane %v873, 7
  %v888 = vrot.slane %v874, 7
  %v889 = vrot.slane %v875, 7
  %v890 = vrot.slane %v876, 7
  %v891 = vrot.slane %v877, 7
  %v892 = vsel %vm651, %v878, %v885
  %v893 = vsel %vm651, %v879, %v886
  %v894 = vsel %vm651, %v880, %v887
  %v895 = vsel %vm651, %v881, %v888
  %v896 = vsel %vm651, %v882, %v889
  %v897 = vsel %vm651, %v883, %v890
  %v898 = vsel %vm651, %v884, %v891
  %v899 = vsel %vm651, %v885, %v878
  %v900 = vsel %vm651, %v886, %v879
  %v901 = vsel %vm651, %v887, %v880
  %v902 = vsel %vm651, %v888, %v881
  %v903 = vsel %vm651, %v889, %v882
  %v904 = vsel %vm651, %v890, %v883
  %v905 = vsel %vm651, %v891, %v884
  %v906 = vlaneseq
  %v907 = vshrl.u32 %v906, 7
  %v908 = vsub.s32 6, %v907
  %v909 = vrot.slane %v607, %v908
  %v910 = vlaneseq
  %v911 = vshrl.u32 %v910, 7
  %v912 = vsub.s32 6, %v911
  %v913 = vrot.slane %v608, %v912
  %v914 = vlaneseq
  %v915 = vshrl.u32 %v914, 7
  %v916 = vsub.s32 6, %v915
  %v917 = vrot.slane %v609, %v916
  %v918 = vlaneseq
  %v919 = vshrl.u32 %v918, 7
  %v920 = vsub.s32 6, %v919
  %v921 = vrot.slane %v610, %v920
  %v922 = vlaneseq
  %v923 = vshrl.u32 %v922, 7
  %v924 = vsub.s32 6, %v923
  %v925 = vrot.slane %v611, %v924
  %v926 = vlaneseq
  %v927 = vshrl.u32 %v926, 7
  %v928 = vsub.s32 6, %v927
  %v929 = vrot.slane %v612, %v928
  %v930 = vlaneseq
  %v931 = vshrl.u32 %v930, 7
  %v932 = vsub.s32 6, %v931
  %v933 = vrot.slane %v613, %v932
  %v934 = vmul.f32 %v899, %v909
  %v935 = vmul.f32 %v900, %v913
  %v936 = vmul.f32 %v901, %v917
  %v937 = vmul.f32 %v902, %v921
  %v938 = vmul.f32 %v903, %v925
  %v939 = vmul.f32 %v904, %v929
  %v940 = vmul.f32 %v905, %v933
  %v941 = vmul.f32 %v892, %v909
  %v942 = vmul.f32 %v893, %v913
  %v943 = vmul.f32 %v894, %v917
  %v944 = vmul.f32 %v895, %v921
  %v945 = vmul.f32 %v896, %v925
  %v946 = vmul.f32 %v897, %v929
  %v947 = vmul.f32 %v898, %v933
  %v948 = vadd.f32 %v849, %v934
  %v949 = vadd.f32 %v850, %v935
  %v950 = vadd.f32 %v851, %v936
  %v951 = vadd.f32 %v852, %v937
  %v952 = vadd.f32 %v853, %v938
  %v953 = vadd.f32 %v854, %v939
  %v954 = vadd.f32 %v855, %v940
  %v955 = vadd.f32 %v856, %v941
  %v956 = vadd.f32 %v857, %v942
  %v957 = vadd.f32 %v858, %v943
  %v958 = vadd.f32 %v859, %v944
  %v959 = vadd.f32 %v860, %v945
  %v960 = vadd.f32 %v861, %v946
  %v961 = vadd.f32 %v862, %v947
  %v962 = vlaneseq
  %v963 = vshrl.u32 %v962, 7
  %v964 = vsub.s32 7, %v963
  %v965 = vrot.slane %v607, %v964
  %v966 = vlaneseq
  %v967 = vshrl.u32 %v966, 7
  %v968 = vsub.s32 7, %v967
  %v969 = vrot.slane %v608, %v968
  %v970 = vlaneseq
  %v971 = vshrl.u32 %v970, 7
  %v972 = vsub.s32 7, %v971
  %v973 = vrot.slane %v609, %v972
  %v974 = vlaneseq
  %v975 = vshrl.u32 %v974, 7
  %v976 = vsub.s32 7, %v975
  %v977 = vrot.slane %v610, %v976
  %v978 = vlaneseq
  %v979 = vshrl.u32 %v978, 7
  %v980 = vsub.s32 7, %v979
  %v981 = vrot.slane %v611, %v980
  %v982 = vlaneseq
  %v983 = vshrl.u32 %v982, 7
  %v984 = vsub.s32 7, %v983
  %v985 = vrot.slane %v612, %v984
  %v986 = vlaneseq
  %v987 = vshrl.u32 %v986, 7
  %v988 = vsub.s32 7, %v987
  %v989 = vrot.slane %v613, %v988
  %v990 = vmul.f32 %v864, %v965
  %v991 = vmul.f32 %v865, %v969
  %v992 = vmul.f32 %v866, %v973
  %v993 = vmul.f32 %v867, %v977
  %v994 = vmul.f32 %v868, %v981
  %v995 = vmul.f32 %v869, %v985
  %v996 = vmul.f32 %v870, %v989
  %v997 = vmul.f32 %v871, %v965
  %v998 = vmul.f32 %v872, %v969
  %v999 = vmul.f32 %v873, %v973
  %v1000 = vmul.f32 %v874, %v977
  %v1001 = vmul.f32 %v875, %v981
  %v1002 = vmul.f32 %v876, %v985
  %v1003 = vmul.f32 %v877, %v989
  %v1004 = vadd.f32 %v948, %v990
  %v1005 = vadd.f32 %v949, %v991
  %v1006 = vadd.f32 %v950, %v992
  %v1007 = vadd.f32 %v951, %v993
  %v1008 = vadd.f32 %v952, %v994
  %v1009 = vadd.f32 %v953, %v995
  %v1010 = vadd.f32 %v954, %v996
  %v1011 = vadd.f32 %v955, %v997
  %v1012 = vadd.f32 %v956, %v998
  %v1013 = vadd.f32 %v957, %v999
  %v1014 = vadd.f32 %v958, %v1000
  %v1015 = vadd.f32 %v959, %v1001
  %v1016 = vadd.f32 %v960, %v1002
  %v1017 = vadd.f32 %v961, %v1003
  %v1018 = vrot.slane %v864, 1
  %v1019 = vrot.slane %v865, 1
  %v1020 = vrot.slane %v866, 1
  %v1021 = vrot.slane %v867, 1
  %v1022 = vrot.slane %v868, 1
  %v1023 = vrot.slane %v869, 1
  %v1024 = vrot.slane %v870, 1
  %v1025 = vrot.slane %v871, 1
  %v1026 = vrot.slane %v872, 1
  %v1027 = vrot.slane %v873, 1
  %v1028 = vrot.slane %v874, 1
  %v1029 = vrot.slane %v875, 1
  %v1030 = vrot.slane %v876, 1
  %v1031 = vrot.slane %v877, 1
  %v1032 = vsel %vm792, %v1018, %v1025
  %v1033 = vsel %vm792, %v1019, %v1026
  %v1034 = vsel %vm792, %v1020, %v1027
  %v1035 = vsel %vm792, %v1021, %v1028
  %v1036 = vsel %vm792, %v1022, %v1029
  %v1037 = vsel %vm792, %v1023, %v1030
  %v1038 = vsel %vm792, %v1024, %v1031
  %v1039 = vsel %vm792, %v1025, %v1018
  %v1040 = vsel %vm792, %v1026, %v1019
  %v1041 = vsel %vm792, %v1027, %v1020
  %v1042 = vsel %vm792, %v1028, %v1021
  %v1043 = vsel %vm792, %v1029, %v1022
  %v1044 = vsel %vm792, %v1030, %v1023
  %v1045 = vsel %vm792, %v1031, %v1024
  %v1046 = vlaneseq
  %v1047 = vshrl.u32 %v1046, 7
  %v1048 = vsub.s32 0, %v1047
  %v1049 = vrot.slane %v614, %v1048
  %v1050 = vlaneseq
  %v1051 = vshrl.u32 %v1050, 7
  %v1052 = vsub.s32 0, %v1051
  %v1053 = vrot.slane %v615, %v1052
  %v1054 = vlaneseq
  %v1055 = vshrl.u32 %v1054, 7
  %v1056 = vsub.s32 0, %v1055
  %v1057 = vrot.slane %v616, %v1056
  %v1058 = vlaneseq
  %v1059 = vshrl.u32 %v1058, 7
  %v1060 = vsub.s32 0, %v1059
  %v1061 = vrot.slane %v617, %v1060
  %v1062 = vlaneseq
  %v1063 = vshrl.u32 %v1062, 7
  %v1064 = vsub.s32 0, %v1063
  %v1065 = vrot.slane %v618, %v1064
  %v1066 = vlaneseq
  %v1067 = vshrl.u32 %v1066, 7
  %v1068 = vsub.s32 0, %v1067
  %v1069 = vrot.slane %v619, %v1068
  %v1070 = vlaneseq
  %v1071 = vshrl.u32 %v1070, 7
  %v1072 = vsub.s32 0, %v1071
  %v1073 = vrot.slane %v620, %v1072
  %v1074 = vmul.f32 %v1032, %v1049
  %v1075 = vmul.f32 %v1033, %v1053
  %v1076 = vmul.f32 %v1034, %v1057
  %v1077 = vmul.f32 %v1035, %v1061
  %v1078 = vmul.f32 %v1036, %v1065
  %v1079 = vmul.f32 %v1037, %v1069
  %v1080 = vmul.f32 %v1038, %v1073
  %v1081 = vmul.f32 %v1039, %v1049
  %v1082 = vmul.f32 %v1040, %v1053
  %v1083 = vmul.f32 %v1041, %v1057
  %v1084 = vmul.f32 %v1042, %v1061
  %v1085 = vmul.f32 %v1043, %v1065
  %v1086 = vmul.f32 %v1044, %v1069
  %v1087 = vmul.f32 %v1045, %v1073
  %v1088 = vadd.f32 %v1004, %v1074
  %v1089 = vadd.f32 %v1005, %v1075
  %v1090 = vadd.f32 %v1006, %v1076
  %v1091 = vadd.f32 %v1007, %v1077
  %v1092 = vadd.f32 %v1008, %v1078
  %v1093 = vadd.f32 %v1009, %v1079
  %v1094 = vadd.f32 %v1010, %v1080
  %v1095 = vadd.f32 %v1011, %v1081
  %v1096 = vadd.f32 %v1012, %v1082
  %v1097 = vadd.f32 %v1013, %v1083
  %v1098 = vadd.f32 %v1014, %v1084
  %v1099 = vadd.f32 %v1015, %v1085
  %v1100 = vadd.f32 %v1016, %v1086
  %v1101 = vadd.f32 %v1017, %v1087
  %1102 = vst [vmem:[#allocation3] sm:$0xff] %v1088
  %1103 = vst [vmem:[#allocation3 + $0x8] sm:$0xff] %v1089
  %1104 = vst [vmem:[#allocation3 + $0x10] sm:$0xff] %v1090
  %1105 = vst [vmem:[#allocation3 + $0x18] sm:$0xff] %v1091
  %1106 = vst [vmem:[#allocation3 + $0x20] sm:$0xff] %v1092
  %1107 = vst [vmem:[#allocation3 + $0x28] sm:$0xff] %v1093
  %1108 = vst.msk [vmem:[#allocation3 + $0x30] sm:$0xff] %vm23, %v1094
  %1109 = vst [vmem:[#allocation3 + $0x38] sm:$0xff] %v1095
  %1110 = vst [vmem:[#allocation3 + $0x40] sm:$0xff] %v1096
  %1111 = vst [vmem:[#allocation3 + $0x48] sm:$0xff] %v1097
  %1112 = vst [vmem:[#allocation3 + $0x50] sm:$0xff] %v1098
  %1113 = vst [vmem:[#allocation3 + $0x58] sm:$0xff] %v1099
  %1114 = vst [vmem:[#allocation3 + $0x60] sm:$0xff] %v1100
  %1115 = vst.msk [vmem:[#allocation3 + $0x68] sm:$0xff] %vm23, %v1101
  %v1116 = vld [vmem:[#allocation2] sm:$0xff]
  %v1117 = vld [vmem:[#allocation2 + $0x8] sm:$0xff]
  %v1118 = vld [vmem:[#allocation2 + $0x10] sm:$0xff]
  %v1119 = vld [vmem:[#allocation2 + $0x18] sm:$0xff]
  %v1120 = vld [vmem:[#allocation2 + $0x20] sm:$0xff]
  %v1121 = vld [vmem:[#allocation2 + $0x28] sm:$0xff]
  %v1122 = vld [vmem:[#allocation2 + $0x30] sm:$0xff]
  %v1123 = vld [vmem:[#allocation2 + $0x38] sm:$0xff]
  %v1124 = vld [vmem:[#allocation2 + $0x40] sm:$0xff]
  %v1125 = vld [vmem:[#allocation2 + $0x48] sm:$0xff]
  %v1126 = vld [vmem:[#allocation2 + $0x50] sm:$0xff]
  %v1127 = vld [vmem:[#allocation2 + $0x58] sm:$0xff]
  %v1128 = vld [vmem:[#allocation2 + $0x60] sm:$0xff]
  %v1129 = vld [vmem:[#allocation2 + $0x68] sm:$0xff]
  %v1130 = vrot.slane %v1116, 7
  %v1131 = vrot.slane %v1117, 7
  %v1132 = vrot.slane %v1118, 7
  %v1133 = vrot.slane %v1119, 7
  %v1134 = vrot.slane %v1120, 7
  %v1135 = vrot.slane %v1121, 7
  %v1136 = vrot.slane %v1122, 7
  %v1137 = vrot.slane %v1123, 7
  %v1138 = vrot.slane %v1124, 7
  %v1139 = vrot.slane %v1125, 7
  %v1140 = vrot.slane %v1126, 7
  %v1141 = vrot.slane %v1127, 7
  %v1142 = vrot.slane %v1128, 7
  %v1143 = vrot.slane %v1129, 7
  %v1144 = vsel %vm651, %v1130, %v1137
  %v1145 = vsel %vm651, %v1131, %v1138
  %v1146 = vsel %vm651, %v1132, %v1139
  %v1147 = vsel %vm651, %v1133, %v1140
  %v1148 = vsel %vm651, %v1134, %v1141
  %v1149 = vsel %vm651, %v1135, %v1142
  %v1150 = vsel %vm651, %v1136, %v1143
  %v1151 = vsel %vm651, %v1137, %v1130
  %v1152 = vsel %vm651, %v1138, %v1131
  %v1153 = vsel %vm651, %v1139, %v1132
  %v1154 = vsel %vm651, %v1140, %v1133
  %v1155 = vsel %vm651, %v1141, %v1134
  %v1156 = vsel %vm651, %v1142, %v1135
  %v1157 = vsel %vm651, %v1143, %v1136
  %v1158 = vlaneseq
  %v1159 = vshrl.u32 %v1158, 7
  %v1160 = vsub.s32 0, %v1159
  %v1161 = vrot.slane %v607, %v1160
  %v1162 = vlaneseq
  %v1163 = vshrl.u32 %v1162, 7
  %v1164 = vsub.s32 0, %v1163
  %v1165 = vrot.slane %v608, %v1164
  %v1166 = vlaneseq
  %v1167 = vshrl.u32 %v1166, 7
  %v1168 = vsub.s32 0, %v1167
  %v1169 = vrot.slane %v609, %v1168
  %v1170 = vlaneseq
  %v1171 = vshrl.u32 %v1170, 7
  %v1172 = vsub.s32 0, %v1171
  %v1173 = vrot.slane %v610, %v1172
  %v1174 = vlaneseq
  %v1175 = vshrl.u32 %v1174, 7
  %v1176 = vsub.s32 0, %v1175
  %v1177 = vrot.slane %v611, %v1176
  %v1178 = vlaneseq
  %v1179 = vshrl.u32 %v1178, 7
  %v1180 = vsub.s32 0, %v1179
  %v1181 = vrot.slane %v612, %v1180
  %v1182 = vlaneseq
  %v1183 = vshrl.u32 %v1182, 7
  %v1184 = vsub.s32 0, %v1183
  %v1185 = vrot.slane %v613, %v1184
  %v1186 = vmul.f32 %v1151, %v1161
  %v1187 = vmul.f32 %v1152, %v1165
  %v1188 = vmul.f32 %v1153, %v1169
  %v1189 = vmul.f32 %v1154, %v1173
  %v1190 = vmul.f32 %v1155, %v1177
  %v1191 = vmul.f32 %v1156, %v1181
  %v1192 = vmul.f32 %v1157, %v1185
  %v1193 = vmul.f32 %v1144, %v1161
  %v1194 = vmul.f32 %v1145, %v1165
  %v1195 = vmul.f32 %v1146, %v1169
  %v1196 = vmul.f32 %v1147, %v1173
  %v1197 = vmul.f32 %v1148, %v1177
  %v1198 = vmul.f32 %v1149, %v1181
  %v1199 = vmul.f32 %v1150, %v1185
  %v1200 = vadd.f32 %v1186, 0.0
  %v1201 = vadd.f32 %v1187, 0.0
  %v1202 = vadd.f32 %v1188, 0.0
  %v1203 = vadd.f32 %v1189, 0.0
  %v1204 = vadd.f32 %v1190, 0.0
  %v1205 = vadd.f32 %v1191, 0.0
  %v1206 = vadd.f32 %v1192, 0.0
  %v1207 = vadd.f32 %v1193, 0.0
  %v1208 = vadd.f32 %v1194, 0.0
  %v1209 = vadd.f32 %v1195, 0.0
  %v1210 = vadd.f32 %v1196, 0.0
  %v1211 = vadd.f32 %v1197, 0.0
  %v1212 = vadd.f32 %v1198, 0.0
  %v1213 = vadd.f32 %v1199, 0.0
  %v1214 = vlaneseq
  %v1215 = vshrl.u32 %v1214, 7
  %v1216 = vsub.s32 1, %v1215
  %v1217 = vrot.slane %v607, %v1216
  %v1218 = vlaneseq
  %v1219 = vshrl.u32 %v1218, 7
  %v1220 = vsub.s32 1, %v1219
  %v1221 = vrot.slane %v608, %v1220
  %v1222 = vlaneseq
  %v1223 = vshrl.u32 %v1222, 7
  %v1224 = vsub.s32 1, %v1223
  %v1225 = vrot.slane %v609, %v1224
  %v1226 = vlaneseq
  %v1227 = vshrl.u32 %v1226, 7
  %v1228 = vsub.s32 1, %v1227
  %v1229 = vrot.slane %v610, %v1228
  %v1230 = vlaneseq
  %v1231 = vshrl.u32 %v1230, 7
  %v1232 = vsub.s32 1, %v1231
  %v1233 = vrot.slane %v611, %v1232
  %v1234 = vlaneseq
  %v1235 = vshrl.u32 %v1234, 7
  %v1236 = vsub.s32 1, %v1235
  %v1237 = vrot.slane %v612, %v1236
  %v1238 = vlaneseq
  %v1239 = vshrl.u32 %v1238, 7
  %v1240 = vsub.s32 1, %v1239
  %v1241 = vrot.slane %v613, %v1240
  %v1242 = vmul.f32 %v1116, %v1217
  %v1243 = vmul.f32 %v1117, %v1221
  %v1244 = vmul.f32 %v1118, %v1225
  %v1245 = vmul.f32 %v1119, %v1229
  %v1246 = vmul.f32 %v1120, %v1233
  %v1247 = vmul.f32 %v1121, %v1237
  %v1248 = vmul.f32 %v1122, %v1241
  %v1249 = vmul.f32 %v1123, %v1217
  %v1250 = vmul.f32 %v1124, %v1221
  %v1251 = vmul.f32 %v1125, %v1225
  %v1252 = vmul.f32 %v1126, %v1229
  %v1253 = vmul.f32 %v1127, %v1233
  %v1254 = vmul.f32 %v1128, %v1237
  %v1255 = vmul.f32 %v1129, %v1241
  %v1256 = vadd.f32 %v1200, %v1242
  %v1257 = vadd.f32 %v1201, %v1243
  %v1258 = vadd.f32 %v1202, %v1244
  %v1259 = vadd.f32 %v1203, %v1245
  %v1260 = vadd.f32 %v1204, %v1246
  %v1261 = vadd.f32 %v1205, %v1247
  %v1262 = vadd.f32 %v1206, %v1248
  %v1263 = vadd.f32 %v1207, %v1249
  %v1264 = vadd.f32 %v1208, %v1250
  %v1265 = vadd.f32 %v1209, %v1251
  %v1266 = vadd.f32 %v1210, %v1252
  %v1267 = vadd.f32 %v1211, %v1253
  %v1268 = vadd.f32 %v1212, %v1254
  %v1269 = vadd.f32 %v1213, %v1255
  %v1270 = vrot.slane %v1116, 1
  %v1271 = vrot.slane %v1117, 1
  %v1272 = vrot.slane %v1118, 1
  %v1273 = vrot.slane %v1119, 1
  %v1274 = vrot.slane %v1120, 1
  %v1275 = vrot.slane %v1121, 1
  %v1276 = vrot.slane %v1122, 1
  %v1277 = vrot.slane %v1123, 1
  %v1278 = vrot.slane %v1124, 1
  %v1279 = vrot.slane %v1125, 1
  %v1280 = vrot.slane %v1126, 1
  %v1281 = vrot.slane %v1127, 1
  %v1282 = vrot.slane %v1128, 1
  %v1283 = vrot.slane %v1129, 1
  %v1284 = vsel %vm792, %v1270, %v1277
  %v1285 = vsel %vm792, %v1271, %v1278
  %v1286 = vsel %vm792, %v1272, %v1279
  %v1287 = vsel %vm792, %v1273, %v1280
  %v1288 = vsel %vm792, %v1274, %v1281
  %v1289 = vsel %vm792, %v1275, %v1282
  %v1290 = vsel %vm792, %v1276, %v1283
  %v1291 = vsel %vm792, %v1277, %v1270
  %v1292 = vsel %vm792, %v1278, %v1271
  %v1293 = vsel %vm792, %v1279, %v1272
  %v1294 = vsel %vm792, %v1280, %v1273
  %v1295 = vsel %vm792, %v1281, %v1274
  %v1296 = vsel %vm792, %v1282, %v1275
  %v1297 = vsel %vm792, %v1283, %v1276
  %v1298 = vlaneseq
  %v1299 = vshrl.u32 %v1298, 7
  %v1300 = vsub.s32 2, %v1299
  %v1301 = vrot.slane %v607, %v1300
  %v1302 = vlaneseq
  %v1303 = vshrl.u32 %v1302, 7
  %v1304 = vsub.s32 2, %v1303
  %v1305 = vrot.slane %v608, %v1304
  %v1306 = vlaneseq
  %v1307 = vshrl.u32 %v1306, 7
  %v1308 = vsub.s32 2, %v1307
  %v1309 = vrot.slane %v609, %v1308
  %v1310 = vlaneseq
  %v1311 = vshrl.u32 %v1310, 7
  %v1312 = vsub.s32 2, %v1311
  %v1313 = vrot.slane %v610, %v1312
  %v1314 = vlaneseq
  %v1315 = vshrl.u32 %v1314, 7
  %v1316 = vsub.s32 2, %v1315
  %v1317 = vrot.slane %v611, %v1316
  %v1318 = vlaneseq
  %v1319 = vshrl.u32 %v1318, 7
  %v1320 = vsub.s32 2, %v1319
  %v1321 = vrot.slane %v612, %v1320
  %v1322 = vlaneseq
  %v1323 = vshrl.u32 %v1322, 7
  %v1324 = vsub.s32 2, %v1323
  %v1325 = vrot.slane %v613, %v1324
  %v1326 = vmul.f32 %v1284, %v1301
  %v1327 = vmul.f32 %v1285, %v1305
  %v1328 = vmul.f32 %v1286, %v1309
  %v1329 = vmul.f32 %v1287, %v1313
  %v1330 = vmul.f32 %v1288, %v1317
  %v1331 = vmul.f32 %v1289, %v1321
  %v1332 = vmul.f32 %v1290, %v1325
  %v1333 = vmul.f32 %v1291, %v1301
  %v1334 = vmul.f32 %v1292, %v1305
  %v1335 = vmul.f32 %v1293, %v1309
  %v1336 = vmul.f32 %v1294, %v1313
  %v1337 = vmul.f32 %v1295, %v1317
  %v1338 = vmul.f32 %v1296, %v1321
  %v1339 = vmul.f32 %v1297, %v1325
  %v1340 = vadd.f32 %v1256, %v1326
  %v1341 = vadd.f32 %v1257, %v1327
  %v1342 = vadd.f32 %v1258, %v1328
  %v1343 = vadd.f32 %v1259, %v1329
  %v1344 = vadd.f32 %v1260, %v1330
  %v1345 = vadd.f32 %v1261, %v1331
  %v1346 = vadd.f32 %v1262, %v1332
  %v1347 = vadd.f32 %v1263, %v1333
  %v1348 = vadd.f32 %v1264, %v1334
  %v1349 = vadd.f32 %v1265, %v1335
  %v1350 = vadd.f32 %v1266, %v1336
  %v1351 = vadd.f32 %v1267, %v1337
  %v1352 = vadd.f32 %v1268, %v1338
  %v1353 = vadd.f32 %v1269, %v1339
  %v1354 = vld [vmem:[%s863] sm:$0xff]
  %v1355 = vld [vmem:[%s863 + $0x8] sm:$0xff]
  %v1356 = vld [vmem:[%s863 + $0x10] sm:$0xff]
  %v1357 = vld [vmem:[%s863 + $0x18] sm:$0xff]
  %v1358 = vld [vmem:[%s863 + $0x20] sm:$0xff]
  %v1359 = vld [vmem:[%s863 + $0x28] sm:$0xff]
  %v1360 = vld [vmem:[%s863 + $0x30] sm:$0xff]
  %v1361 = vld [vmem:[%s863 + $0x38] sm:$0xff]
  %v1362 = vld [vmem:[%s863 + $0x40] sm:$0xff]
  %v1363 = vld [vmem:[%s863 + $0x48] sm:$0xff]
  %v1364 = vld [vmem:[%s863 + $0x50] sm:$0xff]
  %v1365 = vld [vmem:[%s863 + $0x58] sm:$0xff]
  %v1366 = vld [vmem:[%s863 + $0x60] sm:$0xff]
  %v1367 = vld [vmem:[%s863 + $0x68] sm:$0xff]
  %v1368 = vrot.slane %v1354, 7
  %v1369 = vrot.slane %v1355, 7
  %v1370 = vrot.slane %v1356, 7
  %v1371 = vrot.slane %v1357, 7
  %v1372 = vrot.slane %v1358, 7
  %v1373 = vrot.slane %v1359, 7
  %v1374 = vrot.slane %v1360, 7
  %v1375 = vrot.slane %v1361, 7
  %v1376 = vrot.slane %v1362, 7
  %v1377 = vrot.slane %v1363, 7
  %v1378 = vrot.slane %v1364, 7
  %v1379 = vrot.slane %v1365, 7
  %v1380 = vrot.slane %v1366, 7
  %v1381 = vrot.slane %v1367, 7
  %v1382 = vsel %vm651, %v1368, %v1375
  %v1383 = vsel %vm651, %v1369, %v1376
  %v1384 = vsel %vm651, %v1370, %v1377
  %v1385 = vsel %vm651, %v1371, %v1378
  %v1386 = vsel %vm651, %v1372, %v1379
  %v1387 = vsel %vm651, %v1373, %v1380
  %v1388 = vsel %vm651, %v1374, %v1381
  %v1389 = vsel %vm651, %v1375, %v1368
  %v1390 = vsel %vm651, %v1376, %v1369
  %v1391 = vsel %vm651, %v1377, %v1370
  %v1392 = vsel %vm651, %v1378, %v1371
  %v1393 = vsel %vm651, %v1379, %v1372
  %v1394 = vsel %vm651, %v1380, %v1373
  %v1395 = vsel %vm651, %v1381, %v1374
  %v1396 = vmul.f32 %v1389, %v669
  %v1397 = vmul.f32 %v1390, %v673
  %v1398 = vmul.f32 %v1391, %v677
  %v1399 = vmul.f32 %v1392, %v681
  %v1400 = vmul.f32 %v1393, %v685
  %v1401 = vmul.f32 %v1394, %v689
  %v1402 = vmul.f32 %v1395, %v693
  %v1403 = vmul.f32 %v1382, %v669
  %v1404 = vmul.f32 %v1383, %v673
  %v1405 = vmul.f32 %v1384, %v677
  %v1406 = vmul.f32 %v1385, %v681
  %v1407 = vmul.f32 %v1386, %v685
  %v1408 = vmul.f32 %v1387, %v689
  %v1409 = vmul.f32 %v1388, %v693
  %v1410 = vadd.f32 %v1340, %v1396
  %v1411 = vadd.f32 %v1341, %v1397
  %v1412 = vadd.f32 %v1342, %v1398
  %v1413 = vadd.f32 %v1343, %v1399
  %v1414 = vadd.f32 %v1344, %v1400
  %v1415 = vadd.f32 %v1345, %v1401
  %v1416 = vadd.f32 %v1346, %v1402
  %v1417 = vadd.f32 %v1347, %v1403
  %v1418 = vadd.f32 %v1348, %v1404
  %v1419 = vadd.f32 %v1349, %v1405
  %v1420 = vadd.f32 %v1350, %v1406
  %v1421 = vadd.f32 %v1351, %v1407
  %v1422 = vadd.f32 %v1352, %v1408
  %v1423 = vadd.f32 %v1353, %v1409
  %v1424 = vmul.f32 %v1354, %v725
  %v1425 = vmul.f32 %v1355, %v729
  %v1426 = vmul.f32 %v1356, %v733
  %v1427 = vmul.f32 %v1357, %v737
  %v1428 = vmul.f32 %v1358, %v741
  %v1429 = vmul.f32 %v1359, %v745
  %v1430 = vmul.f32 %v1360, %v749
  %v1431 = vmul.f32 %v1361, %v725
  %v1432 = vmul.f32 %v1362, %v729
  %v1433 = vmul.f32 %v1363, %v733
  %v1434 = vmul.f32 %v1364, %v737
  %v1435 = vmul.f32 %v1365, %v741
  %v1436 = vmul.f32 %v1366, %v745
  %v1437 = vmul.f32 %v1367, %v749
  %v1438 = vadd.f32 %v1410, %v1424
  %v1439 = vadd.f32 %v1411, %v1425
  %v1440 = vadd.f32 %v1412, %v1426
  %v1441 = vadd.f32 %v1413, %v1427
  %v1442 = vadd.f32 %v1414, %v1428
  %v1443 = vadd.f32 %v1415, %v1429
  %v1444 = vadd.f32 %v1416, %v1430
  %v1445 = vadd.f32 %v1417, %v1431
  %v1446 = vadd.f32 %v1418, %v1432
  %v1447 = vadd.f32 %v1419, %v1433
  %v1448 = vadd.f32 %v1420, %v1434
  %v1449 = vadd.f32 %v1421, %v1435
  %v1450 = vadd.f32 %v1422, %v1436
  %v1451 = vadd.f32 %v1423, %v1437
  %v1452 = vrot.slane %v1354, 1
  %v1453 = vrot.slane %v1355, 1
  %v1454 = vrot.slane %v1356, 1
  %v1455 = vrot.slane %v1357, 1
  %v1456 = vrot.slane %v1358, 1
  %v1457 = vrot.slane %v1359, 1
  %v1458 = vrot.slane %v1360, 1
  %v1459 = vrot.slane %v1361, 1
  %v1460 = vrot.slane %v1362, 1
  %v1461 = vrot.slane %v1363, 1
  %v1462 = vrot.slane %v1364, 1
  %v1463 = vrot.slane %v1365, 1
  %v1464 = vrot.slane %v1366, 1
  %v1465 = vrot.slane %v1367, 1
  %v1466 = vsel %vm792, %v1452, %v1459
  %v1467 = vsel %vm792, %v1453, %v1460
  %v1468 = vsel %vm792, %v1454, %v1461
  %v1469 = vsel %vm792, %v1455, %v1462
  %v1470 = vsel %vm792, %v1456, %v1463
  %v1471 = vsel %vm792, %v1457, %v1464
  %v1472 = vsel %vm792, %v1458, %v1465
  %v1473 = vsel %vm792, %v1459, %v1452
  %v1474 = vsel %vm792, %v1460, %v1453
  %v1475 = vsel %vm792, %v1461, %v1454
  %v1476 = vsel %vm792, %v1462, %v1455
  %v1477 = vsel %vm792, %v1463, %v1456
  %v1478 = vsel %vm792, %v1464, %v1457
  %v1479 = vsel %vm792, %v1465, %v1458
  %v1480 = vmul.f32 %v1466, %v810
  %v1481 = vmul.f32 %v1467, %v814
  %v1482 = vmul.f32 %v1468, %v818
  %v1483 = vmul.f32 %v1469, %v822
  %v1484 = vmul.f32 %v1470, %v826
  %v1485 = vmul.f32 %v1471, %v830
  %v1486 = vmul.f32 %v1472, %v834
  %v1487 = vmul.f32 %v1473, %v810
  %v1488 = vmul.f32 %v1474, %v814
  %v1489 = vmul.f32 %v1475, %v818
  %v1490 = vmul.f32 %v1476, %v822
  %v1491 = vmul.f32 %v1477, %v826
  %v1492 = vmul.f32 %v1478, %v830
  %v1493 = vmul.f32 %v1479, %v834
  %v1494 = vadd.f32 %v1438, %v1480
  %v1495 = vadd.f32 %v1439, %v1481
  %v1496 = vadd.f32 %v1440, %v1482
  %v1497 = vadd.f32 %v1441, %v1483
  %v1498 = vadd.f32 %v1442, %v1484
  %v1499 = vadd.f32 %v1443, %v1485
  %v1500 = vadd.f32 %v1444, %v1486
  %v1501 = vadd.f32 %v1445, %v1487
  %v1502 = vadd.f32 %v1446, %v1488
  %v1503 = vadd.f32 %v1447, %v1489
  %v1504 = vadd.f32 %v1448, %v1490
  %v1505 = vadd.f32 %v1449, %v1491
  %v1506 = vadd.f32 %v1450, %v1492
  %v1507 = vadd.f32 %v1451, %v1493
  %s1508 = scalar_lea.vmem [#allocation2], 224
  %v1509 = vld [vmem:[%s1508] sm:$0xff]
  %v1510 = vld [vmem:[%s1508 + $0x8] sm:$0xff]
  %v1511 = vld [vmem:[%s1508 + $0x10] sm:$0xff]
  %v1512 = vld [vmem:[%s1508 + $0x18] sm:$0xff]
  %v1513 = vld [vmem:[%s1508 + $0x20] sm:$0xff]
  %v1514 = vld [vmem:[%s1508 + $0x28] sm:$0xff]
  %v1515 = vld [vmem:[%s1508 + $0x30] sm:$0xff]
  %v1516 = vld [vmem:[%s1508 + $0x38] sm:$0xff]
  %v1517 = vld [vmem:[%s1508 + $0x40] sm:$0xff]
  %v1518 = vld [vmem:[%s1508 + $0x48] sm:$0xff]
  %v1519 = vld [vmem:[%s1508 + $0x50] sm:$0xff]
  %v1520 = vld [vmem:[%s1508 + $0x58] sm:$0xff]
  %v1521 = vld [vmem:[%s1508 + $0x60] sm:$0xff]
  %v1522 = vld [vmem:[%s1508 + $0x68] sm:$0xff]
  %v1523 = vrot.slane %v1509, 7
  %v1524 = vrot.slane %v1510, 7
  %v1525 = vrot.slane %v1511, 7
  %v1526 = vrot.slane %v1512, 7
  %v1527 = vrot.slane %v1513, 7
  %v1528 = vrot.slane %v1514, 7
  %v1529 = vrot.slane %v1515, 7
  %v1530 = vrot.slane %v1516, 7
  %v1531 = vrot.slane %v1517, 7
  %v1532 = vrot.slane %v1518, 7
  %v1533 = vrot.slane %v1519, 7
  %v1534 = vrot.slane %v1520, 7
  %v1535 = vrot.slane %v1521, 7
  %v1536 = vrot.slane %v1522, 7
  %v1537 = vsel %vm651, %v1523, %v1530
  %v1538 = vsel %vm651, %v1524, %v1531
  %v1539 = vsel %vm651, %v1525, %v1532
  %v1540 = vsel %vm651, %v1526, %v1533
  %v1541 = vsel %vm651, %v1527, %v1534
  %v1542 = vsel %vm651, %v1528, %v1535
  %v1543 = vsel %vm651, %v1529, %v1536
  %v1544 = vsel %vm651, %v1530, %v1523
  %v1545 = vsel %vm651, %v1531, %v1524
  %v1546 = vsel %vm651, %v1532, %v1525
  %v1547 = vsel %vm651, %v1533, %v1526
  %v1548 = vsel %vm651, %v1534, %v1527
  %v1549 = vsel %vm651, %v1535, %v1528
  %v1550 = vsel %vm651, %v1536, %v1529
  %v1551 = vmul.f32 %v1544, %v909
  %v1552 = vmul.f32 %v1545, %v913
  %v1553 = vmul.f32 %v1546, %v917
  %v1554 = vmul.f32 %v1547, %v921
  %v1555 = vmul.f32 %v1548, %v925
  %v1556 = vmul.f32 %v1549, %v929
  %v1557 = vmul.f32 %v1550, %v933
  %v1558 = vmul.f32 %v1537, %v909
  %v1559 = vmul.f32 %v1538, %v913
  %v1560 = vmul.f32 %v1539, %v917
  %v1561 = vmul.f32 %v1540, %v921
  %v1562 = vmul.f32 %v1541, %v925
  %v1563 = vmul.f32 %v1542, %v929
  %v1564 = vmul.f32 %v1543, %v933
  %v1565 = vadd.f32 %v1494, %v1551
  %v1566 = vadd.f32 %v1495, %v1552
  %v1567 = vadd.f32 %v1496, %v1553
  %v1568 = vadd.f32 %v1497, %v1554
  %v1569 = vadd.f32 %v1498, %v1555
  %v1570 = vadd.f32 %v1499, %v1556
  %v1571 = vadd.f32 %v1500, %v1557
  %v1572 = vadd.f32 %v1501, %v1558
  %v1573 = vadd.f32 %v1502, %v1559
  %v1574 = vadd.f32 %v1503, %v1560
  %v1575 = vadd.f32 %v1504, %v1561
  %v1576 = vadd.f32 %v1505, %v1562
  %v1577 = vadd.f32 %v1506, %v1563
  %v1578 = vadd.f32 %v1507, %v1564
  %v1579 = vmul.f32 %v1509, %v965
  %v1580 = vmul.f32 %v1510, %v969
  %v1581 = vmul.f32 %v1511, %v973
  %v1582 = vmul.f32 %v1512, %v977
  %v1583 = vmul.f32 %v1513, %v981
  %v1584 = vmul.f32 %v1514, %v985
  %v1585 = vmul.f32 %v1515, %v989
  %v1586 = vmul.f32 %v1516, %v965
  %v1587 = vmul.f32 %v1517, %v969
  %v1588 = vmul.f32 %v1518, %v973
  %v1589 = vmul.f32 %v1519, %v977
  %v1590 = vmul.f32 %v1520, %v981
  %v1591 = vmul.f32 %v1521, %v985
  %v1592 = vmul.f32 %v1522, %v989
  %v1593 = vadd.f32 %v1565, %v1579
  %v1594 = vadd.f32 %v1566, %v1580
  %v1595 = vadd.f32 %v1567, %v1581
  %v1596 = vadd.f32 %v1568, %v1582
  %v1597 = vadd.f32 %v1569, %v1583
  %v1598 = vadd.f32 %v1570, %v1584
  %v1599 = vadd.f32 %v1571, %v1585
  %v1600 = vadd.f32 %v1572, %v1586
  %v1601 = vadd.f32 %v1573, %v1587
  %v1602 = vadd.f32 %v1574, %v1588
  %v1603 = vadd.f32 %v1575, %v1589
  %v1604 = vadd.f32 %v1576, %v1590
  %v1605 = vadd.f32 %v1577, %v1591
  %v1606 = vadd.f32 %v1578, %v1592
  %v1607 = vrot.slane %v1509, 1
  %v1608 = vrot.slane %v1510, 1
  %v1609 = vrot.slane %v1511, 1
  %v1610 = vrot.slane %v1512, 1
  %v1611 = vrot.slane %v1513, 1
  %v1612 = vrot.slane %v1514, 1
  %v1613 = vrot.slane %v1515, 1
  %v1614 = vrot.slane %v1516, 1
  %v1615 = vrot.slane %v1517, 1
  %v1616 = vrot.slane %v1518, 1
  %v1617 = vrot.slane %v1519, 1
  %v1618 = vrot.slane %v1520, 1
  %v1619 = vrot.slane %v1521, 1
  %v1620 = vrot.slane %v1522, 1
  %v1621 = vsel %vm792, %v1607, %v1614
  %v1622 = vsel %vm792, %v1608, %v1615
  %v1623 = vsel %vm792, %v1609, %v1616
  %v1624 = vsel %vm792, %v1610, %v1617
  %v1625 = vsel %vm792, %v1611, %v1618
  %v1626 = vsel %vm792, %v1612, %v1619
  %v1627 = vsel %vm792, %v1613, %v1620
  %v1628 = vsel %vm792, %v1614, %v1607
  %v1629 = vsel %vm792, %v1615, %v1608
  %v1630 = vsel %vm792, %v1616, %v1609
  %v1631 = vsel %vm792, %v1617, %v1610
  %v1632 = vsel %vm792, %v1618, %v1611
  %v1633 = vsel %vm792, %v1619, %v1612
  %v1634 = vsel %vm792, %v1620, %v1613
  %v1635 = vmul.f32 %v1621, %v1049
  %v1636 = vmul.f32 %v1622, %v1053
  %v1637 = vmul.f32 %v1623, %v1057
  %v1638 = vmul.f32 %v1624, %v1061
  %v1639 = vmul.f32 %v1625, %v1065
  %v1640 = vmul.f32 %v1626, %v1069
  %v1641 = vmul.f32 %v1627, %v1073
  %v1642 = vmul.f32 %v1628, %v1049
  %v1643 = vmul.f32 %v1629, %v1053
  %v1644 = vmul.f32 %v1630, %v1057
  %v1645 = vmul.f32 %v1631, %v1061
  %v1646 = vmul.f32 %v1632, %v1065
  %v1647 = vmul.f32 %v1633, %v1069
  %v1648 = vmul.f32 %v1634, %v1073
  %v1649 = vadd.f32 %v1593, %v1635
  %v1650 = vadd.f32 %v1594, %v1636
  %v1651 = vadd.f32 %v1595, %v1637
  %v1652 = vadd.f32 %v1596, %v1638
  %v1653 = vadd.f32 %v1597, %v1639
  %v1654 = vadd.f32 %v1598, %v1640
  %v1655 = vadd.f32 %v1599, %v1641
  %v1656 = vadd.f32 %v1600, %v1642
  %v1657 = vadd.f32 %v1601, %v1643
  %v1658 = vadd.f32 %v1602, %v1644
  %v1659 = vadd.f32 %v1603, %v1645
  %v1660 = vadd.f32 %v1604, %v1646
  %v1661 = vadd.f32 %v1605, %v1647
  %v1662 = vadd.f32 %v1606, %v1648
  %s1663 = scalar_lea.vmem [#allocation3], 112
  %1664 = vst [vmem:[%s1663] sm:$0xff] %v1649
  %1665 = vst [vmem:[%s1663 + $0x8] sm:$0xff] %v1650
  %1666 = vst [vmem:[%s1663 + $0x10] sm:$0xff] %v1651
  %1667 = vst [vmem:[%s1663 + $0x18] sm:$0xff] %v1652
  %1668 = vst [vmem:[%s1663 + $0x20] sm:$0xff] %v1653
  %1669 = vst [vmem:[%s1663 + $0x28] sm:$0xff] %v1654
  %1670 = vst.msk [vmem:[%s1663 + $0x30] sm:$0xff] %vm23, %v1655
  %1671 = vst [vmem:[%s1663 + $0x38] sm:$0xff] %v1656
  %1672 = vst [vmem:[%s1663 + $0x40] sm:$0xff] %v1657
  %1673 = vst [vmem:[%s1663 + $0x48] sm:$0xff] %v1658
  %1674 = vst [vmem:[%s1663 + $0x50] sm:$0xff] %v1659
  %1675 = vst [vmem:[%s1663 + $0x58] sm:$0xff] %v1660
  %1676 = vst [vmem:[%s1663 + $0x60] sm:$0xff] %v1661
  %1677 = vst.msk [vmem:[%s1663 + $0x68] sm:$0xff] %vm23, %v1662
  %v1678 = vld [vmem:[%s863] sm:$0xff]
  %v1679 = vld [vmem:[%s863 + $0x8] sm:$0xff]
  %v1680 = vld [vmem:[%s863 + $0x10] sm:$0xff]
  %v1681 = vld [vmem:[%s863 + $0x18] sm:$0xff]
  %v1682 = vld [vmem:[%s863 + $0x20] sm:$0xff]
  %v1683 = vld [vmem:[%s863 + $0x28] sm:$0xff]
  %v1684 = vld [vmem:[%s863 + $0x30] sm:$0xff]
  %v1685 = vld [vmem:[%s863 + $0x38] sm:$0xff]
  %v1686 = vld [vmem:[%s863 + $0x40] sm:$0xff]
  %v1687 = vld [vmem:[%s863 + $0x48] sm:$0xff]
  %v1688 = vld [vmem:[%s863 + $0x50] sm:$0xff]
  %v1689 = vld [vmem:[%s863 + $0x58] sm:$0xff]
  %v1690 = vld [vmem:[%s863 + $0x60] sm:$0xff]
  %v1691 = vld [vmem:[%s863 + $0x68] sm:$0xff]
  %v1692 = vrot.slane %v1678, 7
  %v1693 = vrot.slane %v1679, 7
  %v1694 = vrot.slane %v1680, 7
  %v1695 = vrot.slane %v1681, 7
  %v1696 = vrot.slane %v1682, 7
  %v1697 = vrot.slane %v1683, 7
  %v1698 = vrot.slane %v1684, 7
  %v1699 = vrot.slane %v1685, 7
  %v1700 = vrot.slane %v1686, 7
  %v1701 = vrot.slane %v1687, 7
  %v1702 = vrot.slane %v1688, 7
  %v1703 = vrot.slane %v1689, 7
  %v1704 = vrot.slane %v1690, 7
  %v1705 = vrot.slane %v1691, 7
  %v1706 = vsel %vm651, %v1692, %v1699
  %v1707 = vsel %vm651, %v1693, %v1700
  %v1708 = vsel %vm651, %v1694, %v1701
  %v1709 = vsel %vm651, %v1695, %v1702
  %v1710 = vsel %vm651, %v1696, %v1703
  %v1711 = vsel %vm651, %v1697, %v1704
  %v1712 = vsel %vm651, %v1698, %v1705
  %v1713 = vsel %vm651, %v1699, %v1692
  %v1714 = vsel %vm651, %v1700, %v1693
  %v1715 = vsel %vm651, %v1701, %v1694
  %v1716 = vsel %vm651, %v1702, %v1695
  %v1717 = vsel %vm651, %v1703, %v1696
  %v1718 = vsel %vm651, %v1704, %v1697
  %v1719 = vsel %vm651, %v1705, %v1698
  %v1720 = vmul.f32 %v1713, %v1161
  %v1721 = vmul.f32 %v1714, %v1165
  %v1722 = vmul.f32 %v1715, %v1169
  %v1723 = vmul.f32 %v1716, %v1173
  %v1724 = vmul.f32 %v1717, %v1177
  %v1725 = vmul.f32 %v1718, %v1181
  %v1726 = vmul.f32 %v1719, %v1185
  %v1727 = vmul.f32 %v1706, %v1161
  %v1728 = vmul.f32 %v1707, %v1165
  %v1729 = vmul.f32 %v1708, %v1169
  %v1730 = vmul.f32 %v1709, %v1173
  %v1731 = vmul.f32 %v1710, %v1177
  %v1732 = vmul.f32 %v1711, %v1181
  %v1733 = vmul.f32 %v1712, %v1185
  %v1734 = vadd.f32 %v1720, 0.0
  %v1735 = vadd.f32 %v1721, 0.0
  %v1736 = vadd.f32 %v1722, 0.0
  %v1737 = vadd.f32 %v1723, 0.0
  %v1738 = vadd.f32 %v1724, 0.0
  %v1739 = vadd.f32 %v1725, 0.0
  %v1740 = vadd.f32 %v1726, 0.0
  %v1741 = vadd.f32 %v1727, 0.0
  %v1742 = vadd.f32 %v1728, 0.0
  %v1743 = vadd.f32 %v1729, 0.0
  %v1744 = vadd.f32 %v1730, 0.0
  %v1745 = vadd.f32 %v1731, 0.0
  %v1746 = vadd.f32 %v1732, 0.0
  %v1747 = vadd.f32 %v1733, 0.0
  %v1748 = vmul.f32 %v1678, %v1217
  %v1749 = vmul.f32 %v1679, %v1221
  %v1750 = vmul.f32 %v1680, %v1225
  %v1751 = vmul.f32 %v1681, %v1229
  %v1752 = vmul.f32 %v1682, %v1233
  %v1753 = vmul.f32 %v1683, %v1237
  %v1754 = vmul.f32 %v1684, %v1241
  %v1755 = vmul.f32 %v1685, %v1217
  %v1756 = vmul.f32 %v1686, %v1221
  %v1757 = vmul.f32 %v1687, %v1225
  %v1758 = vmul.f32 %v1688, %v1229
  %v1759 = vmul.f32 %v1689, %v1233
  %v1760 = vmul.f32 %v1690, %v1237
  %v1761 = vmul.f32 %v1691, %v1241
  %v1762 = vadd.f32 %v1734, %v1748
  %v1763 = vadd.f32 %v1735, %v1749
  %v1764 = vadd.f32 %v1736, %v1750
  %v1765 = vadd.f32 %v1737, %v1751
  %v1766 = vadd.f32 %v1738, %v1752
  %v1767 = vadd.f32 %v1739, %v1753
  %v1768 = vadd.f32 %v1740, %v1754
  %v1769 = vadd.f32 %v1741, %v1755
  %v1770 = vadd.f32 %v1742, %v1756
  %v1771 = vadd.f32 %v1743, %v1757
  %v1772 = vadd.f32 %v1744, %v1758
  %v1773 = vadd.f32 %v1745, %v1759
  %v1774 = vadd.f32 %v1746, %v1760
  %v1775 = vadd.f32 %v1747, %v1761
  %v1776 = vrot.slane %v1678, 1
  %v1777 = vrot.slane %v1679, 1
  %v1778 = vrot.slane %v1680, 1
  %v1779 = vrot.slane %v1681, 1
  %v1780 = vrot.slane %v1682, 1
  %v1781 = vrot.slane %v1683, 1
  %v1782 = vrot.slane %v1684, 1
  %v1783 = vrot.slane %v1685, 1
  %v1784 = vrot.slane %v1686, 1
  %v1785 = vrot.slane %v1687, 1
  %v1786 = vrot.slane %v1688, 1
  %v1787 = vrot.slane %v1689, 1
  %v1788 = vrot.slane %v1690, 1
  %v1789 = vrot.slane %v1691, 1
  %v1790 = vsel %vm792, %v1776, %v1783
  %v1791 = vsel %vm792, %v1777, %v1784
  %v1792 = vsel %vm792, %v1778, %v1785
  %v1793 = vsel %vm792, %v1779, %v1786
  %v1794 = vsel %vm792, %v1780, %v1787
  %v1795 = vsel %vm792, %v1781, %v1788
  %v1796 = vsel %vm792, %v1782, %v1789
  %v1797 = vsel %vm792, %v1783, %v1776
  %v1798 = vsel %vm792, %v1784, %v1777
  %v1799 = vsel %vm792, %v1785, %v1778
  %v1800 = vsel %vm792, %v1786, %v1779
  %v1801 = vsel %vm792, %v1787, %v1780
  %v1802 = vsel %vm792, %v1788, %v1781
  %v1803 = vsel %vm792, %v1789, %v1782
  %v1804 = vmul.f32 %v1790, %v1301
  %v1805 = vmul.f32 %v1791, %v1305
  %v1806 = vmul.f32 %v1792, %v1309
  %v1807 = vmul.f32 %v1793, %v1313
  %v1808 = vmul.f32 %v1794, %v1317
  %v1809 = vmul.f32 %v1795, %v1321
  %v1810 = vmul.f32 %v1796, %v1325
  %v1811 = vmul.f32 %v1797, %v1301
  %v1812 = vmul.f32 %v1798, %v1305
  %v1813 = vmul.f32 %v1799, %v1309
  %v1814 = vmul.f32 %v1800, %v1313
  %v1815 = vmul.f32 %v1801, %v1317
  %v1816 = vmul.f32 %v1802, %v1321
  %v1817 = vmul.f32 %v1803, %v1325
  %v1818 = vadd.f32 %v1762, %v1804
  %v1819 = vadd.f32 %v1763, %v1805
  %v1820 = vadd.f32 %v1764, %v1806
  %v1821 = vadd.f32 %v1765, %v1807
  %v1822 = vadd.f32 %v1766, %v1808
  %v1823 = vadd.f32 %v1767, %v1809
  %v1824 = vadd.f32 %v1768, %v1810
  %v1825 = vadd.f32 %v1769, %v1811
  %v1826 = vadd.f32 %v1770, %v1812
  %v1827 = vadd.f32 %v1771, %v1813
  %v1828 = vadd.f32 %v1772, %v1814
  %v1829 = vadd.f32 %v1773, %v1815
  %v1830 = vadd.f32 %v1774, %v1816
  %v1831 = vadd.f32 %v1775, %v1817
  %v1832 = vld [vmem:[%s1508] sm:$0xff]
  %v1833 = vld [vmem:[%s1508 + $0x8] sm:$0xff]
  %v1834 = vld [vmem:[%s1508 + $0x10] sm:$0xff]
  %v1835 = vld [vmem:[%s1508 + $0x18] sm:$0xff]
  %v1836 = vld [vmem:[%s1508 + $0x20] sm:$0xff]
  %v1837 = vld [vmem:[%s1508 + $0x28] sm:$0xff]
  %v1838 = vld [vmem:[%s1508 + $0x30] sm:$0xff]
  %v1839 = vld [vmem:[%s1508 + $0x38] sm:$0xff]
  %v1840 = vld [vmem:[%s1508 + $0x40] sm:$0xff]
  %v1841 = vld [vmem:[%s1508 + $0x48] sm:$0xff]
  %v1842 = vld [vmem:[%s1508 + $0x50] sm:$0xff]
  %v1843 = vld [vmem:[%s1508 + $0x58] sm:$0xff]
  %v1844 = vld [vmem:[%s1508 + $0x60] sm:$0xff]
  %v1845 = vld [vmem:[%s1508 + $0x68] sm:$0xff]
  %v1846 = vrot.slane %v1832, 7
  %v1847 = vrot.slane %v1833, 7
  %v1848 = vrot.slane %v1834, 7
  %v1849 = vrot.slane %v1835, 7
  %v1850 = vrot.slane %v1836, 7
  %v1851 = vrot.slane %v1837, 7
  %v1852 = vrot.slane %v1838, 7
  %v1853 = vrot.slane %v1839, 7
  %v1854 = vrot.slane %v1840, 7
  %v1855 = vrot.slane %v1841, 7
  %v1856 = vrot.slane %v1842, 7
  %v1857 = vrot.slane %v1843, 7
  %v1858 = vrot.slane %v1844, 7
  %v1859 = vrot.slane %v1845, 7
  %v1860 = vsel %vm651, %v1846, %v1853
  %v1861 = vsel %vm651, %v1847, %v1854
  %v1862 = vsel %vm651, %v1848, %v1855
  %v1863 = vsel %vm651, %v1849, %v1856
  %v1864 = vsel %vm651, %v1850, %v1857
  %v1865 = vsel %vm651, %v1851, %v1858
  %v1866 = vsel %vm651, %v1852, %v1859
  %v1867 = vsel %vm651, %v1853, %v1846
  %v1868 = vsel %vm651, %v1854, %v1847
  %v1869 = vsel %vm651, %v1855, %v1848
  %v1870 = vsel %vm651, %v1856, %v1849
  %v1871 = vsel %vm651, %v1857, %v1850
  %v1872 = vsel %vm651, %v1858, %v1851
  %v1873 = vsel %vm651, %v1859, %v1852
  %v1874 = vmul.f32 %v1867, %v669
  %v1875 = vmul.f32 %v1868, %v673
  %v1876 = vmul.f32 %v1869, %v677
  %v1877 = vmul.f32 %v1870, %v681
  %v1878 = vmul.f32 %v1871, %v685
  %v1879 = vmul.f32 %v1872, %v689
  %v1880 = vmul.f32 %v1873, %v693
  %v1881 = vmul.f32 %v1860, %v669
  %v1882 = vmul.f32 %v1861, %v673
  %v1883 = vmul.f32 %v1862, %v677
  %v1884 = vmul.f32 %v1863, %v681
  %v1885 = vmul.f32 %v1864, %v685
  %v1886 = vmul.f32 %v1865, %v689
  %v1887 = vmul.f32 %v1866, %v693
  %v1888 = vadd.f32 %v1818, %v1874
  %v1889 = vadd.f32 %v1819, %v1875
  %v1890 = vadd.f32 %v1820, %v1876
  %v1891 = vadd.f32 %v1821, %v1877
  %v1892 = vadd.f32 %v1822, %v1878
  %v1893 = vadd.f32 %v1823, %v1879
  %v1894 = vadd.f32 %v1824, %v1880
  %v1895 = vadd.f32 %v1825, %v1881
  %v1896 = vadd.f32 %v1826, %v1882
  %v1897 = vadd.f32 %v1827, %v1883
  %v1898 = vadd.f32 %v1828, %v1884
  %v1899 = vadd.f32 %v1829, %v1885
  %v1900 = vadd.f32 %v1830, %v1886
  %v1901 = vadd.f32 %v1831, %v1887
  %v1902 = vmul.f32 %v1832, %v725
  %v1903 = vmul.f32 %v1833, %v729
  %v1904 = vmul.f32 %v1834, %v733
  %v1905 = vmul.f32 %v1835, %v737
  %v1906 = vmul.f32 %v1836, %v741
  %v1907 = vmul.f32 %v1837, %v745
  %v1908 = vmul.f32 %v1838, %v749
  %v1909 = vmul.f32 %v1839, %v725
  %v1910 = vmul.f32 %v1840, %v729
  %v1911 = vmul.f32 %v1841, %v733
  %v1912 = vmul.f32 %v1842, %v737
  %v1913 = vmul.f32 %v1843, %v741
  %v1914 = vmul.f32 %v1844, %v745
  %v1915 = vmul.f32 %v1845, %v749
  %v1916 = vadd.f32 %v1888, %v1902
  %v1917 = vadd.f32 %v1889, %v1903
  %v1918 = vadd.f32 %v1890, %v1904
  %v1919 = vadd.f32 %v1891, %v1905
  %v1920 = vadd.f32 %v1892, %v1906
  %v1921 = vadd.f32 %v1893, %v1907
  %v1922 = vadd.f32 %v1894, %v1908
  %v1923 = vadd.f32 %v1895, %v1909
  %v1924 = vadd.f32 %v1896, %v1910
  %v1925 = vadd.f32 %v1897, %v1911
  %v1926 = vadd.f32 %v1898, %v1912
  %v1927 = vadd.f32 %v1899, %v1913
  %v1928 = vadd.f32 %v1900, %v1914
  %v1929 = vadd.f32 %v1901, %v1915
  %v1930 = vrot.slane %v1832, 1
  %v1931 = vrot.slane %v1833, 1
  %v1932 = vrot.slane %v1834, 1
  %v1933 = vrot.slane %v1835, 1
  %v1934 = vrot.slane %v1836, 1
  %v1935 = vrot.slane %v1837, 1
  %v1936 = vrot.slane %v1838, 1
  %v1937 = vrot.slane %v1839, 1
  %v1938 = vrot.slane %v1840, 1
  %v1939 = vrot.slane %v1841, 1
  %v1940 = vrot.slane %v1842, 1
  %v1941 = vrot.slane %v1843, 1
  %v1942 = vrot.slane %v1844, 1
  %v1943 = vrot.slane %v1845, 1
  %v1944 = vsel %vm792, %v1930, %v1937
  %v1945 = vsel %vm792, %v1931, %v1938
  %v1946 = vsel %vm792, %v1932, %v1939
  %v1947 = vsel %vm792, %v1933, %v1940
  %v1948 = vsel %vm792, %v1934, %v1941
  %v1949 = vsel %vm792, %v1935, %v1942
  %v1950 = vsel %vm792, %v1936, %v1943
  %v1951 = vsel %vm792, %v1937, %v1930
  %v1952 = vsel %vm792, %v1938, %v1931
  %v1953 = vsel %vm792, %v1939, %v1932
  %v1954 = vsel %vm792, %v1940, %v1933
  %v1955 = vsel %vm792, %v1941, %v1934
  %v1956 = vsel %vm792, %v1942, %v1935
  %v1957 = vsel %vm792, %v1943, %v1936
  %v1958 = vmul.f32 %v1944, %v810
  %v1959 = vmul.f32 %v1945, %v814
  %v1960 = vmul.f32 %v1946, %v818
  %v1961 = vmul.f32 %v1947, %v822
  %v1962 = vmul.f32 %v1948, %v826
  %v1963 = vmul.f32 %v1949, %v830
  %v1964 = vmul.f32 %v1950, %v834
  %v1965 = vmul.f32 %v1951, %v810
  %v1966 = vmul.f32 %v1952, %v814
  %v1967 = vmul.f32 %v1953, %v818
  %v1968 = vmul.f32 %v1954, %v822
  %v1969 = vmul.f32 %v1955, %v826
  %v1970 = vmul.f32 %v1956, %v830
  %v1971 = vmul.f32 %v1957, %v834
  %v1972 = vadd.f32 %v1916, %v1958
  %v1973 = vadd.f32 %v1917, %v1959
  %v1974 = vadd.f32 %v1918, %v1960
  %v1975 = vadd.f32 %v1919, %v1961
  %v1976 = vadd.f32 %v1920, %v1962
  %v1977 = vadd.f32 %v1921, %v1963
  %v1978 = vadd.f32 %v1922, %v1964
  %v1979 = vadd.f32 %v1923, %v1965
  %v1980 = vadd.f32 %v1924, %v1966
  %v1981 = vadd.f32 %v1925, %v1967
  %v1982 = vadd.f32 %v1926, %v1968
  %v1983 = vadd.f32 %v1927, %v1969
  %v1984 = vadd.f32 %v1928, %v1970
  %v1985 = vadd.f32 %v1929, %v1971
  %s1986 = scalar_lea.vmem [#allocation2], 336
  %v1987 = vld [vmem:[%s1986] sm:$0xff]
  %v1988 = vld [vmem:[%s1986 + $0x8] sm:$0xff]
  %v1989 = vld [vmem:[%s1986 + $0x10] sm:$0xff]
  %v1990 = vld [vmem:[%s1986 + $0x18] sm:$0xff]
  %v1991 = vld [vmem:[%s1986 + $0x20] sm:$0xff]
  %v1992 = vld [vmem:[%s1986 + $0x28] sm:$0xff]
  %v1993 = vld [vmem:[%s1986 + $0x30] sm:$0xff]
  %v1994 = vld [vmem:[%s1986 + $0x38] sm:$0xff]
  %v1995 = vld [vmem:[%s1986 + $0x40] sm:$0xff]
  %v1996 = vld [vmem:[%s1986 + $0x48] sm:$0xff]
  %v1997 = vld [vmem:[%s1986 + $0x50] sm:$0xff]
  %v1998 = vld [vmem:[%s1986 + $0x58] sm:$0xff]
  %v1999 = vld [vmem:[%s1986 + $0x60] sm:$0xff]
  %v2000 = vld [vmem:[%s1986 + $0x68] sm:$0xff]
  %v2001 = vrot.slane %v1987, 7
  %v2002 = vrot.slane %v1988, 7
  %v2003 = vrot.slane %v1989, 7
  %v2004 = vrot.slane %v1990, 7
  %v2005 = vrot.slane %v1991, 7
  %v2006 = vrot.slane %v1992, 7
  %v2007 = vrot.slane %v1993, 7
  %v2008 = vrot.slane %v1994, 7
  %v2009 = vrot.slane %v1995, 7
  %v2010 = vrot.slane %v1996, 7
  %v2011 = vrot.slane %v1997, 7
  %v2012 = vrot.slane %v1998, 7
  %v2013 = vrot.slane %v1999, 7
  %v2014 = vrot.slane %v2000, 7
  %v2015 = vsel %vm651, %v2001, %v2008
  %v2016 = vsel %vm651, %v2002, %v2009
  %v2017 = vsel %vm651, %v2003, %v2010
  %v2018 = vsel %vm651, %v2004, %v2011
  %v2019 = vsel %vm651, %v2005, %v2012
  %v2020 = vsel %vm651, %v2006, %v2013
  %v2021 = vsel %vm651, %v2007, %v2014
  %v2022 = vsel %vm651, %v2008, %v2001
  %v2023 = vsel %vm651, %v2009, %v2002
  %v2024 = vsel %vm651, %v2010, %v2003
  %v2025 = vsel %vm651, %v2011, %v2004
  %v2026 = vsel %vm651, %v2012, %v2005
  %v2027 = vsel %vm651, %v2013, %v2006
  %v2028 = vsel %vm651, %v2014, %v2007
  %v2029 = vmul.f32 %v2022, %v909
  %v2030 = vmul.f32 %v2023, %v913
  %v2031 = vmul.f32 %v2024, %v917
  %v2032 = vmul.f32 %v2025, %v921
  %v2033 = vmul.f32 %v2026, %v925
  %v2034 = vmul.f32 %v2027, %v929
  %v2035 = vmul.f32 %v2028, %v933
  %v2036 = vmul.f32 %v2015, %v909
  %v2037 = vmul.f32 %v2016, %v913
  %v2038 = vmul.f32 %v2017, %v917
  %v2039 = vmul.f32 %v2018, %v921
  %v2040 = vmul.f32 %v2019, %v925
  %v2041 = vmul.f32 %v2020, %v929
  %v2042 = vmul.f32 %v2021, %v933
  %v2043 = vadd.f32 %v1972, %v2029
  %v2044 = vadd.f32 %v1973, %v2030
  %v2045 = vadd.f32 %v1974, %v2031
  %v2046 = vadd.f32 %v1975, %v2032
  %v2047 = vadd.f32 %v1976, %v2033
  %v2048 = vadd.f32 %v1977, %v2034
  %v2049 = vadd.f32 %v1978, %v2035
  %v2050 = vadd.f32 %v1979, %v2036
  %v2051 = vadd.f32 %v1980, %v2037
  %v2052 = vadd.f32 %v1981, %v2038
  %v2053 = vadd.f32 %v1982, %v2039
  %v2054 = vadd.f32 %v1983, %v2040
  %v2055 = vadd.f32 %v1984, %v2041
  %v2056 = vadd.f32 %v1985, %v2042
  %v2057 = vmul.f32 %v1987, %v965
  %v2058 = vmul.f32 %v1988, %v969
  %v2059 = vmul.f32 %v1989, %v973
  %v2060 = vmul.f32 %v1990, %v977
  %v2061 = vmul.f32 %v1991, %v981
  %v2062 = vmul.f32 %v1992, %v985
  %v2063 = vmul.f32 %v1993, %v989
  %v2064 = vmul.f32 %v1994, %v965
  %v2065 = vmul.f32 %v1995, %v969
  %v2066 = vmul.f32 %v1996, %v973
  %v2067 = vmul.f32 %v1997, %v977
  %v2068 = vmul.f32 %v1998, %v981
  %v2069 = vmul.f32 %v1999, %v985
  %v2070 = vmul.f32 %v2000, %v989
  %v2071 = vadd.f32 %v2043, %v2057
  %v2072 = vadd.f32 %v2044, %v2058
  %v2073 = vadd.f32 %v2045, %v2059
  %v2074 = vadd.f32 %v2046, %v2060
  %v2075 = vadd.f32 %v2047, %v2061
  %v2076 = vadd.f32 %v2048, %v2062
  %v2077 = vadd.f32 %v2049, %v2063
  %v2078 = vadd.f32 %v2050, %v2064
  %v2079 = vadd.f32 %v2051, %v2065
  %v2080 = vadd.f32 %v2052, %v2066
  %v2081 = vadd.f32 %v2053, %v2067
  %v2082 = vadd.f32 %v2054, %v2068
  %v2083 = vadd.f32 %v2055, %v2069
  %v2084 = vadd.f32 %v2056, %v2070
  %v2085 = vrot.slane %v1987, 1
  %v2086 = vrot.slane %v1988, 1
  %v2087 = vrot.slane %v1989, 1
  %v2088 = vrot.slane %v1990, 1
  %v2089 = vrot.slane %v1991, 1
  %v2090 = vrot.slane %v1992, 1
  %v2091 = vrot.slane %v1993, 1
  %v2092 = vrot.slane %v1994, 1
  %v2093 = vrot.slane %v1995, 1
  %v2094 = vrot.slane %v1996, 1
  %v2095 = vrot.slane %v1997, 1
  %v2096 = vrot.slane %v1998, 1
  %v2097 = vrot.slane %v1999, 1
  %v2098 = vrot.slane %v2000, 1
  %v2099 = vsel %vm792, %v2085, %v2092
  %v2100 = vsel %vm792, %v2086, %v2093
  %v2101 = vsel %vm792, %v2087, %v2094
  %v2102 = vsel %vm792, %v2088, %v2095
  %v2103 = vsel %vm792, %v2089, %v2096
  %v2104 = vsel %vm792, %v2090, %v2097
  %v2105 = vsel %vm792, %v2091, %v2098
  %v2106 = vsel %vm792, %v2092, %v2085
  %v2107 = vsel %vm792, %v2093, %v2086
  %v2108 = vsel %vm792, %v2094, %v2087
  %v2109 = vsel %vm792, %v2095, %v2088
  %v2110 = vsel %vm792, %v2096, %v2089
  %v2111 = vsel %vm792, %v2097, %v2090
  %v2112 = vsel %vm792, %v2098, %v2091
  %v2113 = vmul.f32 %v2099, %v1049
  %v2114 = vmul.f32 %v2100, %v1053
  %v2115 = vmul.f32 %v2101, %v1057
  %v2116 = vmul.f32 %v2102, %v1061
  %v2117 = vmul.f32 %v2103, %v1065
  %v2118 = vmul.f32 %v2104, %v1069
  %v2119 = vmul.f32 %v2105, %v1073
  %v2120 = vmul.f32 %v2106, %v1049
  %v2121 = vmul.f32 %v2107, %v1053
  %v2122 = vmul.f32 %v2108, %v1057
  %v2123 = vmul.f32 %v2109, %v1061
  %v2124 = vmul.f32 %v2110, %v1065
  %v2125 = vmul.f32 %v2111, %v1069
  %v2126 = vmul.f32 %v2112, %v1073
  %v2127 = vadd.f32 %v2071, %v2113
  %v2128 = vadd.f32 %v2072, %v2114
  %v2129 = vadd.f32 %v2073, %v2115
  %v2130 = vadd.f32 %v2074, %v2116
  %v2131 = vadd.f32 %v2075, %v2117
  %v2132 = vadd.f32 %v2076, %v2118
  %v2133 = vadd.f32 %v2077, %v2119
  %v2134 = vadd.f32 %v2078, %v2120
  %v2135 = vadd.f32 %v2079, %v2121
  %v2136 = vadd.f32 %v2080, %v2122
  %v2137 = vadd.f32 %v2081, %v2123
  %v2138 = vadd.f32 %v2082, %v2124
  %v2139 = vadd.f32 %v2083, %v2125
  %v2140 = vadd.f32 %v2084, %v2126
  %s2141 = scalar_lea.vmem [#allocation3], 224
  %2142 = vst [vmem:[%s2141] sm:$0xff] %v2127
  %2143 = vst [vmem:[%s2141 + $0x8] sm:$0xff] %v2128
  %2144 = vst [vmem:[%s2141 + $0x10] sm:$0xff] %v2129
  %2145 = vst [vmem:[%s2141 + $0x18] sm:$0xff] %v2130
  %2146 = vst [vmem:[%s2141 + $0x20] sm:$0xff] %v2131
  %2147 = vst [vmem:[%s2141 + $0x28] sm:$0xff] %v2132
  %2148 = vst.msk [vmem:[%s2141 + $0x30] sm:$0xff] %vm23, %v2133
  %2149 = vst [vmem:[%s2141 + $0x38] sm:$0xff] %v2134
  %2150 = vst [vmem:[%s2141 + $0x40] sm:$0xff] %v2135
  %2151 = vst [vmem:[%s2141 + $0x48] sm:$0xff] %v2136
  %2152 = vst [vmem:[%s2141 + $0x50] sm:$0xff] %v2137
  %2153 = vst [vmem:[%s2141 + $0x58] sm:$0xff] %v2138
  %2154 = vst [vmem:[%s2141 + $0x60] sm:$0xff] %v2139
  %2155 = vst.msk [vmem:[%s2141 + $0x68] sm:$0xff] %vm23, %v2140
  %v2156 = vld [vmem:[%s1508] sm:$0xff]
  %v2157 = vld [vmem:[%s1508 + $0x8] sm:$0xff]
  %v2158 = vld [vmem:[%s1508 + $0x10] sm:$0xff]
  %v2159 = vld [vmem:[%s1508 + $0x18] sm:$0xff]
  %v2160 = vld [vmem:[%s1508 + $0x20] sm:$0xff]
  %v2161 = vld [vmem:[%s1508 + $0x28] sm:$0xff]
  %v2162 = vld [vmem:[%s1508 + $0x30] sm:$0xff]
  %v2163 = vld [vmem:[%s1508 + $0x38] sm:$0xff]
  %v2164 = vld [vmem:[%s1508 + $0x40] sm:$0xff]
  %v2165 = vld [vmem:[%s1508 + $0x48] sm:$0xff]
  %v2166 = vld [vmem:[%s1508 + $0x50] sm:$0xff]
  %v2167 = vld [vmem:[%s1508 + $0x58] sm:$0xff]
  %v2168 = vld [vmem:[%s1508 + $0x60] sm:$0xff]
  %v2169 = vld [vmem:[%s1508 + $0x68] sm:$0xff]
  %v2170 = vrot.slane %v2156, 7
  %v2171 = vrot.slane %v2157, 7
  %v2172 = vrot.slane %v2158, 7
  %v2173 = vrot.slane %v2159, 7
  %v2174 = vrot.slane %v2160, 7
  %v2175 = vrot.slane %v2161, 7
  %v2176 = vrot.slane %v2162, 7
  %v2177 = vrot.slane %v2163, 7
  %v2178 = vrot.slane %v2164, 7
  %v2179 = vrot.slane %v2165, 7
  %v2180 = vrot.slane %v2166, 7
  %v2181 = vrot.slane %v2167, 7
  %v2182 = vrot.slane %v2168, 7
  %v2183 = vrot.slane %v2169, 7
  %v2184 = vsel %vm651, %v2170, %v2177
  %v2185 = vsel %vm651, %v2171, %v2178
  %v2186 = vsel %vm651, %v2172, %v2179
  %v2187 = vsel %vm651, %v2173, %v2180
  %v2188 = vsel %vm651, %v2174, %v2181
  %v2189 = vsel %vm651, %v2175, %v2182
  %v2190 = vsel %vm651, %v2176, %v2183
  %v2191 = vsel %vm651, %v2177, %v2170
  %v2192 = vsel %vm651, %v2178, %v2171
  %v2193 = vsel %vm651, %v2179, %v2172
  %v2194 = vsel %vm651, %v2180, %v2173
  %v2195 = vsel %vm651, %v2181, %v2174
  %v2196 = vsel %vm651, %v2182, %v2175
  %v2197 = vsel %vm651, %v2183, %v2176
  %v2198 = vmul.f32 %v2191, %v1161
  %v2199 = vmul.f32 %v2192, %v1165
  %v2200 = vmul.f32 %v2193, %v1169
  %v2201 = vmul.f32 %v2194, %v1173
  %v2202 = vmul.f32 %v2195, %v1177
  %v2203 = vmul.f32 %v2196, %v1181
  %v2204 = vmul.f32 %v2197, %v1185
  %v2205 = vmul.f32 %v2184, %v1161
  %v2206 = vmul.f32 %v2185, %v1165
  %v2207 = vmul.f32 %v2186, %v1169
  %v2208 = vmul.f32 %v2187, %v1173
  %v2209 = vmul.f32 %v2188, %v1177
  %v2210 = vmul.f32 %v2189, %v1181
  %v2211 = vmul.f32 %v2190, %v1185
  %v2212 = vadd.f32 %v2198, 0.0
  %v2213 = vadd.f32 %v2199, 0.0
  %v2214 = vadd.f32 %v2200, 0.0
  %v2215 = vadd.f32 %v2201, 0.0
  %v2216 = vadd.f32 %v2202, 0.0
  %v2217 = vadd.f32 %v2203, 0.0
  %v2218 = vadd.f32 %v2204, 0.0
  %v2219 = vadd.f32 %v2205, 0.0
  %v2220 = vadd.f32 %v2206, 0.0
  %v2221 = vadd.f32 %v2207, 0.0
  %v2222 = vadd.f32 %v2208, 0.0
  %v2223 = vadd.f32 %v2209, 0.0
  %v2224 = vadd.f32 %v2210, 0.0
  %v2225 = vadd.f32 %v2211, 0.0
  %v2226 = vmul.f32 %v2156, %v1217
  %v2227 = vmul.f32 %v2157, %v1221
  %v2228 = vmul.f32 %v2158, %v1225
  %v2229 = vmul.f32 %v2159, %v1229
  %v2230 = vmul.f32 %v2160, %v1233
  %v2231 = vmul.f32 %v2161, %v1237
  %v2232 = vmul.f32 %v2162, %v1241
  %v2233 = vmul.f32 %v2163, %v1217
  %v2234 = vmul.f32 %v2164, %v1221
  %v2235 = vmul.f32 %v2165, %v1225
  %v2236 = vmul.f32 %v2166, %v1229
  %v2237 = vmul.f32 %v2167, %v1233
  %v2238 = vmul.f32 %v2168, %v1237
  %v2239 = vmul.f32 %v2169, %v1241
  %v2240 = vadd.f32 %v2212, %v2226
  %v2241 = vadd.f32 %v2213, %v2227
  %v2242 = vadd.f32 %v2214, %v2228
  %v2243 = vadd.f32 %v2215, %v2229
  %v2244 = vadd.f32 %v2216, %v2230
  %v2245 = vadd.f32 %v2217, %v2231
  %v2246 = vadd.f32 %v2218, %v2232
  %v2247 = vadd.f32 %v2219, %v2233
  %v2248 = vadd.f32 %v2220, %v2234
  %v2249 = vadd.f32 %v2221, %v2235
  %v2250 = vadd.f32 %v2222, %v2236
  %v2251 = vadd.f32 %v2223, %v2237
  %v2252 = vadd.f32 %v2224, %v2238
  %v2253 = vadd.f32 %v2225, %v2239
  %v2254 = vrot.slane %v2156, 1
  %v2255 = vrot.slane %v2157, 1
  %v2256 = vrot.slane %v2158, 1
  %v2257 = vrot.slane %v2159, 1
  %v2258 = vrot.slane %v2160, 1
  %v2259 = vrot.slane %v2161, 1
  %v2260 = vrot.slane %v2162, 1
  %v2261 = vrot.slane %v2163, 1
  %v2262 = vrot.slane %v2164, 1
  %v2263 = vrot.slane %v2165, 1
  %v2264 = vrot.slane %v2166, 1
  %v2265 = vrot.slane %v2167, 1
  %v2266 = vrot.slane %v2168, 1
  %v2267 = vrot.slane %v2169, 1
  %v2268 = vsel %vm792, %v2254, %v2261
  %v2269 = vsel %vm792, %v2255, %v2262
  %v2270 = vsel %vm792, %v2256, %v2263
  %v2271 = vsel %vm792, %v2257, %v2264
  %v2272 = vsel %vm792, %v2258, %v2265
  %v2273 = vsel %vm792, %v2259, %v2266
  %v2274 = vsel %vm792, %v2260, %v2267
  %v2275 = vsel %vm792, %v2261, %v2254
  %v2276 = vsel %vm792, %v2262, %v2255
  %v2277 = vsel %vm792, %v2263, %v2256
  %v2278 = vsel %vm792, %v2264, %v2257
  %v2279 = vsel %vm792, %v2265, %v2258
  %v2280 = vsel %vm792, %v2266, %v2259
  %v2281 = vsel %vm792, %v2267, %v2260
  %v2282 = vmul.f32 %v2268, %v1301
  %v2283 = vmul.f32 %v2269, %v1305
  %v2284 = vmul.f32 %v2270, %v1309
  %v2285 = vmul.f32 %v2271, %v1313
  %v2286 = vmul.f32 %v2272, %v1317
  %v2287 = vmul.f32 %v2273, %v1321
  %v2288 = vmul.f32 %v2274, %v1325
  %v2289 = vmul.f32 %v2275, %v1301
  %v2290 = vmul.f32 %v2276, %v1305
  %v2291 = vmul.f32 %v2277, %v1309
  %v2292 = vmul.f32 %v2278, %v1313
  %v2293 = vmul.f32 %v2279, %v1317
  %v2294 = vmul.f32 %v2280, %v1321
  %v2295 = vmul.f32 %v2281, %v1325
  %v2296 = vadd.f32 %v2240, %v2282
  %v2297 = vadd.f32 %v2241, %v2283
  %v2298 = vadd.f32 %v2242, %v2284
  %v2299 = vadd.f32 %v2243, %v2285
  %v2300 = vadd.f32 %v2244, %v2286
  %v2301 = vadd.f32 %v2245, %v2287
  %v2302 = vadd.f32 %v2246, %v2288
  %v2303 = vadd.f32 %v2247, %v2289
  %v2304 = vadd.f32 %v2248, %v2290
  %v2305 = vadd.f32 %v2249, %v2291
  %v2306 = vadd.f32 %v2250, %v2292
  %v2307 = vadd.f32 %v2251, %v2293
  %v2308 = vadd.f32 %v2252, %v2294
  %v2309 = vadd.f32 %v2253, %v2295
  %v2310 = vld [vmem:[%s1986] sm:$0xff]
  %v2311 = vld [vmem:[%s1986 + $0x8] sm:$0xff]
  %v2312 = vld [vmem:[%s1986 + $0x10] sm:$0xff]
  %v2313 = vld [vmem:[%s1986 + $0x18] sm:$0xff]
  %v2314 = vld [vmem:[%s1986 + $0x20] sm:$0xff]
  %v2315 = vld [vmem:[%s1986 + $0x28] sm:$0xff]
  %v2316 = vld [vmem:[%s1986 + $0x30] sm:$0xff]
  %v2317 = vld [vmem:[%s1986 + $0x38] sm:$0xff]
  %v2318 = vld [vmem:[%s1986 + $0x40] sm:$0xff]
  %v2319 = vld [vmem:[%s1986 + $0x48] sm:$0xff]
  %v2320 = vld [vmem:[%s1986 + $0x50] sm:$0xff]
  %v2321 = vld [vmem:[%s1986 + $0x58] sm:$0xff]
  %v2322 = vld [vmem:[%s1986 + $0x60] sm:$0xff]
  %v2323 = vld [vmem:[%s1986 + $0x68] sm:$0xff]
  %v2324 = vrot.slane %v2310, 7
  %v2325 = vrot.slane %v2311, 7
  %v2326 = vrot.slane %v2312, 7
  %v2327 = vrot.slane %v2313, 7
  %v2328 = vrot.slane %v2314, 7
  %v2329 = vrot.slane %v2315, 7
  %v2330 = vrot.slane %v2316, 7
  %v2331 = vrot.slane %v2317, 7
  %v2332 = vrot.slane %v2318, 7
  %v2333 = vrot.slane %v2319, 7
  %v2334 = vrot.slane %v2320, 7
  %v2335 = vrot.slane %v2321, 7
  %v2336 = vrot.slane %v2322, 7
  %v2337 = vrot.slane %v2323, 7
  %v2338 = vsel %vm651, %v2324, %v2331
  %v2339 = vsel %vm651, %v2325, %v2332
  %v2340 = vsel %vm651, %v2326, %v2333
  %v2341 = vsel %vm651, %v2327, %v2334
  %v2342 = vsel %vm651, %v2328, %v2335
  %v2343 = vsel %vm651, %v2329, %v2336
  %v2344 = vsel %vm651, %v2330, %v2337
  %v2345 = vsel %vm651, %v2331, %v2324
  %v2346 = vsel %vm651, %v2332, %v2325
  %v2347 = vsel %vm651, %v2333, %v2326
  %v2348 = vsel %vm651, %v2334, %v2327
  %v2349 = vsel %vm651, %v2335, %v2328
  %v2350 = vsel %vm651, %v2336, %v2329
  %v2351 = vsel %vm651, %v2337, %v2330
  %v2352 = vmul.f32 %v2345, %v669
  %v2353 = vmul.f32 %v2346, %v673
  %v2354 = vmul.f32 %v2347, %v677
  %v2355 = vmul.f32 %v2348, %v681
  %v2356 = vmul.f32 %v2349, %v685
  %v2357 = vmul.f32 %v2350, %v689
  %v2358 = vmul.f32 %v2351, %v693
  %v2359 = vmul.f32 %v2338, %v669
  %v2360 = vmul.f32 %v2339, %v673
  %v2361 = vmul.f32 %v2340, %v677
  %v2362 = vmul.f32 %v2341, %v681
  %v2363 = vmul.f32 %v2342, %v685
  %v2364 = vmul.f32 %v2343, %v689
  %v2365 = vmul.f32 %v2344, %v693
  %v2366 = vadd.f32 %v2296, %v2352
  %v2367 = vadd.f32 %v2297, %v2353
  %v2368 = vadd.f32 %v2298, %v2354
  %v2369 = vadd.f32 %v2299, %v2355
  %v2370 = vadd.f32 %v2300, %v2356
  %v2371 = vadd.f32 %v2301, %v2357
  %v2372 = vadd.f32 %v2302, %v2358
  %v2373 = vadd.f32 %v2303, %v2359
  %v2374 = vadd.f32 %v2304, %v2360
  %v2375 = vadd.f32 %v2305, %v2361
  %v2376 = vadd.f32 %v2306, %v2362
  %v2377 = vadd.f32 %v2307, %v2363
  %v2378 = vadd.f32 %v2308, %v2364
  %v2379 = vadd.f32 %v2309, %v2365
  %v2380 = vmul.f32 %v2310, %v725
  %v2381 = vmul.f32 %v2311, %v729
  %v2382 = vmul.f32 %v2312, %v733
  %v2383 = vmul.f32 %v2313, %v737
  %v2384 = vmul.f32 %v2314, %v741
  %v2385 = vmul.f32 %v2315, %v745
  %v2386 = vmul.f32 %v2316, %v749
  %v2387 = vmul.f32 %v2317, %v725
  %v2388 = vmul.f32 %v2318, %v729
  %v2389 = vmul.f32 %v2319, %v733
  %v2390 = vmul.f32 %v2320, %v737
  %v2391 = vmul.f32 %v2321, %v741
  %v2392 = vmul.f32 %v2322, %v745
  %v2393 = vmul.f32 %v2323, %v749
  %v2394 = vadd.f32 %v2366, %v2380
  %v2395 = vadd.f32 %v2367, %v2381
  %v2396 = vadd.f32 %v2368, %v2382
  %v2397 = vadd.f32 %v2369, %v2383
  %v2398 = vadd.f32 %v2370, %v2384
  %v2399 = vadd.f32 %v2371, %v2385
  %v2400 = vadd.f32 %v2372, %v2386
  %v2401 = vadd.f32 %v2373, %v2387
  %v2402 = vadd.f32 %v2374, %v2388
  %v2403 = vadd.f32 %v2375, %v2389
  %v2404 = vadd.f32 %v2376, %v2390
  %v2405 = vadd.f32 %v2377, %v2391
  %v2406 = vadd.f32 %v2378, %v2392
  %v2407 = vadd.f32 %v2379, %v2393
  %v2408 = vrot.slane %v2310, 1
  %v2409 = vrot.slane %v2311, 1
  %v2410 = vrot.slane %v2312, 1
  %v2411 = vrot.slane %v2313, 1
  %v2412 = vrot.slane %v2314, 1
  %v2413 = vrot.slane %v2315, 1
  %v2414 = vrot.slane %v2316, 1
  %v2415 = vrot.slane %v2317, 1
  %v2416 = vrot.slane %v2318, 1
  %v2417 = vrot.slane %v2319, 1
  %v2418 = vrot.slane %v2320, 1
  %v2419 = vrot.slane %v2321, 1
  %v2420 = vrot.slane %v2322, 1
  %v2421 = vrot.slane %v2323, 1
  %v2422 = vsel %vm792, %v2408, %v2415
  %v2423 = vsel %vm792, %v2409, %v2416
  %v2424 = vsel %vm792, %v2410, %v2417
  %v2425 = vsel %vm792, %v2411, %v2418
  %v2426 = vsel %vm792, %v2412, %v2419
  %v2427 = vsel %vm792, %v2413, %v2420
  %v2428 = vsel %vm792, %v2414, %v2421
  %v2429 = vsel %vm792, %v2415, %v2408
  %v2430 = vsel %vm792, %v2416, %v2409
  %v2431 = vsel %vm792, %v2417, %v2410
  %v2432 = vsel %vm792, %v2418, %v2411
  %v2433 = vsel %vm792, %v2419, %v2412
  %v2434 = vsel %vm792, %v2420, %v2413
  %v2435 = vsel %vm792, %v2421, %v2414
  %v2436 = vmul.f32 %v2422, %v810
  %v2437 = vmul.f32 %v2423, %v814
  %v2438 = vmul.f32 %v2424, %v818
  %v2439 = vmul.f32 %v2425, %v822
  %v2440 = vmul.f32 %v2426, %v826
  %v2441 = vmul.f32 %v2427, %v830
  %v2442 = vmul.f32 %v2428, %v834
  %v2443 = vmul.f32 %v2429, %v810
  %v2444 = vmul.f32 %v2430, %v814
  %v2445 = vmul.f32 %v2431, %v818
  %v2446 = vmul.f32 %v2432, %v822
  %v2447 = vmul.f32 %v2433, %v826
  %v2448 = vmul.f32 %v2434, %v830
  %v2449 = vmul.f32 %v2435, %v834
  %v2450 = vadd.f32 %v2394, %v2436
  %v2451 = vadd.f32 %v2395, %v2437
  %v2452 = vadd.f32 %v2396, %v2438
  %v2453 = vadd.f32 %v2397, %v2439
  %v2454 = vadd.f32 %v2398, %v2440
  %v2455 = vadd.f32 %v2399, %v2441
  %v2456 = vadd.f32 %v2400, %v2442
  %v2457 = vadd.f32 %v2401, %v2443
  %v2458 = vadd.f32 %v2402, %v2444
  %v2459 = vadd.f32 %v2403, %v2445
  %v2460 = vadd.f32 %v2404, %v2446
  %v2461 = vadd.f32 %v2405, %v2447
  %v2462 = vadd.f32 %v2406, %v2448
  %v2463 = vadd.f32 %v2407, %v2449
  %s2464 = scalar_lea.vmem [#allocation2], 448
  %v2465 = vld [vmem:[%s2464] sm:$0xff]
  %v2466 = vld [vmem:[%s2464 + $0x8] sm:$0xff]
  %v2467 = vld [vmem:[%s2464 + $0x10] sm:$0xff]
  %v2468 = vld [vmem:[%s2464 + $0x18] sm:$0xff]
  %v2469 = vld [vmem:[%s2464 + $0x20] sm:$0xff]
  %v2470 = vld [vmem:[%s2464 + $0x28] sm:$0xff]
  %v2471 = vld [vmem:[%s2464 + $0x30] sm:$0xff]
  %v2472 = vld [vmem:[%s2464 + $0x38] sm:$0xff]
  %v2473 = vld [vmem:[%s2464 + $0x40] sm:$0xff]
  %v2474 = vld [vmem:[%s2464 + $0x48] sm:$0xff]
  %v2475 = vld [vmem:[%s2464 + $0x50] sm:$0xff]
  %v2476 = vld [vmem:[%s2464 + $0x58] sm:$0xff]
  %v2477 = vld [vmem:[%s2464 + $0x60] sm:$0xff]
  %v2478 = vld [vmem:[%s2464 + $0x68] sm:$0xff]
  %v2479 = vrot.slane %v2465, 7
  %v2480 = vrot.slane %v2466, 7
  %v2481 = vrot.slane %v2467, 7
  %v2482 = vrot.slane %v2468, 7
  %v2483 = vrot.slane %v2469, 7
  %v2484 = vrot.slane %v2470, 7
  %v2485 = vrot.slane %v2471, 7
  %v2486 = vrot.slane %v2472, 7
  %v2487 = vrot.slane %v2473, 7
  %v2488 = vrot.slane %v2474, 7
  %v2489 = vrot.slane %v2475, 7
  %v2490 = vrot.slane %v2476, 7
  %v2491 = vrot.slane %v2477, 7
  %v2492 = vrot.slane %v2478, 7
  %v2493 = vsel %vm651, %v2479, %v2486
  %v2494 = vsel %vm651, %v2480, %v2487
  %v2495 = vsel %vm651, %v2481, %v2488
  %v2496 = vsel %vm651, %v2482, %v2489
  %v2497 = vsel %vm651, %v2483, %v2490
  %v2498 = vsel %vm651, %v2484, %v2491
  %v2499 = vsel %vm651, %v2485, %v2492
  %v2500 = vsel %vm651, %v2486, %v2479
  %v2501 = vsel %vm651, %v2487, %v2480
  %v2502 = vsel %vm651, %v2488, %v2481
  %v2503 = vsel %vm651, %v2489, %v2482
  %v2504 = vsel %vm651, %v2490, %v2483
  %v2505 = vsel %vm651, %v2491, %v2484
  %v2506 = vsel %vm651, %v2492, %v2485
  %v2507 = vmul.f32 %v2500, %v909
  %v2508 = vmul.f32 %v2501, %v913
  %v2509 = vmul.f32 %v2502, %v917
  %v2510 = vmul.f32 %v2503, %v921
  %v2511 = vmul.f32 %v2504, %v925
  %v2512 = vmul.f32 %v2505, %v929
  %v2513 = vmul.f32 %v2506, %v933
  %v2514 = vmul.f32 %v2493, %v909
  %v2515 = vmul.f32 %v2494, %v913
  %v2516 = vmul.f32 %v2495, %v917
  %v2517 = vmul.f32 %v2496, %v921
  %v2518 = vmul.f32 %v2497, %v925
  %v2519 = vmul.f32 %v2498, %v929
  %v2520 = vmul.f32 %v2499, %v933
  %v2521 = vadd.f32 %v2450, %v2507
  %v2522 = vadd.f32 %v2451, %v2508
  %v2523 = vadd.f32 %v2452, %v2509
  %v2524 = vadd.f32 %v2453, %v2510
  %v2525 = vadd.f32 %v2454, %v2511
  %v2526 = vadd.f32 %v2455, %v2512
  %v2527 = vadd.f32 %v2456, %v2513
  %v2528 = vadd.f32 %v2457, %v2514
  %v2529 = vadd.f32 %v2458, %v2515
  %v2530 = vadd.f32 %v2459, %v2516
  %v2531 = vadd.f32 %v2460, %v2517
  %v2532 = vadd.f32 %v2461, %v2518
  %v2533 = vadd.f32 %v2462, %v2519
  %v2534 = vadd.f32 %v2463, %v2520
  %v2535 = vmul.f32 %v2465, %v965
  %v2536 = vmul.f32 %v2466, %v969
  %v2537 = vmul.f32 %v2467, %v973
  %v2538 = vmul.f32 %v2468, %v977
  %v2539 = vmul.f32 %v2469, %v981
  %v2540 = vmul.f32 %v2470, %v985
  %v2541 = vmul.f32 %v2471, %v989
  %v2542 = vmul.f32 %v2472, %v965
  %v2543 = vmul.f32 %v2473, %v969
  %v2544 = vmul.f32 %v2474, %v973
  %v2545 = vmul.f32 %v2475, %v977
  %v2546 = vmul.f32 %v2476, %v981
  %v2547 = vmul.f32 %v2477, %v985
  %v2548 = vmul.f32 %v2478, %v989
  %v2549 = vadd.f32 %v2521, %v2535
  %v2550 = vadd.f32 %v2522, %v2536
  %v2551 = vadd.f32 %v2523, %v2537
  %v2552 = vadd.f32 %v2524, %v2538
  %v2553 = vadd.f32 %v2525, %v2539
  %v2554 = vadd.f32 %v2526, %v2540
  %v2555 = vadd.f32 %v2527, %v2541
  %v2556 = vadd.f32 %v2528, %v2542
  %v2557 = vadd.f32 %v2529, %v2543
  %v2558 = vadd.f32 %v2530, %v2544
  %v2559 = vadd.f32 %v2531, %v2545
  %v2560 = vadd.f32 %v2532, %v2546
  %v2561 = vadd.f32 %v2533, %v2547
  %v2562 = vadd.f32 %v2534, %v2548
  %v2563 = vrot.slane %v2465, 1
  %v2564 = vrot.slane %v2466, 1
  %v2565 = vrot.slane %v2467, 1
  %v2566 = vrot.slane %v2468, 1
  %v2567 = vrot.slane %v2469, 1
  %v2568 = vrot.slane %v2470, 1
  %v2569 = vrot.slane %v2471, 1
  %v2570 = vrot.slane %v2472, 1
  %v2571 = vrot.slane %v2473, 1
  %v2572 = vrot.slane %v2474, 1
  %v2573 = vrot.slane %v2475, 1
  %v2574 = vrot.slane %v2476, 1
  %v2575 = vrot.slane %v2477, 1
  %v2576 = vrot.slane %v2478, 1
  %v2577 = vsel %vm792, %v2563, %v2570
  %v2578 = vsel %vm792, %v2564, %v2571
  %v2579 = vsel %vm792, %v2565, %v2572
  %v2580 = vsel %vm792, %v2566, %v2573
  %v2581 = vsel %vm792, %v2567, %v2574
  %v2582 = vsel %vm792, %v2568, %v2575
  %v2583 = vsel %vm792, %v2569, %v2576
  %v2584 = vsel %vm792, %v2570, %v2563
  %v2585 = vsel %vm792, %v2571, %v2564
  %v2586 = vsel %vm792, %v2572, %v2565
  %v2587 = vsel %vm792, %v2573, %v2566
  %v2588 = vsel %vm792, %v2574, %v2567
  %v2589 = vsel %vm792, %v2575, %v2568
  %v2590 = vsel %vm792, %v2576, %v2569
  %v2591 = vmul.f32 %v2577, %v1049
  %v2592 = vmul.f32 %v2578, %v1053
  %v2593 = vmul.f32 %v2579, %v1057
  %v2594 = vmul.f32 %v2580, %v1061
  %v2595 = vmul.f32 %v2581, %v1065
  %v2596 = vmul.f32 %v2582, %v1069
  %v2597 = vmul.f32 %v2583, %v1073
  %v2598 = vmul.f32 %v2584, %v1049
  %v2599 = vmul.f32 %v2585, %v1053
  %v2600 = vmul.f32 %v2586, %v1057
  %v2601 = vmul.f32 %v2587, %v1061
  %v2602 = vmul.f32 %v2588, %v1065
  %v2603 = vmul.f32 %v2589, %v1069
  %v2604 = vmul.f32 %v2590, %v1073
  %v2605 = vadd.f32 %v2549, %v2591
  %v2606 = vadd.f32 %v2550, %v2592
  %v2607 = vadd.f32 %v2551, %v2593
  %v2608 = vadd.f32 %v2552, %v2594
  %v2609 = vadd.f32 %v2553, %v2595
  %v2610 = vadd.f32 %v2554, %v2596
  %v2611 = vadd.f32 %v2555, %v2597
  %v2612 = vadd.f32 %v2556, %v2598
  %v2613 = vadd.f32 %v2557, %v2599
  %v2614 = vadd.f32 %v2558, %v2600
  %v2615 = vadd.f32 %v2559, %v2601
  %v2616 = vadd.f32 %v2560, %v2602
  %v2617 = vadd.f32 %v2561, %v2603
  %v2618 = vadd.f32 %v2562, %v2604
  %s2619 = scalar_lea.vmem [#allocation3], 336
  %2620 = vst [vmem:[%s2619] sm:$0xff] %v2605
  %2621 = vst [vmem:[%s2619 + $0x8] sm:$0xff] %v2606
  %2622 = vst [vmem:[%s2619 + $0x10] sm:$0xff] %v2607
  %2623 = vst [vmem:[%s2619 + $0x18] sm:$0xff] %v2608
  %2624 = vst [vmem:[%s2619 + $0x20] sm:$0xff] %v2609
  %2625 = vst [vmem:[%s2619 + $0x28] sm:$0xff] %v2610
  %2626 = vst.msk [vmem:[%s2619 + $0x30] sm:$0xff] %vm23, %v2611
  %2627 = vst [vmem:[%s2619 + $0x38] sm:$0xff] %v2612
  %2628 = vst [vmem:[%s2619 + $0x40] sm:$0xff] %v2613
  %2629 = vst [vmem:[%s2619 + $0x48] sm:$0xff] %v2614
  %2630 = vst [vmem:[%s2619 + $0x50] sm:$0xff] %v2615
  %2631 = vst [vmem:[%s2619 + $0x58] sm:$0xff] %v2616
  %2632 = vst [vmem:[%s2619 + $0x60] sm:$0xff] %v2617
  %2633 = vst.msk [vmem:[%s2619 + $0x68] sm:$0xff] %vm23, %v2618
  %v2634 = vld [vmem:[%s1986] sm:$0xff]
  %v2635 = vld [vmem:[%s1986 + $0x8] sm:$0xff]
  %v2636 = vld [vmem:[%s1986 + $0x10] sm:$0xff]
  %v2637 = vld [vmem:[%s1986 + $0x18] sm:$0xff]
  %v2638 = vld [vmem:[%s1986 + $0x20] sm:$0xff]
  %v2639 = vld [vmem:[%s1986 + $0x28] sm:$0xff]
  %v2640 = vld [vmem:[%s1986 + $0x30] sm:$0xff]
  %v2641 = vld [vmem:[%s1986 + $0x38] sm:$0xff]
  %v2642 = vld [vmem:[%s1986 + $0x40] sm:$0xff]
  %v2643 = vld [vmem:[%s1986 + $0x48] sm:$0xff]
  %v2644 = vld [vmem:[%s1986 + $0x50] sm:$0xff]
  %v2645 = vld [vmem:[%s1986 + $0x58] sm:$0xff]
  %v2646 = vld [vmem:[%s1986 + $0x60] sm:$0xff]
  %v2647 = vld [vmem:[%s1986 + $0x68] sm:$0xff]
  %v2648 = vrot.slane %v2634, 7
  %v2649 = vrot.slane %v2635, 7
  %v2650 = vrot.slane %v2636, 7
  %v2651 = vrot.slane %v2637, 7
  %v2652 = vrot.slane %v2638, 7
  %v2653 = vrot.slane %v2639, 7
  %v2654 = vrot.slane %v2640, 7
  %v2655 = vrot.slane %v2641, 7
  %v2656 = vrot.slane %v2642, 7
  %v2657 = vrot.slane %v2643, 7
  %v2658 = vrot.slane %v2644, 7
  %v2659 = vrot.slane %v2645, 7
  %v2660 = vrot.slane %v2646, 7
  %v2661 = vrot.slane %v2647, 7
  %v2662 = vsel %vm651, %v2648, %v2655
  %v2663 = vsel %vm651, %v2649, %v2656
  %v2664 = vsel %vm651, %v2650, %v2657
  %v2665 = vsel %vm651, %v2651, %v2658
  %v2666 = vsel %vm651, %v2652, %v2659
  %v2667 = vsel %vm651, %v2653, %v2660
  %v2668 = vsel %vm651, %v2654, %v2661
  %v2669 = vsel %vm651, %v2655, %v2648
  %v2670 = vsel %vm651, %v2656, %v2649
  %v2671 = vsel %vm651, %v2657, %v2650
  %v2672 = vsel %vm651, %v2658, %v2651
  %v2673 = vsel %vm651, %v2659, %v2652
  %v2674 = vsel %vm651, %v2660, %v2653
  %v2675 = vsel %vm651, %v2661, %v2654
  %v2676 = vmul.f32 %v2669, %v1161
  %v2677 = vmul.f32 %v2670, %v1165
  %v2678 = vmul.f32 %v2671, %v1169
  %v2679 = vmul.f32 %v2672, %v1173
  %v2680 = vmul.f32 %v2673, %v1177
  %v2681 = vmul.f32 %v2674, %v1181
  %v2682 = vmul.f32 %v2675, %v1185
  %v2683 = vmul.f32 %v2662, %v1161
  %v2684 = vmul.f32 %v2663, %v1165
  %v2685 = vmul.f32 %v2664, %v1169
  %v2686 = vmul.f32 %v2665, %v1173
  %v2687 = vmul.f32 %v2666, %v1177
  %v2688 = vmul.f32 %v2667, %v1181
  %v2689 = vmul.f32 %v2668, %v1185
  %v2690 = vadd.f32 %v2676, 0.0
  %v2691 = vadd.f32 %v2677, 0.0
  %v2692 = vadd.f32 %v2678, 0.0
  %v2693 = vadd.f32 %v2679, 0.0
  %v2694 = vadd.f32 %v2680, 0.0
  %v2695 = vadd.f32 %v2681, 0.0
  %v2696 = vadd.f32 %v2682, 0.0
  %v2697 = vadd.f32 %v2683, 0.0
  %v2698 = vadd.f32 %v2684, 0.0
  %v2699 = vadd.f32 %v2685, 0.0
  %v2700 = vadd.f32 %v2686, 0.0
  %v2701 = vadd.f32 %v2687, 0.0
  %v2702 = vadd.f32 %v2688, 0.0
  %v2703 = vadd.f32 %v2689, 0.0
  %v2704 = vmul.f32 %v2634, %v1217
  %v2705 = vmul.f32 %v2635, %v1221
  %v2706 = vmul.f32 %v2636, %v1225
  %v2707 = vmul.f32 %v2637, %v1229
  %v2708 = vmul.f32 %v2638, %v1233
  %v2709 = vmul.f32 %v2639, %v1237
  %v2710 = vmul.f32 %v2640, %v1241
  %v2711 = vmul.f32 %v2641, %v1217
  %v2712 = vmul.f32 %v2642, %v1221
  %v2713 = vmul.f32 %v2643, %v1225
  %v2714 = vmul.f32 %v2644, %v1229
  %v2715 = vmul.f32 %v2645, %v1233
  %v2716 = vmul.f32 %v2646, %v1237
  %v2717 = vmul.f32 %v2647, %v1241
  %v2718 = vadd.f32 %v2690, %v2704
  %v2719 = vadd.f32 %v2691, %v2705
  %v2720 = vadd.f32 %v2692, %v2706
  %v2721 = vadd.f32 %v2693, %v2707
  %v2722 = vadd.f32 %v2694, %v2708
  %v2723 = vadd.f32 %v2695, %v2709
  %v2724 = vadd.f32 %v2696, %v2710
  %v2725 = vadd.f32 %v2697, %v2711
  %v2726 = vadd.f32 %v2698, %v2712
  %v2727 = vadd.f32 %v2699, %v2713
  %v2728 = vadd.f32 %v2700, %v2714
  %v2729 = vadd.f32 %v2701, %v2715
  %v2730 = vadd.f32 %v2702, %v2716
  %v2731 = vadd.f32 %v2703, %v2717
  %v2732 = vrot.slane %v2634, 1
  %v2733 = vrot.slane %v2635, 1
  %v2734 = vrot.slane %v2636, 1
  %v2735 = vrot.slane %v2637, 1
  %v2736 = vrot.slane %v2638, 1
  %v2737 = vrot.slane %v2639, 1
  %v2738 = vrot.slane %v2640, 1
  %v2739 = vrot.slane %v2641, 1
  %v2740 = vrot.slane %v2642, 1
  %v2741 = vrot.slane %v2643, 1
  %v2742 = vrot.slane %v2644, 1
  %v2743 = vrot.slane %v2645, 1
  %v2744 = vrot.slane %v2646, 1
  %v2745 = vrot.slane %v2647, 1
  %v2746 = vsel %vm792, %v2732, %v2739
  %v2747 = vsel %vm792, %v2733, %v2740
  %v2748 = vsel %vm792, %v2734, %v2741
  %v2749 = vsel %vm792, %v2735, %v2742
  %v2750 = vsel %vm792, %v2736, %v2743
  %v2751 = vsel %vm792, %v2737, %v2744
  %v2752 = vsel %vm792, %v2738, %v2745
  %v2753 = vsel %vm792, %v2739, %v2732
  %v2754 = vsel %vm792, %v2740, %v2733
  %v2755 = vsel %vm792, %v2741, %v2734
  %v2756 = vsel %vm792, %v2742, %v2735
  %v2757 = vsel %vm792, %v2743, %v2736
  %v2758 = vsel %vm792, %v2744, %v2737
  %v2759 = vsel %vm792, %v2745, %v2738
  %v2760 = vmul.f32 %v2746, %v1301
  %v2761 = vmul.f32 %v2747, %v1305
  %v2762 = vmul.f32 %v2748, %v1309
  %v2763 = vmul.f32 %v2749, %v1313
  %v2764 = vmul.f32 %v2750, %v1317
  %v2765 = vmul.f32 %v2751, %v1321
  %v2766 = vmul.f32 %v2752, %v1325
  %v2767 = vmul.f32 %v2753, %v1301
  %v2768 = vmul.f32 %v2754, %v1305
  %v2769 = vmul.f32 %v2755, %v1309
  %v2770 = vmul.f32 %v2756, %v1313
  %v2771 = vmul.f32 %v2757, %v1317
  %v2772 = vmul.f32 %v2758, %v1321
  %v2773 = vmul.f32 %v2759, %v1325
  %v2774 = vadd.f32 %v2718, %v2760
  %v2775 = vadd.f32 %v2719, %v2761
  %v2776 = vadd.f32 %v2720, %v2762
  %v2777 = vadd.f32 %v2721, %v2763
  %v2778 = vadd.f32 %v2722, %v2764
  %v2779 = vadd.f32 %v2723, %v2765
  %v2780 = vadd.f32 %v2724, %v2766
  %v2781 = vadd.f32 %v2725, %v2767
  %v2782 = vadd.f32 %v2726, %v2768
  %v2783 = vadd.f32 %v2727, %v2769
  %v2784 = vadd.f32 %v2728, %v2770
  %v2785 = vadd.f32 %v2729, %v2771
  %v2786 = vadd.f32 %v2730, %v2772
  %v2787 = vadd.f32 %v2731, %v2773
  %v2788 = vld [vmem:[%s2464] sm:$0xff]
  %v2789 = vld [vmem:[%s2464 + $0x8] sm:$0xff]
  %v2790 = vld [vmem:[%s2464 + $0x10] sm:$0xff]
  %v2791 = vld [vmem:[%s2464 + $0x18] sm:$0xff]
  %v2792 = vld [vmem:[%s2464 + $0x20] sm:$0xff]
  %v2793 = vld [vmem:[%s2464 + $0x28] sm:$0xff]
  %v2794 = vld [vmem:[%s2464 + $0x30] sm:$0xff]
  %v2795 = vld [vmem:[%s2464 + $0x38] sm:$0xff]
  %v2796 = vld [vmem:[%s2464 + $0x40] sm:$0xff]
  %v2797 = vld [vmem:[%s2464 + $0x48] sm:$0xff]
  %v2798 = vld [vmem:[%s2464 + $0x50] sm:$0xff]
  %v2799 = vld [vmem:[%s2464 + $0x58] sm:$0xff]
  %v2800 = vld [vmem:[%s2464 + $0x60] sm:$0xff]
  %v2801 = vld [vmem:[%s2464 + $0x68] sm:$0xff]
  %v2802 = vrot.slane %v2788, 7
  %v2803 = vrot.slane %v2789, 7
  %v2804 = vrot.slane %v2790, 7
  %v2805 = vrot.slane %v2791, 7
  %v2806 = vrot.slane %v2792, 7
  %v2807 = vrot.slane %v2793, 7
  %v2808 = vrot.slane %v2794, 7
  %v2809 = vrot.slane %v2795, 7
  %v2810 = vrot.slane %v2796, 7
  %v2811 = vrot.slane %v2797, 7
  %v2812 = vrot.slane %v2798, 7
  %v2813 = vrot.slane %v2799, 7
  %v2814 = vrot.slane %v2800, 7
  %v2815 = vrot.slane %v2801, 7
  %v2816 = vsel %vm651, %v2802, %v2809
  %v2817 = vsel %vm651, %v2803, %v2810
  %v2818 = vsel %vm651, %v2804, %v2811
  %v2819 = vsel %vm651, %v2805, %v2812
  %v2820 = vsel %vm651, %v2806, %v2813
  %v2821 = vsel %vm651, %v2807, %v2814
  %v2822 = vsel %vm651, %v2808, %v2815
  %v2823 = vsel %vm651, %v2809, %v2802
  %v2824 = vsel %vm651, %v2810, %v2803
  %v2825 = vsel %vm651, %v2811, %v2804
  %v2826 = vsel %vm651, %v2812, %v2805
  %v2827 = vsel %vm651, %v2813, %v2806
  %v2828 = vsel %vm651, %v2814, %v2807
  %v2829 = vsel %vm651, %v2815, %v2808
  %v2830 = vmul.f32 %v2823, %v669
  %v2831 = vmul.f32 %v2824, %v673
  %v2832 = vmul.f32 %v2825, %v677
  %v2833 = vmul.f32 %v2826, %v681
  %v2834 = vmul.f32 %v2827, %v685
  %v2835 = vmul.f32 %v2828, %v689
  %v2836 = vmul.f32 %v2829, %v693
  %v2837 = vmul.f32 %v2816, %v669
  %v2838 = vmul.f32 %v2817, %v673
  %v2839 = vmul.f32 %v2818, %v677
  %v2840 = vmul.f32 %v2819, %v681
  %v2841 = vmul.f32 %v2820, %v685
  %v2842 = vmul.f32 %v2821, %v689
  %v2843 = vmul.f32 %v2822, %v693
  %v2844 = vadd.f32 %v2774, %v2830
  %v2845 = vadd.f32 %v2775, %v2831
  %v2846 = vadd.f32 %v2776, %v2832
  %v2847 = vadd.f32 %v2777, %v2833
  %v2848 = vadd.f32 %v2778, %v2834
  %v2849 = vadd.f32 %v2779, %v2835
  %v2850 = vadd.f32 %v2780, %v2836
  %v2851 = vadd.f32 %v2781, %v2837
  %v2852 = vadd.f32 %v2782, %v2838
  %v2853 = vadd.f32 %v2783, %v2839
  %v2854 = vadd.f32 %v2784, %v2840
  %v2855 = vadd.f32 %v2785, %v2841
  %v2856 = vadd.f32 %v2786, %v2842
  %v2857 = vadd.f32 %v2787, %v2843
  %v2858 = vmul.f32 %v2788, %v725
  %v2859 = vmul.f32 %v2789, %v729
  %v2860 = vmul.f32 %v2790, %v733
  %v2861 = vmul.f32 %v2791, %v737
  %v2862 = vmul.f32 %v2792, %v741
  %v2863 = vmul.f32 %v2793, %v745
  %v2864 = vmul.f32 %v2794, %v749
  %v2865 = vmul.f32 %v2795, %v725
  %v2866 = vmul.f32 %v2796, %v729
  %v2867 = vmul.f32 %v2797, %v733
  %v2868 = vmul.f32 %v2798, %v737
  %v2869 = vmul.f32 %v2799, %v741
  %v2870 = vmul.f32 %v2800, %v745
  %v2871 = vmul.f32 %v2801, %v749
  %v2872 = vadd.f32 %v2844, %v2858
  %v2873 = vadd.f32 %v2845, %v2859
  %v2874 = vadd.f32 %v2846, %v2860
  %v2875 = vadd.f32 %v2847, %v2861
  %v2876 = vadd.f32 %v2848, %v2862
  %v2877 = vadd.f32 %v2849, %v2863
  %v2878 = vadd.f32 %v2850, %v2864
  %v2879 = vadd.f32 %v2851, %v2865
  %v2880 = vadd.f32 %v2852, %v2866
  %v2881 = vadd.f32 %v2853, %v2867
  %v2882 = vadd.f32 %v2854, %v2868
  %v2883 = vadd.f32 %v2855, %v2869
  %v2884 = vadd.f32 %v2856, %v2870
  %v2885 = vadd.f32 %v2857, %v2871
  %v2886 = vrot.slane %v2788, 1
  %v2887 = vrot.slane %v2789, 1
  %v2888 = vrot.slane %v2790, 1
  %v2889 = vrot.slane %v2791, 1
  %v2890 = vrot.slane %v2792, 1
  %v2891 = vrot.slane %v2793, 1
  %v2892 = vrot.slane %v2794, 1
  %v2893 = vrot.slane %v2795, 1
  %v2894 = vrot.slane %v2796, 1
  %v2895 = vrot.slane %v2797, 1
  %v2896 = vrot.slane %v2798, 1
  %v2897 = vrot.slane %v2799, 1
  %v2898 = vrot.slane %v2800, 1
  %v2899 = vrot.slane %v2801, 1
  %v2900 = vsel %vm792, %v2886, %v2893
  %v2901 = vsel %vm792, %v2887, %v2894
  %v2902 = vsel %vm792, %v2888, %v2895
  %v2903 = vsel %vm792, %v2889, %v2896
  %v2904 = vsel %vm792, %v2890, %v2897
  %v2905 = vsel %vm792, %v2891, %v2898
  %v2906 = vsel %vm792, %v2892, %v2899
  %v2907 = vsel %vm792, %v2893, %v2886
  %v2908 = vsel %vm792, %v2894, %v2887
  %v2909 = vsel %vm792, %v2895, %v2888
  %v2910 = vsel %vm792, %v2896, %v2889
  %v2911 = vsel %vm792, %v2897, %v2890
  %v2912 = vsel %vm792, %v2898, %v2891
  %v2913 = vsel %vm792, %v2899, %v2892
  %v2914 = vmul.f32 %v2900, %v810
  %v2915 = vmul.f32 %v2901, %v814
  %v2916 = vmul.f32 %v2902, %v818
  %v2917 = vmul.f32 %v2903, %v822
  %v2918 = vmul.f32 %v2904, %v826
  %v2919 = vmul.f32 %v2905, %v830
  %v2920 = vmul.f32 %v2906, %v834
  %v2921 = vmul.f32 %v2907, %v810
  %v2922 = vmul.f32 %v2908, %v814
  %v2923 = vmul.f32 %v2909, %v818
  %v2924 = vmul.f32 %v2910, %v822
  %v2925 = vmul.f32 %v2911, %v826
  %v2926 = vmul.f32 %v2912, %v830
  %v2927 = vmul.f32 %v2913, %v834
  %v2928 = vadd.f32 %v2872, %v2914
  %v2929 = vadd.f32 %v2873, %v2915
  %v2930 = vadd.f32 %v2874, %v2916
  %v2931 = vadd.f32 %v2875, %v2917
  %v2932 = vadd.f32 %v2876, %v2918
  %v2933 = vadd.f32 %v2877, %v2919
  %v2934 = vadd.f32 %v2878, %v2920
  %v2935 = vadd.f32 %v2879, %v2921
  %v2936 = vadd.f32 %v2880, %v2922
  %v2937 = vadd.f32 %v2881, %v2923
  %v2938 = vadd.f32 %v2882, %v2924
  %v2939 = vadd.f32 %v2883, %v2925
  %v2940 = vadd.f32 %v2884, %v2926
  %v2941 = vadd.f32 %v2885, %v2927
  %s2942 = scalar_lea.vmem [#allocation2], 560
  %v2943 = vld [vmem:[%s2942] sm:$0xff]
  %v2944 = vld [vmem:[%s2942 + $0x8] sm:$0xff]
  %v2945 = vld [vmem:[%s2942 + $0x10] sm:$0xff]
  %v2946 = vld [vmem:[%s2942 + $0x18] sm:$0xff]
  %v2947 = vld [vmem:[%s2942 + $0x20] sm:$0xff]
  %v2948 = vld [vmem:[%s2942 + $0x28] sm:$0xff]
  %v2949 = vld [vmem:[%s2942 + $0x30] sm:$0xff]
  %v2950 = vld [vmem:[%s2942 + $0x38] sm:$0xff]
  %v2951 = vld [vmem:[%s2942 + $0x40] sm:$0xff]
  %v2952 = vld [vmem:[%s2942 + $0x48] sm:$0xff]
  %v2953 = vld [vmem:[%s2942 + $0x50] sm:$0xff]
  %v2954 = vld [vmem:[%s2942 + $0x58] sm:$0xff]
  %v2955 = vld [vmem:[%s2942 + $0x60] sm:$0xff]
  %v2956 = vld [vmem:[%s2942 + $0x68] sm:$0xff]
  %v2957 = vrot.slane %v2943, 7
  %v2958 = vrot.slane %v2944, 7
  %v2959 = vrot.slane %v2945, 7
  %v2960 = vrot.slane %v2946, 7
  %v2961 = vrot.slane %v2947, 7
  %v2962 = vrot.slane %v2948, 7
  %v2963 = vrot.slane %v2949, 7
  %v2964 = vrot.slane %v2950, 7
  %v2965 = vrot.slane %v2951, 7
  %v2966 = vrot.slane %v2952, 7
  %v2967 = vrot.slane %v2953, 7
  %v2968 = vrot.slane %v2954, 7
  %v2969 = vrot.slane %v2955, 7
  %v2970 = vrot.slane %v2956, 7
  %v2971 = vsel %vm651, %v2957, %v2964
  %v2972 = vsel %vm651, %v2958, %v2965
  %v2973 = vsel %vm651, %v2959, %v2966
  %v2974 = vsel %vm651, %v2960, %v2967
  %v2975 = vsel %vm651, %v2961, %v2968
  %v2976 = vsel %vm651, %v2962, %v2969
  %v2977 = vsel %vm651, %v2963, %v2970
  %v2978 = vsel %vm651, %v2964, %v2957
  %v2979 = vsel %vm651, %v2965, %v2958
  %v2980 = vsel %vm651, %v2966, %v2959
  %v2981 = vsel %vm651, %v2967, %v2960
  %v2982 = vsel %vm651, %v2968, %v2961
  %v2983 = vsel %vm651, %v2969, %v2962
  %v2984 = vsel %vm651, %v2970, %v2963
  %v2985 = vmul.f32 %v2978, %v909
  %v2986 = vmul.f32 %v2979, %v913
  %v2987 = vmul.f32 %v2980, %v917
  %v2988 = vmul.f32 %v2981, %v921
  %v2989 = vmul.f32 %v2982, %v925
  %v2990 = vmul.f32 %v2983, %v929
  %v2991 = vmul.f32 %v2984, %v933
  %v2992 = vmul.f32 %v2971, %v909
  %v2993 = vmul.f32 %v2972, %v913
  %v2994 = vmul.f32 %v2973, %v917
  %v2995 = vmul.f32 %v2974, %v921
  %v2996 = vmul.f32 %v2975, %v925
  %v2997 = vmul.f32 %v2976, %v929
  %v2998 = vmul.f32 %v2977, %v933
  %v2999 = vadd.f32 %v2928, %v2985
  %v3000 = vadd.f32 %v2929, %v2986
  %v3001 = vadd.f32 %v2930, %v2987
  %v3002 = vadd.f32 %v2931, %v2988
  %v3003 = vadd.f32 %v2932, %v2989
  %v3004 = vadd.f32 %v2933, %v2990
  %v3005 = vadd.f32 %v2934, %v2991
  %v3006 = vadd.f32 %v2935, %v2992
  %v3007 = vadd.f32 %v2936, %v2993
  %v3008 = vadd.f32 %v2937, %v2994
  %v3009 = vadd.f32 %v2938, %v2995
  %v3010 = vadd.f32 %v2939, %v2996
  %v3011 = vadd.f32 %v2940, %v2997
  %v3012 = vadd.f32 %v2941, %v2998
  %v3013 = vmul.f32 %v2943, %v965
  %v3014 = vmul.f32 %v2944, %v969
  %v3015 = vmul.f32 %v2945, %v973
  %v3016 = vmul.f32 %v2946, %v977
  %v3017 = vmul.f32 %v2947, %v981
  %v3018 = vmul.f32 %v2948, %v985
  %v3019 = vmul.f32 %v2949, %v989
  %v3020 = vmul.f32 %v2950, %v965
  %v3021 = vmul.f32 %v2951, %v969
  %v3022 = vmul.f32 %v2952, %v973
  %v3023 = vmul.f32 %v2953, %v977
  %v3024 = vmul.f32 %v2954, %v981
  %v3025 = vmul.f32 %v2955, %v985
  %v3026 = vmul.f32 %v2956, %v989
  %v3027 = vadd.f32 %v2999, %v3013
  %v3028 = vadd.f32 %v3000, %v3014
  %v3029 = vadd.f32 %v3001, %v3015
  %v3030 = vadd.f32 %v3002, %v3016
  %v3031 = vadd.f32 %v3003, %v3017
  %v3032 = vadd.f32 %v3004, %v3018
  %v3033 = vadd.f32 %v3005, %v3019
  %v3034 = vadd.f32 %v3006, %v3020
  %v3035 = vadd.f32 %v3007, %v3021
  %v3036 = vadd.f32 %v3008, %v3022
  %v3037 = vadd.f32 %v3009, %v3023
  %v3038 = vadd.f32 %v3010, %v3024
  %v3039 = vadd.f32 %v3011, %v3025
  %v3040 = vadd.f32 %v3012, %v3026
  %v3041 = vrot.slane %v2943, 1
  %v3042 = vrot.slane %v2944, 1
  %v3043 = vrot.slane %v2945, 1
  %v3044 = vrot.slane %v2946, 1
  %v3045 = vrot.slane %v2947, 1
  %v3046 = vrot.slane %v2948, 1
  %v3047 = vrot.slane %v2949, 1
  %v3048 = vrot.slane %v2950, 1
  %v3049 = vrot.slane %v2951, 1
  %v3050 = vrot.slane %v2952, 1
  %v3051 = vrot.slane %v2953, 1
  %v3052 = vrot.slane %v2954, 1
  %v3053 = vrot.slane %v2955, 1
  %v3054 = vrot.slane %v2956, 1
  %v3055 = vsel %vm792, %v3041, %v3048
  %v3056 = vsel %vm792, %v3042, %v3049
  %v3057 = vsel %vm792, %v3043, %v3050
  %v3058 = vsel %vm792, %v3044, %v3051
  %v3059 = vsel %vm792, %v3045, %v3052
  %v3060 = vsel %vm792, %v3046, %v3053
  %v3061 = vsel %vm792, %v3047, %v3054
  %v3062 = vsel %vm792, %v3048, %v3041
  %v3063 = vsel %vm792, %v3049, %v3042
  %v3064 = vsel %vm792, %v3050, %v3043
  %v3065 = vsel %vm792, %v3051, %v3044
  %v3066 = vsel %vm792, %v3052, %v3045
  %v3067 = vsel %vm792, %v3053, %v3046
  %v3068 = vsel %vm792, %v3054, %v3047
  %v3069 = vmul.f32 %v3055, %v1049
  %v3070 = vmul.f32 %v3056, %v1053
  %v3071 = vmul.f32 %v3057, %v1057
  %v3072 = vmul.f32 %v3058, %v1061
  %v3073 = vmul.f32 %v3059, %v1065
  %v3074 = vmul.f32 %v3060, %v1069
  %v3075 = vmul.f32 %v3061, %v1073
  %v3076 = vmul.f32 %v3062, %v1049
  %v3077 = vmul.f32 %v3063, %v1053
  %v3078 = vmul.f32 %v3064, %v1057
  %v3079 = vmul.f32 %v3065, %v1061
  %v3080 = vmul.f32 %v3066, %v1065
  %v3081 = vmul.f32 %v3067, %v1069
  %v3082 = vmul.f32 %v3068, %v1073
  %v3083 = vadd.f32 %v3027, %v3069
  %v3084 = vadd.f32 %v3028, %v3070
  %v3085 = vadd.f32 %v3029, %v3071
  %v3086 = vadd.f32 %v3030, %v3072
  %v3087 = vadd.f32 %v3031, %v3073
  %v3088 = vadd.f32 %v3032, %v3074
  %v3089 = vadd.f32 %v3033, %v3075
  %v3090 = vadd.f32 %v3034, %v3076
  %v3091 = vadd.f32 %v3035, %v3077
  %v3092 = vadd.f32 %v3036, %v3078
  %v3093 = vadd.f32 %v3037, %v3079
  %v3094 = vadd.f32 %v3038, %v3080
  %v3095 = vadd.f32 %v3039, %v3081
  %v3096 = vadd.f32 %v3040, %v3082
  %s3097 = scalar_lea.vmem [#allocation3], 448
  %3098 = vst [vmem:[%s3097] sm:$0xff] %v3083
  %3099 = vst [vmem:[%s3097 + $0x8] sm:$0xff] %v3084
  %3100 = vst [vmem:[%s3097 + $0x10] sm:$0xff] %v3085
  %3101 = vst [vmem:[%s3097 + $0x18] sm:$0xff] %v3086
  %3102 = vst [vmem:[%s3097 + $0x20] sm:$0xff] %v3087
  %3103 = vst [vmem:[%s3097 + $0x28] sm:$0xff] %v3088
  %3104 = vst.msk [vmem:[%s3097 + $0x30] sm:$0xff] %vm23, %v3089
  %3105 = vst [vmem:[%s3097 + $0x38] sm:$0xff] %v3090
  %3106 = vst [vmem:[%s3097 + $0x40] sm:$0xff] %v3091
  %3107 = vst [vmem:[%s3097 + $0x48] sm:$0xff] %v3092
  %3108 = vst [vmem:[%s3097 + $0x50] sm:$0xff] %v3093
  %3109 = vst [vmem:[%s3097 + $0x58] sm:$0xff] %v3094
  %3110 = vst [vmem:[%s3097 + $0x60] sm:$0xff] %v3095
  %3111 = vst.msk [vmem:[%s3097 + $0x68] sm:$0xff] %vm23, %v3096
  %v3112 = vld [vmem:[%s2464] sm:$0xff]
  %v3113 = vld [vmem:[%s2464 + $0x8] sm:$0xff]
  %v3114 = vld [vmem:[%s2464 + $0x10] sm:$0xff]
  %v3115 = vld [vmem:[%s2464 + $0x18] sm:$0xff]
  %v3116 = vld [vmem:[%s2464 + $0x20] sm:$0xff]
  %v3117 = vld [vmem:[%s2464 + $0x28] sm:$0xff]
  %v3118 = vld [vmem:[%s2464 + $0x30] sm:$0xff]
  %v3119 = vld [vmem:[%s2464 + $0x38] sm:$0xff]
  %v3120 = vld [vmem:[%s2464 + $0x40] sm:$0xff]
  %v3121 = vld [vmem:[%s2464 + $0x48] sm:$0xff]
  %v3122 = vld [vmem:[%s2464 + $0x50] sm:$0xff]
  %v3123 = vld [vmem:[%s2464 + $0x58] sm:$0xff]
  %v3124 = vld [vmem:[%s2464 + $0x60] sm:$0xff]
  %v3125 = vld [vmem:[%s2464 + $0x68] sm:$0xff]
  %v3126 = vrot.slane %v3112, 7
  %v3127 = vrot.slane %v3113, 7
  %v3128 = vrot.slane %v3114, 7
  %v3129 = vrot.slane %v3115, 7
  %v3130 = vrot.slane %v3116, 7
  %v3131 = vrot.slane %v3117, 7
  %v3132 = vrot.slane %v3118, 7
  %v3133 = vrot.slane %v3119, 7
  %v3134 = vrot.slane %v3120, 7
  %v3135 = vrot.slane %v3121, 7
  %v3136 = vrot.slane %v3122, 7
  %v3137 = vrot.slane %v3123, 7
  %v3138 = vrot.slane %v3124, 7
  %v3139 = vrot.slane %v3125, 7
  %v3140 = vsel %vm651, %v3126, %v3133
  %v3141 = vsel %vm651, %v3127, %v3134
  %v3142 = vsel %vm651, %v3128, %v3135
  %v3143 = vsel %vm651, %v3129, %v3136
  %v3144 = vsel %vm651, %v3130, %v3137
  %v3145 = vsel %vm651, %v3131, %v3138
  %v3146 = vsel %vm651, %v3132, %v3139
  %v3147 = vsel %vm651, %v3133, %v3126
  %v3148 = vsel %vm651, %v3134, %v3127
  %v3149 = vsel %vm651, %v3135, %v3128
  %v3150 = vsel %vm651, %v3136, %v3129
  %v3151 = vsel %vm651, %v3137, %v3130
  %v3152 = vsel %vm651, %v3138, %v3131
  %v3153 = vsel %vm651, %v3139, %v3132
  %v3154 = vmul.f32 %v3147, %v1161
  %v3155 = vmul.f32 %v3148, %v1165
  %v3156 = vmul.f32 %v3149, %v1169
  %v3157 = vmul.f32 %v3150, %v1173
  %v3158 = vmul.f32 %v3151, %v1177
  %v3159 = vmul.f32 %v3152, %v1181
  %v3160 = vmul.f32 %v3153, %v1185
  %v3161 = vmul.f32 %v3140, %v1161
  %v3162 = vmul.f32 %v3141, %v1165
  %v3163 = vmul.f32 %v3142, %v1169
  %v3164 = vmul.f32 %v3143, %v1173
  %v3165 = vmul.f32 %v3144, %v1177
  %v3166 = vmul.f32 %v3145, %v1181
  %v3167 = vmul.f32 %v3146, %v1185
  %v3168 = vadd.f32 %v3154, 0.0
  %v3169 = vadd.f32 %v3155, 0.0
  %v3170 = vadd.f32 %v3156, 0.0
  %v3171 = vadd.f32 %v3157, 0.0
  %v3172 = vadd.f32 %v3158, 0.0
  %v3173 = vadd.f32 %v3159, 0.0
  %v3174 = vadd.f32 %v3160, 0.0
  %v3175 = vadd.f32 %v3161, 0.0
  %v3176 = vadd.f32 %v3162, 0.0
  %v3177 = vadd.f32 %v3163, 0.0
  %v3178 = vadd.f32 %v3164, 0.0
  %v3179 = vadd.f32 %v3165, 0.0
  %v3180 = vadd.f32 %v3166, 0.0
  %v3181 = vadd.f32 %v3167, 0.0
  %v3182 = vmul.f32 %v3112, %v1217
  %v3183 = vmul.f32 %v3113, %v1221
  %v3184 = vmul.f32 %v3114, %v1225
  %v3185 = vmul.f32 %v3115, %v1229
  %v3186 = vmul.f32 %v3116, %v1233
  %v3187 = vmul.f32 %v3117, %v1237
  %v3188 = vmul.f32 %v3118, %v1241
  %v3189 = vmul.f32 %v3119, %v1217
  %v3190 = vmul.f32 %v3120, %v1221
  %v3191 = vmul.f32 %v3121, %v1225
  %v3192 = vmul.f32 %v3122, %v1229
  %v3193 = vmul.f32 %v3123, %v1233
  %v3194 = vmul.f32 %v3124, %v1237
  %v3195 = vmul.f32 %v3125, %v1241
  %v3196 = vadd.f32 %v3168, %v3182
  %v3197 = vadd.f32 %v3169, %v3183
  %v3198 = vadd.f32 %v3170, %v3184
  %v3199 = vadd.f32 %v3171, %v3185
  %v3200 = vadd.f32 %v3172, %v3186
  %v3201 = vadd.f32 %v3173, %v3187
  %v3202 = vadd.f32 %v3174, %v3188
  %v3203 = vadd.f32 %v3175, %v3189
  %v3204 = vadd.f32 %v3176, %v3190
  %v3205 = vadd.f32 %v3177, %v3191
  %v3206 = vadd.f32 %v3178, %v3192
  %v3207 = vadd.f32 %v3179, %v3193
  %v3208 = vadd.f32 %v3180, %v3194
  %v3209 = vadd.f32 %v3181, %v3195
  %v3210 = vrot.slane %v3112, 1
  %v3211 = vrot.slane %v3113, 1
  %v3212 = vrot.slane %v3114, 1
  %v3213 = vrot.slane %v3115, 1
  %v3214 = vrot.slane %v3116, 1
  %v3215 = vrot.slane %v3117, 1
  %v3216 = vrot.slane %v3118, 1
  %v3217 = vrot.slane %v3119, 1
  %v3218 = vrot.slane %v3120, 1
  %v3219 = vrot.slane %v3121, 1
  %v3220 = vrot.slane %v3122, 1
  %v3221 = vrot.slane %v3123, 1
  %v3222 = vrot.slane %v3124, 1
  %v3223 = vrot.slane %v3125, 1
  %v3224 = vsel %vm792, %v3210, %v3217
  %v3225 = vsel %vm792, %v3211, %v3218
  %v3226 = vsel %vm792, %v3212, %v3219
  %v3227 = vsel %vm792, %v3213, %v3220
  %v3228 = vsel %vm792, %v3214, %v3221
  %v3229 = vsel %vm792, %v3215, %v3222
  %v3230 = vsel %vm792, %v3216, %v3223
  %v3231 = vsel %vm792, %v3217, %v3210
  %v3232 = vsel %vm792, %v3218, %v3211
  %v3233 = vsel %vm792, %v3219, %v3212
  %v3234 = vsel %vm792, %v3220, %v3213
  %v3235 = vsel %vm792, %v3221, %v3214
  %v3236 = vsel %vm792, %v3222, %v3215
  %v3237 = vsel %vm792, %v3223, %v3216
  %v3238 = vmul.f32 %v3224, %v1301
  %v3239 = vmul.f32 %v3225, %v1305
  %v3240 = vmul.f32 %v3226, %v1309
  %v3241 = vmul.f32 %v3227, %v1313
  %v3242 = vmul.f32 %v3228, %v1317
  %v3243 = vmul.f32 %v3229, %v1321
  %v3244 = vmul.f32 %v3230, %v1325
  %v3245 = vmul.f32 %v3231, %v1301
  %v3246 = vmul.f32 %v3232, %v1305
  %v3247 = vmul.f32 %v3233, %v1309
  %v3248 = vmul.f32 %v3234, %v1313
  %v3249 = vmul.f32 %v3235, %v1317
  %v3250 = vmul.f32 %v3236, %v1321
  %v3251 = vmul.f32 %v3237, %v1325
  %v3252 = vadd.f32 %v3196, %v3238
  %v3253 = vadd.f32 %v3197, %v3239
  %v3254 = vadd.f32 %v3198, %v3240
  %v3255 = vadd.f32 %v3199, %v3241
  %v3256 = vadd.f32 %v3200, %v3242
  %v3257 = vadd.f32 %v3201, %v3243
  %v3258 = vadd.f32 %v3202, %v3244
  %v3259 = vadd.f32 %v3203, %v3245
  %v3260 = vadd.f32 %v3204, %v3246
  %v3261 = vadd.f32 %v3205, %v3247
  %v3262 = vadd.f32 %v3206, %v3248
  %v3263 = vadd.f32 %v3207, %v3249
  %v3264 = vadd.f32 %v3208, %v3250
  %v3265 = vadd.f32 %v3209, %v3251
  %v3266 = vld [vmem:[%s2942] sm:$0xff]
  %v3267 = vld [vmem:[%s2942 + $0x8] sm:$0xff]
  %v3268 = vld [vmem:[%s2942 + $0x10] sm:$0xff]
  %v3269 = vld [vmem:[%s2942 + $0x18] sm:$0xff]
  %v3270 = vld [vmem:[%s2942 + $0x20] sm:$0xff]
  %v3271 = vld [vmem:[%s2942 + $0x28] sm:$0xff]
  %v3272 = vld [vmem:[%s2942 + $0x30] sm:$0xff]
  %v3273 = vld [vmem:[%s2942 + $0x38] sm:$0xff]
  %v3274 = vld [vmem:[%s2942 + $0x40] sm:$0xff]
  %v3275 = vld [vmem:[%s2942 + $0x48] sm:$0xff]
  %v3276 = vld [vmem:[%s2942 + $0x50] sm:$0xff]
  %v3277 = vld [vmem:[%s2942 + $0x58] sm:$0xff]
  %v3278 = vld [vmem:[%s2942 + $0x60] sm:$0xff]
  %v3279 = vld [vmem:[%s2942 + $0x68] sm:$0xff]
  %v3280 = vrot.slane %v3266, 7
  %v3281 = vrot.slane %v3267, 7
  %v3282 = vrot.slane %v3268, 7
  %v3283 = vrot.slane %v3269, 7
  %v3284 = vrot.slane %v3270, 7
  %v3285 = vrot.slane %v3271, 7
  %v3286 = vrot.slane %v3272, 7
  %v3287 = vrot.slane %v3273, 7
  %v3288 = vrot.slane %v3274, 7
  %v3289 = vrot.slane %v3275, 7
  %v3290 = vrot.slane %v3276, 7
  %v3291 = vrot.slane %v3277, 7
  %v3292 = vrot.slane %v3278, 7
  %v3293 = vrot.slane %v3279, 7
  %v3294 = vsel %vm651, %v3280, %v3287
  %v3295 = vsel %vm651, %v3281, %v3288
  %v3296 = vsel %vm651, %v3282, %v3289
  %v3297 = vsel %vm651, %v3283, %v3290
  %v3298 = vsel %vm651, %v3284, %v3291
  %v3299 = vsel %vm651, %v3285, %v3292
  %v3300 = vsel %vm651, %v3286, %v3293
  %v3301 = vsel %vm651, %v3287, %v3280
  %v3302 = vsel %vm651, %v3288, %v3281
  %v3303 = vsel %vm651, %v3289, %v3282
  %v3304 = vsel %vm651, %v3290, %v3283
  %v3305 = vsel %vm651, %v3291, %v3284
  %v3306 = vsel %vm651, %v3292, %v3285
  %v3307 = vsel %vm651, %v3293, %v3286
  %v3308 = vmul.f32 %v3301, %v669
  %v3309 = vmul.f32 %v3302, %v673
  %v3310 = vmul.f32 %v3303, %v677
  %v3311 = vmul.f32 %v3304, %v681
  %v3312 = vmul.f32 %v3305, %v685
  %v3313 = vmul.f32 %v3306, %v689
  %v3314 = vmul.f32 %v3307, %v693
  %v3315 = vmul.f32 %v3294, %v669
  %v3316 = vmul.f32 %v3295, %v673
  %v3317 = vmul.f32 %v3296, %v677
  %v3318 = vmul.f32 %v3297, %v681
  %v3319 = vmul.f32 %v3298, %v685
  %v3320 = vmul.f32 %v3299, %v689
  %v3321 = vmul.f32 %v3300, %v693
  %v3322 = vadd.f32 %v3252, %v3308
  %v3323 = vadd.f32 %v3253, %v3309
  %v3324 = vadd.f32 %v3254, %v3310
  %v3325 = vadd.f32 %v3255, %v3311
  %v3326 = vadd.f32 %v3256, %v3312
  %v3327 = vadd.f32 %v3257, %v3313
  %v3328 = vadd.f32 %v3258, %v3314
  %v3329 = vadd.f32 %v3259, %v3315
  %v3330 = vadd.f32 %v3260, %v3316
  %v3331 = vadd.f32 %v3261, %v3317
  %v3332 = vadd.f32 %v3262, %v3318
  %v3333 = vadd.f32 %v3263, %v3319
  %v3334 = vadd.f32 %v3264, %v3320
  %v3335 = vadd.f32 %v3265, %v3321
  %v3336 = vmul.f32 %v3266, %v725
  %v3337 = vmul.f32 %v3267, %v729
  %v3338 = vmul.f32 %v3268, %v733
  %v3339 = vmul.f32 %v3269, %v737
  %v3340 = vmul.f32 %v3270, %v741
  %v3341 = vmul.f32 %v3271, %v745
  %v3342 = vmul.f32 %v3272, %v749
  %v3343 = vmul.f32 %v3273, %v725
  %v3344 = vmul.f32 %v3274, %v729
  %v3345 = vmul.f32 %v3275, %v733
  %v3346 = vmul.f32 %v3276, %v737
  %v3347 = vmul.f32 %v3277, %v741
  %v3348 = vmul.f32 %v3278, %v745
  %v3349 = vmul.f32 %v3279, %v749
  %v3350 = vadd.f32 %v3322, %v3336
  %v3351 = vadd.f32 %v3323, %v3337
  %v3352 = vadd.f32 %v3324, %v3338
  %v3353 = vadd.f32 %v3325, %v3339
  %v3354 = vadd.f32 %v3326, %v3340
  %v3355 = vadd.f32 %v3327, %v3341
  %v3356 = vadd.f32 %v3328, %v3342
  %v3357 = vadd.f32 %v3329, %v3343
  %v3358 = vadd.f32 %v3330, %v3344
  %v3359 = vadd.f32 %v3331, %v3345
  %v3360 = vadd.f32 %v3332, %v3346
  %v3361 = vadd.f32 %v3333, %v3347
  %v3362 = vadd.f32 %v3334, %v3348
  %v3363 = vadd.f32 %v3335, %v3349
  %v3364 = vrot.slane %v3266, 1
  %v3365 = vrot.slane %v3267, 1
  %v3366 = vrot.slane %v3268, 1
  %v3367 = vrot.slane %v3269, 1
  %v3368 = vrot.slane %v3270, 1
  %v3369 = vrot.slane %v3271, 1
  %v3370 = vrot.slane %v3272, 1
  %v3371 = vrot.slane %v3273, 1
  %v3372 = vrot.slane %v3274, 1
  %v3373 = vrot.slane %v3275, 1
  %v3374 = vrot.slane %v3276, 1
  %v3375 = vrot.slane %v3277, 1
  %v3376 = vrot.slane %v3278, 1
  %v3377 = vrot.slane %v3279, 1
  %v3378 = vsel %vm792, %v3364, %v3371
  %v3379 = vsel %vm792, %v3365, %v3372
  %v3380 = vsel %vm792, %v3366, %v3373
  %v3381 = vsel %vm792, %v3367, %v3374
  %v3382 = vsel %vm792, %v3368, %v3375
  %v3383 = vsel %vm792, %v3369, %v3376
  %v3384 = vsel %vm792, %v3370, %v3377
  %v3385 = vsel %vm792, %v3371, %v3364
  %v3386 = vsel %vm792, %v3372, %v3365
  %v3387 = vsel %vm792, %v3373, %v3366
  %v3388 = vsel %vm792, %v3374, %v3367
  %v3389 = vsel %vm792, %v3375, %v3368
  %v3390 = vsel %vm792, %v3376, %v3369
  %v3391 = vsel %vm792, %v3377, %v3370
  %v3392 = vmul.f32 %v3378, %v810
  %v3393 = vmul.f32 %v3379, %v814
  %v3394 = vmul.f32 %v3380, %v818
  %v3395 = vmul.f32 %v3381, %v822
  %v3396 = vmul.f32 %v3382, %v826
  %v3397 = vmul.f32 %v3383, %v830
  %v3398 = vmul.f32 %v3384, %v834
  %v3399 = vmul.f32 %v3385, %v810
  %v3400 = vmul.f32 %v3386, %v814
  %v3401 = vmul.f32 %v3387, %v818
  %v3402 = vmul.f32 %v3388, %v822
  %v3403 = vmul.f32 %v3389, %v826
  %v3404 = vmul.f32 %v3390, %v830
  %v3405 = vmul.f32 %v3391, %v834
  %v3406 = vadd.f32 %v3350, %v3392
  %v3407 = vadd.f32 %v3351, %v3393
  %v3408 = vadd.f32 %v3352, %v3394
  %v3409 = vadd.f32 %v3353, %v3395
  %v3410 = vadd.f32 %v3354, %v3396
  %v3411 = vadd.f32 %v3355, %v3397
  %v3412 = vadd.f32 %v3356, %v3398
  %v3413 = vadd.f32 %v3357, %v3399
  %v3414 = vadd.f32 %v3358, %v3400
  %v3415 = vadd.f32 %v3359, %v3401
  %v3416 = vadd.f32 %v3360, %v3402
  %v3417 = vadd.f32 %v3361, %v3403
  %v3418 = vadd.f32 %v3362, %v3404
  %v3419 = vadd.f32 %v3363, %v3405
  %s3420 = scalar_lea.vmem [#allocation2], 672
  %v3421 = vld [vmem:[%s3420] sm:$0xff]
  %v3422 = vld [vmem:[%s3420 + $0x8] sm:$0xff]
  %v3423 = vld [vmem:[%s3420 + $0x10] sm:$0xff]
  %v3424 = vld [vmem:[%s3420 + $0x18] sm:$0xff]
  %v3425 = vld [vmem:[%s3420 + $0x20] sm:$0xff]
  %v3426 = vld [vmem:[%s3420 + $0x28] sm:$0xff]
  %v3427 = vld [vmem:[%s3420 + $0x30] sm:$0xff]
  %v3428 = vld [vmem:[%s3420 + $0x38] sm:$0xff]
  %v3429 = vld [vmem:[%s3420 + $0x40] sm:$0xff]
  %v3430 = vld [vmem:[%s3420 + $0x48] sm:$0xff]
  %v3431 = vld [vmem:[%s3420 + $0x50] sm:$0xff]
  %v3432 = vld [vmem:[%s3420 + $0x58] sm:$0xff]
  %v3433 = vld [vmem:[%s3420 + $0x60] sm:$0xff]
  %v3434 = vld [vmem:[%s3420 + $0x68] sm:$0xff]
  %v3435 = vrot.slane %v3421, 7
  %v3436 = vrot.slane %v3422, 7
  %v3437 = vrot.slane %v3423, 7
  %v3438 = vrot.slane %v3424, 7
  %v3439 = vrot.slane %v3425, 7
  %v3440 = vrot.slane %v3426, 7
  %v3441 = vrot.slane %v3427, 7
  %v3442 = vrot.slane %v3428, 7
  %v3443 = vrot.slane %v3429, 7
  %v3444 = vrot.slane %v3430, 7
  %v3445 = vrot.slane %v3431, 7
  %v3446 = vrot.slane %v3432, 7
  %v3447 = vrot.slane %v3433, 7
  %v3448 = vrot.slane %v3434, 7
  %v3449 = vsel %vm651, %v3435, %v3442
  %v3450 = vsel %vm651, %v3436, %v3443
  %v3451 = vsel %vm651, %v3437, %v3444
  %v3452 = vsel %vm651, %v3438, %v3445
  %v3453 = vsel %vm651, %v3439, %v3446
  %v3454 = vsel %vm651, %v3440, %v3447
  %v3455 = vsel %vm651, %v3441, %v3448
  %v3456 = vsel %vm651, %v3442, %v3435
  %v3457 = vsel %vm651, %v3443, %v3436
  %v3458 = vsel %vm651, %v3444, %v3437
  %v3459 = vsel %vm651, %v3445, %v3438
  %v3460 = vsel %vm651, %v3446, %v3439
  %v3461 = vsel %vm651, %v3447, %v3440
  %v3462 = vsel %vm651, %v3448, %v3441
  %v3463 = vmul.f32 %v3456, %v909
  %v3464 = vmul.f32 %v3457, %v913
  %v3465 = vmul.f32 %v3458, %v917
  %v3466 = vmul.f32 %v3459, %v921
  %v3467 = vmul.f32 %v3460, %v925
  %v3468 = vmul.f32 %v3461, %v929
  %v3469 = vmul.f32 %v3462, %v933
  %v3470 = vmul.f32 %v3449, %v909
  %v3471 = vmul.f32 %v3450, %v913
  %v3472 = vmul.f32 %v3451, %v917
  %v3473 = vmul.f32 %v3452, %v921
  %v3474 = vmul.f32 %v3453, %v925
  %v3475 = vmul.f32 %v3454, %v929
  %v3476 = vmul.f32 %v3455, %v933
  %v3477 = vadd.f32 %v3406, %v3463
  %v3478 = vadd.f32 %v3407, %v3464
  %v3479 = vadd.f32 %v3408, %v3465
  %v3480 = vadd.f32 %v3409, %v3466
  %v3481 = vadd.f32 %v3410, %v3467
  %v3482 = vadd.f32 %v3411, %v3468
  %v3483 = vadd.f32 %v3412, %v3469
  %v3484 = vadd.f32 %v3413, %v3470
  %v3485 = vadd.f32 %v3414, %v3471
  %v3486 = vadd.f32 %v3415, %v3472
  %v3487 = vadd.f32 %v3416, %v3473
  %v3488 = vadd.f32 %v3417, %v3474
  %v3489 = vadd.f32 %v3418, %v3475
  %v3490 = vadd.f32 %v3419, %v3476
  %v3491 = vmul.f32 %v3421, %v965
  %v3492 = vmul.f32 %v3422, %v969
  %v3493 = vmul.f32 %v3423, %v973
  %v3494 = vmul.f32 %v3424, %v977
  %v3495 = vmul.f32 %v3425, %v981
  %v3496 = vmul.f32 %v3426, %v985
  %v3497 = vmul.f32 %v3427, %v989
  %v3498 = vmul.f32 %v3428, %v965
  %v3499 = vmul.f32 %v3429, %v969
  %v3500 = vmul.f32 %v3430, %v973
  %v3501 = vmul.f32 %v3431, %v977
  %v3502 = vmul.f32 %v3432, %v981
  %v3503 = vmul.f32 %v3433, %v985
  %v3504 = vmul.f32 %v3434, %v989
  %v3505 = vadd.f32 %v3477, %v3491
  %v3506 = vadd.f32 %v3478, %v3492
  %v3507 = vadd.f32 %v3479, %v3493
  %v3508 = vadd.f32 %v3480, %v3494
  %v3509 = vadd.f32 %v3481, %v3495
  %v3510 = vadd.f32 %v3482, %v3496
  %v3511 = vadd.f32 %v3483, %v3497
  %v3512 = vadd.f32 %v3484, %v3498
  %v3513 = vadd.f32 %v3485, %v3499
  %v3514 = vadd.f32 %v3486, %v3500
  %v3515 = vadd.f32 %v3487, %v3501
  %v3516 = vadd.f32 %v3488, %v3502
  %v3517 = vadd.f32 %v3489, %v3503
  %v3518 = vadd.f32 %v3490, %v3504
  %v3519 = vrot.slane %v3421, 1
  %v3520 = vrot.slane %v3422, 1
  %v3521 = vrot.slane %v3423, 1
  %v3522 = vrot.slane %v3424, 1
  %v3523 = vrot.slane %v3425, 1
  %v3524 = vrot.slane %v3426, 1
  %v3525 = vrot.slane %v3427, 1
  %v3526 = vrot.slane %v3428, 1
  %v3527 = vrot.slane %v3429, 1
  %v3528 = vrot.slane %v3430, 1
  %v3529 = vrot.slane %v3431, 1
  %v3530 = vrot.slane %v3432, 1
  %v3531 = vrot.slane %v3433, 1
  %v3532 = vrot.slane %v3434, 1
  %v3533 = vsel %vm792, %v3519, %v3526
  %v3534 = vsel %vm792, %v3520, %v3527
  %v3535 = vsel %vm792, %v3521, %v3528
  %v3536 = vsel %vm792, %v3522, %v3529
  %v3537 = vsel %vm792, %v3523, %v3530
  %v3538 = vsel %vm792, %v3524, %v3531
  %v3539 = vsel %vm792, %v3525, %v3532
  %v3540 = vsel %vm792, %v3526, %v3519
  %v3541 = vsel %vm792, %v3527, %v3520
  %v3542 = vsel %vm792, %v3528, %v3521
  %v3543 = vsel %vm792, %v3529, %v3522
  %v3544 = vsel %vm792, %v3530, %v3523
  %v3545 = vsel %vm792, %v3531, %v3524
  %v3546 = vsel %vm792, %v3532, %v3525
  %v3547 = vmul.f32 %v3533, %v1049
  %v3548 = vmul.f32 %v3534, %v1053
  %v3549 = vmul.f32 %v3535, %v1057
  %v3550 = vmul.f32 %v3536, %v1061
  %v3551 = vmul.f32 %v3537, %v1065
  %v3552 = vmul.f32 %v3538, %v1069
  %v3553 = vmul.f32 %v3539, %v1073
  %v3554 = vmul.f32 %v3540, %v1049
  %v3555 = vmul.f32 %v3541, %v1053
  %v3556 = vmul.f32 %v3542, %v1057
  %v3557 = vmul.f32 %v3543, %v1061
  %v3558 = vmul.f32 %v3544, %v1065
  %v3559 = vmul.f32 %v3545, %v1069
  %v3560 = vmul.f32 %v3546, %v1073
  %v3561 = vadd.f32 %v3505, %v3547
  %v3562 = vadd.f32 %v3506, %v3548
  %v3563 = vadd.f32 %v3507, %v3549
  %v3564 = vadd.f32 %v3508, %v3550
  %v3565 = vadd.f32 %v3509, %v3551
  %v3566 = vadd.f32 %v3510, %v3552
  %v3567 = vadd.f32 %v3511, %v3553
  %v3568 = vadd.f32 %v3512, %v3554
  %v3569 = vadd.f32 %v3513, %v3555
  %v3570 = vadd.f32 %v3514, %v3556
  %v3571 = vadd.f32 %v3515, %v3557
  %v3572 = vadd.f32 %v3516, %v3558
  %v3573 = vadd.f32 %v3517, %v3559
  %v3574 = vadd.f32 %v3518, %v3560
  %s3575 = scalar_lea.vmem [#allocation3], 560
  %3576 = vst [vmem:[%s3575] sm:$0xff] %v3561
  %3577 = vst [vmem:[%s3575 + $0x8] sm:$0xff] %v3562
  %3578 = vst [vmem:[%s3575 + $0x10] sm:$0xff] %v3563
  %3579 = vst [vmem:[%s3575 + $0x18] sm:$0xff] %v3564
  %3580 = vst [vmem:[%s3575 + $0x20] sm:$0xff] %v3565
  %3581 = vst [vmem:[%s3575 + $0x28] sm:$0xff] %v3566
  %3582 = vst.msk [vmem:[%s3575 + $0x30] sm:$0xff] %vm23, %v3567
  %3583 = vst [vmem:[%s3575 + $0x38] sm:$0xff] %v3568
  %3584 = vst [vmem:[%s3575 + $0x40] sm:$0xff] %v3569
  %3585 = vst [vmem:[%s3575 + $0x48] sm:$0xff] %v3570
  %3586 = vst [vmem:[%s3575 + $0x50] sm:$0xff] %v3571
  %3587 = vst [vmem:[%s3575 + $0x58] sm:$0xff] %v3572
  %3588 = vst [vmem:[%s3575 + $0x60] sm:$0xff] %v3573
  %3589 = vst.msk [vmem:[%s3575 + $0x68] sm:$0xff] %vm23, %v3574
  %v3590 = vld [vmem:[%s2942] sm:$0xff]
  %v3591 = vld [vmem:[%s2942 + $0x8] sm:$0xff]
  %v3592 = vld [vmem:[%s2942 + $0x10] sm:$0xff]
  %v3593 = vld [vmem:[%s2942 + $0x18] sm:$0xff]
  %v3594 = vld [vmem:[%s2942 + $0x20] sm:$0xff]
  %v3595 = vld [vmem:[%s2942 + $0x28] sm:$0xff]
  %v3596 = vld [vmem:[%s2942 + $0x30] sm:$0xff]
  %v3597 = vld [vmem:[%s2942 + $0x38] sm:$0xff]
  %v3598 = vld [vmem:[%s2942 + $0x40] sm:$0xff]
  %v3599 = vld [vmem:[%s2942 + $0x48] sm:$0xff]
  %v3600 = vld [vmem:[%s2942 + $0x50] sm:$0xff]
  %v3601 = vld [vmem:[%s2942 + $0x58] sm:$0xff]
  %v3602 = vld [vmem:[%s2942 + $0x60] sm:$0xff]
  %v3603 = vld [vmem:[%s2942 + $0x68] sm:$0xff]
  %v3604 = vrot.slane %v3590, 7
  %v3605 = vrot.slane %v3591, 7
  %v3606 = vrot.slane %v3592, 7
  %v3607 = vrot.slane %v3593, 7
  %v3608 = vrot.slane %v3594, 7
  %v3609 = vrot.slane %v3595, 7
  %v3610 = vrot.slane %v3596, 7
  %v3611 = vrot.slane %v3597, 7
  %v3612 = vrot.slane %v3598, 7
  %v3613 = vrot.slane %v3599, 7
  %v3614 = vrot.slane %v3600, 7
  %v3615 = vrot.slane %v3601, 7
  %v3616 = vrot.slane %v3602, 7
  %v3617 = vrot.slane %v3603, 7
  %v3618 = vsel %vm651, %v3604, %v3611
  %v3619 = vsel %vm651, %v3605, %v3612
  %v3620 = vsel %vm651, %v3606, %v3613
  %v3621 = vsel %vm651, %v3607, %v3614
  %v3622 = vsel %vm651, %v3608, %v3615
  %v3623 = vsel %vm651, %v3609, %v3616
  %v3624 = vsel %vm651, %v3610, %v3617
  %v3625 = vsel %vm651, %v3611, %v3604
  %v3626 = vsel %vm651, %v3612, %v3605
  %v3627 = vsel %vm651, %v3613, %v3606
  %v3628 = vsel %vm651, %v3614, %v3607
  %v3629 = vsel %vm651, %v3615, %v3608
  %v3630 = vsel %vm651, %v3616, %v3609
  %v3631 = vsel %vm651, %v3617, %v3610
  %v3632 = vmul.f32 %v3625, %v1161
  %v3633 = vmul.f32 %v3626, %v1165
  %v3634 = vmul.f32 %v3627, %v1169
  %v3635 = vmul.f32 %v3628, %v1173
  %v3636 = vmul.f32 %v3629, %v1177
  %v3637 = vmul.f32 %v3630, %v1181
  %v3638 = vmul.f32 %v3631, %v1185
  %v3639 = vmul.f32 %v3618, %v1161
  %v3640 = vmul.f32 %v3619, %v1165
  %v3641 = vmul.f32 %v3620, %v1169
  %v3642 = vmul.f32 %v3621, %v1173
  %v3643 = vmul.f32 %v3622, %v1177
  %v3644 = vmul.f32 %v3623, %v1181
  %v3645 = vmul.f32 %v3624, %v1185
  %v3646 = vadd.f32 %v3632, 0.0
  %v3647 = vadd.f32 %v3633, 0.0
  %v3648 = vadd.f32 %v3634, 0.0
  %v3649 = vadd.f32 %v3635, 0.0
  %v3650 = vadd.f32 %v3636, 0.0
  %v3651 = vadd.f32 %v3637, 0.0
  %v3652 = vadd.f32 %v3638, 0.0
  %v3653 = vadd.f32 %v3639, 0.0
  %v3654 = vadd.f32 %v3640, 0.0
  %v3655 = vadd.f32 %v3641, 0.0
  %v3656 = vadd.f32 %v3642, 0.0
  %v3657 = vadd.f32 %v3643, 0.0
  %v3658 = vadd.f32 %v3644, 0.0
  %v3659 = vadd.f32 %v3645, 0.0
  %v3660 = vmul.f32 %v3590, %v1217
  %v3661 = vmul.f32 %v3591, %v1221
  %v3662 = vmul.f32 %v3592, %v1225
  %v3663 = vmul.f32 %v3593, %v1229
  %v3664 = vmul.f32 %v3594, %v1233
  %v3665 = vmul.f32 %v3595, %v1237
  %v3666 = vmul.f32 %v3596, %v1241
  %v3667 = vmul.f32 %v3597, %v1217
  %v3668 = vmul.f32 %v3598, %v1221
  %v3669 = vmul.f32 %v3599, %v1225
  %v3670 = vmul.f32 %v3600, %v1229
  %v3671 = vmul.f32 %v3601, %v1233
  %v3672 = vmul.f32 %v3602, %v1237
  %v3673 = vmul.f32 %v3603, %v1241
  %v3674 = vadd.f32 %v3646, %v3660
  %v3675 = vadd.f32 %v3647, %v3661
  %v3676 = vadd.f32 %v3648, %v3662
  %v3677 = vadd.f32 %v3649, %v3663
  %v3678 = vadd.f32 %v3650, %v3664
  %v3679 = vadd.f32 %v3651, %v3665
  %v3680 = vadd.f32 %v3652, %v3666
  %v3681 = vadd.f32 %v3653, %v3667
  %v3682 = vadd.f32 %v3654, %v3668
  %v3683 = vadd.f32 %v3655, %v3669
  %v3684 = vadd.f32 %v3656, %v3670
  %v3685 = vadd.f32 %v3657, %v3671
  %v3686 = vadd.f32 %v3658, %v3672
  %v3687 = vadd.f32 %v3659, %v3673
  %v3688 = vrot.slane %v3590, 1
  %v3689 = vrot.slane %v3591, 1
  %v3690 = vrot.slane %v3592, 1
  %v3691 = vrot.slane %v3593, 1
  %v3692 = vrot.slane %v3594, 1
  %v3693 = vrot.slane %v3595, 1
  %v3694 = vrot.slane %v3596, 1
  %v3695 = vrot.slane %v3597, 1
  %v3696 = vrot.slane %v3598, 1
  %v3697 = vrot.slane %v3599, 1
  %v3698 = vrot.slane %v3600, 1
  %v3699 = vrot.slane %v3601, 1
  %v3700 = vrot.slane %v3602, 1
  %v3701 = vrot.slane %v3603, 1
  %v3702 = vsel %vm792, %v3688, %v3695
  %v3703 = vsel %vm792, %v3689, %v3696
  %v3704 = vsel %vm792, %v3690, %v3697
  %v3705 = vsel %vm792, %v3691, %v3698
  %v3706 = vsel %vm792, %v3692, %v3699
  %v3707 = vsel %vm792, %v3693, %v3700
  %v3708 = vsel %vm792, %v3694, %v3701
  %v3709 = vsel %vm792, %v3695, %v3688
  %v3710 = vsel %vm792, %v3696, %v3689
  %v3711 = vsel %vm792, %v3697, %v3690
  %v3712 = vsel %vm792, %v3698, %v3691
  %v3713 = vsel %vm792, %v3699, %v3692
  %v3714 = vsel %vm792, %v3700, %v3693
  %v3715 = vsel %vm792, %v3701, %v3694
  %v3716 = vmul.f32 %v3702, %v1301
  %v3717 = vmul.f32 %v3703, %v1305
  %v3718 = vmul.f32 %v3704, %v1309
  %v3719 = vmul.f32 %v3705, %v1313
  %v3720 = vmul.f32 %v3706, %v1317
  %v3721 = vmul.f32 %v3707, %v1321
  %v3722 = vmul.f32 %v3708, %v1325
  %v3723 = vmul.f32 %v3709, %v1301
  %v3724 = vmul.f32 %v3710, %v1305
  %v3725 = vmul.f32 %v3711, %v1309
  %v3726 = vmul.f32 %v3712, %v1313
  %v3727 = vmul.f32 %v3713, %v1317
  %v3728 = vmul.f32 %v3714, %v1321
  %v3729 = vmul.f32 %v3715, %v1325
  %v3730 = vadd.f32 %v3674, %v3716
  %v3731 = vadd.f32 %v3675, %v3717
  %v3732 = vadd.f32 %v3676, %v3718
  %v3733 = vadd.f32 %v3677, %v3719
  %v3734 = vadd.f32 %v3678, %v3720
  %v3735 = vadd.f32 %v3679, %v3721
  %v3736 = vadd.f32 %v3680, %v3722
  %v3737 = vadd.f32 %v3681, %v3723
  %v3738 = vadd.f32 %v3682, %v3724
  %v3739 = vadd.f32 %v3683, %v3725
  %v3740 = vadd.f32 %v3684, %v3726
  %v3741 = vadd.f32 %v3685, %v3727
  %v3742 = vadd.f32 %v3686, %v3728
  %v3743 = vadd.f32 %v3687, %v3729
  %v3744 = vld [vmem:[%s3420] sm:$0xff]
  %v3745 = vld [vmem:[%s3420 + $0x8] sm:$0xff]
  %v3746 = vld [vmem:[%s3420 + $0x10] sm:$0xff]
  %v3747 = vld [vmem:[%s3420 + $0x18] sm:$0xff]
  %v3748 = vld [vmem:[%s3420 + $0x20] sm:$0xff]
  %v3749 = vld [vmem:[%s3420 + $0x28] sm:$0xff]
  %v3750 = vld [vmem:[%s3420 + $0x30] sm:$0xff]
  %v3751 = vld [vmem:[%s3420 + $0x38] sm:$0xff]
  %v3752 = vld [vmem:[%s3420 + $0x40] sm:$0xff]
  %v3753 = vld [vmem:[%s3420 + $0x48] sm:$0xff]
  %v3754 = vld [vmem:[%s3420 + $0x50] sm:$0xff]
  %v3755 = vld [vmem:[%s3420 + $0x58] sm:$0xff]
  %v3756 = vld [vmem:[%s3420 + $0x60] sm:$0xff]
  %v3757 = vld [vmem:[%s3420 + $0x68] sm:$0xff]
  %v3758 = vrot.slane %v3744, 7
  %v3759 = vrot.slane %v3745, 7
  %v3760 = vrot.slane %v3746, 7
  %v3761 = vrot.slane %v3747, 7
  %v3762 = vrot.slane %v3748, 7
  %v3763 = vrot.slane %v3749, 7
  %v3764 = vrot.slane %v3750, 7
  %v3765 = vrot.slane %v3751, 7
  %v3766 = vrot.slane %v3752, 7
  %v3767 = vrot.slane %v3753, 7
  %v3768 = vrot.slane %v3754, 7
  %v3769 = vrot.slane %v3755, 7
  %v3770 = vrot.slane %v3756, 7
  %v3771 = vrot.slane %v3757, 7
  %v3772 = vsel %vm651, %v3758, %v3765
  %v3773 = vsel %vm651, %v3759, %v3766
  %v3774 = vsel %vm651, %v3760, %v3767
  %v3775 = vsel %vm651, %v3761, %v3768
  %v3776 = vsel %vm651, %v3762, %v3769
  %v3777 = vsel %vm651, %v3763, %v3770
  %v3778 = vsel %vm651, %v3764, %v3771
  %v3779 = vsel %vm651, %v3765, %v3758
  %v3780 = vsel %vm651, %v3766, %v3759
  %v3781 = vsel %vm651, %v3767, %v3760
  %v3782 = vsel %vm651, %v3768, %v3761
  %v3783 = vsel %vm651, %v3769, %v3762
  %v3784 = vsel %vm651, %v3770, %v3763
  %v3785 = vsel %vm651, %v3771, %v3764
  %v3786 = vmul.f32 %v3779, %v669
  %v3787 = vmul.f32 %v3780, %v673
  %v3788 = vmul.f32 %v3781, %v677
  %v3789 = vmul.f32 %v3782, %v681
  %v3790 = vmul.f32 %v3783, %v685
  %v3791 = vmul.f32 %v3784, %v689
  %v3792 = vmul.f32 %v3785, %v693
  %v3793 = vmul.f32 %v3772, %v669
  %v3794 = vmul.f32 %v3773, %v673
  %v3795 = vmul.f32 %v3774, %v677
  %v3796 = vmul.f32 %v3775, %v681
  %v3797 = vmul.f32 %v3776, %v685
  %v3798 = vmul.f32 %v3777, %v689
  %v3799 = vmul.f32 %v3778, %v693
  %v3800 = vadd.f32 %v3730, %v3786
  %v3801 = vadd.f32 %v3731, %v3787
  %v3802 = vadd.f32 %v3732, %v3788
  %v3803 = vadd.f32 %v3733, %v3789
  %v3804 = vadd.f32 %v3734, %v3790
  %v3805 = vadd.f32 %v3735, %v3791
  %v3806 = vadd.f32 %v3736, %v3792
  %v3807 = vadd.f32 %v3737, %v3793
  %v3808 = vadd.f32 %v3738, %v3794
  %v3809 = vadd.f32 %v3739, %v3795
  %v3810 = vadd.f32 %v3740, %v3796
  %v3811 = vadd.f32 %v3741, %v3797
  %v3812 = vadd.f32 %v3742, %v3798
  %v3813 = vadd.f32 %v3743, %v3799
  %v3814 = vmul.f32 %v3744, %v725
  %v3815 = vmul.f32 %v3745, %v729
  %v3816 = vmul.f32 %v3746, %v733
  %v3817 = vmul.f32 %v3747, %v737
  %v3818 = vmul.f32 %v3748, %v741
  %v3819 = vmul.f32 %v3749, %v745
  %v3820 = vmul.f32 %v3750, %v749
  %v3821 = vmul.f32 %v3751, %v725
  %v3822 = vmul.f32 %v3752, %v729
  %v3823 = vmul.f32 %v3753, %v733
  %v3824 = vmul.f32 %v3754, %v737
  %v3825 = vmul.f32 %v3755, %v741
  %v3826 = vmul.f32 %v3756, %v745
  %v3827 = vmul.f32 %v3757, %v749
  %v3828 = vadd.f32 %v3800, %v3814
  %v3829 = vadd.f32 %v3801, %v3815
  %v3830 = vadd.f32 %v3802, %v3816
  %v3831 = vadd.f32 %v3803, %v3817
  %v3832 = vadd.f32 %v3804, %v3818
  %v3833 = vadd.f32 %v3805, %v3819
  %v3834 = vadd.f32 %v3806, %v3820
  %v3835 = vadd.f32 %v3807, %v3821
  %v3836 = vadd.f32 %v3808, %v3822
  %v3837 = vadd.f32 %v3809, %v3823
  %v3838 = vadd.f32 %v3810, %v3824
  %v3839 = vadd.f32 %v3811, %v3825
  %v3840 = vadd.f32 %v3812, %v3826
  %v3841 = vadd.f32 %v3813, %v3827
  %v3842 = vrot.slane %v3744, 1
  %v3843 = vrot.slane %v3745, 1
  %v3844 = vrot.slane %v3746, 1
  %v3845 = vrot.slane %v3747, 1
  %v3846 = vrot.slane %v3748, 1
  %v3847 = vrot.slane %v3749, 1
  %v3848 = vrot.slane %v3750, 1
  %v3849 = vrot.slane %v3751, 1
  %v3850 = vrot.slane %v3752, 1
  %v3851 = vrot.slane %v3753, 1
  %v3852 = vrot.slane %v3754, 1
  %v3853 = vrot.slane %v3755, 1
  %v3854 = vrot.slane %v3756, 1
  %v3855 = vrot.slane %v3757, 1
  %v3856 = vsel %vm792, %v3842, %v3849
  %v3857 = vsel %vm792, %v3843, %v3850
  %v3858 = vsel %vm792, %v3844, %v3851
  %v3859 = vsel %vm792, %v3845, %v3852
  %v3860 = vsel %vm792, %v3846, %v3853
  %v3861 = vsel %vm792, %v3847, %v3854
  %v3862 = vsel %vm792, %v3848, %v3855
  %v3863 = vsel %vm792, %v3849, %v3842
  %v3864 = vsel %vm792, %v3850, %v3843
  %v3865 = vsel %vm792, %v3851, %v3844
  %v3866 = vsel %vm792, %v3852, %v3845
  %v3867 = vsel %vm792, %v3853, %v3846
  %v3868 = vsel %vm792, %v3854, %v3847
  %v3869 = vsel %vm792, %v3855, %v3848
  %v3870 = vmul.f32 %v3856, %v810
  %v3871 = vmul.f32 %v3857, %v814
  %v3872 = vmul.f32 %v3858, %v818
  %v3873 = vmul.f32 %v3859, %v822
  %v3874 = vmul.f32 %v3860, %v826
  %v3875 = vmul.f32 %v3861, %v830
  %v3876 = vmul.f32 %v3862, %v834
  %v3877 = vmul.f32 %v3863, %v810
  %v3878 = vmul.f32 %v3864, %v814
  %v3879 = vmul.f32 %v3865, %v818
  %v3880 = vmul.f32 %v3866, %v822
  %v3881 = vmul.f32 %v3867, %v826
  %v3882 = vmul.f32 %v3868, %v830
  %v3883 = vmul.f32 %v3869, %v834
  %v3884 = vadd.f32 %v3828, %v3870
  %v3885 = vadd.f32 %v3829, %v3871
  %v3886 = vadd.f32 %v3830, %v3872
  %v3887 = vadd.f32 %v3831, %v3873
  %v3888 = vadd.f32 %v3832, %v3874
  %v3889 = vadd.f32 %v3833, %v3875
  %v3890 = vadd.f32 %v3834, %v3876
  %v3891 = vadd.f32 %v3835, %v3877
  %v3892 = vadd.f32 %v3836, %v3878
  %v3893 = vadd.f32 %v3837, %v3879
  %v3894 = vadd.f32 %v3838, %v3880
  %v3895 = vadd.f32 %v3839, %v3881
  %v3896 = vadd.f32 %v3840, %v3882
  %v3897 = vadd.f32 %v3841, %v3883
  %s3898 = scalar_lea.vmem [#allocation2], 784
  %v3899 = vld [vmem:[%s3898] sm:$0xff]
  %v3900 = vld [vmem:[%s3898 + $0x8] sm:$0xff]
  %v3901 = vld [vmem:[%s3898 + $0x10] sm:$0xff]
  %v3902 = vld [vmem:[%s3898 + $0x18] sm:$0xff]
  %v3903 = vld [vmem:[%s3898 + $0x20] sm:$0xff]
  %v3904 = vld [vmem:[%s3898 + $0x28] sm:$0xff]
  %v3905 = vld [vmem:[%s3898 + $0x30] sm:$0xff]
  %v3906 = vld [vmem:[%s3898 + $0x38] sm:$0xff]
  %v3907 = vld [vmem:[%s3898 + $0x40] sm:$0xff]
  %v3908 = vld [vmem:[%s3898 + $0x48] sm:$0xff]
  %v3909 = vld [vmem:[%s3898 + $0x50] sm:$0xff]
  %v3910 = vld [vmem:[%s3898 + $0x58] sm:$0xff]
  %v3911 = vld [vmem:[%s3898 + $0x60] sm:$0xff]
  %v3912 = vld [vmem:[%s3898 + $0x68] sm:$0xff]
  %v3913 = vrot.slane %v3899, 7
  %v3914 = vrot.slane %v3900, 7
  %v3915 = vrot.slane %v3901, 7
  %v3916 = vrot.slane %v3902, 7
  %v3917 = vrot.slane %v3903, 7
  %v3918 = vrot.slane %v3904, 7
  %v3919 = vrot.slane %v3905, 7
  %v3920 = vrot.slane %v3906, 7
  %v3921 = vrot.slane %v3907, 7
  %v3922 = vrot.slane %v3908, 7
  %v3923 = vrot.slane %v3909, 7
  %v3924 = vrot.slane %v3910, 7
  %v3925 = vrot.slane %v3911, 7
  %v3926 = vrot.slane %v3912, 7
  %v3927 = vsel %vm651, %v3913, %v3920
  %v3928 = vsel %vm651, %v3914, %v3921
  %v3929 = vsel %vm651, %v3915, %v3922
  %v3930 = vsel %vm651, %v3916, %v3923
  %v3931 = vsel %vm651, %v3917, %v3924
  %v3932 = vsel %vm651, %v3918, %v3925
  %v3933 = vsel %vm651, %v3919, %v3926
  %v3934 = vsel %vm651, %v3920, %v3913
  %v3935 = vsel %vm651, %v3921, %v3914
  %v3936 = vsel %vm651, %v3922, %v3915
  %v3937 = vsel %vm651, %v3923, %v3916
  %v3938 = vsel %vm651, %v3924, %v3917
  %v3939 = vsel %vm651, %v3925, %v3918
  %v3940 = vsel %vm651, %v3926, %v3919
  %v3941 = vmul.f32 %v3934, %v909
  %v3942 = vmul.f32 %v3935, %v913
  %v3943 = vmul.f32 %v3936, %v917
  %v3944 = vmul.f32 %v3937, %v921
  %v3945 = vmul.f32 %v3938, %v925
  %v3946 = vmul.f32 %v3939, %v929
  %v3947 = vmul.f32 %v3940, %v933
  %v3948 = vmul.f32 %v3927, %v909
  %v3949 = vmul.f32 %v3928, %v913
  %v3950 = vmul.f32 %v3929, %v917
  %v3951 = vmul.f32 %v3930, %v921
  %v3952 = vmul.f32 %v3931, %v925
  %v3953 = vmul.f32 %v3932, %v929
  %v3954 = vmul.f32 %v3933, %v933
  %v3955 = vadd.f32 %v3884, %v3941
  %v3956 = vadd.f32 %v3885, %v3942
  %v3957 = vadd.f32 %v3886, %v3943
  %v3958 = vadd.f32 %v3887, %v3944
  %v3959 = vadd.f32 %v3888, %v3945
  %v3960 = vadd.f32 %v3889, %v3946
  %v3961 = vadd.f32 %v3890, %v3947
  %v3962 = vadd.f32 %v3891, %v3948
  %v3963 = vadd.f32 %v3892, %v3949
  %v3964 = vadd.f32 %v3893, %v3950
  %v3965 = vadd.f32 %v3894, %v3951
  %v3966 = vadd.f32 %v3895, %v3952
  %v3967 = vadd.f32 %v3896, %v3953
  %v3968 = vadd.f32 %v3897, %v3954
  %v3969 = vmul.f32 %v3899, %v965
  %v3970 = vmul.f32 %v3900, %v969
  %v3971 = vmul.f32 %v3901, %v973
  %v3972 = vmul.f32 %v3902, %v977
  %v3973 = vmul.f32 %v3903, %v981
  %v3974 = vmul.f32 %v3904, %v985
  %v3975 = vmul.f32 %v3905, %v989
  %v3976 = vmul.f32 %v3906, %v965
  %v3977 = vmul.f32 %v3907, %v969
  %v3978 = vmul.f32 %v3908, %v973
  %v3979 = vmul.f32 %v3909, %v977
  %v3980 = vmul.f32 %v3910, %v981
  %v3981 = vmul.f32 %v3911, %v985
  %v3982 = vmul.f32 %v3912, %v989
  %v3983 = vadd.f32 %v3955, %v3969
  %v3984 = vadd.f32 %v3956, %v3970
  %v3985 = vadd.f32 %v3957, %v3971
  %v3986 = vadd.f32 %v3958, %v3972
  %v3987 = vadd.f32 %v3959, %v3973
  %v3988 = vadd.f32 %v3960, %v3974
  %v3989 = vadd.f32 %v3961, %v3975
  %v3990 = vadd.f32 %v3962, %v3976
  %v3991 = vadd.f32 %v3963, %v3977
  %v3992 = vadd.f32 %v3964, %v3978
  %v3993 = vadd.f32 %v3965, %v3979
  %v3994 = vadd.f32 %v3966, %v3980
  %v3995 = vadd.f32 %v3967, %v3981
  %v3996 = vadd.f32 %v3968, %v3982
  %v3997 = vrot.slane %v3899, 1
  %v3998 = vrot.slane %v3900, 1
  %v3999 = vrot.slane %v3901, 1
  %v4000 = vrot.slane %v3902, 1
  %v4001 = vrot.slane %v3903, 1
  %v4002 = vrot.slane %v3904, 1
  %v4003 = vrot.slane %v3905, 1
  %v4004 = vrot.slane %v3906, 1
  %v4005 = vrot.slane %v3907, 1
  %v4006 = vrot.slane %v3908, 1
  %v4007 = vrot.slane %v3909, 1
  %v4008 = vrot.slane %v3910, 1
  %v4009 = vrot.slane %v3911, 1
  %v4010 = vrot.slane %v3912, 1
  %v4011 = vsel %vm792, %v3997, %v4004
  %v4012 = vsel %vm792, %v3998, %v4005
  %v4013 = vsel %vm792, %v3999, %v4006
  %v4014 = vsel %vm792, %v4000, %v4007
  %v4015 = vsel %vm792, %v4001, %v4008
  %v4016 = vsel %vm792, %v4002, %v4009
  %v4017 = vsel %vm792, %v4003, %v4010
  %v4018 = vsel %vm792, %v4004, %v3997
  %v4019 = vsel %vm792, %v4005, %v3998
  %v4020 = vsel %vm792, %v4006, %v3999
  %v4021 = vsel %vm792, %v4007, %v4000
  %v4022 = vsel %vm792, %v4008, %v4001
  %v4023 = vsel %vm792, %v4009, %v4002
  %v4024 = vsel %vm792, %v4010, %v4003
  %v4025 = vmul.f32 %v4011, %v1049
  %v4026 = vmul.f32 %v4012, %v1053
  %v4027 = vmul.f32 %v4013, %v1057
  %v4028 = vmul.f32 %v4014, %v1061
  %v4029 = vmul.f32 %v4015, %v1065
  %v4030 = vmul.f32 %v4016, %v1069
  %v4031 = vmul.f32 %v4017, %v1073
  %v4032 = vmul.f32 %v4018, %v1049
  %v4033 = vmul.f32 %v4019, %v1053
  %v4034 = vmul.f32 %v4020, %v1057
  %v4035 = vmul.f32 %v4021, %v1061
  %v4036 = vmul.f32 %v4022, %v1065
  %v4037 = vmul.f32 %v4023, %v1069
  %v4038 = vmul.f32 %v4024, %v1073
  %v4039 = vadd.f32 %v3983, %v4025
  %v4040 = vadd.f32 %v3984, %v4026
  %v4041 = vadd.f32 %v3985, %v4027
  %v4042 = vadd.f32 %v3986, %v4028
  %v4043 = vadd.f32 %v3987, %v4029
  %v4044 = vadd.f32 %v3988, %v4030
  %v4045 = vadd.f32 %v3989, %v4031
  %v4046 = vadd.f32 %v3990, %v4032
  %v4047 = vadd.f32 %v3991, %v4033
  %v4048 = vadd.f32 %v3992, %v4034
  %v4049 = vadd.f32 %v3993, %v4035
  %v4050 = vadd.f32 %v3994, %v4036
  %v4051 = vadd.f32 %v3995, %v4037
  %v4052 = vadd.f32 %v3996, %v4038
  %s4053 = scalar_lea.vmem [#allocation3], 672
  %4054 = vst [vmem:[%s4053] sm:$0xff] %v4039
  %4055 = vst [vmem:[%s4053 + $0x8] sm:$0xff] %v4040
  %4056 = vst [vmem:[%s4053 + $0x10] sm:$0xff] %v4041
  %4057 = vst [vmem:[%s4053 + $0x18] sm:$0xff] %v4042
  %4058 = vst [vmem:[%s4053 + $0x20] sm:$0xff] %v4043
  %4059 = vst [vmem:[%s4053 + $0x28] sm:$0xff] %v4044
  %4060 = vst.msk [vmem:[%s4053 + $0x30] sm:$0xff] %vm23, %v4045
  %4061 = vst [vmem:[%s4053 + $0x38] sm:$0xff] %v4046
  %4062 = vst [vmem:[%s4053 + $0x40] sm:$0xff] %v4047
  %4063 = vst [vmem:[%s4053 + $0x48] sm:$0xff] %v4048
  %4064 = vst [vmem:[%s4053 + $0x50] sm:$0xff] %v4049
  %4065 = vst [vmem:[%s4053 + $0x58] sm:$0xff] %v4050
  %4066 = vst [vmem:[%s4053 + $0x60] sm:$0xff] %v4051
  %4067 = vst.msk [vmem:[%s4053 + $0x68] sm:$0xff] %vm23, %v4052
  %v4068 = vld [vmem:[%s3420] sm:$0xff]
  %v4069 = vld [vmem:[%s3420 + $0x8] sm:$0xff]
  %v4070 = vld [vmem:[%s3420 + $0x10] sm:$0xff]
  %v4071 = vld [vmem:[%s3420 + $0x18] sm:$0xff]
  %v4072 = vld [vmem:[%s3420 + $0x20] sm:$0xff]
  %v4073 = vld [vmem:[%s3420 + $0x28] sm:$0xff]
  %v4074 = vld [vmem:[%s3420 + $0x30] sm:$0xff]
  %v4075 = vld [vmem:[%s3420 + $0x38] sm:$0xff]
  %v4076 = vld [vmem:[%s3420 + $0x40] sm:$0xff]
  %v4077 = vld [vmem:[%s3420 + $0x48] sm:$0xff]
  %v4078 = vld [vmem:[%s3420 + $0x50] sm:$0xff]
  %v4079 = vld [vmem:[%s3420 + $0x58] sm:$0xff]
  %v4080 = vld [vmem:[%s3420 + $0x60] sm:$0xff]
  %v4081 = vld [vmem:[%s3420 + $0x68] sm:$0xff]
  %v4082 = vrot.slane %v4068, 7
  %v4083 = vrot.slane %v4069, 7
  %v4084 = vrot.slane %v4070, 7
  %v4085 = vrot.slane %v4071, 7
  %v4086 = vrot.slane %v4072, 7
  %v4087 = vrot.slane %v4073, 7
  %v4088 = vrot.slane %v4074, 7
  %v4089 = vrot.slane %v4075, 7
  %v4090 = vrot.slane %v4076, 7
  %v4091 = vrot.slane %v4077, 7
  %v4092 = vrot.slane %v4078, 7
  %v4093 = vrot.slane %v4079, 7
  %v4094 = vrot.slane %v4080, 7
  %v4095 = vrot.slane %v4081, 7
  %v4096 = vsel %vm651, %v4082, %v4089
  %v4097 = vsel %vm651, %v4083, %v4090
  %v4098 = vsel %vm651, %v4084, %v4091
  %v4099 = vsel %vm651, %v4085, %v4092
  %v4100 = vsel %vm651, %v4086, %v4093
  %v4101 = vsel %vm651, %v4087, %v4094
  %v4102 = vsel %vm651, %v4088, %v4095
  %v4103 = vsel %vm651, %v4089, %v4082
  %v4104 = vsel %vm651, %v4090, %v4083
  %v4105 = vsel %vm651, %v4091, %v4084
  %v4106 = vsel %vm651, %v4092, %v4085
  %v4107 = vsel %vm651, %v4093, %v4086
  %v4108 = vsel %vm651, %v4094, %v4087
  %v4109 = vsel %vm651, %v4095, %v4088
  %v4110 = vmul.f32 %v4103, %v1161
  %v4111 = vmul.f32 %v4104, %v1165
  %v4112 = vmul.f32 %v4105, %v1169
  %v4113 = vmul.f32 %v4106, %v1173
  %v4114 = vmul.f32 %v4107, %v1177
  %v4115 = vmul.f32 %v4108, %v1181
  %v4116 = vmul.f32 %v4109, %v1185
  %v4117 = vmul.f32 %v4096, %v1161
  %v4118 = vmul.f32 %v4097, %v1165
  %v4119 = vmul.f32 %v4098, %v1169
  %v4120 = vmul.f32 %v4099, %v1173
  %v4121 = vmul.f32 %v4100, %v1177
  %v4122 = vmul.f32 %v4101, %v1181
  %v4123 = vmul.f32 %v4102, %v1185
  %v4124 = vadd.f32 %v4110, 0.0
  %v4125 = vadd.f32 %v4111, 0.0
  %v4126 = vadd.f32 %v4112, 0.0
  %v4127 = vadd.f32 %v4113, 0.0
  %v4128 = vadd.f32 %v4114, 0.0
  %v4129 = vadd.f32 %v4115, 0.0
  %v4130 = vadd.f32 %v4116, 0.0
  %v4131 = vadd.f32 %v4117, 0.0
  %v4132 = vadd.f32 %v4118, 0.0
  %v4133 = vadd.f32 %v4119, 0.0
  %v4134 = vadd.f32 %v4120, 0.0
  %v4135 = vadd.f32 %v4121, 0.0
  %v4136 = vadd.f32 %v4122, 0.0
  %v4137 = vadd.f32 %v4123, 0.0
  %v4138 = vmul.f32 %v4068, %v1217
  %v4139 = vmul.f32 %v4069, %v1221
  %v4140 = vmul.f32 %v4070, %v1225
  %v4141 = vmul.f32 %v4071, %v1229
  %v4142 = vmul.f32 %v4072, %v1233
  %v4143 = vmul.f32 %v4073, %v1237
  %v4144 = vmul.f32 %v4074, %v1241
  %v4145 = vmul.f32 %v4075, %v1217
  %v4146 = vmul.f32 %v4076, %v1221
  %v4147 = vmul.f32 %v4077, %v1225
  %v4148 = vmul.f32 %v4078, %v1229
  %v4149 = vmul.f32 %v4079, %v1233
  %v4150 = vmul.f32 %v4080, %v1237
  %v4151 = vmul.f32 %v4081, %v1241
  %v4152 = vadd.f32 %v4124, %v4138
  %v4153 = vadd.f32 %v4125, %v4139
  %v4154 = vadd.f32 %v4126, %v4140
  %v4155 = vadd.f32 %v4127, %v4141
  %v4156 = vadd.f32 %v4128, %v4142
  %v4157 = vadd.f32 %v4129, %v4143
  %v4158 = vadd.f32 %v4130, %v4144
  %v4159 = vadd.f32 %v4131, %v4145
  %v4160 = vadd.f32 %v4132, %v4146
  %v4161 = vadd.f32 %v4133, %v4147
  %v4162 = vadd.f32 %v4134, %v4148
  %v4163 = vadd.f32 %v4135, %v4149
  %v4164 = vadd.f32 %v4136, %v4150
  %v4165 = vadd.f32 %v4137, %v4151
  %v4166 = vrot.slane %v4068, 1
  %v4167 = vrot.slane %v4069, 1
  %v4168 = vrot.slane %v4070, 1
  %v4169 = vrot.slane %v4071, 1
  %v4170 = vrot.slane %v4072, 1
  %v4171 = vrot.slane %v4073, 1
  %v4172 = vrot.slane %v4074, 1
  %v4173 = vrot.slane %v4075, 1
  %v4174 = vrot.slane %v4076, 1
  %v4175 = vrot.slane %v4077, 1
  %v4176 = vrot.slane %v4078, 1
  %v4177 = vrot.slane %v4079, 1
  %v4178 = vrot.slane %v4080, 1
  %v4179 = vrot.slane %v4081, 1
  %v4180 = vsel %vm792, %v4166, %v4173
  %v4181 = vsel %vm792, %v4167, %v4174
  %v4182 = vsel %vm792, %v4168, %v4175
  %v4183 = vsel %vm792, %v4169, %v4176
  %v4184 = vsel %vm792, %v4170, %v4177
  %v4185 = vsel %vm792, %v4171, %v4178
  %v4186 = vsel %vm792, %v4172, %v4179
  %v4187 = vsel %vm792, %v4173, %v4166
  %v4188 = vsel %vm792, %v4174, %v4167
  %v4189 = vsel %vm792, %v4175, %v4168
  %v4190 = vsel %vm792, %v4176, %v4169
  %v4191 = vsel %vm792, %v4177, %v4170
  %v4192 = vsel %vm792, %v4178, %v4171
  %v4193 = vsel %vm792, %v4179, %v4172
  %v4194 = vmul.f32 %v4180, %v1301
  %v4195 = vmul.f32 %v4181, %v1305
  %v4196 = vmul.f32 %v4182, %v1309
  %v4197 = vmul.f32 %v4183, %v1313
  %v4198 = vmul.f32 %v4184, %v1317
  %v4199 = vmul.f32 %v4185, %v1321
  %v4200 = vmul.f32 %v4186, %v1325
  %v4201 = vmul.f32 %v4187, %v1301
  %v4202 = vmul.f32 %v4188, %v1305
  %v4203 = vmul.f32 %v4189, %v1309
  %v4204 = vmul.f32 %v4190, %v1313
  %v4205 = vmul.f32 %v4191, %v1317
  %v4206 = vmul.f32 %v4192, %v1321
  %v4207 = vmul.f32 %v4193, %v1325
  %v4208 = vadd.f32 %v4152, %v4194
  %v4209 = vadd.f32 %v4153, %v4195
  %v4210 = vadd.f32 %v4154, %v4196
  %v4211 = vadd.f32 %v4155, %v4197
  %v4212 = vadd.f32 %v4156, %v4198
  %v4213 = vadd.f32 %v4157, %v4199
  %v4214 = vadd.f32 %v4158, %v4200
  %v4215 = vadd.f32 %v4159, %v4201
  %v4216 = vadd.f32 %v4160, %v4202
  %v4217 = vadd.f32 %v4161, %v4203
  %v4218 = vadd.f32 %v4162, %v4204
  %v4219 = vadd.f32 %v4163, %v4205
  %v4220 = vadd.f32 %v4164, %v4206
  %v4221 = vadd.f32 %v4165, %v4207
  %v4222 = vld [vmem:[%s3898] sm:$0xff]
  %v4223 = vld [vmem:[%s3898 + $0x8] sm:$0xff]
  %v4224 = vld [vmem:[%s3898 + $0x10] sm:$0xff]
  %v4225 = vld [vmem:[%s3898 + $0x18] sm:$0xff]
  %v4226 = vld [vmem:[%s3898 + $0x20] sm:$0xff]
  %v4227 = vld [vmem:[%s3898 + $0x28] sm:$0xff]
  %v4228 = vld [vmem:[%s3898 + $0x30] sm:$0xff]
  %v4229 = vld [vmem:[%s3898 + $0x38] sm:$0xff]
  %v4230 = vld [vmem:[%s3898 + $0x40] sm:$0xff]
  %v4231 = vld [vmem:[%s3898 + $0x48] sm:$0xff]
  %v4232 = vld [vmem:[%s3898 + $0x50] sm:$0xff]
  %v4233 = vld [vmem:[%s3898 + $0x58] sm:$0xff]
  %v4234 = vld [vmem:[%s3898 + $0x60] sm:$0xff]
  %v4235 = vld [vmem:[%s3898 + $0x68] sm:$0xff]
  %v4236 = vrot.slane %v4222, 7
  %v4237 = vrot.slane %v4223, 7
  %v4238 = vrot.slane %v4224, 7
  %v4239 = vrot.slane %v4225, 7
  %v4240 = vrot.slane %v4226, 7
  %v4241 = vrot.slane %v4227, 7
  %v4242 = vrot.slane %v4228, 7
  %v4243 = vrot.slane %v4229, 7
  %v4244 = vrot.slane %v4230, 7
  %v4245 = vrot.slane %v4231, 7
  %v4246 = vrot.slane %v4232, 7
  %v4247 = vrot.slane %v4233, 7
  %v4248 = vrot.slane %v4234, 7
  %v4249 = vrot.slane %v4235, 7
  %v4250 = vsel %vm651, %v4236, %v4243
  %v4251 = vsel %vm651, %v4237, %v4244
  %v4252 = vsel %vm651, %v4238, %v4245
  %v4253 = vsel %vm651, %v4239, %v4246
  %v4254 = vsel %vm651, %v4240, %v4247
  %v4255 = vsel %vm651, %v4241, %v4248
  %v4256 = vsel %vm651, %v4242, %v4249
  %v4257 = vsel %vm651, %v4243, %v4236
  %v4258 = vsel %vm651, %v4244, %v4237
  %v4259 = vsel %vm651, %v4245, %v4238
  %v4260 = vsel %vm651, %v4246, %v4239
  %v4261 = vsel %vm651, %v4247, %v4240
  %v4262 = vsel %vm651, %v4248, %v4241
  %v4263 = vsel %vm651, %v4249, %v4242
  %v4264 = vmul.f32 %v4257, %v669
  %v4265 = vmul.f32 %v4258, %v673
  %v4266 = vmul.f32 %v4259, %v677
  %v4267 = vmul.f32 %v4260, %v681
  %v4268 = vmul.f32 %v4261, %v685
  %v4269 = vmul.f32 %v4262, %v689
  %v4270 = vmul.f32 %v4263, %v693
  %v4271 = vmul.f32 %v4250, %v669
  %v4272 = vmul.f32 %v4251, %v673
  %v4273 = vmul.f32 %v4252, %v677
  %v4274 = vmul.f32 %v4253, %v681
  %v4275 = vmul.f32 %v4254, %v685
  %v4276 = vmul.f32 %v4255, %v689
  %v4277 = vmul.f32 %v4256, %v693
  %v4278 = vadd.f32 %v4208, %v4264
  %v4279 = vadd.f32 %v4209, %v4265
  %v4280 = vadd.f32 %v4210, %v4266
  %v4281 = vadd.f32 %v4211, %v4267
  %v4282 = vadd.f32 %v4212, %v4268
  %v4283 = vadd.f32 %v4213, %v4269
  %v4284 = vadd.f32 %v4214, %v4270
  %v4285 = vadd.f32 %v4215, %v4271
  %v4286 = vadd.f32 %v4216, %v4272
  %v4287 = vadd.f32 %v4217, %v4273
  %v4288 = vadd.f32 %v4218, %v4274
  %v4289 = vadd.f32 %v4219, %v4275
  %v4290 = vadd.f32 %v4220, %v4276
  %v4291 = vadd.f32 %v4221, %v4277
  %v4292 = vmul.f32 %v4222, %v725
  %v4293 = vmul.f32 %v4223, %v729
  %v4294 = vmul.f32 %v4224, %v733
  %v4295 = vmul.f32 %v4225, %v737
  %v4296 = vmul.f32 %v4226, %v741
  %v4297 = vmul.f32 %v4227, %v745
  %v4298 = vmul.f32 %v4228, %v749
  %v4299 = vmul.f32 %v4229, %v725
  %v4300 = vmul.f32 %v4230, %v729
  %v4301 = vmul.f32 %v4231, %v733
  %v4302 = vmul.f32 %v4232, %v737
  %v4303 = vmul.f32 %v4233, %v741
  %v4304 = vmul.f32 %v4234, %v745
  %v4305 = vmul.f32 %v4235, %v749
  %v4306 = vadd.f32 %v4278, %v4292
  %v4307 = vadd.f32 %v4279, %v4293
  %v4308 = vadd.f32 %v4280, %v4294
  %v4309 = vadd.f32 %v4281, %v4295
  %v4310 = vadd.f32 %v4282, %v4296
  %v4311 = vadd.f32 %v4283, %v4297
  %v4312 = vadd.f32 %v4284, %v4298
  %v4313 = vadd.f32 %v4285, %v4299
  %v4314 = vadd.f32 %v4286, %v4300
  %v4315 = vadd.f32 %v4287, %v4301
  %v4316 = vadd.f32 %v4288, %v4302
  %v4317 = vadd.f32 %v4289, %v4303
  %v4318 = vadd.f32 %v4290, %v4304
  %v4319 = vadd.f32 %v4291, %v4305
  %v4320 = vrot.slane %v4222, 1
  %v4321 = vrot.slane %v4223, 1
  %v4322 = vrot.slane %v4224, 1
  %v4323 = vrot.slane %v4225, 1
  %v4324 = vrot.slane %v4226, 1
  %v4325 = vrot.slane %v4227, 1
  %v4326 = vrot.slane %v4228, 1
  %v4327 = vrot.slane %v4229, 1
  %v4328 = vrot.slane %v4230, 1
  %v4329 = vrot.slane %v4231, 1
  %v4330 = vrot.slane %v4232, 1
  %v4331 = vrot.slane %v4233, 1
  %v4332 = vrot.slane %v4234, 1
  %v4333 = vrot.slane %v4235, 1
  %v4334 = vsel %vm792, %v4320, %v4327
  %v4335 = vsel %vm792, %v4321, %v4328
  %v4336 = vsel %vm792, %v4322, %v4329
  %v4337 = vsel %vm792, %v4323, %v4330
  %v4338 = vsel %vm792, %v4324, %v4331
  %v4339 = vsel %vm792, %v4325, %v4332
  %v4340 = vsel %vm792, %v4326, %v4333
  %v4341 = vsel %vm792, %v4327, %v4320
  %v4342 = vsel %vm792, %v4328, %v4321
  %v4343 = vsel %vm792, %v4329, %v4322
  %v4344 = vsel %vm792, %v4330, %v4323
  %v4345 = vsel %vm792, %v4331, %v4324
  %v4346 = vsel %vm792, %v4332, %v4325
  %v4347 = vsel %vm792, %v4333, %v4326
  %v4348 = vmul.f32 %v4334, %v810
  %v4349 = vmul.f32 %v4335, %v814
  %v4350 = vmul.f32 %v4336, %v818
  %v4351 = vmul.f32 %v4337, %v822
  %v4352 = vmul.f32 %v4338, %v826
  %v4353 = vmul.f32 %v4339, %v830
  %v4354 = vmul.f32 %v4340, %v834
  %v4355 = vmul.f32 %v4341, %v810
  %v4356 = vmul.f32 %v4342, %v814
  %v4357 = vmul.f32 %v4343, %v818
  %v4358 = vmul.f32 %v4344, %v822
  %v4359 = vmul.f32 %v4345, %v826
  %v4360 = vmul.f32 %v4346, %v830
  %v4361 = vmul.f32 %v4347, %v834
  %v4362 = vadd.f32 %v4306, %v4348
  %v4363 = vadd.f32 %v4307, %v4349
  %v4364 = vadd.f32 %v4308, %v4350
  %v4365 = vadd.f32 %v4309, %v4351
  %v4366 = vadd.f32 %v4310, %v4352
  %v4367 = vadd.f32 %v4311, %v4353
  %v4368 = vadd.f32 %v4312, %v4354
  %v4369 = vadd.f32 %v4313, %v4355
  %v4370 = vadd.f32 %v4314, %v4356
  %v4371 = vadd.f32 %v4315, %v4357
  %v4372 = vadd.f32 %v4316, %v4358
  %v4373 = vadd.f32 %v4317, %v4359
  %v4374 = vadd.f32 %v4318, %v4360
  %v4375 = vadd.f32 %v4319, %v4361
  %s4376 = scalar_lea.vmem [#allocation2], 896
  %v4377 = vld [vmem:[%s4376] sm:$0xff]
  %v4378 = vld [vmem:[%s4376 + $0x8] sm:$0xff]
  %v4379 = vld [vmem:[%s4376 + $0x10] sm:$0xff]
  %v4380 = vld [vmem:[%s4376 + $0x18] sm:$0xff]
  %v4381 = vld [vmem:[%s4376 + $0x20] sm:$0xff]
  %v4382 = vld [vmem:[%s4376 + $0x28] sm:$0xff]
  %v4383 = vld [vmem:[%s4376 + $0x30] sm:$0xff]
  %v4384 = vld [vmem:[%s4376 + $0x38] sm:$0xff]
  %v4385 = vld [vmem:[%s4376 + $0x40] sm:$0xff]
  %v4386 = vld [vmem:[%s4376 + $0x48] sm:$0xff]
  %v4387 = vld [vmem:[%s4376 + $0x50] sm:$0xff]
  %v4388 = vld [vmem:[%s4376 + $0x58] sm:$0xff]
  %v4389 = vld [vmem:[%s4376 + $0x60] sm:$0xff]
  %v4390 = vld [vmem:[%s4376 + $0x68] sm:$0xff]
  %v4391 = vrot.slane %v4377, 7
  %v4392 = vrot.slane %v4378, 7
  %v4393 = vrot.slane %v4379, 7
  %v4394 = vrot.slane %v4380, 7
  %v4395 = vrot.slane %v4381, 7
  %v4396 = vrot.slane %v4382, 7
  %v4397 = vrot.slane %v4383, 7
  %v4398 = vrot.slane %v4384, 7
  %v4399 = vrot.slane %v4385, 7
  %v4400 = vrot.slane %v4386, 7
  %v4401 = vrot.slane %v4387, 7
  %v4402 = vrot.slane %v4388, 7
  %v4403 = vrot.slane %v4389, 7
  %v4404 = vrot.slane %v4390, 7
  %v4405 = vsel %vm651, %v4391, %v4398
  %v4406 = vsel %vm651, %v4392, %v4399
  %v4407 = vsel %vm651, %v4393, %v4400
  %v4408 = vsel %vm651, %v4394, %v4401
  %v4409 = vsel %vm651, %v4395, %v4402
  %v4410 = vsel %vm651, %v4396, %v4403
  %v4411 = vsel %vm651, %v4397, %v4404
  %v4412 = vsel %vm651, %v4398, %v4391
  %v4413 = vsel %vm651, %v4399, %v4392
  %v4414 = vsel %vm651, %v4400, %v4393
  %v4415 = vsel %vm651, %v4401, %v4394
  %v4416 = vsel %vm651, %v4402, %v4395
  %v4417 = vsel %vm651, %v4403, %v4396
  %v4418 = vsel %vm651, %v4404, %v4397
  %v4419 = vmul.f32 %v4412, %v909
  %v4420 = vmul.f32 %v4413, %v913
  %v4421 = vmul.f32 %v4414, %v917
  %v4422 = vmul.f32 %v4415, %v921
  %v4423 = vmul.f32 %v4416, %v925
  %v4424 = vmul.f32 %v4417, %v929
  %v4425 = vmul.f32 %v4418, %v933
  %v4426 = vmul.f32 %v4405, %v909
  %v4427 = vmul.f32 %v4406, %v913
  %v4428 = vmul.f32 %v4407, %v917
  %v4429 = vmul.f32 %v4408, %v921
  %v4430 = vmul.f32 %v4409, %v925
  %v4431 = vmul.f32 %v4410, %v929
  %v4432 = vmul.f32 %v4411, %v933
  %v4433 = vadd.f32 %v4362, %v4419
  %v4434 = vadd.f32 %v4363, %v4420
  %v4435 = vadd.f32 %v4364, %v4421
  %v4436 = vadd.f32 %v4365, %v4422
  %v4437 = vadd.f32 %v4366, %v4423
  %v4438 = vadd.f32 %v4367, %v4424
  %v4439 = vadd.f32 %v4368, %v4425
  %v4440 = vadd.f32 %v4369, %v4426
  %v4441 = vadd.f32 %v4370, %v4427
  %v4442 = vadd.f32 %v4371, %v4428
  %v4443 = vadd.f32 %v4372, %v4429
  %v4444 = vadd.f32 %v4373, %v4430
  %v4445 = vadd.f32 %v4374, %v4431
  %v4446 = vadd.f32 %v4375, %v4432
  %v4447 = vmul.f32 %v4377, %v965
  %v4448 = vmul.f32 %v4378, %v969
  %v4449 = vmul.f32 %v4379, %v973
  %v4450 = vmul.f32 %v4380, %v977
  %v4451 = vmul.f32 %v4381, %v981
  %v4452 = vmul.f32 %v4382, %v985
  %v4453 = vmul.f32 %v4383, %v989
  %v4454 = vmul.f32 %v4384, %v965
  %v4455 = vmul.f32 %v4385, %v969
  %v4456 = vmul.f32 %v4386, %v973
  %v4457 = vmul.f32 %v4387, %v977
  %v4458 = vmul.f32 %v4388, %v981
  %v4459 = vmul.f32 %v4389, %v985
  %v4460 = vmul.f32 %v4390, %v989
  %v4461 = vadd.f32 %v4433, %v4447
  %v4462 = vadd.f32 %v4434, %v4448
  %v4463 = vadd.f32 %v4435, %v4449
  %v4464 = vadd.f32 %v4436, %v4450
  %v4465 = vadd.f32 %v4437, %v4451
  %v4466 = vadd.f32 %v4438, %v4452
  %v4467 = vadd.f32 %v4439, %v4453
  %v4468 = vadd.f32 %v4440, %v4454
  %v4469 = vadd.f32 %v4441, %v4455
  %v4470 = vadd.f32 %v4442, %v4456
  %v4471 = vadd.f32 %v4443, %v4457
  %v4472 = vadd.f32 %v4444, %v4458
  %v4473 = vadd.f32 %v4445, %v4459
  %v4474 = vadd.f32 %v4446, %v4460
  %v4475 = vrot.slane %v4377, 1
  %v4476 = vrot.slane %v4378, 1
  %v4477 = vrot.slane %v4379, 1
  %v4478 = vrot.slane %v4380, 1
  %v4479 = vrot.slane %v4381, 1
  %v4480 = vrot.slane %v4382, 1
  %v4481 = vrot.slane %v4383, 1
  %v4482 = vrot.slane %v4384, 1
  %v4483 = vrot.slane %v4385, 1
  %v4484 = vrot.slane %v4386, 1
  %v4485 = vrot.slane %v4387, 1
  %v4486 = vrot.slane %v4388, 1
  %v4487 = vrot.slane %v4389, 1
  %v4488 = vrot.slane %v4390, 1
  %v4489 = vsel %vm792, %v4475, %v4482
  %v4490 = vsel %vm792, %v4476, %v4483
  %v4491 = vsel %vm792, %v4477, %v4484
  %v4492 = vsel %vm792, %v4478, %v4485
  %v4493 = vsel %vm792, %v4479, %v4486
  %v4494 = vsel %vm792, %v4480, %v4487
  %v4495 = vsel %vm792, %v4481, %v4488
  %v4496 = vsel %vm792, %v4482, %v4475
  %v4497 = vsel %vm792, %v4483, %v4476
  %v4498 = vsel %vm792, %v4484, %v4477
  %v4499 = vsel %vm792, %v4485, %v4478
  %v4500 = vsel %vm792, %v4486, %v4479
  %v4501 = vsel %vm792, %v4487, %v4480
  %v4502 = vsel %vm792, %v4488, %v4481
  %v4503 = vmul.f32 %v4489, %v1049
  %v4504 = vmul.f32 %v4490, %v1053
  %v4505 = vmul.f32 %v4491, %v1057
  %v4506 = vmul.f32 %v4492, %v1061
  %v4507 = vmul.f32 %v4493, %v1065
  %v4508 = vmul.f32 %v4494, %v1069
  %v4509 = vmul.f32 %v4495, %v1073
  %v4510 = vmul.f32 %v4496, %v1049
  %v4511 = vmul.f32 %v4497, %v1053
  %v4512 = vmul.f32 %v4498, %v1057
  %v4513 = vmul.f32 %v4499, %v1061
  %v4514 = vmul.f32 %v4500, %v1065
  %v4515 = vmul.f32 %v4501, %v1069
  %v4516 = vmul.f32 %v4502, %v1073
  %v4517 = vadd.f32 %v4461, %v4503
  %v4518 = vadd.f32 %v4462, %v4504
  %v4519 = vadd.f32 %v4463, %v4505
  %v4520 = vadd.f32 %v4464, %v4506
  %v4521 = vadd.f32 %v4465, %v4507
  %v4522 = vadd.f32 %v4466, %v4508
  %v4523 = vadd.f32 %v4467, %v4509
  %v4524 = vadd.f32 %v4468, %v4510
  %v4525 = vadd.f32 %v4469, %v4511
  %v4526 = vadd.f32 %v4470, %v4512
  %v4527 = vadd.f32 %v4471, %v4513
  %v4528 = vadd.f32 %v4472, %v4514
  %v4529 = vadd.f32 %v4473, %v4515
  %v4530 = vadd.f32 %v4474, %v4516
  %s4531 = scalar_lea.vmem [#allocation3], 784
  %4532 = vst [vmem:[%s4531] sm:$0xff] %v4517
  %4533 = vst [vmem:[%s4531 + $0x8] sm:$0xff] %v4518
  %4534 = vst [vmem:[%s4531 + $0x10] sm:$0xff] %v4519
  %4535 = vst [vmem:[%s4531 + $0x18] sm:$0xff] %v4520
  %4536 = vst [vmem:[%s4531 + $0x20] sm:$0xff] %v4521
  %4537 = vst [vmem:[%s4531 + $0x28] sm:$0xff] %v4522
  %4538 = vst.msk [vmem:[%s4531 + $0x30] sm:$0xff] %vm23, %v4523
  %4539 = vst [vmem:[%s4531 + $0x38] sm:$0xff] %v4524
  %4540 = vst [vmem:[%s4531 + $0x40] sm:$0xff] %v4525
  %4541 = vst [vmem:[%s4531 + $0x48] sm:$0xff] %v4526
  %4542 = vst [vmem:[%s4531 + $0x50] sm:$0xff] %v4527
  %4543 = vst [vmem:[%s4531 + $0x58] sm:$0xff] %v4528
  %4544 = vst [vmem:[%s4531 + $0x60] sm:$0xff] %v4529
  %4545 = vst.msk [vmem:[%s4531 + $0x68] sm:$0xff] %vm23, %v4530
  %v4546 = vld [vmem:[%s3898] sm:$0xff]
  %v4547 = vld [vmem:[%s3898 + $0x8] sm:$0xff]
  %v4548 = vld [vmem:[%s3898 + $0x10] sm:$0xff]
  %v4549 = vld [vmem:[%s3898 + $0x18] sm:$0xff]
  %v4550 = vld [vmem:[%s3898 + $0x20] sm:$0xff]
  %v4551 = vld [vmem:[%s3898 + $0x28] sm:$0xff]
  %v4552 = vld [vmem:[%s3898 + $0x30] sm:$0xff]
  %v4553 = vld [vmem:[%s3898 + $0x38] sm:$0xff]
  %v4554 = vld [vmem:[%s3898 + $0x40] sm:$0xff]
  %v4555 = vld [vmem:[%s3898 + $0x48] sm:$0xff]
  %v4556 = vld [vmem:[%s3898 + $0x50] sm:$0xff]
  %v4557 = vld [vmem:[%s3898 + $0x58] sm:$0xff]
  %v4558 = vld [vmem:[%s3898 + $0x60] sm:$0xff]
  %v4559 = vld [vmem:[%s3898 + $0x68] sm:$0xff]
  %v4560 = vrot.slane %v4546, 7
  %v4561 = vrot.slane %v4547, 7
  %v4562 = vrot.slane %v4548, 7
  %v4563 = vrot.slane %v4549, 7
  %v4564 = vrot.slane %v4550, 7
  %v4565 = vrot.slane %v4551, 7
  %v4566 = vrot.slane %v4552, 7
  %v4567 = vrot.slane %v4553, 7
  %v4568 = vrot.slane %v4554, 7
  %v4569 = vrot.slane %v4555, 7
  %v4570 = vrot.slane %v4556, 7
  %v4571 = vrot.slane %v4557, 7
  %v4572 = vrot.slane %v4558, 7
  %v4573 = vrot.slane %v4559, 7
  %v4574 = vsel %vm651, %v4560, %v4567
  %v4575 = vsel %vm651, %v4561, %v4568
  %v4576 = vsel %vm651, %v4562, %v4569
  %v4577 = vsel %vm651, %v4563, %v4570
  %v4578 = vsel %vm651, %v4564, %v4571
  %v4579 = vsel %vm651, %v4565, %v4572
  %v4580 = vsel %vm651, %v4566, %v4573
  %v4581 = vsel %vm651, %v4567, %v4560
  %v4582 = vsel %vm651, %v4568, %v4561
  %v4583 = vsel %vm651, %v4569, %v4562
  %v4584 = vsel %vm651, %v4570, %v4563
  %v4585 = vsel %vm651, %v4571, %v4564
  %v4586 = vsel %vm651, %v4572, %v4565
  %v4587 = vsel %vm651, %v4573, %v4566
  %v4588 = vmul.f32 %v4581, %v1161
  %v4589 = vmul.f32 %v4582, %v1165
  %v4590 = vmul.f32 %v4583, %v1169
  %v4591 = vmul.f32 %v4584, %v1173
  %v4592 = vmul.f32 %v4585, %v1177
  %v4593 = vmul.f32 %v4586, %v1181
  %v4594 = vmul.f32 %v4587, %v1185
  %v4595 = vmul.f32 %v4574, %v1161
  %v4596 = vmul.f32 %v4575, %v1165
  %v4597 = vmul.f32 %v4576, %v1169
  %v4598 = vmul.f32 %v4577, %v1173
  %v4599 = vmul.f32 %v4578, %v1177
  %v4600 = vmul.f32 %v4579, %v1181
  %v4601 = vmul.f32 %v4580, %v1185
  %v4602 = vadd.f32 %v4588, 0.0
  %v4603 = vadd.f32 %v4589, 0.0
  %v4604 = vadd.f32 %v4590, 0.0
  %v4605 = vadd.f32 %v4591, 0.0
  %v4606 = vadd.f32 %v4592, 0.0
  %v4607 = vadd.f32 %v4593, 0.0
  %v4608 = vadd.f32 %v4594, 0.0
  %v4609 = vadd.f32 %v4595, 0.0
  %v4610 = vadd.f32 %v4596, 0.0
  %v4611 = vadd.f32 %v4597, 0.0
  %v4612 = vadd.f32 %v4598, 0.0
  %v4613 = vadd.f32 %v4599, 0.0
  %v4614 = vadd.f32 %v4600, 0.0
  %v4615 = vadd.f32 %v4601, 0.0
  %v4616 = vmul.f32 %v4546, %v1217
  %v4617 = vmul.f32 %v4547, %v1221
  %v4618 = vmul.f32 %v4548, %v1225
  %v4619 = vmul.f32 %v4549, %v1229
  %v4620 = vmul.f32 %v4550, %v1233
  %v4621 = vmul.f32 %v4551, %v1237
  %v4622 = vmul.f32 %v4552, %v1241
  %v4623 = vmul.f32 %v4553, %v1217
  %v4624 = vmul.f32 %v4554, %v1221
  %v4625 = vmul.f32 %v4555, %v1225
  %v4626 = vmul.f32 %v4556, %v1229
  %v4627 = vmul.f32 %v4557, %v1233
  %v4628 = vmul.f32 %v4558, %v1237
  %v4629 = vmul.f32 %v4559, %v1241
  %v4630 = vadd.f32 %v4602, %v4616
  %v4631 = vadd.f32 %v4603, %v4617
  %v4632 = vadd.f32 %v4604, %v4618
  %v4633 = vadd.f32 %v4605, %v4619
  %v4634 = vadd.f32 %v4606, %v4620
  %v4635 = vadd.f32 %v4607, %v4621
  %v4636 = vadd.f32 %v4608, %v4622
  %v4637 = vadd.f32 %v4609, %v4623
  %v4638 = vadd.f32 %v4610, %v4624
  %v4639 = vadd.f32 %v4611, %v4625
  %v4640 = vadd.f32 %v4612, %v4626
  %v4641 = vadd.f32 %v4613, %v4627
  %v4642 = vadd.f32 %v4614, %v4628
  %v4643 = vadd.f32 %v4615, %v4629
  %v4644 = vrot.slane %v4546, 1
  %v4645 = vrot.slane %v4547, 1
  %v4646 = vrot.slane %v4548, 1
  %v4647 = vrot.slane %v4549, 1
  %v4648 = vrot.slane %v4550, 1
  %v4649 = vrot.slane %v4551, 1
  %v4650 = vrot.slane %v4552, 1
  %v4651 = vrot.slane %v4553, 1
  %v4652 = vrot.slane %v4554, 1
  %v4653 = vrot.slane %v4555, 1
  %v4654 = vrot.slane %v4556, 1
  %v4655 = vrot.slane %v4557, 1
  %v4656 = vrot.slane %v4558, 1
  %v4657 = vrot.slane %v4559, 1
  %v4658 = vsel %vm792, %v4644, %v4651
  %v4659 = vsel %vm792, %v4645, %v4652
  %v4660 = vsel %vm792, %v4646, %v4653
  %v4661 = vsel %vm792, %v4647, %v4654
  %v4662 = vsel %vm792, %v4648, %v4655
  %v4663 = vsel %vm792, %v4649, %v4656
  %v4664 = vsel %vm792, %v4650, %v4657
  %v4665 = vsel %vm792, %v4651, %v4644
  %v4666 = vsel %vm792, %v4652, %v4645
  %v4667 = vsel %vm792, %v4653, %v4646
  %v4668 = vsel %vm792, %v4654, %v4647
  %v4669 = vsel %vm792, %v4655, %v4648
  %v4670 = vsel %vm792, %v4656, %v4649
  %v4671 = vsel %vm792, %v4657, %v4650
  %v4672 = vmul.f32 %v4658, %v1301
  %v4673 = vmul.f32 %v4659, %v1305
  %v4674 = vmul.f32 %v4660, %v1309
  %v4675 = vmul.f32 %v4661, %v1313
  %v4676 = vmul.f32 %v4662, %v1317
  %v4677 = vmul.f32 %v4663, %v1321
  %v4678 = vmul.f32 %v4664, %v1325
  %v4679 = vmul.f32 %v4665, %v1301
  %v4680 = vmul.f32 %v4666, %v1305
  %v4681 = vmul.f32 %v4667, %v1309
  %v4682 = vmul.f32 %v4668, %v1313
  %v4683 = vmul.f32 %v4669, %v1317
  %v4684 = vmul.f32 %v4670, %v1321
  %v4685 = vmul.f32 %v4671, %v1325
  %v4686 = vadd.f32 %v4630, %v4672
  %v4687 = vadd.f32 %v4631, %v4673
  %v4688 = vadd.f32 %v4632, %v4674
  %v4689 = vadd.f32 %v4633, %v4675
  %v4690 = vadd.f32 %v4634, %v4676
  %v4691 = vadd.f32 %v4635, %v4677
  %v4692 = vadd.f32 %v4636, %v4678
  %v4693 = vadd.f32 %v4637, %v4679
  %v4694 = vadd.f32 %v4638, %v4680
  %v4695 = vadd.f32 %v4639, %v4681
  %v4696 = vadd.f32 %v4640, %v4682
  %v4697 = vadd.f32 %v4641, %v4683
  %v4698 = vadd.f32 %v4642, %v4684
  %v4699 = vadd.f32 %v4643, %v4685
  %v4700 = vld [vmem:[%s4376] sm:$0xff]
  %v4701 = vld [vmem:[%s4376 + $0x8] sm:$0xff]
  %v4702 = vld [vmem:[%s4376 + $0x10] sm:$0xff]
  %v4703 = vld [vmem:[%s4376 + $0x18] sm:$0xff]
  %v4704 = vld [vmem:[%s4376 + $0x20] sm:$0xff]
  %v4705 = vld [vmem:[%s4376 + $0x28] sm:$0xff]
  %v4706 = vld [vmem:[%s4376 + $0x30] sm:$0xff]
  %v4707 = vld [vmem:[%s4376 + $0x38] sm:$0xff]
  %v4708 = vld [vmem:[%s4376 + $0x40] sm:$0xff]
  %v4709 = vld [vmem:[%s4376 + $0x48] sm:$0xff]
  %v4710 = vld [vmem:[%s4376 + $0x50] sm:$0xff]
  %v4711 = vld [vmem:[%s4376 + $0x58] sm:$0xff]
  %v4712 = vld [vmem:[%s4376 + $0x60] sm:$0xff]
  %v4713 = vld [vmem:[%s4376 + $0x68] sm:$0xff]
  %v4714 = vrot.slane %v4700, 7
  %v4715 = vrot.slane %v4701, 7
  %v4716 = vrot.slane %v4702, 7
  %v4717 = vrot.slane %v4703, 7
  %v4718 = vrot.slane %v4704, 7
  %v4719 = vrot.slane %v4705, 7
  %v4720 = vrot.slane %v4706, 7
  %v4721 = vrot.slane %v4707, 7
  %v4722 = vrot.slane %v4708, 7
  %v4723 = vrot.slane %v4709, 7
  %v4724 = vrot.slane %v4710, 7
  %v4725 = vrot.slane %v4711, 7
  %v4726 = vrot.slane %v4712, 7
  %v4727 = vrot.slane %v4713, 7
  %v4728 = vsel %vm651, %v4714, %v4721
  %v4729 = vsel %vm651, %v4715, %v4722
  %v4730 = vsel %vm651, %v4716, %v4723
  %v4731 = vsel %vm651, %v4717, %v4724
  %v4732 = vsel %vm651, %v4718, %v4725
  %v4733 = vsel %vm651, %v4719, %v4726
  %v4734 = vsel %vm651, %v4720, %v4727
  %v4735 = vsel %vm651, %v4721, %v4714
  %v4736 = vsel %vm651, %v4722, %v4715
  %v4737 = vsel %vm651, %v4723, %v4716
  %v4738 = vsel %vm651, %v4724, %v4717
  %v4739 = vsel %vm651, %v4725, %v4718
  %v4740 = vsel %vm651, %v4726, %v4719
  %v4741 = vsel %vm651, %v4727, %v4720
  %v4742 = vmul.f32 %v4735, %v669
  %v4743 = vmul.f32 %v4736, %v673
  %v4744 = vmul.f32 %v4737, %v677
  %v4745 = vmul.f32 %v4738, %v681
  %v4746 = vmul.f32 %v4739, %v685
  %v4747 = vmul.f32 %v4740, %v689
  %v4748 = vmul.f32 %v4741, %v693
  %v4749 = vmul.f32 %v4728, %v669
  %v4750 = vmul.f32 %v4729, %v673
  %v4751 = vmul.f32 %v4730, %v677
  %v4752 = vmul.f32 %v4731, %v681
  %v4753 = vmul.f32 %v4732, %v685
  %v4754 = vmul.f32 %v4733, %v689
  %v4755 = vmul.f32 %v4734, %v693
  %v4756 = vadd.f32 %v4686, %v4742
  %v4757 = vadd.f32 %v4687, %v4743
  %v4758 = vadd.f32 %v4688, %v4744
  %v4759 = vadd.f32 %v4689, %v4745
  %v4760 = vadd.f32 %v4690, %v4746
  %v4761 = vadd.f32 %v4691, %v4747
  %v4762 = vadd.f32 %v4692, %v4748
  %v4763 = vadd.f32 %v4693, %v4749
  %v4764 = vadd.f32 %v4694, %v4750
  %v4765 = vadd.f32 %v4695, %v4751
  %v4766 = vadd.f32 %v4696, %v4752
  %v4767 = vadd.f32 %v4697, %v4753
  %v4768 = vadd.f32 %v4698, %v4754
  %v4769 = vadd.f32 %v4699, %v4755
  %v4770 = vmul.f32 %v4700, %v725
  %v4771 = vmul.f32 %v4701, %v729
  %v4772 = vmul.f32 %v4702, %v733
  %v4773 = vmul.f32 %v4703, %v737
  %v4774 = vmul.f32 %v4704, %v741
  %v4775 = vmul.f32 %v4705, %v745
  %v4776 = vmul.f32 %v4706, %v749
  %v4777 = vmul.f32 %v4707, %v725
  %v4778 = vmul.f32 %v4708, %v729
  %v4779 = vmul.f32 %v4709, %v733
  %v4780 = vmul.f32 %v4710, %v737
  %v4781 = vmul.f32 %v4711, %v741
  %v4782 = vmul.f32 %v4712, %v745
  %v4783 = vmul.f32 %v4713, %v749
  %v4784 = vadd.f32 %v4756, %v4770
  %v4785 = vadd.f32 %v4757, %v4771
  %v4786 = vadd.f32 %v4758, %v4772
  %v4787 = vadd.f32 %v4759, %v4773
  %v4788 = vadd.f32 %v4760, %v4774
  %v4789 = vadd.f32 %v4761, %v4775
  %v4790 = vadd.f32 %v4762, %v4776
  %v4791 = vadd.f32 %v4763, %v4777
  %v4792 = vadd.f32 %v4764, %v4778
  %v4793 = vadd.f32 %v4765, %v4779
  %v4794 = vadd.f32 %v4766, %v4780
  %v4795 = vadd.f32 %v4767, %v4781
  %v4796 = vadd.f32 %v4768, %v4782
  %v4797 = vadd.f32 %v4769, %v4783
  %v4798 = vrot.slane %v4700, 1
  %v4799 = vrot.slane %v4701, 1
  %v4800 = vrot.slane %v4702, 1
  %v4801 = vrot.slane %v4703, 1
  %v4802 = vrot.slane %v4704, 1
  %v4803 = vrot.slane %v4705, 1
  %v4804 = vrot.slane %v4706, 1
  %v4805 = vrot.slane %v4707, 1
  %v4806 = vrot.slane %v4708, 1
  %v4807 = vrot.slane %v4709, 1
  %v4808 = vrot.slane %v4710, 1
  %v4809 = vrot.slane %v4711, 1
  %v4810 = vrot.slane %v4712, 1
  %v4811 = vrot.slane %v4713, 1
  %v4812 = vsel %vm792, %v4798, %v4805
  %v4813 = vsel %vm792, %v4799, %v4806
  %v4814 = vsel %vm792, %v4800, %v4807
  %v4815 = vsel %vm792, %v4801, %v4808
  %v4816 = vsel %vm792, %v4802, %v4809
  %v4817 = vsel %vm792, %v4803, %v4810
  %v4818 = vsel %vm792, %v4804, %v4811
  %v4819 = vsel %vm792, %v4805, %v4798
  %v4820 = vsel %vm792, %v4806, %v4799
  %v4821 = vsel %vm792, %v4807, %v4800
  %v4822 = vsel %vm792, %v4808, %v4801
  %v4823 = vsel %vm792, %v4809, %v4802
  %v4824 = vsel %vm792, %v4810, %v4803
  %v4825 = vsel %vm792, %v4811, %v4804
  %v4826 = vmul.f32 %v4812, %v810
  %v4827 = vmul.f32 %v4813, %v814
  %v4828 = vmul.f32 %v4814, %v818
  %v4829 = vmul.f32 %v4815, %v822
  %v4830 = vmul.f32 %v4816, %v826
  %v4831 = vmul.f32 %v4817, %v830
  %v4832 = vmul.f32 %v4818, %v834
  %v4833 = vmul.f32 %v4819, %v810
  %v4834 = vmul.f32 %v4820, %v814
  %v4835 = vmul.f32 %v4821, %v818
  %v4836 = vmul.f32 %v4822, %v822
  %v4837 = vmul.f32 %v4823, %v826
  %v4838 = vmul.f32 %v4824, %v830
  %v4839 = vmul.f32 %v4825, %v834
  %v4840 = vadd.f32 %v4784, %v4826
  %v4841 = vadd.f32 %v4785, %v4827
  %v4842 = vadd.f32 %v4786, %v4828
  %v4843 = vadd.f32 %v4787, %v4829
  %v4844 = vadd.f32 %v4788, %v4830
  %v4845 = vadd.f32 %v4789, %v4831
  %v4846 = vadd.f32 %v4790, %v4832
  %v4847 = vadd.f32 %v4791, %v4833
  %v4848 = vadd.f32 %v4792, %v4834
  %v4849 = vadd.f32 %v4793, %v4835
  %v4850 = vadd.f32 %v4794, %v4836
  %v4851 = vadd.f32 %v4795, %v4837
  %v4852 = vadd.f32 %v4796, %v4838
  %v4853 = vadd.f32 %v4797, %v4839
  %s4854 = scalar_lea.vmem [#allocation2], 1008
  %v4855 = vld [vmem:[%s4854] sm:$0xff]
  %v4856 = vld [vmem:[%s4854 + $0x8] sm:$0xff]
  %v4857 = vld [vmem:[%s4854 + $0x10] sm:$0xff]
  %v4858 = vld [vmem:[%s4854 + $0x18] sm:$0xff]
  %v4859 = vld [vmem:[%s4854 + $0x20] sm:$0xff]
  %v4860 = vld [vmem:[%s4854 + $0x28] sm:$0xff]
  %v4861 = vld [vmem:[%s4854 + $0x30] sm:$0xff]
  %v4862 = vld [vmem:[%s4854 + $0x38] sm:$0xff]
  %v4863 = vld [vmem:[%s4854 + $0x40] sm:$0xff]
  %v4864 = vld [vmem:[%s4854 + $0x48] sm:$0xff]
  %v4865 = vld [vmem:[%s4854 + $0x50] sm:$0xff]
  %v4866 = vld [vmem:[%s4854 + $0x58] sm:$0xff]
  %v4867 = vld [vmem:[%s4854 + $0x60] sm:$0xff]
  %v4868 = vld [vmem:[%s4854 + $0x68] sm:$0xff]
  %v4869 = vrot.slane %v4855, 7
  %v4870 = vrot.slane %v4856, 7
  %v4871 = vrot.slane %v4857, 7
  %v4872 = vrot.slane %v4858, 7
  %v4873 = vrot.slane %v4859, 7
  %v4874 = vrot.slane %v4860, 7
  %v4875 = vrot.slane %v4861, 7
  %v4876 = vrot.slane %v4862, 7
  %v4877 = vrot.slane %v4863, 7
  %v4878 = vrot.slane %v4864, 7
  %v4879 = vrot.slane %v4865, 7
  %v4880 = vrot.slane %v4866, 7
  %v4881 = vrot.slane %v4867, 7
  %v4882 = vrot.slane %v4868, 7
  %v4883 = vsel %vm651, %v4869, %v4876
  %v4884 = vsel %vm651, %v4870, %v4877
  %v4885 = vsel %vm651, %v4871, %v4878
  %v4886 = vsel %vm651, %v4872, %v4879
  %v4887 = vsel %vm651, %v4873, %v4880
  %v4888 = vsel %vm651, %v4874, %v4881
  %v4889 = vsel %vm651, %v4875, %v4882
  %v4890 = vsel %vm651, %v4876, %v4869
  %v4891 = vsel %vm651, %v4877, %v4870
  %v4892 = vsel %vm651, %v4878, %v4871
  %v4893 = vsel %vm651, %v4879, %v4872
  %v4894 = vsel %vm651, %v4880, %v4873
  %v4895 = vsel %vm651, %v4881, %v4874
  %v4896 = vsel %vm651, %v4882, %v4875
  %v4897 = vmul.f32 %v4890, %v909
  %v4898 = vmul.f32 %v4891, %v913
  %v4899 = vmul.f32 %v4892, %v917
  %v4900 = vmul.f32 %v4893, %v921
  %v4901 = vmul.f32 %v4894, %v925
  %v4902 = vmul.f32 %v4895, %v929
  %v4903 = vmul.f32 %v4896, %v933
  %v4904 = vmul.f32 %v4883, %v909
  %v4905 = vmul.f32 %v4884, %v913
  %v4906 = vmul.f32 %v4885, %v917
  %v4907 = vmul.f32 %v4886, %v921
  %v4908 = vmul.f32 %v4887, %v925
  %v4909 = vmul.f32 %v4888, %v929
  %v4910 = vmul.f32 %v4889, %v933
  %v4911 = vadd.f32 %v4840, %v4897
  %v4912 = vadd.f32 %v4841, %v4898
  %v4913 = vadd.f32 %v4842, %v4899
  %v4914 = vadd.f32 %v4843, %v4900
  %v4915 = vadd.f32 %v4844, %v4901
  %v4916 = vadd.f32 %v4845, %v4902
  %v4917 = vadd.f32 %v4846, %v4903
  %v4918 = vadd.f32 %v4847, %v4904
  %v4919 = vadd.f32 %v4848, %v4905
  %v4920 = vadd.f32 %v4849, %v4906
  %v4921 = vadd.f32 %v4850, %v4907
  %v4922 = vadd.f32 %v4851, %v4908
  %v4923 = vadd.f32 %v4852, %v4909
  %v4924 = vadd.f32 %v4853, %v4910
  %v4925 = vmul.f32 %v4855, %v965
  %v4926 = vmul.f32 %v4856, %v969
  %v4927 = vmul.f32 %v4857, %v973
  %v4928 = vmul.f32 %v4858, %v977
  %v4929 = vmul.f32 %v4859, %v981
  %v4930 = vmul.f32 %v4860, %v985
  %v4931 = vmul.f32 %v4861, %v989
  %v4932 = vmul.f32 %v4862, %v965
  %v4933 = vmul.f32 %v4863, %v969
  %v4934 = vmul.f32 %v4864, %v973
  %v4935 = vmul.f32 %v4865, %v977
  %v4936 = vmul.f32 %v4866, %v981
  %v4937 = vmul.f32 %v4867, %v985
  %v4938 = vmul.f32 %v4868, %v989
  %v4939 = vadd.f32 %v4911, %v4925
  %v4940 = vadd.f32 %v4912, %v4926
  %v4941 = vadd.f32 %v4913, %v4927
  %v4942 = vadd.f32 %v4914, %v4928
  %v4943 = vadd.f32 %v4915, %v4929
  %v4944 = vadd.f32 %v4916, %v4930
  %v4945 = vadd.f32 %v4917, %v4931
  %v4946 = vadd.f32 %v4918, %v4932
  %v4947 = vadd.f32 %v4919, %v4933
  %v4948 = vadd.f32 %v4920, %v4934
  %v4949 = vadd.f32 %v4921, %v4935
  %v4950 = vadd.f32 %v4922, %v4936
  %v4951 = vadd.f32 %v4923, %v4937
  %v4952 = vadd.f32 %v4924, %v4938
  %v4953 = vrot.slane %v4855, 1
  %v4954 = vrot.slane %v4856, 1
  %v4955 = vrot.slane %v4857, 1
  %v4956 = vrot.slane %v4858, 1
  %v4957 = vrot.slane %v4859, 1
  %v4958 = vrot.slane %v4860, 1
  %v4959 = vrot.slane %v4861, 1
  %v4960 = vrot.slane %v4862, 1
  %v4961 = vrot.slane %v4863, 1
  %v4962 = vrot.slane %v4864, 1
  %v4963 = vrot.slane %v4865, 1
  %v4964 = vrot.slane %v4866, 1
  %v4965 = vrot.slane %v4867, 1
  %v4966 = vrot.slane %v4868, 1
  %v4967 = vsel %vm792, %v4953, %v4960
  %v4968 = vsel %vm792, %v4954, %v4961
  %v4969 = vsel %vm792, %v4955, %v4962
  %v4970 = vsel %vm792, %v4956, %v4963
  %v4971 = vsel %vm792, %v4957, %v4964
  %v4972 = vsel %vm792, %v4958, %v4965
  %v4973 = vsel %vm792, %v4959, %v4966
  %v4974 = vsel %vm792, %v4960, %v4953
  %v4975 = vsel %vm792, %v4961, %v4954
  %v4976 = vsel %vm792, %v4962, %v4955
  %v4977 = vsel %vm792, %v4963, %v4956
  %v4978 = vsel %vm792, %v4964, %v4957
  %v4979 = vsel %vm792, %v4965, %v4958
  %v4980 = vsel %vm792, %v4966, %v4959
  %v4981 = vmul.f32 %v4967, %v1049
  %v4982 = vmul.f32 %v4968, %v1053
  %v4983 = vmul.f32 %v4969, %v1057
  %v4984 = vmul.f32 %v4970, %v1061
  %v4985 = vmul.f32 %v4971, %v1065
  %v4986 = vmul.f32 %v4972, %v1069
  %v4987 = vmul.f32 %v4973, %v1073
  %v4988 = vmul.f32 %v4974, %v1049
  %v4989 = vmul.f32 %v4975, %v1053
  %v4990 = vmul.f32 %v4976, %v1057
  %v4991 = vmul.f32 %v4977, %v1061
  %v4992 = vmul.f32 %v4978, %v1065
  %v4993 = vmul.f32 %v4979, %v1069
  %v4994 = vmul.f32 %v4980, %v1073
  %v4995 = vadd.f32 %v4939, %v4981
  %v4996 = vadd.f32 %v4940, %v4982
  %v4997 = vadd.f32 %v4941, %v4983
  %v4998 = vadd.f32 %v4942, %v4984
  %v4999 = vadd.f32 %v4943, %v4985
  %v5000 = vadd.f32 %v4944, %v4986
  %v5001 = vadd.f32 %v4945, %v4987
  %v5002 = vadd.f32 %v4946, %v4988
  %v5003 = vadd.f32 %v4947, %v4989
  %v5004 = vadd.f32 %v4948, %v4990
  %v5005 = vadd.f32 %v4949, %v4991
  %v5006 = vadd.f32 %v4950, %v4992
  %v5007 = vadd.f32 %v4951, %v4993
  %v5008 = vadd.f32 %v4952, %v4994
  %s5009 = scalar_lea.vmem [#allocation3], 896
  %5010 = vst [vmem:[%s5009] sm:$0xff] %v4995
  %5011 = vst [vmem:[%s5009 + $0x8] sm:$0xff] %v4996
  %5012 = vst [vmem:[%s5009 + $0x10] sm:$0xff] %v4997
  %5013 = vst [vmem:[%s5009 + $0x18] sm:$0xff] %v4998
  %5014 = vst [vmem:[%s5009 + $0x20] sm:$0xff] %v4999
  %5015 = vst [vmem:[%s5009 + $0x28] sm:$0xff] %v5000
  %5016 = vst.msk [vmem:[%s5009 + $0x30] sm:$0xff] %vm23, %v5001
  %5017 = vst [vmem:[%s5009 + $0x38] sm:$0xff] %v5002
  %5018 = vst [vmem:[%s5009 + $0x40] sm:$0xff] %v5003
  %5019 = vst [vmem:[%s5009 + $0x48] sm:$0xff] %v5004
  %5020 = vst [vmem:[%s5009 + $0x50] sm:$0xff] %v5005
  %5021 = vst [vmem:[%s5009 + $0x58] sm:$0xff] %v5006
  %5022 = vst [vmem:[%s5009 + $0x60] sm:$0xff] %v5007
  %5023 = vst.msk [vmem:[%s5009 + $0x68] sm:$0xff] %vm23, %v5008
  %v5024 = vld [vmem:[%s4376] sm:$0xff]
  %v5025 = vld [vmem:[%s4376 + $0x8] sm:$0xff]
  %v5026 = vld [vmem:[%s4376 + $0x10] sm:$0xff]
  %v5027 = vld [vmem:[%s4376 + $0x18] sm:$0xff]
  %v5028 = vld [vmem:[%s4376 + $0x20] sm:$0xff]
  %v5029 = vld [vmem:[%s4376 + $0x28] sm:$0xff]
  %v5030 = vld [vmem:[%s4376 + $0x30] sm:$0xff]
  %v5031 = vld [vmem:[%s4376 + $0x38] sm:$0xff]
  %v5032 = vld [vmem:[%s4376 + $0x40] sm:$0xff]
  %v5033 = vld [vmem:[%s4376 + $0x48] sm:$0xff]
  %v5034 = vld [vmem:[%s4376 + $0x50] sm:$0xff]
  %v5035 = vld [vmem:[%s4376 + $0x58] sm:$0xff]
  %v5036 = vld [vmem:[%s4376 + $0x60] sm:$0xff]
  %v5037 = vld [vmem:[%s4376 + $0x68] sm:$0xff]
  %v5038 = vrot.slane %v5024, 7
  %v5039 = vrot.slane %v5025, 7
  %v5040 = vrot.slane %v5026, 7
  %v5041 = vrot.slane %v5027, 7
  %v5042 = vrot.slane %v5028, 7
  %v5043 = vrot.slane %v5029, 7
  %v5044 = vrot.slane %v5030, 7
  %v5045 = vrot.slane %v5031, 7
  %v5046 = vrot.slane %v5032, 7
  %v5047 = vrot.slane %v5033, 7
  %v5048 = vrot.slane %v5034, 7
  %v5049 = vrot.slane %v5035, 7
  %v5050 = vrot.slane %v5036, 7
  %v5051 = vrot.slane %v5037, 7
  %v5052 = vsel %vm651, %v5038, %v5045
  %v5053 = vsel %vm651, %v5039, %v5046
  %v5054 = vsel %vm651, %v5040, %v5047
  %v5055 = vsel %vm651, %v5041, %v5048
  %v5056 = vsel %vm651, %v5042, %v5049
  %v5057 = vsel %vm651, %v5043, %v5050
  %v5058 = vsel %vm651, %v5044, %v5051
  %v5059 = vsel %vm651, %v5045, %v5038
  %v5060 = vsel %vm651, %v5046, %v5039
  %v5061 = vsel %vm651, %v5047, %v5040
  %v5062 = vsel %vm651, %v5048, %v5041
  %v5063 = vsel %vm651, %v5049, %v5042
  %v5064 = vsel %vm651, %v5050, %v5043
  %v5065 = vsel %vm651, %v5051, %v5044
  %v5066 = vmul.f32 %v5059, %v1161
  %v5067 = vmul.f32 %v5060, %v1165
  %v5068 = vmul.f32 %v5061, %v1169
  %v5069 = vmul.f32 %v5062, %v1173
  %v5070 = vmul.f32 %v5063, %v1177
  %v5071 = vmul.f32 %v5064, %v1181
  %v5072 = vmul.f32 %v5065, %v1185
  %v5073 = vmul.f32 %v5052, %v1161
  %v5074 = vmul.f32 %v5053, %v1165
  %v5075 = vmul.f32 %v5054, %v1169
  %v5076 = vmul.f32 %v5055, %v1173
  %v5077 = vmul.f32 %v5056, %v1177
  %v5078 = vmul.f32 %v5057, %v1181
  %v5079 = vmul.f32 %v5058, %v1185
  %v5080 = vadd.f32 %v5066, 0.0
  %v5081 = vadd.f32 %v5067, 0.0
  %v5082 = vadd.f32 %v5068, 0.0
  %v5083 = vadd.f32 %v5069, 0.0
  %v5084 = vadd.f32 %v5070, 0.0
  %v5085 = vadd.f32 %v5071, 0.0
  %v5086 = vadd.f32 %v5072, 0.0
  %v5087 = vadd.f32 %v5073, 0.0
  %v5088 = vadd.f32 %v5074, 0.0
  %v5089 = vadd.f32 %v5075, 0.0
  %v5090 = vadd.f32 %v5076, 0.0
  %v5091 = vadd.f32 %v5077, 0.0
  %v5092 = vadd.f32 %v5078, 0.0
  %v5093 = vadd.f32 %v5079, 0.0
  %v5094 = vmul.f32 %v5024, %v1217
  %v5095 = vmul.f32 %v5025, %v1221
  %v5096 = vmul.f32 %v5026, %v1225
  %v5097 = vmul.f32 %v5027, %v1229
  %v5098 = vmul.f32 %v5028, %v1233
  %v5099 = vmul.f32 %v5029, %v1237
  %v5100 = vmul.f32 %v5030, %v1241
  %v5101 = vmul.f32 %v5031, %v1217
  %v5102 = vmul.f32 %v5032, %v1221
  %v5103 = vmul.f32 %v5033, %v1225
  %v5104 = vmul.f32 %v5034, %v1229
  %v5105 = vmul.f32 %v5035, %v1233
  %v5106 = vmul.f32 %v5036, %v1237
  %v5107 = vmul.f32 %v5037, %v1241
  %v5108 = vadd.f32 %v5080, %v5094
  %v5109 = vadd.f32 %v5081, %v5095
  %v5110 = vadd.f32 %v5082, %v5096
  %v5111 = vadd.f32 %v5083, %v5097
  %v5112 = vadd.f32 %v5084, %v5098
  %v5113 = vadd.f32 %v5085, %v5099
  %v5114 = vadd.f32 %v5086, %v5100
  %v5115 = vadd.f32 %v5087, %v5101
  %v5116 = vadd.f32 %v5088, %v5102
  %v5117 = vadd.f32 %v5089, %v5103
  %v5118 = vadd.f32 %v5090, %v5104
  %v5119 = vadd.f32 %v5091, %v5105
  %v5120 = vadd.f32 %v5092, %v5106
  %v5121 = vadd.f32 %v5093, %v5107
  %v5122 = vrot.slane %v5024, 1
  %v5123 = vrot.slane %v5025, 1
  %v5124 = vrot.slane %v5026, 1
  %v5125 = vrot.slane %v5027, 1
  %v5126 = vrot.slane %v5028, 1
  %v5127 = vrot.slane %v5029, 1
  %v5128 = vrot.slane %v5030, 1
  %v5129 = vrot.slane %v5031, 1
  %v5130 = vrot.slane %v5032, 1
  %v5131 = vrot.slane %v5033, 1
  %v5132 = vrot.slane %v5034, 1
  %v5133 = vrot.slane %v5035, 1
  %v5134 = vrot.slane %v5036, 1
  %v5135 = vrot.slane %v5037, 1
  %v5136 = vsel %vm792, %v5122, %v5129
  %v5137 = vsel %vm792, %v5123, %v5130
  %v5138 = vsel %vm792, %v5124, %v5131
  %v5139 = vsel %vm792, %v5125, %v5132
  %v5140 = vsel %vm792, %v5126, %v5133
  %v5141 = vsel %vm792, %v5127, %v5134
  %v5142 = vsel %vm792, %v5128, %v5135
  %v5143 = vsel %vm792, %v5129, %v5122
  %v5144 = vsel %vm792, %v5130, %v5123
  %v5145 = vsel %vm792, %v5131, %v5124
  %v5146 = vsel %vm792, %v5132, %v5125
  %v5147 = vsel %vm792, %v5133, %v5126
  %v5148 = vsel %vm792, %v5134, %v5127
  %v5149 = vsel %vm792, %v5135, %v5128
  %v5150 = vmul.f32 %v5136, %v1301
  %v5151 = vmul.f32 %v5137, %v1305
  %v5152 = vmul.f32 %v5138, %v1309
  %v5153 = vmul.f32 %v5139, %v1313
  %v5154 = vmul.f32 %v5140, %v1317
  %v5155 = vmul.f32 %v5141, %v1321
  %v5156 = vmul.f32 %v5142, %v1325
  %v5157 = vmul.f32 %v5143, %v1301
  %v5158 = vmul.f32 %v5144, %v1305
  %v5159 = vmul.f32 %v5145, %v1309
  %v5160 = vmul.f32 %v5146, %v1313
  %v5161 = vmul.f32 %v5147, %v1317
  %v5162 = vmul.f32 %v5148, %v1321
  %v5163 = vmul.f32 %v5149, %v1325
  %v5164 = vadd.f32 %v5108, %v5150
  %v5165 = vadd.f32 %v5109, %v5151
  %v5166 = vadd.f32 %v5110, %v5152
  %v5167 = vadd.f32 %v5111, %v5153
  %v5168 = vadd.f32 %v5112, %v5154
  %v5169 = vadd.f32 %v5113, %v5155
  %v5170 = vadd.f32 %v5114, %v5156
  %v5171 = vadd.f32 %v5115, %v5157
  %v5172 = vadd.f32 %v5116, %v5158
  %v5173 = vadd.f32 %v5117, %v5159
  %v5174 = vadd.f32 %v5118, %v5160
  %v5175 = vadd.f32 %v5119, %v5161
  %v5176 = vadd.f32 %v5120, %v5162
  %v5177 = vadd.f32 %v5121, %v5163
  %v5178 = vld [vmem:[%s4854] sm:$0xff]
  %v5179 = vld [vmem:[%s4854 + $0x8] sm:$0xff]
  %v5180 = vld [vmem:[%s4854 + $0x10] sm:$0xff]
  %v5181 = vld [vmem:[%s4854 + $0x18] sm:$0xff]
  %v5182 = vld [vmem:[%s4854 + $0x20] sm:$0xff]
  %v5183 = vld [vmem:[%s4854 + $0x28] sm:$0xff]
  %v5184 = vld [vmem:[%s4854 + $0x30] sm:$0xff]
  %v5185 = vld [vmem:[%s4854 + $0x38] sm:$0xff]
  %v5186 = vld [vmem:[%s4854 + $0x40] sm:$0xff]
  %v5187 = vld [vmem:[%s4854 + $0x48] sm:$0xff]
  %v5188 = vld [vmem:[%s4854 + $0x50] sm:$0xff]
  %v5189 = vld [vmem:[%s4854 + $0x58] sm:$0xff]
  %v5190 = vld [vmem:[%s4854 + $0x60] sm:$0xff]
  %v5191 = vld [vmem:[%s4854 + $0x68] sm:$0xff]
  %v5192 = vrot.slane %v5178, 7
  %v5193 = vrot.slane %v5179, 7
  %v5194 = vrot.slane %v5180, 7
  %v5195 = vrot.slane %v5181, 7
  %v5196 = vrot.slane %v5182, 7
  %v5197 = vrot.slane %v5183, 7
  %v5198 = vrot.slane %v5184, 7
  %v5199 = vrot.slane %v5185, 7
  %v5200 = vrot.slane %v5186, 7
  %v5201 = vrot.slane %v5187, 7
  %v5202 = vrot.slane %v5188, 7
  %v5203 = vrot.slane %v5189, 7
  %v5204 = vrot.slane %v5190, 7
  %v5205 = vrot.slane %v5191, 7
  %v5206 = vsel %vm651, %v5192, %v5199
  %v5207 = vsel %vm651, %v5193, %v5200
  %v5208 = vsel %vm651, %v5194, %v5201
  %v5209 = vsel %vm651, %v5195, %v5202
  %v5210 = vsel %vm651, %v5196, %v5203
  %v5211 = vsel %vm651, %v5197, %v5204
  %v5212 = vsel %vm651, %v5198, %v5205
  %v5213 = vsel %vm651, %v5199, %v5192
  %v5214 = vsel %vm651, %v5200, %v5193
  %v5215 = vsel %vm651, %v5201, %v5194
  %v5216 = vsel %vm651, %v5202, %v5195
  %v5217 = vsel %vm651, %v5203, %v5196
  %v5218 = vsel %vm651, %v5204, %v5197
  %v5219 = vsel %vm651, %v5205, %v5198
  %v5220 = vmul.f32 %v5213, %v669
  %v5221 = vmul.f32 %v5214, %v673
  %v5222 = vmul.f32 %v5215, %v677
  %v5223 = vmul.f32 %v5216, %v681
  %v5224 = vmul.f32 %v5217, %v685
  %v5225 = vmul.f32 %v5218, %v689
  %v5226 = vmul.f32 %v5219, %v693
  %v5227 = vmul.f32 %v5206, %v669
  %v5228 = vmul.f32 %v5207, %v673
  %v5229 = vmul.f32 %v5208, %v677
  %v5230 = vmul.f32 %v5209, %v681
  %v5231 = vmul.f32 %v5210, %v685
  %v5232 = vmul.f32 %v5211, %v689
  %v5233 = vmul.f32 %v5212, %v693
  %v5234 = vadd.f32 %v5164, %v5220
  %v5235 = vadd.f32 %v5165, %v5221
  %v5236 = vadd.f32 %v5166, %v5222
  %v5237 = vadd.f32 %v5167, %v5223
  %v5238 = vadd.f32 %v5168, %v5224
  %v5239 = vadd.f32 %v5169, %v5225
  %v5240 = vadd.f32 %v5170, %v5226
  %v5241 = vadd.f32 %v5171, %v5227
  %v5242 = vadd.f32 %v5172, %v5228
  %v5243 = vadd.f32 %v5173, %v5229
  %v5244 = vadd.f32 %v5174, %v5230
  %v5245 = vadd.f32 %v5175, %v5231
  %v5246 = vadd.f32 %v5176, %v5232
  %v5247 = vadd.f32 %v5177, %v5233
  %v5248 = vmul.f32 %v5178, %v725
  %v5249 = vmul.f32 %v5179, %v729
  %v5250 = vmul.f32 %v5180, %v733
  %v5251 = vmul.f32 %v5181, %v737
  %v5252 = vmul.f32 %v5182, %v741
  %v5253 = vmul.f32 %v5183, %v745
  %v5254 = vmul.f32 %v5184, %v749
  %v5255 = vmul.f32 %v5185, %v725
  %v5256 = vmul.f32 %v5186, %v729
  %v5257 = vmul.f32 %v5187, %v733
  %v5258 = vmul.f32 %v5188, %v737
  %v5259 = vmul.f32 %v5189, %v741
  %v5260 = vmul.f32 %v5190, %v745
  %v5261 = vmul.f32 %v5191, %v749
  %v5262 = vadd.f32 %v5234, %v5248
  %v5263 = vadd.f32 %v5235, %v5249
  %v5264 = vadd.f32 %v5236, %v5250
  %v5265 = vadd.f32 %v5237, %v5251
  %v5266 = vadd.f32 %v5238, %v5252
  %v5267 = vadd.f32 %v5239, %v5253
  %v5268 = vadd.f32 %v5240, %v5254
  %v5269 = vadd.f32 %v5241, %v5255
  %v5270 = vadd.f32 %v5242, %v5256
  %v5271 = vadd.f32 %v5243, %v5257
  %v5272 = vadd.f32 %v5244, %v5258
  %v5273 = vadd.f32 %v5245, %v5259
  %v5274 = vadd.f32 %v5246, %v5260
  %v5275 = vadd.f32 %v5247, %v5261
  %v5276 = vrot.slane %v5178, 1
  %v5277 = vrot.slane %v5179, 1
  %v5278 = vrot.slane %v5180, 1
  %v5279 = vrot.slane %v5181, 1
  %v5280 = vrot.slane %v5182, 1
  %v5281 = vrot.slane %v5183, 1
  %v5282 = vrot.slane %v5184, 1
  %v5283 = vrot.slane %v5185, 1
  %v5284 = vrot.slane %v5186, 1
  %v5285 = vrot.slane %v5187, 1
  %v5286 = vrot.slane %v5188, 1
  %v5287 = vrot.slane %v5189, 1
  %v5288 = vrot.slane %v5190, 1
  %v5289 = vrot.slane %v5191, 1
  %v5290 = vsel %vm792, %v5276, %v5283
  %v5291 = vsel %vm792, %v5277, %v5284
  %v5292 = vsel %vm792, %v5278, %v5285
  %v5293 = vsel %vm792, %v5279, %v5286
  %v5294 = vsel %vm792, %v5280, %v5287
  %v5295 = vsel %vm792, %v5281, %v5288
  %v5296 = vsel %vm792, %v5282, %v5289
  %v5297 = vsel %vm792, %v5283, %v5276
  %v5298 = vsel %vm792, %v5284, %v5277
  %v5299 = vsel %vm792, %v5285, %v5278
  %v5300 = vsel %vm792, %v5286, %v5279
  %v5301 = vsel %vm792, %v5287, %v5280
  %v5302 = vsel %vm792, %v5288, %v5281
  %v5303 = vsel %vm792, %v5289, %v5282
  %v5304 = vmul.f32 %v5290, %v810
  %v5305 = vmul.f32 %v5291, %v814
  %v5306 = vmul.f32 %v5292, %v818
  %v5307 = vmul.f32 %v5293, %v822
  %v5308 = vmul.f32 %v5294, %v826
  %v5309 = vmul.f32 %v5295, %v830
  %v5310 = vmul.f32 %v5296, %v834
  %v5311 = vmul.f32 %v5297, %v810
  %v5312 = vmul.f32 %v5298, %v814
  %v5313 = vmul.f32 %v5299, %v818
  %v5314 = vmul.f32 %v5300, %v822
  %v5315 = vmul.f32 %v5301, %v826
  %v5316 = vmul.f32 %v5302, %v830
  %v5317 = vmul.f32 %v5303, %v834
  %v5318 = vadd.f32 %v5262, %v5304
  %v5319 = vadd.f32 %v5263, %v5305
  %v5320 = vadd.f32 %v5264, %v5306
  %v5321 = vadd.f32 %v5265, %v5307
  %v5322 = vadd.f32 %v5266, %v5308
  %v5323 = vadd.f32 %v5267, %v5309
  %v5324 = vadd.f32 %v5268, %v5310
  %v5325 = vadd.f32 %v5269, %v5311
  %v5326 = vadd.f32 %v5270, %v5312
  %v5327 = vadd.f32 %v5271, %v5313
  %v5328 = vadd.f32 %v5272, %v5314
  %v5329 = vadd.f32 %v5273, %v5315
  %v5330 = vadd.f32 %v5274, %v5316
  %v5331 = vadd.f32 %v5275, %v5317
  %s5332 = scalar_lea.vmem [#allocation2], 1120
  %v5333 = vld [vmem:[%s5332] sm:$0xff]
  %v5334 = vld [vmem:[%s5332 + $0x8] sm:$0xff]
  %v5335 = vld [vmem:[%s5332 + $0x10] sm:$0xff]
  %v5336 = vld [vmem:[%s5332 + $0x18] sm:$0xff]
  %v5337 = vld [vmem:[%s5332 + $0x20] sm:$0xff]
  %v5338 = vld [vmem:[%s5332 + $0x28] sm:$0xff]
  %v5339 = vld [vmem:[%s5332 + $0x30] sm:$0xff]
  %v5340 = vld [vmem:[%s5332 + $0x38] sm:$0xff]
  %v5341 = vld [vmem:[%s5332 + $0x40] sm:$0xff]
  %v5342 = vld [vmem:[%s5332 + $0x48] sm:$0xff]
  %v5343 = vld [vmem:[%s5332 + $0x50] sm:$0xff]
  %v5344 = vld [vmem:[%s5332 + $0x58] sm:$0xff]
  %v5345 = vld [vmem:[%s5332 + $0x60] sm:$0xff]
  %v5346 = vld [vmem:[%s5332 + $0x68] sm:$0xff]
  %v5347 = vrot.slane %v5333, 7
  %v5348 = vrot.slane %v5334, 7
  %v5349 = vrot.slane %v5335, 7
  %v5350 = vrot.slane %v5336, 7
  %v5351 = vrot.slane %v5337, 7
  %v5352 = vrot.slane %v5338, 7
  %v5353 = vrot.slane %v5339, 7
  %v5354 = vrot.slane %v5340, 7
  %v5355 = vrot.slane %v5341, 7
  %v5356 = vrot.slane %v5342, 7
  %v5357 = vrot.slane %v5343, 7
  %v5358 = vrot.slane %v5344, 7
  %v5359 = vrot.slane %v5345, 7
  %v5360 = vrot.slane %v5346, 7
  %v5361 = vsel %vm651, %v5347, %v5354
  %v5362 = vsel %vm651, %v5348, %v5355
  %v5363 = vsel %vm651, %v5349, %v5356
  %v5364 = vsel %vm651, %v5350, %v5357
  %v5365 = vsel %vm651, %v5351, %v5358
  %v5366 = vsel %vm651, %v5352, %v5359
  %v5367 = vsel %vm651, %v5353, %v5360
  %v5368 = vsel %vm651, %v5354, %v5347
  %v5369 = vsel %vm651, %v5355, %v5348
  %v5370 = vsel %vm651, %v5356, %v5349
  %v5371 = vsel %vm651, %v5357, %v5350
  %v5372 = vsel %vm651, %v5358, %v5351
  %v5373 = vsel %vm651, %v5359, %v5352
  %v5374 = vsel %vm651, %v5360, %v5353
  %v5375 = vmul.f32 %v5368, %v909
  %v5376 = vmul.f32 %v5369, %v913
  %v5377 = vmul.f32 %v5370, %v917
  %v5378 = vmul.f32 %v5371, %v921
  %v5379 = vmul.f32 %v5372, %v925
  %v5380 = vmul.f32 %v5373, %v929
  %v5381 = vmul.f32 %v5374, %v933
  %v5382 = vmul.f32 %v5361, %v909
  %v5383 = vmul.f32 %v5362, %v913
  %v5384 = vmul.f32 %v5363, %v917
  %v5385 = vmul.f32 %v5364, %v921
  %v5386 = vmul.f32 %v5365, %v925
  %v5387 = vmul.f32 %v5366, %v929
  %v5388 = vmul.f32 %v5367, %v933
  %v5389 = vadd.f32 %v5318, %v5375
  %v5390 = vadd.f32 %v5319, %v5376
  %v5391 = vadd.f32 %v5320, %v5377
  %v5392 = vadd.f32 %v5321, %v5378
  %v5393 = vadd.f32 %v5322, %v5379
  %v5394 = vadd.f32 %v5323, %v5380
  %v5395 = vadd.f32 %v5324, %v5381
  %v5396 = vadd.f32 %v5325, %v5382
  %v5397 = vadd.f32 %v5326, %v5383
  %v5398 = vadd.f32 %v5327, %v5384
  %v5399 = vadd.f32 %v5328, %v5385
  %v5400 = vadd.f32 %v5329, %v5386
  %v5401 = vadd.f32 %v5330, %v5387
  %v5402 = vadd.f32 %v5331, %v5388
  %v5403 = vmul.f32 %v5333, %v965
  %v5404 = vmul.f32 %v5334, %v969
  %v5405 = vmul.f32 %v5335, %v973
  %v5406 = vmul.f32 %v5336, %v977
  %v5407 = vmul.f32 %v5337, %v981
  %v5408 = vmul.f32 %v5338, %v985
  %v5409 = vmul.f32 %v5339, %v989
  %v5410 = vmul.f32 %v5340, %v965
  %v5411 = vmul.f32 %v5341, %v969
  %v5412 = vmul.f32 %v5342, %v973
  %v5413 = vmul.f32 %v5343, %v977
  %v5414 = vmul.f32 %v5344, %v981
  %v5415 = vmul.f32 %v5345, %v985
  %v5416 = vmul.f32 %v5346, %v989
  %v5417 = vadd.f32 %v5389, %v5403
  %v5418 = vadd.f32 %v5390, %v5404
  %v5419 = vadd.f32 %v5391, %v5405
  %v5420 = vadd.f32 %v5392, %v5406
  %v5421 = vadd.f32 %v5393, %v5407
  %v5422 = vadd.f32 %v5394, %v5408
  %v5423 = vadd.f32 %v5395, %v5409
  %v5424 = vadd.f32 %v5396, %v5410
  %v5425 = vadd.f32 %v5397, %v5411
  %v5426 = vadd.f32 %v5398, %v5412
  %v5427 = vadd.f32 %v5399, %v5413
  %v5428 = vadd.f32 %v5400, %v5414
  %v5429 = vadd.f32 %v5401, %v5415
  %v5430 = vadd.f32 %v5402, %v5416
  %v5431 = vrot.slane %v5333, 1
  %v5432 = vrot.slane %v5334, 1
  %v5433 = vrot.slane %v5335, 1
  %v5434 = vrot.slane %v5336, 1
  %v5435 = vrot.slane %v5337, 1
  %v5436 = vrot.slane %v5338, 1
  %v5437 = vrot.slane %v5339, 1
  %v5438 = vrot.slane %v5340, 1
  %v5439 = vrot.slane %v5341, 1
  %v5440 = vrot.slane %v5342, 1
  %v5441 = vrot.slane %v5343, 1
  %v5442 = vrot.slane %v5344, 1
  %v5443 = vrot.slane %v5345, 1
  %v5444 = vrot.slane %v5346, 1
  %v5445 = vsel %vm792, %v5431, %v5438
  %v5446 = vsel %vm792, %v5432, %v5439
  %v5447 = vsel %vm792, %v5433, %v5440
  %v5448 = vsel %vm792, %v5434, %v5441
  %v5449 = vsel %vm792, %v5435, %v5442
  %v5450 = vsel %vm792, %v5436, %v5443
  %v5451 = vsel %vm792, %v5437, %v5444
  %v5452 = vsel %vm792, %v5438, %v5431
  %v5453 = vsel %vm792, %v5439, %v5432
  %v5454 = vsel %vm792, %v5440, %v5433
  %v5455 = vsel %vm792, %v5441, %v5434
  %v5456 = vsel %vm792, %v5442, %v5435
  %v5457 = vsel %vm792, %v5443, %v5436
  %v5458 = vsel %vm792, %v5444, %v5437
  %v5459 = vmul.f32 %v5445, %v1049
  %v5460 = vmul.f32 %v5446, %v1053
  %v5461 = vmul.f32 %v5447, %v1057
  %v5462 = vmul.f32 %v5448, %v1061
  %v5463 = vmul.f32 %v5449, %v1065
  %v5464 = vmul.f32 %v5450, %v1069
  %v5465 = vmul.f32 %v5451, %v1073
  %v5466 = vmul.f32 %v5452, %v1049
  %v5467 = vmul.f32 %v5453, %v1053
  %v5468 = vmul.f32 %v5454, %v1057
  %v5469 = vmul.f32 %v5455, %v1061
  %v5470 = vmul.f32 %v5456, %v1065
  %v5471 = vmul.f32 %v5457, %v1069
  %v5472 = vmul.f32 %v5458, %v1073
  %v5473 = vadd.f32 %v5417, %v5459
  %v5474 = vadd.f32 %v5418, %v5460
  %v5475 = vadd.f32 %v5419, %v5461
  %v5476 = vadd.f32 %v5420, %v5462
  %v5477 = vadd.f32 %v5421, %v5463
  %v5478 = vadd.f32 %v5422, %v5464
  %v5479 = vadd.f32 %v5423, %v5465
  %v5480 = vadd.f32 %v5424, %v5466
  %v5481 = vadd.f32 %v5425, %v5467
  %v5482 = vadd.f32 %v5426, %v5468
  %v5483 = vadd.f32 %v5427, %v5469
  %v5484 = vadd.f32 %v5428, %v5470
  %v5485 = vadd.f32 %v5429, %v5471
  %v5486 = vadd.f32 %v5430, %v5472
  %s5487 = scalar_lea.vmem [#allocation3], 1008
  %5488 = vst [vmem:[%s5487] sm:$0xff] %v5473
  %5489 = vst [vmem:[%s5487 + $0x8] sm:$0xff] %v5474
  %5490 = vst [vmem:[%s5487 + $0x10] sm:$0xff] %v5475
  %5491 = vst [vmem:[%s5487 + $0x18] sm:$0xff] %v5476
  %5492 = vst [vmem:[%s5487 + $0x20] sm:$0xff] %v5477
  %5493 = vst [vmem:[%s5487 + $0x28] sm:$0xff] %v5478
  %5494 = vst.msk [vmem:[%s5487 + $0x30] sm:$0xff] %vm23, %v5479
  %5495 = vst [vmem:[%s5487 + $0x38] sm:$0xff] %v5480
  %5496 = vst [vmem:[%s5487 + $0x40] sm:$0xff] %v5481
  %5497 = vst [vmem:[%s5487 + $0x48] sm:$0xff] %v5482
  %5498 = vst [vmem:[%s5487 + $0x50] sm:$0xff] %v5483
  %5499 = vst [vmem:[%s5487 + $0x58] sm:$0xff] %v5484
  %5500 = vst [vmem:[%s5487 + $0x60] sm:$0xff] %v5485
  %5501 = vst.msk [vmem:[%s5487 + $0x68] sm:$0xff] %vm23, %v5486
  %v5502 = vld [vmem:[%s4854] sm:$0xff]
  %v5503 = vld [vmem:[%s4854 + $0x8] sm:$0xff]
  %v5504 = vld [vmem:[%s4854 + $0x10] sm:$0xff]
  %v5505 = vld [vmem:[%s4854 + $0x18] sm:$0xff]
  %v5506 = vld [vmem:[%s4854 + $0x20] sm:$0xff]
  %v5507 = vld [vmem:[%s4854 + $0x28] sm:$0xff]
  %v5508 = vld [vmem:[%s4854 + $0x30] sm:$0xff]
  %v5509 = vld [vmem:[%s4854 + $0x38] sm:$0xff]
  %v5510 = vld [vmem:[%s4854 + $0x40] sm:$0xff]
  %v5511 = vld [vmem:[%s4854 + $0x48] sm:$0xff]
  %v5512 = vld [vmem:[%s4854 + $0x50] sm:$0xff]
  %v5513 = vld [vmem:[%s4854 + $0x58] sm:$0xff]
  %v5514 = vld [vmem:[%s4854 + $0x60] sm:$0xff]
  %v5515 = vld [vmem:[%s4854 + $0x68] sm:$0xff]
  %v5516 = vrot.slane %v5502, 7
  %v5517 = vrot.slane %v5503, 7
  %v5518 = vrot.slane %v5504, 7
  %v5519 = vrot.slane %v5505, 7
  %v5520 = vrot.slane %v5506, 7
  %v5521 = vrot.slane %v5507, 7
  %v5522 = vrot.slane %v5508, 7
  %v5523 = vrot.slane %v5509, 7
  %v5524 = vrot.slane %v5510, 7
  %v5525 = vrot.slane %v5511, 7
  %v5526 = vrot.slane %v5512, 7
  %v5527 = vrot.slane %v5513, 7
  %v5528 = vrot.slane %v5514, 7
  %v5529 = vrot.slane %v5515, 7
  %v5530 = vsel %vm651, %v5516, %v5523
  %v5531 = vsel %vm651, %v5517, %v5524
  %v5532 = vsel %vm651, %v5518, %v5525
  %v5533 = vsel %vm651, %v5519, %v5526
  %v5534 = vsel %vm651, %v5520, %v5527
  %v5535 = vsel %vm651, %v5521, %v5528
  %v5536 = vsel %vm651, %v5522, %v5529
  %v5537 = vsel %vm651, %v5523, %v5516
  %v5538 = vsel %vm651, %v5524, %v5517
  %v5539 = vsel %vm651, %v5525, %v5518
  %v5540 = vsel %vm651, %v5526, %v5519
  %v5541 = vsel %vm651, %v5527, %v5520
  %v5542 = vsel %vm651, %v5528, %v5521
  %v5543 = vsel %vm651, %v5529, %v5522
  %v5544 = vmul.f32 %v5537, %v1161
  %v5545 = vmul.f32 %v5538, %v1165
  %v5546 = vmul.f32 %v5539, %v1169
  %v5547 = vmul.f32 %v5540, %v1173
  %v5548 = vmul.f32 %v5541, %v1177
  %v5549 = vmul.f32 %v5542, %v1181
  %v5550 = vmul.f32 %v5543, %v1185
  %v5551 = vmul.f32 %v5530, %v1161
  %v5552 = vmul.f32 %v5531, %v1165
  %v5553 = vmul.f32 %v5532, %v1169
  %v5554 = vmul.f32 %v5533, %v1173
  %v5555 = vmul.f32 %v5534, %v1177
  %v5556 = vmul.f32 %v5535, %v1181
  %v5557 = vmul.f32 %v5536, %v1185
  %v5558 = vadd.f32 %v5544, 0.0
  %v5559 = vadd.f32 %v5545, 0.0
  %v5560 = vadd.f32 %v5546, 0.0
  %v5561 = vadd.f32 %v5547, 0.0
  %v5562 = vadd.f32 %v5548, 0.0
  %v5563 = vadd.f32 %v5549, 0.0
  %v5564 = vadd.f32 %v5550, 0.0
  %v5565 = vadd.f32 %v5551, 0.0
  %v5566 = vadd.f32 %v5552, 0.0
  %v5567 = vadd.f32 %v5553, 0.0
  %v5568 = vadd.f32 %v5554, 0.0
  %v5569 = vadd.f32 %v5555, 0.0
  %v5570 = vadd.f32 %v5556, 0.0
  %v5571 = vadd.f32 %v5557, 0.0
  %v5572 = vmul.f32 %v5502, %v1217
  %v5573 = vmul.f32 %v5503, %v1221
  %v5574 = vmul.f32 %v5504, %v1225
  %v5575 = vmul.f32 %v5505, %v1229
  %v5576 = vmul.f32 %v5506, %v1233
  %v5577 = vmul.f32 %v5507, %v1237
  %v5578 = vmul.f32 %v5508, %v1241
  %v5579 = vmul.f32 %v5509, %v1217
  %v5580 = vmul.f32 %v5510, %v1221
  %v5581 = vmul.f32 %v5511, %v1225
  %v5582 = vmul.f32 %v5512, %v1229
  %v5583 = vmul.f32 %v5513, %v1233
  %v5584 = vmul.f32 %v5514, %v1237
  %v5585 = vmul.f32 %v5515, %v1241
  %v5586 = vadd.f32 %v5558, %v5572
  %v5587 = vadd.f32 %v5559, %v5573
  %v5588 = vadd.f32 %v5560, %v5574
  %v5589 = vadd.f32 %v5561, %v5575
  %v5590 = vadd.f32 %v5562, %v5576
  %v5591 = vadd.f32 %v5563, %v5577
  %v5592 = vadd.f32 %v5564, %v5578
  %v5593 = vadd.f32 %v5565, %v5579
  %v5594 = vadd.f32 %v5566, %v5580
  %v5595 = vadd.f32 %v5567, %v5581
  %v5596 = vadd.f32 %v5568, %v5582
  %v5597 = vadd.f32 %v5569, %v5583
  %v5598 = vadd.f32 %v5570, %v5584
  %v5599 = vadd.f32 %v5571, %v5585
  %v5600 = vrot.slane %v5502, 1
  %v5601 = vrot.slane %v5503, 1
  %v5602 = vrot.slane %v5504, 1
  %v5603 = vrot.slane %v5505, 1
  %v5604 = vrot.slane %v5506, 1
  %v5605 = vrot.slane %v5507, 1
  %v5606 = vrot.slane %v5508, 1
  %v5607 = vrot.slane %v5509, 1
  %v5608 = vrot.slane %v5510, 1
  %v5609 = vrot.slane %v5511, 1
  %v5610 = vrot.slane %v5512, 1
  %v5611 = vrot.slane %v5513, 1
  %v5612 = vrot.slane %v5514, 1
  %v5613 = vrot.slane %v5515, 1
  %v5614 = vsel %vm792, %v5600, %v5607
  %v5615 = vsel %vm792, %v5601, %v5608
  %v5616 = vsel %vm792, %v5602, %v5609
  %v5617 = vsel %vm792, %v5603, %v5610
  %v5618 = vsel %vm792, %v5604, %v5611
  %v5619 = vsel %vm792, %v5605, %v5612
  %v5620 = vsel %vm792, %v5606, %v5613
  %v5621 = vsel %vm792, %v5607, %v5600
  %v5622 = vsel %vm792, %v5608, %v5601
  %v5623 = vsel %vm792, %v5609, %v5602
  %v5624 = vsel %vm792, %v5610, %v5603
  %v5625 = vsel %vm792, %v5611, %v5604
  %v5626 = vsel %vm792, %v5612, %v5605
  %v5627 = vsel %vm792, %v5613, %v5606
  %v5628 = vmul.f32 %v5614, %v1301
  %v5629 = vmul.f32 %v5615, %v1305
  %v5630 = vmul.f32 %v5616, %v1309
  %v5631 = vmul.f32 %v5617, %v1313
  %v5632 = vmul.f32 %v5618, %v1317
  %v5633 = vmul.f32 %v5619, %v1321
  %v5634 = vmul.f32 %v5620, %v1325
  %v5635 = vmul.f32 %v5621, %v1301
  %v5636 = vmul.f32 %v5622, %v1305
  %v5637 = vmul.f32 %v5623, %v1309
  %v5638 = vmul.f32 %v5624, %v1313
  %v5639 = vmul.f32 %v5625, %v1317
  %v5640 = vmul.f32 %v5626, %v1321
  %v5641 = vmul.f32 %v5627, %v1325
  %v5642 = vadd.f32 %v5586, %v5628
  %v5643 = vadd.f32 %v5587, %v5629
  %v5644 = vadd.f32 %v5588, %v5630
  %v5645 = vadd.f32 %v5589, %v5631
  %v5646 = vadd.f32 %v5590, %v5632
  %v5647 = vadd.f32 %v5591, %v5633
  %v5648 = vadd.f32 %v5592, %v5634
  %v5649 = vadd.f32 %v5593, %v5635
  %v5650 = vadd.f32 %v5594, %v5636
  %v5651 = vadd.f32 %v5595, %v5637
  %v5652 = vadd.f32 %v5596, %v5638
  %v5653 = vadd.f32 %v5597, %v5639
  %v5654 = vadd.f32 %v5598, %v5640
  %v5655 = vadd.f32 %v5599, %v5641
  %v5656 = vld [vmem:[%s5332] sm:$0xff]
  %v5657 = vld [vmem:[%s5332 + $0x8] sm:$0xff]
  %v5658 = vld [vmem:[%s5332 + $0x10] sm:$0xff]
  %v5659 = vld [vmem:[%s5332 + $0x18] sm:$0xff]
  %v5660 = vld [vmem:[%s5332 + $0x20] sm:$0xff]
  %v5661 = vld [vmem:[%s5332 + $0x28] sm:$0xff]
  %v5662 = vld [vmem:[%s5332 + $0x30] sm:$0xff]
  %v5663 = vld [vmem:[%s5332 + $0x38] sm:$0xff]
  %v5664 = vld [vmem:[%s5332 + $0x40] sm:$0xff]
  %v5665 = vld [vmem:[%s5332 + $0x48] sm:$0xff]
  %v5666 = vld [vmem:[%s5332 + $0x50] sm:$0xff]
  %v5667 = vld [vmem:[%s5332 + $0x58] sm:$0xff]
  %v5668 = vld [vmem:[%s5332 + $0x60] sm:$0xff]
  %v5669 = vld [vmem:[%s5332 + $0x68] sm:$0xff]
  %v5670 = vrot.slane %v5656, 7
  %v5671 = vrot.slane %v5657, 7
  %v5672 = vrot.slane %v5658, 7
  %v5673 = vrot.slane %v5659, 7
  %v5674 = vrot.slane %v5660, 7
  %v5675 = vrot.slane %v5661, 7
  %v5676 = vrot.slane %v5662, 7
  %v5677 = vrot.slane %v5663, 7
  %v5678 = vrot.slane %v5664, 7
  %v5679 = vrot.slane %v5665, 7
  %v5680 = vrot.slane %v5666, 7
  %v5681 = vrot.slane %v5667, 7
  %v5682 = vrot.slane %v5668, 7
  %v5683 = vrot.slane %v5669, 7
  %v5684 = vsel %vm651, %v5670, %v5677
  %v5685 = vsel %vm651, %v5671, %v5678
  %v5686 = vsel %vm651, %v5672, %v5679
  %v5687 = vsel %vm651, %v5673, %v5680
  %v5688 = vsel %vm651, %v5674, %v5681
  %v5689 = vsel %vm651, %v5675, %v5682
  %v5690 = vsel %vm651, %v5676, %v5683
  %v5691 = vsel %vm651, %v5677, %v5670
  %v5692 = vsel %vm651, %v5678, %v5671
  %v5693 = vsel %vm651, %v5679, %v5672
  %v5694 = vsel %vm651, %v5680, %v5673
  %v5695 = vsel %vm651, %v5681, %v5674
  %v5696 = vsel %vm651, %v5682, %v5675
  %v5697 = vsel %vm651, %v5683, %v5676
  %v5698 = vmul.f32 %v5691, %v669
  %v5699 = vmul.f32 %v5692, %v673
  %v5700 = vmul.f32 %v5693, %v677
  %v5701 = vmul.f32 %v5694, %v681
  %v5702 = vmul.f32 %v5695, %v685
  %v5703 = vmul.f32 %v5696, %v689
  %v5704 = vmul.f32 %v5697, %v693
  %v5705 = vmul.f32 %v5684, %v669
  %v5706 = vmul.f32 %v5685, %v673
  %v5707 = vmul.f32 %v5686, %v677
  %v5708 = vmul.f32 %v5687, %v681
  %v5709 = vmul.f32 %v5688, %v685
  %v5710 = vmul.f32 %v5689, %v689
  %v5711 = vmul.f32 %v5690, %v693
  %v5712 = vadd.f32 %v5642, %v5698
  %v5713 = vadd.f32 %v5643, %v5699
  %v5714 = vadd.f32 %v5644, %v5700
  %v5715 = vadd.f32 %v5645, %v5701
  %v5716 = vadd.f32 %v5646, %v5702
  %v5717 = vadd.f32 %v5647, %v5703
  %v5718 = vadd.f32 %v5648, %v5704
  %v5719 = vadd.f32 %v5649, %v5705
  %v5720 = vadd.f32 %v5650, %v5706
  %v5721 = vadd.f32 %v5651, %v5707
  %v5722 = vadd.f32 %v5652, %v5708
  %v5723 = vadd.f32 %v5653, %v5709
  %v5724 = vadd.f32 %v5654, %v5710
  %v5725 = vadd.f32 %v5655, %v5711
  %v5726 = vmul.f32 %v5656, %v725
  %v5727 = vmul.f32 %v5657, %v729
  %v5728 = vmul.f32 %v5658, %v733
  %v5729 = vmul.f32 %v5659, %v737
  %v5730 = vmul.f32 %v5660, %v741
  %v5731 = vmul.f32 %v5661, %v745
  %v5732 = vmul.f32 %v5662, %v749
  %v5733 = vmul.f32 %v5663, %v725
  %v5734 = vmul.f32 %v5664, %v729
  %v5735 = vmul.f32 %v5665, %v733
  %v5736 = vmul.f32 %v5666, %v737
  %v5737 = vmul.f32 %v5667, %v741
  %v5738 = vmul.f32 %v5668, %v745
  %v5739 = vmul.f32 %v5669, %v749
  %v5740 = vadd.f32 %v5712, %v5726
  %v5741 = vadd.f32 %v5713, %v5727
  %v5742 = vadd.f32 %v5714, %v5728
  %v5743 = vadd.f32 %v5715, %v5729
  %v5744 = vadd.f32 %v5716, %v5730
  %v5745 = vadd.f32 %v5717, %v5731
  %v5746 = vadd.f32 %v5718, %v5732
  %v5747 = vadd.f32 %v5719, %v5733
  %v5748 = vadd.f32 %v5720, %v5734
  %v5749 = vadd.f32 %v5721, %v5735
  %v5750 = vadd.f32 %v5722, %v5736
  %v5751 = vadd.f32 %v5723, %v5737
  %v5752 = vadd.f32 %v5724, %v5738
  %v5753 = vadd.f32 %v5725, %v5739
  %v5754 = vrot.slane %v5656, 1
  %v5755 = vrot.slane %v5657, 1
  %v5756 = vrot.slane %v5658, 1
  %v5757 = vrot.slane %v5659, 1
  %v5758 = vrot.slane %v5660, 1
  %v5759 = vrot.slane %v5661, 1
  %v5760 = vrot.slane %v5662, 1
  %v5761 = vrot.slane %v5663, 1
  %v5762 = vrot.slane %v5664, 1
  %v5763 = vrot.slane %v5665, 1
  %v5764 = vrot.slane %v5666, 1
  %v5765 = vrot.slane %v5667, 1
  %v5766 = vrot.slane %v5668, 1
  %v5767 = vrot.slane %v5669, 1
  %v5768 = vsel %vm792, %v5754, %v5761
  %v5769 = vsel %vm792, %v5755, %v5762
  %v5770 = vsel %vm792, %v5756, %v5763
  %v5771 = vsel %vm792, %v5757, %v5764
  %v5772 = vsel %vm792, %v5758, %v5765
  %v5773 = vsel %vm792, %v5759, %v5766
  %v5774 = vsel %vm792, %v5760, %v5767
  %v5775 = vsel %vm792, %v5761, %v5754
  %v5776 = vsel %vm792, %v5762, %v5755
  %v5777 = vsel %vm792, %v5763, %v5756
  %v5778 = vsel %vm792, %v5764, %v5757
  %v5779 = vsel %vm792, %v5765, %v5758
  %v5780 = vsel %vm792, %v5766, %v5759
  %v5781 = vsel %vm792, %v5767, %v5760
  %v5782 = vmul.f32 %v5768, %v810
  %v5783 = vmul.f32 %v5769, %v814
  %v5784 = vmul.f32 %v5770, %v818
  %v5785 = vmul.f32 %v5771, %v822
  %v5786 = vmul.f32 %v5772, %v826
  %v5787 = vmul.f32 %v5773, %v830
  %v5788 = vmul.f32 %v5774, %v834
  %v5789 = vmul.f32 %v5775, %v810
  %v5790 = vmul.f32 %v5776, %v814
  %v5791 = vmul.f32 %v5777, %v818
  %v5792 = vmul.f32 %v5778, %v822
  %v5793 = vmul.f32 %v5779, %v826
  %v5794 = vmul.f32 %v5780, %v830
  %v5795 = vmul.f32 %v5781, %v834
  %v5796 = vadd.f32 %v5740, %v5782
  %v5797 = vadd.f32 %v5741, %v5783
  %v5798 = vadd.f32 %v5742, %v5784
  %v5799 = vadd.f32 %v5743, %v5785
  %v5800 = vadd.f32 %v5744, %v5786
  %v5801 = vadd.f32 %v5745, %v5787
  %v5802 = vadd.f32 %v5746, %v5788
  %v5803 = vadd.f32 %v5747, %v5789
  %v5804 = vadd.f32 %v5748, %v5790
  %v5805 = vadd.f32 %v5749, %v5791
  %v5806 = vadd.f32 %v5750, %v5792
  %v5807 = vadd.f32 %v5751, %v5793
  %v5808 = vadd.f32 %v5752, %v5794
  %v5809 = vadd.f32 %v5753, %v5795
  %s5810 = scalar_lea.vmem [#allocation2], 1232
  %v5811 = vld [vmem:[%s5810] sm:$0xff]
  %v5812 = vld [vmem:[%s5810 + $0x8] sm:$0xff]
  %v5813 = vld [vmem:[%s5810 + $0x10] sm:$0xff]
  %v5814 = vld [vmem:[%s5810 + $0x18] sm:$0xff]
  %v5815 = vld [vmem:[%s5810 + $0x20] sm:$0xff]
  %v5816 = vld [vmem:[%s5810 + $0x28] sm:$0xff]
  %v5817 = vld [vmem:[%s5810 + $0x30] sm:$0xff]
  %v5818 = vld [vmem:[%s5810 + $0x38] sm:$0xff]
  %v5819 = vld [vmem:[%s5810 + $0x40] sm:$0xff]
  %v5820 = vld [vmem:[%s5810 + $0x48] sm:$0xff]
  %v5821 = vld [vmem:[%s5810 + $0x50] sm:$0xff]
  %v5822 = vld [vmem:[%s5810 + $0x58] sm:$0xff]
  %v5823 = vld [vmem:[%s5810 + $0x60] sm:$0xff]
  %v5824 = vld [vmem:[%s5810 + $0x68] sm:$0xff]
  %v5825 = vrot.slane %v5811, 7
  %v5826 = vrot.slane %v5812, 7
  %v5827 = vrot.slane %v5813, 7
  %v5828 = vrot.slane %v5814, 7
  %v5829 = vrot.slane %v5815, 7
  %v5830 = vrot.slane %v5816, 7
  %v5831 = vrot.slane %v5817, 7
  %v5832 = vrot.slane %v5818, 7
  %v5833 = vrot.slane %v5819, 7
  %v5834 = vrot.slane %v5820, 7
  %v5835 = vrot.slane %v5821, 7
  %v5836 = vrot.slane %v5822, 7
  %v5837 = vrot.slane %v5823, 7
  %v5838 = vrot.slane %v5824, 7
  %v5839 = vsel %vm651, %v5825, %v5832
  %v5840 = vsel %vm651, %v5826, %v5833
  %v5841 = vsel %vm651, %v5827, %v5834
  %v5842 = vsel %vm651, %v5828, %v5835
  %v5843 = vsel %vm651, %v5829, %v5836
  %v5844 = vsel %vm651, %v5830, %v5837
  %v5845 = vsel %vm651, %v5831, %v5838
  %v5846 = vsel %vm651, %v5832, %v5825
  %v5847 = vsel %vm651, %v5833, %v5826
  %v5848 = vsel %vm651, %v5834, %v5827
  %v5849 = vsel %vm651, %v5835, %v5828
  %v5850 = vsel %vm651, %v5836, %v5829
  %v5851 = vsel %vm651, %v5837, %v5830
  %v5852 = vsel %vm651, %v5838, %v5831
  %v5853 = vmul.f32 %v5846, %v909
  %v5854 = vmul.f32 %v5847, %v913
  %v5855 = vmul.f32 %v5848, %v917
  %v5856 = vmul.f32 %v5849, %v921
  %v5857 = vmul.f32 %v5850, %v925
  %v5858 = vmul.f32 %v5851, %v929
  %v5859 = vmul.f32 %v5852, %v933
  %v5860 = vmul.f32 %v5839, %v909
  %v5861 = vmul.f32 %v5840, %v913
  %v5862 = vmul.f32 %v5841, %v917
  %v5863 = vmul.f32 %v5842, %v921
  %v5864 = vmul.f32 %v5843, %v925
  %v5865 = vmul.f32 %v5844, %v929
  %v5866 = vmul.f32 %v5845, %v933
  %v5867 = vadd.f32 %v5796, %v5853
  %v5868 = vadd.f32 %v5797, %v5854
  %v5869 = vadd.f32 %v5798, %v5855
  %v5870 = vadd.f32 %v5799, %v5856
  %v5871 = vadd.f32 %v5800, %v5857
  %v5872 = vadd.f32 %v5801, %v5858
  %v5873 = vadd.f32 %v5802, %v5859
  %v5874 = vadd.f32 %v5803, %v5860
  %v5875 = vadd.f32 %v5804, %v5861
  %v5876 = vadd.f32 %v5805, %v5862
  %v5877 = vadd.f32 %v5806, %v5863
  %v5878 = vadd.f32 %v5807, %v5864
  %v5879 = vadd.f32 %v5808, %v5865
  %v5880 = vadd.f32 %v5809, %v5866
  %v5881 = vmul.f32 %v5811, %v965
  %v5882 = vmul.f32 %v5812, %v969
  %v5883 = vmul.f32 %v5813, %v973
  %v5884 = vmul.f32 %v5814, %v977
  %v5885 = vmul.f32 %v5815, %v981
  %v5886 = vmul.f32 %v5816, %v985
  %v5887 = vmul.f32 %v5817, %v989
  %v5888 = vmul.f32 %v5818, %v965
  %v5889 = vmul.f32 %v5819, %v969
  %v5890 = vmul.f32 %v5820, %v973
  %v5891 = vmul.f32 %v5821, %v977
  %v5892 = vmul.f32 %v5822, %v981
  %v5893 = vmul.f32 %v5823, %v985
  %v5894 = vmul.f32 %v5824, %v989
  %v5895 = vadd.f32 %v5867, %v5881
  %v5896 = vadd.f32 %v5868, %v5882
  %v5897 = vadd.f32 %v5869, %v5883
  %v5898 = vadd.f32 %v5870, %v5884
  %v5899 = vadd.f32 %v5871, %v5885
  %v5900 = vadd.f32 %v5872, %v5886
  %v5901 = vadd.f32 %v5873, %v5887
  %v5902 = vadd.f32 %v5874, %v5888
  %v5903 = vadd.f32 %v5875, %v5889
  %v5904 = vadd.f32 %v5876, %v5890
  %v5905 = vadd.f32 %v5877, %v5891
  %v5906 = vadd.f32 %v5878, %v5892
  %v5907 = vadd.f32 %v5879, %v5893
  %v5908 = vadd.f32 %v5880, %v5894
  %v5909 = vrot.slane %v5811, 1
  %v5910 = vrot.slane %v5812, 1
  %v5911 = vrot.slane %v5813, 1
  %v5912 = vrot.slane %v5814, 1
  %v5913 = vrot.slane %v5815, 1
  %v5914 = vrot.slane %v5816, 1
  %v5915 = vrot.slane %v5817, 1
  %v5916 = vrot.slane %v5818, 1
  %v5917 = vrot.slane %v5819, 1
  %v5918 = vrot.slane %v5820, 1
  %v5919 = vrot.slane %v5821, 1
  %v5920 = vrot.slane %v5822, 1
  %v5921 = vrot.slane %v5823, 1
  %v5922 = vrot.slane %v5824, 1
  %v5923 = vsel %vm792, %v5909, %v5916
  %v5924 = vsel %vm792, %v5910, %v5917
  %v5925 = vsel %vm792, %v5911, %v5918
  %v5926 = vsel %vm792, %v5912, %v5919
  %v5927 = vsel %vm792, %v5913, %v5920
  %v5928 = vsel %vm792, %v5914, %v5921
  %v5929 = vsel %vm792, %v5915, %v5922
  %v5930 = vsel %vm792, %v5916, %v5909
  %v5931 = vsel %vm792, %v5917, %v5910
  %v5932 = vsel %vm792, %v5918, %v5911
  %v5933 = vsel %vm792, %v5919, %v5912
  %v5934 = vsel %vm792, %v5920, %v5913
  %v5935 = vsel %vm792, %v5921, %v5914
  %v5936 = vsel %vm792, %v5922, %v5915
  %v5937 = vmul.f32 %v5923, %v1049
  %v5938 = vmul.f32 %v5924, %v1053
  %v5939 = vmul.f32 %v5925, %v1057
  %v5940 = vmul.f32 %v5926, %v1061
  %v5941 = vmul.f32 %v5927, %v1065
  %v5942 = vmul.f32 %v5928, %v1069
  %v5943 = vmul.f32 %v5929, %v1073
  %v5944 = vmul.f32 %v5930, %v1049
  %v5945 = vmul.f32 %v5931, %v1053
  %v5946 = vmul.f32 %v5932, %v1057
  %v5947 = vmul.f32 %v5933, %v1061
  %v5948 = vmul.f32 %v5934, %v1065
  %v5949 = vmul.f32 %v5935, %v1069
  %v5950 = vmul.f32 %v5936, %v1073
  %v5951 = vadd.f32 %v5895, %v5937
  %v5952 = vadd.f32 %v5896, %v5938
  %v5953 = vadd.f32 %v5897, %v5939
  %v5954 = vadd.f32 %v5898, %v5940
  %v5955 = vadd.f32 %v5899, %v5941
  %v5956 = vadd.f32 %v5900, %v5942
  %v5957 = vadd.f32 %v5901, %v5943
  %v5958 = vadd.f32 %v5902, %v5944
  %v5959 = vadd.f32 %v5903, %v5945
  %v5960 = vadd.f32 %v5904, %v5946
  %v5961 = vadd.f32 %v5905, %v5947
  %v5962 = vadd.f32 %v5906, %v5948
  %v5963 = vadd.f32 %v5907, %v5949
  %v5964 = vadd.f32 %v5908, %v5950
  %s5965 = scalar_lea.vmem [#allocation3], 1120
  %5966 = vst [vmem:[%s5965] sm:$0xff] %v5951
  %5967 = vst [vmem:[%s5965 + $0x8] sm:$0xff] %v5952
  %5968 = vst [vmem:[%s5965 + $0x10] sm:$0xff] %v5953
  %5969 = vst [vmem:[%s5965 + $0x18] sm:$0xff] %v5954
  %5970 = vst [vmem:[%s5965 + $0x20] sm:$0xff] %v5955
  %5971 = vst [vmem:[%s5965 + $0x28] sm:$0xff] %v5956
  %5972 = vst.msk [vmem:[%s5965 + $0x30] sm:$0xff] %vm23, %v5957
  %5973 = vst [vmem:[%s5965 + $0x38] sm:$0xff] %v5958
  %5974 = vst [vmem:[%s5965 + $0x40] sm:$0xff] %v5959
  %5975 = vst [vmem:[%s5965 + $0x48] sm:$0xff] %v5960
  %5976 = vst [vmem:[%s5965 + $0x50] sm:$0xff] %v5961
  %5977 = vst [vmem:[%s5965 + $0x58] sm:$0xff] %v5962
  %5978 = vst [vmem:[%s5965 + $0x60] sm:$0xff] %v5963
  %5979 = vst.msk [vmem:[%s5965 + $0x68] sm:$0xff] %vm23, %v5964
  %v5980 = vld [vmem:[%s5332] sm:$0xff]
  %v5981 = vld [vmem:[%s5332 + $0x8] sm:$0xff]
  %v5982 = vld [vmem:[%s5332 + $0x10] sm:$0xff]
  %v5983 = vld [vmem:[%s5332 + $0x18] sm:$0xff]
  %v5984 = vld [vmem:[%s5332 + $0x20] sm:$0xff]
  %v5985 = vld [vmem:[%s5332 + $0x28] sm:$0xff]
  %v5986 = vld [vmem:[%s5332 + $0x30] sm:$0xff]
  %v5987 = vld [vmem:[%s5332 + $0x38] sm:$0xff]
  %v5988 = vld [vmem:[%s5332 + $0x40] sm:$0xff]
  %v5989 = vld [vmem:[%s5332 + $0x48] sm:$0xff]
  %v5990 = vld [vmem:[%s5332 + $0x50] sm:$0xff]
  %v5991 = vld [vmem:[%s5332 + $0x58] sm:$0xff]
  %v5992 = vld [vmem:[%s5332 + $0x60] sm:$0xff]
  %v5993 = vld [vmem:[%s5332 + $0x68] sm:$0xff]
  %v5994 = vrot.slane %v5980, 7
  %v5995 = vrot.slane %v5981, 7
  %v5996 = vrot.slane %v5982, 7
  %v5997 = vrot.slane %v5983, 7
  %v5998 = vrot.slane %v5984, 7
  %v5999 = vrot.slane %v5985, 7
  %v6000 = vrot.slane %v5986, 7
  %v6001 = vrot.slane %v5987, 7
  %v6002 = vrot.slane %v5988, 7
  %v6003 = vrot.slane %v5989, 7
  %v6004 = vrot.slane %v5990, 7
  %v6005 = vrot.slane %v5991, 7
  %v6006 = vrot.slane %v5992, 7
  %v6007 = vrot.slane %v5993, 7
  %v6008 = vsel %vm651, %v5994, %v6001
  %v6009 = vsel %vm651, %v5995, %v6002
  %v6010 = vsel %vm651, %v5996, %v6003
  %v6011 = vsel %vm651, %v5997, %v6004
  %v6012 = vsel %vm651, %v5998, %v6005
  %v6013 = vsel %vm651, %v5999, %v6006
  %v6014 = vsel %vm651, %v6000, %v6007
  %v6015 = vsel %vm651, %v6001, %v5994
  %v6016 = vsel %vm651, %v6002, %v5995
  %v6017 = vsel %vm651, %v6003, %v5996
  %v6018 = vsel %vm651, %v6004, %v5997
  %v6019 = vsel %vm651, %v6005, %v5998
  %v6020 = vsel %vm651, %v6006, %v5999
  %v6021 = vsel %vm651, %v6007, %v6000
  %v6022 = vmul.f32 %v6015, %v1161
  %v6023 = vmul.f32 %v6016, %v1165
  %v6024 = vmul.f32 %v6017, %v1169
  %v6025 = vmul.f32 %v6018, %v1173
  %v6026 = vmul.f32 %v6019, %v1177
  %v6027 = vmul.f32 %v6020, %v1181
  %v6028 = vmul.f32 %v6021, %v1185
  %v6029 = vmul.f32 %v6008, %v1161
  %v6030 = vmul.f32 %v6009, %v1165
  %v6031 = vmul.f32 %v6010, %v1169
  %v6032 = vmul.f32 %v6011, %v1173
  %v6033 = vmul.f32 %v6012, %v1177
  %v6034 = vmul.f32 %v6013, %v1181
  %v6035 = vmul.f32 %v6014, %v1185
  %v6036 = vadd.f32 %v6022, 0.0
  %v6037 = vadd.f32 %v6023, 0.0
  %v6038 = vadd.f32 %v6024, 0.0
  %v6039 = vadd.f32 %v6025, 0.0
  %v6040 = vadd.f32 %v6026, 0.0
  %v6041 = vadd.f32 %v6027, 0.0
  %v6042 = vadd.f32 %v6028, 0.0
  %v6043 = vadd.f32 %v6029, 0.0
  %v6044 = vadd.f32 %v6030, 0.0
  %v6045 = vadd.f32 %v6031, 0.0
  %v6046 = vadd.f32 %v6032, 0.0
  %v6047 = vadd.f32 %v6033, 0.0
  %v6048 = vadd.f32 %v6034, 0.0
  %v6049 = vadd.f32 %v6035, 0.0
  %v6050 = vmul.f32 %v5980, %v1217
  %v6051 = vmul.f32 %v5981, %v1221
  %v6052 = vmul.f32 %v5982, %v1225
  %v6053 = vmul.f32 %v5983, %v1229
  %v6054 = vmul.f32 %v5984, %v1233
  %v6055 = vmul.f32 %v5985, %v1237
  %v6056 = vmul.f32 %v5986, %v1241
  %v6057 = vmul.f32 %v5987, %v1217
  %v6058 = vmul.f32 %v5988, %v1221
  %v6059 = vmul.f32 %v5989, %v1225
  %v6060 = vmul.f32 %v5990, %v1229
  %v6061 = vmul.f32 %v5991, %v1233
  %v6062 = vmul.f32 %v5992, %v1237
  %v6063 = vmul.f32 %v5993, %v1241
  %v6064 = vadd.f32 %v6036, %v6050
  %v6065 = vadd.f32 %v6037, %v6051
  %v6066 = vadd.f32 %v6038, %v6052
  %v6067 = vadd.f32 %v6039, %v6053
  %v6068 = vadd.f32 %v6040, %v6054
  %v6069 = vadd.f32 %v6041, %v6055
  %v6070 = vadd.f32 %v6042, %v6056
  %v6071 = vadd.f32 %v6043, %v6057
  %v6072 = vadd.f32 %v6044, %v6058
  %v6073 = vadd.f32 %v6045, %v6059
  %v6074 = vadd.f32 %v6046, %v6060
  %v6075 = vadd.f32 %v6047, %v6061
  %v6076 = vadd.f32 %v6048, %v6062
  %v6077 = vadd.f32 %v6049, %v6063
  %v6078 = vrot.slane %v5980, 1
  %v6079 = vrot.slane %v5981, 1
  %v6080 = vrot.slane %v5982, 1
  %v6081 = vrot.slane %v5983, 1
  %v6082 = vrot.slane %v5984, 1
  %v6083 = vrot.slane %v5985, 1
  %v6084 = vrot.slane %v5986, 1
  %v6085 = vrot.slane %v5987, 1
  %v6086 = vrot.slane %v5988, 1
  %v6087 = vrot.slane %v5989, 1
  %v6088 = vrot.slane %v5990, 1
  %v6089 = vrot.slane %v5991, 1
  %v6090 = vrot.slane %v5992, 1
  %v6091 = vrot.slane %v5993, 1
  %v6092 = vsel %vm792, %v6078, %v6085
  %v6093 = vsel %vm792, %v6079, %v6086
  %v6094 = vsel %vm792, %v6080, %v6087
  %v6095 = vsel %vm792, %v6081, %v6088
  %v6096 = vsel %vm792, %v6082, %v6089
  %v6097 = vsel %vm792, %v6083, %v6090
  %v6098 = vsel %vm792, %v6084, %v6091
  %v6099 = vsel %vm792, %v6085, %v6078
  %v6100 = vsel %vm792, %v6086, %v6079
  %v6101 = vsel %vm792, %v6087, %v6080
  %v6102 = vsel %vm792, %v6088, %v6081
  %v6103 = vsel %vm792, %v6089, %v6082
  %v6104 = vsel %vm792, %v6090, %v6083
  %v6105 = vsel %vm792, %v6091, %v6084
  %v6106 = vmul.f32 %v6092, %v1301
  %v6107 = vmul.f32 %v6093, %v1305
  %v6108 = vmul.f32 %v6094, %v1309
  %v6109 = vmul.f32 %v6095, %v1313
  %v6110 = vmul.f32 %v6096, %v1317
  %v6111 = vmul.f32 %v6097, %v1321
  %v6112 = vmul.f32 %v6098, %v1325
  %v6113 = vmul.f32 %v6099, %v1301
  %v6114 = vmul.f32 %v6100, %v1305
  %v6115 = vmul.f32 %v6101, %v1309
  %v6116 = vmul.f32 %v6102, %v1313
  %v6117 = vmul.f32 %v6103, %v1317
  %v6118 = vmul.f32 %v6104, %v1321
  %v6119 = vmul.f32 %v6105, %v1325
  %v6120 = vadd.f32 %v6064, %v6106
  %v6121 = vadd.f32 %v6065, %v6107
  %v6122 = vadd.f32 %v6066, %v6108
  %v6123 = vadd.f32 %v6067, %v6109
  %v6124 = vadd.f32 %v6068, %v6110
  %v6125 = vadd.f32 %v6069, %v6111
  %v6126 = vadd.f32 %v6070, %v6112
  %v6127 = vadd.f32 %v6071, %v6113
  %v6128 = vadd.f32 %v6072, %v6114
  %v6129 = vadd.f32 %v6073, %v6115
  %v6130 = vadd.f32 %v6074, %v6116
  %v6131 = vadd.f32 %v6075, %v6117
  %v6132 = vadd.f32 %v6076, %v6118
  %v6133 = vadd.f32 %v6077, %v6119
  %v6134 = vld [vmem:[%s5810] sm:$0xff]
  %v6135 = vld [vmem:[%s5810 + $0x8] sm:$0xff]
  %v6136 = vld [vmem:[%s5810 + $0x10] sm:$0xff]
  %v6137 = vld [vmem:[%s5810 + $0x18] sm:$0xff]
  %v6138 = vld [vmem:[%s5810 + $0x20] sm:$0xff]
  %v6139 = vld [vmem:[%s5810 + $0x28] sm:$0xff]
  %v6140 = vld [vmem:[%s5810 + $0x30] sm:$0xff]
  %v6141 = vld [vmem:[%s5810 + $0x38] sm:$0xff]
  %v6142 = vld [vmem:[%s5810 + $0x40] sm:$0xff]
  %v6143 = vld [vmem:[%s5810 + $0x48] sm:$0xff]
  %v6144 = vld [vmem:[%s5810 + $0x50] sm:$0xff]
  %v6145 = vld [vmem:[%s5810 + $0x58] sm:$0xff]
  %v6146 = vld [vmem:[%s5810 + $0x60] sm:$0xff]
  %v6147 = vld [vmem:[%s5810 + $0x68] sm:$0xff]
  %v6148 = vrot.slane %v6134, 7
  %v6149 = vrot.slane %v6135, 7
  %v6150 = vrot.slane %v6136, 7
  %v6151 = vrot.slane %v6137, 7
  %v6152 = vrot.slane %v6138, 7
  %v6153 = vrot.slane %v6139, 7
  %v6154 = vrot.slane %v6140, 7
  %v6155 = vrot.slane %v6141, 7
  %v6156 = vrot.slane %v6142, 7
  %v6157 = vrot.slane %v6143, 7
  %v6158 = vrot.slane %v6144, 7
  %v6159 = vrot.slane %v6145, 7
  %v6160 = vrot.slane %v6146, 7
  %v6161 = vrot.slane %v6147, 7
  %v6162 = vsel %vm651, %v6148, %v6155
  %v6163 = vsel %vm651, %v6149, %v6156
  %v6164 = vsel %vm651, %v6150, %v6157
  %v6165 = vsel %vm651, %v6151, %v6158
  %v6166 = vsel %vm651, %v6152, %v6159
  %v6167 = vsel %vm651, %v6153, %v6160
  %v6168 = vsel %vm651, %v6154, %v6161
  %v6169 = vsel %vm651, %v6155, %v6148
  %v6170 = vsel %vm651, %v6156, %v6149
  %v6171 = vsel %vm651, %v6157, %v6150
  %v6172 = vsel %vm651, %v6158, %v6151
  %v6173 = vsel %vm651, %v6159, %v6152
  %v6174 = vsel %vm651, %v6160, %v6153
  %v6175 = vsel %vm651, %v6161, %v6154
  %v6176 = vmul.f32 %v6169, %v669
  %v6177 = vmul.f32 %v6170, %v673
  %v6178 = vmul.f32 %v6171, %v677
  %v6179 = vmul.f32 %v6172, %v681
  %v6180 = vmul.f32 %v6173, %v685
  %v6181 = vmul.f32 %v6174, %v689
  %v6182 = vmul.f32 %v6175, %v693
  %v6183 = vmul.f32 %v6162, %v669
  %v6184 = vmul.f32 %v6163, %v673
  %v6185 = vmul.f32 %v6164, %v677
  %v6186 = vmul.f32 %v6165, %v681
  %v6187 = vmul.f32 %v6166, %v685
  %v6188 = vmul.f32 %v6167, %v689
  %v6189 = vmul.f32 %v6168, %v693
  %v6190 = vadd.f32 %v6120, %v6176
  %v6191 = vadd.f32 %v6121, %v6177
  %v6192 = vadd.f32 %v6122, %v6178
  %v6193 = vadd.f32 %v6123, %v6179
  %v6194 = vadd.f32 %v6124, %v6180
  %v6195 = vadd.f32 %v6125, %v6181
  %v6196 = vadd.f32 %v6126, %v6182
  %v6197 = vadd.f32 %v6127, %v6183
  %v6198 = vadd.f32 %v6128, %v6184
  %v6199 = vadd.f32 %v6129, %v6185
  %v6200 = vadd.f32 %v6130, %v6186
  %v6201 = vadd.f32 %v6131, %v6187
  %v6202 = vadd.f32 %v6132, %v6188
  %v6203 = vadd.f32 %v6133, %v6189
  %v6204 = vmul.f32 %v6134, %v725
  %v6205 = vmul.f32 %v6135, %v729
  %v6206 = vmul.f32 %v6136, %v733
  %v6207 = vmul.f32 %v6137, %v737
  %v6208 = vmul.f32 %v6138, %v741
  %v6209 = vmul.f32 %v6139, %v745
  %v6210 = vmul.f32 %v6140, %v749
  %v6211 = vmul.f32 %v6141, %v725
  %v6212 = vmul.f32 %v6142, %v729
  %v6213 = vmul.f32 %v6143, %v733
  %v6214 = vmul.f32 %v6144, %v737
  %v6215 = vmul.f32 %v6145, %v741
  %v6216 = vmul.f32 %v6146, %v745
  %v6217 = vmul.f32 %v6147, %v749
  %v6218 = vadd.f32 %v6190, %v6204
  %v6219 = vadd.f32 %v6191, %v6205
  %v6220 = vadd.f32 %v6192, %v6206
  %v6221 = vadd.f32 %v6193, %v6207
  %v6222 = vadd.f32 %v6194, %v6208
  %v6223 = vadd.f32 %v6195, %v6209
  %v6224 = vadd.f32 %v6196, %v6210
  %v6225 = vadd.f32 %v6197, %v6211
  %v6226 = vadd.f32 %v6198, %v6212
  %v6227 = vadd.f32 %v6199, %v6213
  %v6228 = vadd.f32 %v6200, %v6214
  %v6229 = vadd.f32 %v6201, %v6215
  %v6230 = vadd.f32 %v6202, %v6216
  %v6231 = vadd.f32 %v6203, %v6217
  %v6232 = vrot.slane %v6134, 1
  %v6233 = vrot.slane %v6135, 1
  %v6234 = vrot.slane %v6136, 1
  %v6235 = vrot.slane %v6137, 1
  %v6236 = vrot.slane %v6138, 1
  %v6237 = vrot.slane %v6139, 1
  %v6238 = vrot.slane %v6140, 1
  %v6239 = vrot.slane %v6141, 1
  %v6240 = vrot.slane %v6142, 1
  %v6241 = vrot.slane %v6143, 1
  %v6242 = vrot.slane %v6144, 1
  %v6243 = vrot.slane %v6145, 1
  %v6244 = vrot.slane %v6146, 1
  %v6245 = vrot.slane %v6147, 1
  %v6246 = vsel %vm792, %v6232, %v6239
  %v6247 = vsel %vm792, %v6233, %v6240
  %v6248 = vsel %vm792, %v6234, %v6241
  %v6249 = vsel %vm792, %v6235, %v6242
  %v6250 = vsel %vm792, %v6236, %v6243
  %v6251 = vsel %vm792, %v6237, %v6244
  %v6252 = vsel %vm792, %v6238, %v6245
  %v6253 = vsel %vm792, %v6239, %v6232
  %v6254 = vsel %vm792, %v6240, %v6233
  %v6255 = vsel %vm792, %v6241, %v6234
  %v6256 = vsel %vm792, %v6242, %v6235
  %v6257 = vsel %vm792, %v6243, %v6236
  %v6258 = vsel %vm792, %v6244, %v6237
  %v6259 = vsel %vm792, %v6245, %v6238
  %v6260 = vmul.f32 %v6246, %v810
  %v6261 = vmul.f32 %v6247, %v814
  %v6262 = vmul.f32 %v6248, %v818
  %v6263 = vmul.f32 %v6249, %v822
  %v6264 = vmul.f32 %v6250, %v826
  %v6265 = vmul.f32 %v6251, %v830
  %v6266 = vmul.f32 %v6252, %v834
  %v6267 = vmul.f32 %v6253, %v810
  %v6268 = vmul.f32 %v6254, %v814
  %v6269 = vmul.f32 %v6255, %v818
  %v6270 = vmul.f32 %v6256, %v822
  %v6271 = vmul.f32 %v6257, %v826
  %v6272 = vmul.f32 %v6258, %v830
  %v6273 = vmul.f32 %v6259, %v834
  %v6274 = vadd.f32 %v6218, %v6260
  %v6275 = vadd.f32 %v6219, %v6261
  %v6276 = vadd.f32 %v6220, %v6262
  %v6277 = vadd.f32 %v6221, %v6263
  %v6278 = vadd.f32 %v6222, %v6264
  %v6279 = vadd.f32 %v6223, %v6265
  %v6280 = vadd.f32 %v6224, %v6266
  %v6281 = vadd.f32 %v6225, %v6267
  %v6282 = vadd.f32 %v6226, %v6268
  %v6283 = vadd.f32 %v6227, %v6269
  %v6284 = vadd.f32 %v6228, %v6270
  %v6285 = vadd.f32 %v6229, %v6271
  %v6286 = vadd.f32 %v6230, %v6272
  %v6287 = vadd.f32 %v6231, %v6273
  %s6288 = scalar_lea.vmem [#allocation2], 1344
  %v6289 = vld [vmem:[%s6288] sm:$0xff]
  %v6290 = vld [vmem:[%s6288 + $0x8] sm:$0xff]
  %v6291 = vld [vmem:[%s6288 + $0x10] sm:$0xff]
  %v6292 = vld [vmem:[%s6288 + $0x18] sm:$0xff]
  %v6293 = vld [vmem:[%s6288 + $0x20] sm:$0xff]
  %v6294 = vld [vmem:[%s6288 + $0x28] sm:$0xff]
  %v6295 = vld [vmem:[%s6288 + $0x30] sm:$0xff]
  %v6296 = vld [vmem:[%s6288 + $0x38] sm:$0xff]
  %v6297 = vld [vmem:[%s6288 + $0x40] sm:$0xff]
  %v6298 = vld [vmem:[%s6288 + $0x48] sm:$0xff]
  %v6299 = vld [vmem:[%s6288 + $0x50] sm:$0xff]
  %v6300 = vld [vmem:[%s6288 + $0x58] sm:$0xff]
  %v6301 = vld [vmem:[%s6288 + $0x60] sm:$0xff]
  %v6302 = vld [vmem:[%s6288 + $0x68] sm:$0xff]
  %v6303 = vrot.slane %v6289, 7
  %v6304 = vrot.slane %v6290, 7
  %v6305 = vrot.slane %v6291, 7
  %v6306 = vrot.slane %v6292, 7
  %v6307 = vrot.slane %v6293, 7
  %v6308 = vrot.slane %v6294, 7
  %v6309 = vrot.slane %v6295, 7
  %v6310 = vrot.slane %v6296, 7
  %v6311 = vrot.slane %v6297, 7
  %v6312 = vrot.slane %v6298, 7
  %v6313 = vrot.slane %v6299, 7
  %v6314 = vrot.slane %v6300, 7
  %v6315 = vrot.slane %v6301, 7
  %v6316 = vrot.slane %v6302, 7
  %v6317 = vsel %vm651, %v6303, %v6310
  %v6318 = vsel %vm651, %v6304, %v6311
  %v6319 = vsel %vm651, %v6305, %v6312
  %v6320 = vsel %vm651, %v6306, %v6313
  %v6321 = vsel %vm651, %v6307, %v6314
  %v6322 = vsel %vm651, %v6308, %v6315
  %v6323 = vsel %vm651, %v6309, %v6316
  %v6324 = vsel %vm651, %v6310, %v6303
  %v6325 = vsel %vm651, %v6311, %v6304
  %v6326 = vsel %vm651, %v6312, %v6305
  %v6327 = vsel %vm651, %v6313, %v6306
  %v6328 = vsel %vm651, %v6314, %v6307
  %v6329 = vsel %vm651, %v6315, %v6308
  %v6330 = vsel %vm651, %v6316, %v6309
  %v6331 = vmul.f32 %v6324, %v909
  %v6332 = vmul.f32 %v6325, %v913
  %v6333 = vmul.f32 %v6326, %v917
  %v6334 = vmul.f32 %v6327, %v921
  %v6335 = vmul.f32 %v6328, %v925
  %v6336 = vmul.f32 %v6329, %v929
  %v6337 = vmul.f32 %v6330, %v933
  %v6338 = vmul.f32 %v6317, %v909
  %v6339 = vmul.f32 %v6318, %v913
  %v6340 = vmul.f32 %v6319, %v917
  %v6341 = vmul.f32 %v6320, %v921
  %v6342 = vmul.f32 %v6321, %v925
  %v6343 = vmul.f32 %v6322, %v929
  %v6344 = vmul.f32 %v6323, %v933
  %v6345 = vadd.f32 %v6274, %v6331
  %v6346 = vadd.f32 %v6275, %v6332
  %v6347 = vadd.f32 %v6276, %v6333
  %v6348 = vadd.f32 %v6277, %v6334
  %v6349 = vadd.f32 %v6278, %v6335
  %v6350 = vadd.f32 %v6279, %v6336
  %v6351 = vadd.f32 %v6280, %v6337
  %v6352 = vadd.f32 %v6281, %v6338
  %v6353 = vadd.f32 %v6282, %v6339
  %v6354 = vadd.f32 %v6283, %v6340
  %v6355 = vadd.f32 %v6284, %v6341
  %v6356 = vadd.f32 %v6285, %v6342
  %v6357 = vadd.f32 %v6286, %v6343
  %v6358 = vadd.f32 %v6287, %v6344
  %v6359 = vmul.f32 %v6289, %v965
  %v6360 = vmul.f32 %v6290, %v969
  %v6361 = vmul.f32 %v6291, %v973
  %v6362 = vmul.f32 %v6292, %v977
  %v6363 = vmul.f32 %v6293, %v981
  %v6364 = vmul.f32 %v6294, %v985
  %v6365 = vmul.f32 %v6295, %v989
  %v6366 = vmul.f32 %v6296, %v965
  %v6367 = vmul.f32 %v6297, %v969
  %v6368 = vmul.f32 %v6298, %v973
  %v6369 = vmul.f32 %v6299, %v977
  %v6370 = vmul.f32 %v6300, %v981
  %v6371 = vmul.f32 %v6301, %v985
  %v6372 = vmul.f32 %v6302, %v989
  %v6373 = vadd.f32 %v6345, %v6359
  %v6374 = vadd.f32 %v6346, %v6360
  %v6375 = vadd.f32 %v6347, %v6361
  %v6376 = vadd.f32 %v6348, %v6362
  %v6377 = vadd.f32 %v6349, %v6363
  %v6378 = vadd.f32 %v6350, %v6364
  %v6379 = vadd.f32 %v6351, %v6365
  %v6380 = vadd.f32 %v6352, %v6366
  %v6381 = vadd.f32 %v6353, %v6367
  %v6382 = vadd.f32 %v6354, %v6368
  %v6383 = vadd.f32 %v6355, %v6369
  %v6384 = vadd.f32 %v6356, %v6370
  %v6385 = vadd.f32 %v6357, %v6371
  %v6386 = vadd.f32 %v6358, %v6372
  %v6387 = vrot.slane %v6289, 1
  %v6388 = vrot.slane %v6290, 1
  %v6389 = vrot.slane %v6291, 1
  %v6390 = vrot.slane %v6292, 1
  %v6391 = vrot.slane %v6293, 1
  %v6392 = vrot.slane %v6294, 1
  %v6393 = vrot.slane %v6295, 1
  %v6394 = vrot.slane %v6296, 1
  %v6395 = vrot.slane %v6297, 1
  %v6396 = vrot.slane %v6298, 1
  %v6397 = vrot.slane %v6299, 1
  %v6398 = vrot.slane %v6300, 1
  %v6399 = vrot.slane %v6301, 1
  %v6400 = vrot.slane %v6302, 1
  %v6401 = vsel %vm792, %v6387, %v6394
  %v6402 = vsel %vm792, %v6388, %v6395
  %v6403 = vsel %vm792, %v6389, %v6396
  %v6404 = vsel %vm792, %v6390, %v6397
  %v6405 = vsel %vm792, %v6391, %v6398
  %v6406 = vsel %vm792, %v6392, %v6399
  %v6407 = vsel %vm792, %v6393, %v6400
  %v6408 = vsel %vm792, %v6394, %v6387
  %v6409 = vsel %vm792, %v6395, %v6388
  %v6410 = vsel %vm792, %v6396, %v6389
  %v6411 = vsel %vm792, %v6397, %v6390
  %v6412 = vsel %vm792, %v6398, %v6391
  %v6413 = vsel %vm792, %v6399, %v6392
  %v6414 = vsel %vm792, %v6400, %v6393
  %v6415 = vmul.f32 %v6401, %v1049
  %v6416 = vmul.f32 %v6402, %v1053
  %v6417 = vmul.f32 %v6403, %v1057
  %v6418 = vmul.f32 %v6404, %v1061
  %v6419 = vmul.f32 %v6405, %v1065
  %v6420 = vmul.f32 %v6406, %v1069
  %v6421 = vmul.f32 %v6407, %v1073
  %v6422 = vmul.f32 %v6408, %v1049
  %v6423 = vmul.f32 %v6409, %v1053
  %v6424 = vmul.f32 %v6410, %v1057
  %v6425 = vmul.f32 %v6411, %v1061
  %v6426 = vmul.f32 %v6412, %v1065
  %v6427 = vmul.f32 %v6413, %v1069
  %v6428 = vmul.f32 %v6414, %v1073
  %v6429 = vadd.f32 %v6373, %v6415
  %v6430 = vadd.f32 %v6374, %v6416
  %v6431 = vadd.f32 %v6375, %v6417
  %v6432 = vadd.f32 %v6376, %v6418
  %v6433 = vadd.f32 %v6377, %v6419
  %v6434 = vadd.f32 %v6378, %v6420
  %v6435 = vadd.f32 %v6379, %v6421
  %v6436 = vadd.f32 %v6380, %v6422
  %v6437 = vadd.f32 %v6381, %v6423
  %v6438 = vadd.f32 %v6382, %v6424
  %v6439 = vadd.f32 %v6383, %v6425
  %v6440 = vadd.f32 %v6384, %v6426
  %v6441 = vadd.f32 %v6385, %v6427
  %v6442 = vadd.f32 %v6386, %v6428
  %s6443 = scalar_lea.vmem [#allocation3], 1232
  %6444 = vst [vmem:[%s6443] sm:$0xff] %v6429
  %6445 = vst [vmem:[%s6443 + $0x8] sm:$0xff] %v6430
  %6446 = vst [vmem:[%s6443 + $0x10] sm:$0xff] %v6431
  %6447 = vst [vmem:[%s6443 + $0x18] sm:$0xff] %v6432
  %6448 = vst [vmem:[%s6443 + $0x20] sm:$0xff] %v6433
  %6449 = vst [vmem:[%s6443 + $0x28] sm:$0xff] %v6434
  %6450 = vst.msk [vmem:[%s6443 + $0x30] sm:$0xff] %vm23, %v6435
  %6451 = vst [vmem:[%s6443 + $0x38] sm:$0xff] %v6436
  %6452 = vst [vmem:[%s6443 + $0x40] sm:$0xff] %v6437
  %6453 = vst [vmem:[%s6443 + $0x48] sm:$0xff] %v6438
  %6454 = vst [vmem:[%s6443 + $0x50] sm:$0xff] %v6439
  %6455 = vst [vmem:[%s6443 + $0x58] sm:$0xff] %v6440
  %6456 = vst [vmem:[%s6443 + $0x60] sm:$0xff] %v6441
  %6457 = vst.msk [vmem:[%s6443 + $0x68] sm:$0xff] %vm23, %v6442
  %v6458 = vld [vmem:[%s5810] sm:$0xff]
  %v6459 = vld [vmem:[%s5810 + $0x8] sm:$0xff]
  %v6460 = vld [vmem:[%s5810 + $0x10] sm:$0xff]
  %v6461 = vld [vmem:[%s5810 + $0x18] sm:$0xff]
  %v6462 = vld [vmem:[%s5810 + $0x20] sm:$0xff]
  %v6463 = vld [vmem:[%s5810 + $0x28] sm:$0xff]
  %v6464 = vld [vmem:[%s5810 + $0x30] sm:$0xff]
  %v6465 = vld [vmem:[%s5810 + $0x38] sm:$0xff]
  %v6466 = vld [vmem:[%s5810 + $0x40] sm:$0xff]
  %v6467 = vld [vmem:[%s5810 + $0x48] sm:$0xff]
  %v6468 = vld [vmem:[%s5810 + $0x50] sm:$0xff]
  %v6469 = vld [vmem:[%s5810 + $0x58] sm:$0xff]
  %v6470 = vld [vmem:[%s5810 + $0x60] sm:$0xff]
  %v6471 = vld [vmem:[%s5810 + $0x68] sm:$0xff]
  %v6472 = vrot.slane %v6458, 7
  %v6473 = vrot.slane %v6459, 7
  %v6474 = vrot.slane %v6460, 7
  %v6475 = vrot.slane %v6461, 7
  %v6476 = vrot.slane %v6462, 7
  %v6477 = vrot.slane %v6463, 7
  %v6478 = vrot.slane %v6464, 7
  %v6479 = vrot.slane %v6465, 7
  %v6480 = vrot.slane %v6466, 7
  %v6481 = vrot.slane %v6467, 7
  %v6482 = vrot.slane %v6468, 7
  %v6483 = vrot.slane %v6469, 7
  %v6484 = vrot.slane %v6470, 7
  %v6485 = vrot.slane %v6471, 7
  %v6486 = vsel %vm651, %v6472, %v6479
  %v6487 = vsel %vm651, %v6473, %v6480
  %v6488 = vsel %vm651, %v6474, %v6481
  %v6489 = vsel %vm651, %v6475, %v6482
  %v6490 = vsel %vm651, %v6476, %v6483
  %v6491 = vsel %vm651, %v6477, %v6484
  %v6492 = vsel %vm651, %v6478, %v6485
  %v6493 = vsel %vm651, %v6479, %v6472
  %v6494 = vsel %vm651, %v6480, %v6473
  %v6495 = vsel %vm651, %v6481, %v6474
  %v6496 = vsel %vm651, %v6482, %v6475
  %v6497 = vsel %vm651, %v6483, %v6476
  %v6498 = vsel %vm651, %v6484, %v6477
  %v6499 = vsel %vm651, %v6485, %v6478
  %v6500 = vmul.f32 %v6493, %v1161
  %v6501 = vmul.f32 %v6494, %v1165
  %v6502 = vmul.f32 %v6495, %v1169
  %v6503 = vmul.f32 %v6496, %v1173
  %v6504 = vmul.f32 %v6497, %v1177
  %v6505 = vmul.f32 %v6498, %v1181
  %v6506 = vmul.f32 %v6499, %v1185
  %v6507 = vmul.f32 %v6486, %v1161
  %v6508 = vmul.f32 %v6487, %v1165
  %v6509 = vmul.f32 %v6488, %v1169
  %v6510 = vmul.f32 %v6489, %v1173
  %v6511 = vmul.f32 %v6490, %v1177
  %v6512 = vmul.f32 %v6491, %v1181
  %v6513 = vmul.f32 %v6492, %v1185
  %v6514 = vadd.f32 %v6500, 0.0
  %v6515 = vadd.f32 %v6501, 0.0
  %v6516 = vadd.f32 %v6502, 0.0
  %v6517 = vadd.f32 %v6503, 0.0
  %v6518 = vadd.f32 %v6504, 0.0
  %v6519 = vadd.f32 %v6505, 0.0
  %v6520 = vadd.f32 %v6506, 0.0
  %v6521 = vadd.f32 %v6507, 0.0
  %v6522 = vadd.f32 %v6508, 0.0
  %v6523 = vadd.f32 %v6509, 0.0
  %v6524 = vadd.f32 %v6510, 0.0
  %v6525 = vadd.f32 %v6511, 0.0
  %v6526 = vadd.f32 %v6512, 0.0
  %v6527 = vadd.f32 %v6513, 0.0
  %v6528 = vmul.f32 %v6458, %v1217
  %v6529 = vmul.f32 %v6459, %v1221
  %v6530 = vmul.f32 %v6460, %v1225
  %v6531 = vmul.f32 %v6461, %v1229
  %v6532 = vmul.f32 %v6462, %v1233
  %v6533 = vmul.f32 %v6463, %v1237
  %v6534 = vmul.f32 %v6464, %v1241
  %v6535 = vmul.f32 %v6465, %v1217
  %v6536 = vmul.f32 %v6466, %v1221
  %v6537 = vmul.f32 %v6467, %v1225
  %v6538 = vmul.f32 %v6468, %v1229
  %v6539 = vmul.f32 %v6469, %v1233
  %v6540 = vmul.f32 %v6470, %v1237
  %v6541 = vmul.f32 %v6471, %v1241
  %v6542 = vadd.f32 %v6514, %v6528
  %v6543 = vadd.f32 %v6515, %v6529
  %v6544 = vadd.f32 %v6516, %v6530
  %v6545 = vadd.f32 %v6517, %v6531
  %v6546 = vadd.f32 %v6518, %v6532
  %v6547 = vadd.f32 %v6519, %v6533
  %v6548 = vadd.f32 %v6520, %v6534
  %v6549 = vadd.f32 %v6521, %v6535
  %v6550 = vadd.f32 %v6522, %v6536
  %v6551 = vadd.f32 %v6523, %v6537
  %v6552 = vadd.f32 %v6524, %v6538
  %v6553 = vadd.f32 %v6525, %v6539
  %v6554 = vadd.f32 %v6526, %v6540
  %v6555 = vadd.f32 %v6527, %v6541
  %v6556 = vrot.slane %v6458, 1
  %v6557 = vrot.slane %v6459, 1
  %v6558 = vrot.slane %v6460, 1
  %v6559 = vrot.slane %v6461, 1
  %v6560 = vrot.slane %v6462, 1
  %v6561 = vrot.slane %v6463, 1
  %v6562 = vrot.slane %v6464, 1
  %v6563 = vrot.slane %v6465, 1
  %v6564 = vrot.slane %v6466, 1
  %v6565 = vrot.slane %v6467, 1
  %v6566 = vrot.slane %v6468, 1
  %v6567 = vrot.slane %v6469, 1
  %v6568 = vrot.slane %v6470, 1
  %v6569 = vrot.slane %v6471, 1
  %v6570 = vsel %vm792, %v6556, %v6563
  %v6571 = vsel %vm792, %v6557, %v6564
  %v6572 = vsel %vm792, %v6558, %v6565
  %v6573 = vsel %vm792, %v6559, %v6566
  %v6574 = vsel %vm792, %v6560, %v6567
  %v6575 = vsel %vm792, %v6561, %v6568
  %v6576 = vsel %vm792, %v6562, %v6569
  %v6577 = vsel %vm792, %v6563, %v6556
  %v6578 = vsel %vm792, %v6564, %v6557
  %v6579 = vsel %vm792, %v6565, %v6558
  %v6580 = vsel %vm792, %v6566, %v6559
  %v6581 = vsel %vm792, %v6567, %v6560
  %v6582 = vsel %vm792, %v6568, %v6561
  %v6583 = vsel %vm792, %v6569, %v6562
  %v6584 = vmul.f32 %v6570, %v1301
  %v6585 = vmul.f32 %v6571, %v1305
  %v6586 = vmul.f32 %v6572, %v1309
  %v6587 = vmul.f32 %v6573, %v1313
  %v6588 = vmul.f32 %v6574, %v1317
  %v6589 = vmul.f32 %v6575, %v1321
  %v6590 = vmul.f32 %v6576, %v1325
  %v6591 = vmul.f32 %v6577, %v1301
  %v6592 = vmul.f32 %v6578, %v1305
  %v6593 = vmul.f32 %v6579, %v1309
  %v6594 = vmul.f32 %v6580, %v1313
  %v6595 = vmul.f32 %v6581, %v1317
  %v6596 = vmul.f32 %v6582, %v1321
  %v6597 = vmul.f32 %v6583, %v1325
  %v6598 = vadd.f32 %v6542, %v6584
  %v6599 = vadd.f32 %v6543, %v6585
  %v6600 = vadd.f32 %v6544, %v6586
  %v6601 = vadd.f32 %v6545, %v6587
  %v6602 = vadd.f32 %v6546, %v6588
  %v6603 = vadd.f32 %v6547, %v6589
  %v6604 = vadd.f32 %v6548, %v6590
  %v6605 = vadd.f32 %v6549, %v6591
  %v6606 = vadd.f32 %v6550, %v6592
  %v6607 = vadd.f32 %v6551, %v6593
  %v6608 = vadd.f32 %v6552, %v6594
  %v6609 = vadd.f32 %v6553, %v6595
  %v6610 = vadd.f32 %v6554, %v6596
  %v6611 = vadd.f32 %v6555, %v6597
  %v6612 = vld [vmem:[%s6288] sm:$0xff]
  %v6613 = vld [vmem:[%s6288 + $0x8] sm:$0xff]
  %v6614 = vld [vmem:[%s6288 + $0x10] sm:$0xff]
  %v6615 = vld [vmem:[%s6288 + $0x18] sm:$0xff]
  %v6616 = vld [vmem:[%s6288 + $0x20] sm:$0xff]
  %v6617 = vld [vmem:[%s6288 + $0x28] sm:$0xff]
  %v6618 = vld [vmem:[%s6288 + $0x30] sm:$0xff]
  %v6619 = vld [vmem:[%s6288 + $0x38] sm:$0xff]
  %v6620 = vld [vmem:[%s6288 + $0x40] sm:$0xff]
  %v6621 = vld [vmem:[%s6288 + $0x48] sm:$0xff]
  %v6622 = vld [vmem:[%s6288 + $0x50] sm:$0xff]
  %v6623 = vld [vmem:[%s6288 + $0x58] sm:$0xff]
  %v6624 = vld [vmem:[%s6288 + $0x60] sm:$0xff]
  %v6625 = vld [vmem:[%s6288 + $0x68] sm:$0xff]
  %v6626 = vrot.slane %v6612, 7
  %v6627 = vrot.slane %v6613, 7
  %v6628 = vrot.slane %v6614, 7
  %v6629 = vrot.slane %v6615, 7
  %v6630 = vrot.slane %v6616, 7
  %v6631 = vrot.slane %v6617, 7
  %v6632 = vrot.slane %v6618, 7
  %v6633 = vrot.slane %v6619, 7
  %v6634 = vrot.slane %v6620, 7
  %v6635 = vrot.slane %v6621, 7
  %v6636 = vrot.slane %v6622, 7
  %v6637 = vrot.slane %v6623, 7
  %v6638 = vrot.slane %v6624, 7
  %v6639 = vrot.slane %v6625, 7
  %v6640 = vsel %vm651, %v6626, %v6633
  %v6641 = vsel %vm651, %v6627, %v6634
  %v6642 = vsel %vm651, %v6628, %v6635
  %v6643 = vsel %vm651, %v6629, %v6636
  %v6644 = vsel %vm651, %v6630, %v6637
  %v6645 = vsel %vm651, %v6631, %v6638
  %v6646 = vsel %vm651, %v6632, %v6639
  %v6647 = vsel %vm651, %v6633, %v6626
  %v6648 = vsel %vm651, %v6634, %v6627
  %v6649 = vsel %vm651, %v6635, %v6628
  %v6650 = vsel %vm651, %v6636, %v6629
  %v6651 = vsel %vm651, %v6637, %v6630
  %v6652 = vsel %vm651, %v6638, %v6631
  %v6653 = vsel %vm651, %v6639, %v6632
  %v6654 = vmul.f32 %v6647, %v669
  %v6655 = vmul.f32 %v6648, %v673
  %v6656 = vmul.f32 %v6649, %v677
  %v6657 = vmul.f32 %v6650, %v681
  %v6658 = vmul.f32 %v6651, %v685
  %v6659 = vmul.f32 %v6652, %v689
  %v6660 = vmul.f32 %v6653, %v693
  %v6661 = vmul.f32 %v6640, %v669
  %v6662 = vmul.f32 %v6641, %v673
  %v6663 = vmul.f32 %v6642, %v677
  %v6664 = vmul.f32 %v6643, %v681
  %v6665 = vmul.f32 %v6644, %v685
  %v6666 = vmul.f32 %v6645, %v689
  %v6667 = vmul.f32 %v6646, %v693
  %v6668 = vadd.f32 %v6598, %v6654
  %v6669 = vadd.f32 %v6599, %v6655
  %v6670 = vadd.f32 %v6600, %v6656
  %v6671 = vadd.f32 %v6601, %v6657
  %v6672 = vadd.f32 %v6602, %v6658
  %v6673 = vadd.f32 %v6603, %v6659
  %v6674 = vadd.f32 %v6604, %v6660
  %v6675 = vadd.f32 %v6605, %v6661
  %v6676 = vadd.f32 %v6606, %v6662
  %v6677 = vadd.f32 %v6607, %v6663
  %v6678 = vadd.f32 %v6608, %v6664
  %v6679 = vadd.f32 %v6609, %v6665
  %v6680 = vadd.f32 %v6610, %v6666
  %v6681 = vadd.f32 %v6611, %v6667
  %v6682 = vmul.f32 %v6612, %v725
  %v6683 = vmul.f32 %v6613, %v729
  %v6684 = vmul.f32 %v6614, %v733
  %v6685 = vmul.f32 %v6615, %v737
  %v6686 = vmul.f32 %v6616, %v741
  %v6687 = vmul.f32 %v6617, %v745
  %v6688 = vmul.f32 %v6618, %v749
  %v6689 = vmul.f32 %v6619, %v725
  %v6690 = vmul.f32 %v6620, %v729
  %v6691 = vmul.f32 %v6621, %v733
  %v6692 = vmul.f32 %v6622, %v737
  %v6693 = vmul.f32 %v6623, %v741
  %v6694 = vmul.f32 %v6624, %v745
  %v6695 = vmul.f32 %v6625, %v749
  %v6696 = vadd.f32 %v6668, %v6682
  %v6697 = vadd.f32 %v6669, %v6683
  %v6698 = vadd.f32 %v6670, %v6684
  %v6699 = vadd.f32 %v6671, %v6685
  %v6700 = vadd.f32 %v6672, %v6686
  %v6701 = vadd.f32 %v6673, %v6687
  %v6702 = vadd.f32 %v6674, %v6688
  %v6703 = vadd.f32 %v6675, %v6689
  %v6704 = vadd.f32 %v6676, %v6690
  %v6705 = vadd.f32 %v6677, %v6691
  %v6706 = vadd.f32 %v6678, %v6692
  %v6707 = vadd.f32 %v6679, %v6693
  %v6708 = vadd.f32 %v6680, %v6694
  %v6709 = vadd.f32 %v6681, %v6695
  %v6710 = vrot.slane %v6612, 1
  %v6711 = vrot.slane %v6613, 1
  %v6712 = vrot.slane %v6614, 1
  %v6713 = vrot.slane %v6615, 1
  %v6714 = vrot.slane %v6616, 1
  %v6715 = vrot.slane %v6617, 1
  %v6716 = vrot.slane %v6618, 1
  %v6717 = vrot.slane %v6619, 1
  %v6718 = vrot.slane %v6620, 1
  %v6719 = vrot.slane %v6621, 1
  %v6720 = vrot.slane %v6622, 1
  %v6721 = vrot.slane %v6623, 1
  %v6722 = vrot.slane %v6624, 1
  %v6723 = vrot.slane %v6625, 1
  %v6724 = vsel %vm792, %v6710, %v6717
  %v6725 = vsel %vm792, %v6711, %v6718
  %v6726 = vsel %vm792, %v6712, %v6719
  %v6727 = vsel %vm792, %v6713, %v6720
  %v6728 = vsel %vm792, %v6714, %v6721
  %v6729 = vsel %vm792, %v6715, %v6722
  %v6730 = vsel %vm792, %v6716, %v6723
  %v6731 = vsel %vm792, %v6717, %v6710
  %v6732 = vsel %vm792, %v6718, %v6711
  %v6733 = vsel %vm792, %v6719, %v6712
  %v6734 = vsel %vm792, %v6720, %v6713
  %v6735 = vsel %vm792, %v6721, %v6714
  %v6736 = vsel %vm792, %v6722, %v6715
  %v6737 = vsel %vm792, %v6723, %v6716
  %v6738 = vmul.f32 %v6724, %v810
  %v6739 = vmul.f32 %v6725, %v814
  %v6740 = vmul.f32 %v6726, %v818
  %v6741 = vmul.f32 %v6727, %v822
  %v6742 = vmul.f32 %v6728, %v826
  %v6743 = vmul.f32 %v6729, %v830
  %v6744 = vmul.f32 %v6730, %v834
  %v6745 = vmul.f32 %v6731, %v810
  %v6746 = vmul.f32 %v6732, %v814
  %v6747 = vmul.f32 %v6733, %v818
  %v6748 = vmul.f32 %v6734, %v822
  %v6749 = vmul.f32 %v6735, %v826
  %v6750 = vmul.f32 %v6736, %v830
  %v6751 = vmul.f32 %v6737, %v834
  %v6752 = vadd.f32 %v6696, %v6738
  %v6753 = vadd.f32 %v6697, %v6739
  %v6754 = vadd.f32 %v6698, %v6740
  %v6755 = vadd.f32 %v6699, %v6741
  %v6756 = vadd.f32 %v6700, %v6742
  %v6757 = vadd.f32 %v6701, %v6743
  %v6758 = vadd.f32 %v6702, %v6744
  %v6759 = vadd.f32 %v6703, %v6745
  %v6760 = vadd.f32 %v6704, %v6746
  %v6761 = vadd.f32 %v6705, %v6747
  %v6762 = vadd.f32 %v6706, %v6748
  %v6763 = vadd.f32 %v6707, %v6749
  %v6764 = vadd.f32 %v6708, %v6750
  %v6765 = vadd.f32 %v6709, %v6751
  %s6766 = scalar_lea.vmem [#allocation2], 1456
  %v6767 = vld [vmem:[%s6766] sm:$0xff]
  %v6768 = vld [vmem:[%s6766 + $0x8] sm:$0xff]
  %v6769 = vld [vmem:[%s6766 + $0x10] sm:$0xff]
  %v6770 = vld [vmem:[%s6766 + $0x18] sm:$0xff]
  %v6771 = vld [vmem:[%s6766 + $0x20] sm:$0xff]
  %v6772 = vld [vmem:[%s6766 + $0x28] sm:$0xff]
  %v6773 = vld [vmem:[%s6766 + $0x30] sm:$0xff]
  %v6774 = vld [vmem:[%s6766 + $0x38] sm:$0xff]
  %v6775 = vld [vmem:[%s6766 + $0x40] sm:$0xff]
  %v6776 = vld [vmem:[%s6766 + $0x48] sm:$0xff]
  %v6777 = vld [vmem:[%s6766 + $0x50] sm:$0xff]
  %v6778 = vld [vmem:[%s6766 + $0x58] sm:$0xff]
  %v6779 = vld [vmem:[%s6766 + $0x60] sm:$0xff]
  %v6780 = vld [vmem:[%s6766 + $0x68] sm:$0xff]
  %v6781 = vrot.slane %v6767, 7
  %v6782 = vrot.slane %v6768, 7
  %v6783 = vrot.slane %v6769, 7
  %v6784 = vrot.slane %v6770, 7
  %v6785 = vrot.slane %v6771, 7
  %v6786 = vrot.slane %v6772, 7
  %v6787 = vrot.slane %v6773, 7
  %v6788 = vrot.slane %v6774, 7
  %v6789 = vrot.slane %v6775, 7
  %v6790 = vrot.slane %v6776, 7
  %v6791 = vrot.slane %v6777, 7
  %v6792 = vrot.slane %v6778, 7
  %v6793 = vrot.slane %v6779, 7
  %v6794 = vrot.slane %v6780, 7
  %v6795 = vsel %vm651, %v6781, %v6788
  %v6796 = vsel %vm651, %v6782, %v6789
  %v6797 = vsel %vm651, %v6783, %v6790
  %v6798 = vsel %vm651, %v6784, %v6791
  %v6799 = vsel %vm651, %v6785, %v6792
  %v6800 = vsel %vm651, %v6786, %v6793
  %v6801 = vsel %vm651, %v6787, %v6794
  %v6802 = vsel %vm651, %v6788, %v6781
  %v6803 = vsel %vm651, %v6789, %v6782
  %v6804 = vsel %vm651, %v6790, %v6783
  %v6805 = vsel %vm651, %v6791, %v6784
  %v6806 = vsel %vm651, %v6792, %v6785
  %v6807 = vsel %vm651, %v6793, %v6786
  %v6808 = vsel %vm651, %v6794, %v6787
  %v6809 = vmul.f32 %v6802, %v909
  %v6810 = vmul.f32 %v6803, %v913
  %v6811 = vmul.f32 %v6804, %v917
  %v6812 = vmul.f32 %v6805, %v921
  %v6813 = vmul.f32 %v6806, %v925
  %v6814 = vmul.f32 %v6807, %v929
  %v6815 = vmul.f32 %v6808, %v933
  %v6816 = vmul.f32 %v6795, %v909
  %v6817 = vmul.f32 %v6796, %v913
  %v6818 = vmul.f32 %v6797, %v917
  %v6819 = vmul.f32 %v6798, %v921
  %v6820 = vmul.f32 %v6799, %v925
  %v6821 = vmul.f32 %v6800, %v929
  %v6822 = vmul.f32 %v6801, %v933
  %v6823 = vadd.f32 %v6752, %v6809
  %v6824 = vadd.f32 %v6753, %v6810
  %v6825 = vadd.f32 %v6754, %v6811
  %v6826 = vadd.f32 %v6755, %v6812
  %v6827 = vadd.f32 %v6756, %v6813
  %v6828 = vadd.f32 %v6757, %v6814
  %v6829 = vadd.f32 %v6758, %v6815
  %v6830 = vadd.f32 %v6759, %v6816
  %v6831 = vadd.f32 %v6760, %v6817
  %v6832 = vadd.f32 %v6761, %v6818
  %v6833 = vadd.f32 %v6762, %v6819
  %v6834 = vadd.f32 %v6763, %v6820
  %v6835 = vadd.f32 %v6764, %v6821
  %v6836 = vadd.f32 %v6765, %v6822
  %v6837 = vmul.f32 %v6767, %v965
  %v6838 = vmul.f32 %v6768, %v969
  %v6839 = vmul.f32 %v6769, %v973
  %v6840 = vmul.f32 %v6770, %v977
  %v6841 = vmul.f32 %v6771, %v981
  %v6842 = vmul.f32 %v6772, %v985
  %v6843 = vmul.f32 %v6773, %v989
  %v6844 = vmul.f32 %v6774, %v965
  %v6845 = vmul.f32 %v6775, %v969
  %v6846 = vmul.f32 %v6776, %v973
  %v6847 = vmul.f32 %v6777, %v977
  %v6848 = vmul.f32 %v6778, %v981
  %v6849 = vmul.f32 %v6779, %v985
  %v6850 = vmul.f32 %v6780, %v989
  %v6851 = vadd.f32 %v6823, %v6837
  %v6852 = vadd.f32 %v6824, %v6838
  %v6853 = vadd.f32 %v6825, %v6839
  %v6854 = vadd.f32 %v6826, %v6840
  %v6855 = vadd.f32 %v6827, %v6841
  %v6856 = vadd.f32 %v6828, %v6842
  %v6857 = vadd.f32 %v6829, %v6843
  %v6858 = vadd.f32 %v6830, %v6844
  %v6859 = vadd.f32 %v6831, %v6845
  %v6860 = vadd.f32 %v6832, %v6846
  %v6861 = vadd.f32 %v6833, %v6847
  %v6862 = vadd.f32 %v6834, %v6848
  %v6863 = vadd.f32 %v6835, %v6849
  %v6864 = vadd.f32 %v6836, %v6850
  %v6865 = vrot.slane %v6767, 1
  %v6866 = vrot.slane %v6768, 1
  %v6867 = vrot.slane %v6769, 1
  %v6868 = vrot.slane %v6770, 1
  %v6869 = vrot.slane %v6771, 1
  %v6870 = vrot.slane %v6772, 1
  %v6871 = vrot.slane %v6773, 1
  %v6872 = vrot.slane %v6774, 1
  %v6873 = vrot.slane %v6775, 1
  %v6874 = vrot.slane %v6776, 1
  %v6875 = vrot.slane %v6777, 1
  %v6876 = vrot.slane %v6778, 1
  %v6877 = vrot.slane %v6779, 1
  %v6878 = vrot.slane %v6780, 1
  %v6879 = vsel %vm792, %v6865, %v6872
  %v6880 = vsel %vm792, %v6866, %v6873
  %v6881 = vsel %vm792, %v6867, %v6874
  %v6882 = vsel %vm792, %v6868, %v6875
  %v6883 = vsel %vm792, %v6869, %v6876
  %v6884 = vsel %vm792, %v6870, %v6877
  %v6885 = vsel %vm792, %v6871, %v6878
  %v6886 = vsel %vm792, %v6872, %v6865
  %v6887 = vsel %vm792, %v6873, %v6866
  %v6888 = vsel %vm792, %v6874, %v6867
  %v6889 = vsel %vm792, %v6875, %v6868
  %v6890 = vsel %vm792, %v6876, %v6869
  %v6891 = vsel %vm792, %v6877, %v6870
  %v6892 = vsel %vm792, %v6878, %v6871
  %v6893 = vmul.f32 %v6879, %v1049
  %v6894 = vmul.f32 %v6880, %v1053
  %v6895 = vmul.f32 %v6881, %v1057
  %v6896 = vmul.f32 %v6882, %v1061
  %v6897 = vmul.f32 %v6883, %v1065
  %v6898 = vmul.f32 %v6884, %v1069
  %v6899 = vmul.f32 %v6885, %v1073
  %v6900 = vmul.f32 %v6886, %v1049
  %v6901 = vmul.f32 %v6887, %v1053
  %v6902 = vmul.f32 %v6888, %v1057
  %v6903 = vmul.f32 %v6889, %v1061
  %v6904 = vmul.f32 %v6890, %v1065
  %v6905 = vmul.f32 %v6891, %v1069
  %v6906 = vmul.f32 %v6892, %v1073
  %v6907 = vadd.f32 %v6851, %v6893
  %v6908 = vadd.f32 %v6852, %v6894
  %v6909 = vadd.f32 %v6853, %v6895
  %v6910 = vadd.f32 %v6854, %v6896
  %v6911 = vadd.f32 %v6855, %v6897
  %v6912 = vadd.f32 %v6856, %v6898
  %v6913 = vadd.f32 %v6857, %v6899
  %v6914 = vadd.f32 %v6858, %v6900
  %v6915 = vadd.f32 %v6859, %v6901
  %v6916 = vadd.f32 %v6860, %v6902
  %v6917 = vadd.f32 %v6861, %v6903
  %v6918 = vadd.f32 %v6862, %v6904
  %v6919 = vadd.f32 %v6863, %v6905
  %v6920 = vadd.f32 %v6864, %v6906
  %s6921 = scalar_lea.vmem [#allocation3], 1344
  %6922 = vst [vmem:[%s6921] sm:$0xff] %v6907
  %6923 = vst [vmem:[%s6921 + $0x8] sm:$0xff] %v6908
  %6924 = vst [vmem:[%s6921 + $0x10] sm:$0xff] %v6909
  %6925 = vst [vmem:[%s6921 + $0x18] sm:$0xff] %v6910
  %6926 = vst [vmem:[%s6921 + $0x20] sm:$0xff] %v6911
  %6927 = vst [vmem:[%s6921 + $0x28] sm:$0xff] %v6912
  %6928 = vst.msk [vmem:[%s6921 + $0x30] sm:$0xff] %vm23, %v6913
  %6929 = vst [vmem:[%s6921 + $0x38] sm:$0xff] %v6914
  %6930 = vst [vmem:[%s6921 + $0x40] sm:$0xff] %v6915
  %6931 = vst [vmem:[%s6921 + $0x48] sm:$0xff] %v6916
  %6932 = vst [vmem:[%s6921 + $0x50] sm:$0xff] %v6917
  %6933 = vst [vmem:[%s6921 + $0x58] sm:$0xff] %v6918
  %6934 = vst [vmem:[%s6921 + $0x60] sm:$0xff] %v6919
  %6935 = vst.msk [vmem:[%s6921 + $0x68] sm:$0xff] %vm23, %v6920
  %v6936 = vld [vmem:[%s6288] sm:$0xff]
  %v6937 = vld [vmem:[%s6288 + $0x8] sm:$0xff]
  %v6938 = vld [vmem:[%s6288 + $0x10] sm:$0xff]
  %v6939 = vld [vmem:[%s6288 + $0x18] sm:$0xff]
  %v6940 = vld [vmem:[%s6288 + $0x20] sm:$0xff]
  %v6941 = vld [vmem:[%s6288 + $0x28] sm:$0xff]
  %v6942 = vld [vmem:[%s6288 + $0x30] sm:$0xff]
  %v6943 = vld [vmem:[%s6288 + $0x38] sm:$0xff]
  %v6944 = vld [vmem:[%s6288 + $0x40] sm:$0xff]
  %v6945 = vld [vmem:[%s6288 + $0x48] sm:$0xff]
  %v6946 = vld [vmem:[%s6288 + $0x50] sm:$0xff]
  %v6947 = vld [vmem:[%s6288 + $0x58] sm:$0xff]
  %v6948 = vld [vmem:[%s6288 + $0x60] sm:$0xff]
  %v6949 = vld [vmem:[%s6288 + $0x68] sm:$0xff]
  %v6950 = vrot.slane %v6936, 7
  %v6951 = vrot.slane %v6937, 7
  %v6952 = vrot.slane %v6938, 7
  %v6953 = vrot.slane %v6939, 7
  %v6954 = vrot.slane %v6940, 7
  %v6955 = vrot.slane %v6941, 7
  %v6956 = vrot.slane %v6942, 7
  %v6957 = vrot.slane %v6943, 7
  %v6958 = vrot.slane %v6944, 7
  %v6959 = vrot.slane %v6945, 7
  %v6960 = vrot.slane %v6946, 7
  %v6961 = vrot.slane %v6947, 7
  %v6962 = vrot.slane %v6948, 7
  %v6963 = vrot.slane %v6949, 7
  %v6964 = vsel %vm651, %v6950, %v6957
  %v6965 = vsel %vm651, %v6951, %v6958
  %v6966 = vsel %vm651, %v6952, %v6959
  %v6967 = vsel %vm651, %v6953, %v6960
  %v6968 = vsel %vm651, %v6954, %v6961
  %v6969 = vsel %vm651, %v6955, %v6962
  %v6970 = vsel %vm651, %v6956, %v6963
  %v6971 = vsel %vm651, %v6957, %v6950
  %v6972 = vsel %vm651, %v6958, %v6951
  %v6973 = vsel %vm651, %v6959, %v6952
  %v6974 = vsel %vm651, %v6960, %v6953
  %v6975 = vsel %vm651, %v6961, %v6954
  %v6976 = vsel %vm651, %v6962, %v6955
  %v6977 = vsel %vm651, %v6963, %v6956
  %v6978 = vmul.f32 %v6971, %v1161
  %v6979 = vmul.f32 %v6972, %v1165
  %v6980 = vmul.f32 %v6973, %v1169
  %v6981 = vmul.f32 %v6974, %v1173
  %v6982 = vmul.f32 %v6975, %v1177
  %v6983 = vmul.f32 %v6976, %v1181
  %v6984 = vmul.f32 %v6977, %v1185
  %v6985 = vmul.f32 %v6964, %v1161
  %v6986 = vmul.f32 %v6965, %v1165
  %v6987 = vmul.f32 %v6966, %v1169
  %v6988 = vmul.f32 %v6967, %v1173
  %v6989 = vmul.f32 %v6968, %v1177
  %v6990 = vmul.f32 %v6969, %v1181
  %v6991 = vmul.f32 %v6970, %v1185
  %v6992 = vadd.f32 %v6978, 0.0
  %v6993 = vadd.f32 %v6979, 0.0
  %v6994 = vadd.f32 %v6980, 0.0
  %v6995 = vadd.f32 %v6981, 0.0
  %v6996 = vadd.f32 %v6982, 0.0
  %v6997 = vadd.f32 %v6983, 0.0
  %v6998 = vadd.f32 %v6984, 0.0
  %v6999 = vadd.f32 %v6985, 0.0
  %v7000 = vadd.f32 %v6986, 0.0
  %v7001 = vadd.f32 %v6987, 0.0
  %v7002 = vadd.f32 %v6988, 0.0
  %v7003 = vadd.f32 %v6989, 0.0
  %v7004 = vadd.f32 %v6990, 0.0
  %v7005 = vadd.f32 %v6991, 0.0
  %v7006 = vmul.f32 %v6936, %v1217
  %v7007 = vmul.f32 %v6937, %v1221
  %v7008 = vmul.f32 %v6938, %v1225
  %v7009 = vmul.f32 %v6939, %v1229
  %v7010 = vmul.f32 %v6940, %v1233
  %v7011 = vmul.f32 %v6941, %v1237
  %v7012 = vmul.f32 %v6942, %v1241
  %v7013 = vmul.f32 %v6943, %v1217
  %v7014 = vmul.f32 %v6944, %v1221
  %v7015 = vmul.f32 %v6945, %v1225
  %v7016 = vmul.f32 %v6946, %v1229
  %v7017 = vmul.f32 %v6947, %v1233
  %v7018 = vmul.f32 %v6948, %v1237
  %v7019 = vmul.f32 %v6949, %v1241
  %v7020 = vadd.f32 %v6992, %v7006
  %v7021 = vadd.f32 %v6993, %v7007
  %v7022 = vadd.f32 %v6994, %v7008
  %v7023 = vadd.f32 %v6995, %v7009
  %v7024 = vadd.f32 %v6996, %v7010
  %v7025 = vadd.f32 %v6997, %v7011
  %v7026 = vadd.f32 %v6998, %v7012
  %v7027 = vadd.f32 %v6999, %v7013
  %v7028 = vadd.f32 %v7000, %v7014
  %v7029 = vadd.f32 %v7001, %v7015
  %v7030 = vadd.f32 %v7002, %v7016
  %v7031 = vadd.f32 %v7003, %v7017
  %v7032 = vadd.f32 %v7004, %v7018
  %v7033 = vadd.f32 %v7005, %v7019
  %v7034 = vrot.slane %v6936, 1
  %v7035 = vrot.slane %v6937, 1
  %v7036 = vrot.slane %v6938, 1
  %v7037 = vrot.slane %v6939, 1
  %v7038 = vrot.slane %v6940, 1
  %v7039 = vrot.slane %v6941, 1
  %v7040 = vrot.slane %v6942, 1
  %v7041 = vrot.slane %v6943, 1
  %v7042 = vrot.slane %v6944, 1
  %v7043 = vrot.slane %v6945, 1
  %v7044 = vrot.slane %v6946, 1
  %v7045 = vrot.slane %v6947, 1
  %v7046 = vrot.slane %v6948, 1
  %v7047 = vrot.slane %v6949, 1
  %v7048 = vsel %vm792, %v7034, %v7041
  %v7049 = vsel %vm792, %v7035, %v7042
  %v7050 = vsel %vm792, %v7036, %v7043
  %v7051 = vsel %vm792, %v7037, %v7044
  %v7052 = vsel %vm792, %v7038, %v7045
  %v7053 = vsel %vm792, %v7039, %v7046
  %v7054 = vsel %vm792, %v7040, %v7047
  %v7055 = vsel %vm792, %v7041, %v7034
  %v7056 = vsel %vm792, %v7042, %v7035
  %v7057 = vsel %vm792, %v7043, %v7036
  %v7058 = vsel %vm792, %v7044, %v7037
  %v7059 = vsel %vm792, %v7045, %v7038
  %v7060 = vsel %vm792, %v7046, %v7039
  %v7061 = vsel %vm792, %v7047, %v7040
  %v7062 = vmul.f32 %v7048, %v1301
  %v7063 = vmul.f32 %v7049, %v1305
  %v7064 = vmul.f32 %v7050, %v1309
  %v7065 = vmul.f32 %v7051, %v1313
  %v7066 = vmul.f32 %v7052, %v1317
  %v7067 = vmul.f32 %v7053, %v1321
  %v7068 = vmul.f32 %v7054, %v1325
  %v7069 = vmul.f32 %v7055, %v1301
  %v7070 = vmul.f32 %v7056, %v1305
  %v7071 = vmul.f32 %v7057, %v1309
  %v7072 = vmul.f32 %v7058, %v1313
  %v7073 = vmul.f32 %v7059, %v1317
  %v7074 = vmul.f32 %v7060, %v1321
  %v7075 = vmul.f32 %v7061, %v1325
  %v7076 = vadd.f32 %v7020, %v7062
  %v7077 = vadd.f32 %v7021, %v7063
  %v7078 = vadd.f32 %v7022, %v7064
  %v7079 = vadd.f32 %v7023, %v7065
  %v7080 = vadd.f32 %v7024, %v7066
  %v7081 = vadd.f32 %v7025, %v7067
  %v7082 = vadd.f32 %v7026, %v7068
  %v7083 = vadd.f32 %v7027, %v7069
  %v7084 = vadd.f32 %v7028, %v7070
  %v7085 = vadd.f32 %v7029, %v7071
  %v7086 = vadd.f32 %v7030, %v7072
  %v7087 = vadd.f32 %v7031, %v7073
  %v7088 = vadd.f32 %v7032, %v7074
  %v7089 = vadd.f32 %v7033, %v7075
  %v7090 = vld [vmem:[%s6766] sm:$0xff]
  %v7091 = vld [vmem:[%s6766 + $0x8] sm:$0xff]
  %v7092 = vld [vmem:[%s6766 + $0x10] sm:$0xff]
  %v7093 = vld [vmem:[%s6766 + $0x18] sm:$0xff]
  %v7094 = vld [vmem:[%s6766 + $0x20] sm:$0xff]
  %v7095 = vld [vmem:[%s6766 + $0x28] sm:$0xff]
  %v7096 = vld [vmem:[%s6766 + $0x30] sm:$0xff]
  %v7097 = vld [vmem:[%s6766 + $0x38] sm:$0xff]
  %v7098 = vld [vmem:[%s6766 + $0x40] sm:$0xff]
  %v7099 = vld [vmem:[%s6766 + $0x48] sm:$0xff]
  %v7100 = vld [vmem:[%s6766 + $0x50] sm:$0xff]
  %v7101 = vld [vmem:[%s6766 + $0x58] sm:$0xff]
  %v7102 = vld [vmem:[%s6766 + $0x60] sm:$0xff]
  %v7103 = vld [vmem:[%s6766 + $0x68] sm:$0xff]
  %v7104 = vrot.slane %v7090, 7
  %v7105 = vrot.slane %v7091, 7
  %v7106 = vrot.slane %v7092, 7
  %v7107 = vrot.slane %v7093, 7
  %v7108 = vrot.slane %v7094, 7
  %v7109 = vrot.slane %v7095, 7
  %v7110 = vrot.slane %v7096, 7
  %v7111 = vrot.slane %v7097, 7
  %v7112 = vrot.slane %v7098, 7
  %v7113 = vrot.slane %v7099, 7
  %v7114 = vrot.slane %v7100, 7
  %v7115 = vrot.slane %v7101, 7
  %v7116 = vrot.slane %v7102, 7
  %v7117 = vrot.slane %v7103, 7
  %v7118 = vsel %vm651, %v7104, %v7111
  %v7119 = vsel %vm651, %v7105, %v7112
  %v7120 = vsel %vm651, %v7106, %v7113
  %v7121 = vsel %vm651, %v7107, %v7114
  %v7122 = vsel %vm651, %v7108, %v7115
  %v7123 = vsel %vm651, %v7109, %v7116
  %v7124 = vsel %vm651, %v7110, %v7117
  %v7125 = vsel %vm651, %v7111, %v7104
  %v7126 = vsel %vm651, %v7112, %v7105
  %v7127 = vsel %vm651, %v7113, %v7106
  %v7128 = vsel %vm651, %v7114, %v7107
  %v7129 = vsel %vm651, %v7115, %v7108
  %v7130 = vsel %vm651, %v7116, %v7109
  %v7131 = vsel %vm651, %v7117, %v7110
  %v7132 = vmul.f32 %v7125, %v669
  %v7133 = vmul.f32 %v7126, %v673
  %v7134 = vmul.f32 %v7127, %v677
  %v7135 = vmul.f32 %v7128, %v681
  %v7136 = vmul.f32 %v7129, %v685
  %v7137 = vmul.f32 %v7130, %v689
  %v7138 = vmul.f32 %v7131, %v693
  %v7139 = vmul.f32 %v7118, %v669
  %v7140 = vmul.f32 %v7119, %v673
  %v7141 = vmul.f32 %v7120, %v677
  %v7142 = vmul.f32 %v7121, %v681
  %v7143 = vmul.f32 %v7122, %v685
  %v7144 = vmul.f32 %v7123, %v689
  %v7145 = vmul.f32 %v7124, %v693
  %v7146 = vadd.f32 %v7076, %v7132
  %v7147 = vadd.f32 %v7077, %v7133
  %v7148 = vadd.f32 %v7078, %v7134
  %v7149 = vadd.f32 %v7079, %v7135
  %v7150 = vadd.f32 %v7080, %v7136
  %v7151 = vadd.f32 %v7081, %v7137
  %v7152 = vadd.f32 %v7082, %v7138
  %v7153 = vadd.f32 %v7083, %v7139
  %v7154 = vadd.f32 %v7084, %v7140
  %v7155 = vadd.f32 %v7085, %v7141
  %v7156 = vadd.f32 %v7086, %v7142
  %v7157 = vadd.f32 %v7087, %v7143
  %v7158 = vadd.f32 %v7088, %v7144
  %v7159 = vadd.f32 %v7089, %v7145
  %v7160 = vmul.f32 %v7090, %v725
  %v7161 = vmul.f32 %v7091, %v729
  %v7162 = vmul.f32 %v7092, %v733
  %v7163 = vmul.f32 %v7093, %v737
  %v7164 = vmul.f32 %v7094, %v741
  %v7165 = vmul.f32 %v7095, %v745
  %v7166 = vmul.f32 %v7096, %v749
  %v7167 = vmul.f32 %v7097, %v725
  %v7168 = vmul.f32 %v7098, %v729
  %v7169 = vmul.f32 %v7099, %v733
  %v7170 = vmul.f32 %v7100, %v737
  %v7171 = vmul.f32 %v7101, %v741
  %v7172 = vmul.f32 %v7102, %v745
  %v7173 = vmul.f32 %v7103, %v749
  %v7174 = vadd.f32 %v7146, %v7160
  %v7175 = vadd.f32 %v7147, %v7161
  %v7176 = vadd.f32 %v7148, %v7162
  %v7177 = vadd.f32 %v7149, %v7163
  %v7178 = vadd.f32 %v7150, %v7164
  %v7179 = vadd.f32 %v7151, %v7165
  %v7180 = vadd.f32 %v7152, %v7166
  %v7181 = vadd.f32 %v7153, %v7167
  %v7182 = vadd.f32 %v7154, %v7168
  %v7183 = vadd.f32 %v7155, %v7169
  %v7184 = vadd.f32 %v7156, %v7170
  %v7185 = vadd.f32 %v7157, %v7171
  %v7186 = vadd.f32 %v7158, %v7172
  %v7187 = vadd.f32 %v7159, %v7173
  %v7188 = vrot.slane %v7090, 1
  %v7189 = vrot.slane %v7091, 1
  %v7190 = vrot.slane %v7092, 1
  %v7191 = vrot.slane %v7093, 1
  %v7192 = vrot.slane %v7094, 1
  %v7193 = vrot.slane %v7095, 1
  %v7194 = vrot.slane %v7096, 1
  %v7195 = vrot.slane %v7097, 1
  %v7196 = vrot.slane %v7098, 1
  %v7197 = vrot.slane %v7099, 1
  %v7198 = vrot.slane %v7100, 1
  %v7199 = vrot.slane %v7101, 1
  %v7200 = vrot.slane %v7102, 1
  %v7201 = vrot.slane %v7103, 1
  %v7202 = vsel %vm792, %v7188, %v7195
  %v7203 = vsel %vm792, %v7189, %v7196
  %v7204 = vsel %vm792, %v7190, %v7197
  %v7205 = vsel %vm792, %v7191, %v7198
  %v7206 = vsel %vm792, %v7192, %v7199
  %v7207 = vsel %vm792, %v7193, %v7200
  %v7208 = vsel %vm792, %v7194, %v7201
  %v7209 = vsel %vm792, %v7195, %v7188
  %v7210 = vsel %vm792, %v7196, %v7189
  %v7211 = vsel %vm792, %v7197, %v7190
  %v7212 = vsel %vm792, %v7198, %v7191
  %v7213 = vsel %vm792, %v7199, %v7192
  %v7214 = vsel %vm792, %v7200, %v7193
  %v7215 = vsel %vm792, %v7201, %v7194
  %v7216 = vmul.f32 %v7202, %v810
  %v7217 = vmul.f32 %v7203, %v814
  %v7218 = vmul.f32 %v7204, %v818
  %v7219 = vmul.f32 %v7205, %v822
  %v7220 = vmul.f32 %v7206, %v826
  %v7221 = vmul.f32 %v7207, %v830
  %v7222 = vmul.f32 %v7208, %v834
  %v7223 = vmul.f32 %v7209, %v810
  %v7224 = vmul.f32 %v7210, %v814
  %v7225 = vmul.f32 %v7211, %v818
  %v7226 = vmul.f32 %v7212, %v822
  %v7227 = vmul.f32 %v7213, %v826
  %v7228 = vmul.f32 %v7214, %v830
  %v7229 = vmul.f32 %v7215, %v834
  %v7230 = vadd.f32 %v7174, %v7216
  %v7231 = vadd.f32 %v7175, %v7217
  %v7232 = vadd.f32 %v7176, %v7218
  %v7233 = vadd.f32 %v7177, %v7219
  %v7234 = vadd.f32 %v7178, %v7220
  %v7235 = vadd.f32 %v7179, %v7221
  %v7236 = vadd.f32 %v7180, %v7222
  %v7237 = vadd.f32 %v7181, %v7223
  %v7238 = vadd.f32 %v7182, %v7224
  %v7239 = vadd.f32 %v7183, %v7225
  %v7240 = vadd.f32 %v7184, %v7226
  %v7241 = vadd.f32 %v7185, %v7227
  %v7242 = vadd.f32 %v7186, %v7228
  %v7243 = vadd.f32 %v7187, %v7229
  %s7244 = scalar_lea.vmem [#allocation3], 1456
  %7245 = vst [vmem:[%s7244] sm:$0xff] %v7230
  %7246 = vst [vmem:[%s7244 + $0x8] sm:$0xff] %v7231
  %7247 = vst [vmem:[%s7244 + $0x10] sm:$0xff] %v7232
  %7248 = vst [vmem:[%s7244 + $0x18] sm:$0xff] %v7233
  %7249 = vst [vmem:[%s7244 + $0x20] sm:$0xff] %v7234
  %7250 = vst [vmem:[%s7244 + $0x28] sm:$0xff] %v7235
  %7251 = vst.msk [vmem:[%s7244 + $0x30] sm:$0xff] %vm23, %v7236
  %7252 = vst [vmem:[%s7244 + $0x38] sm:$0xff] %v7237
  %7253 = vst [vmem:[%s7244 + $0x40] sm:$0xff] %v7238
  %7254 = vst [vmem:[%s7244 + $0x48] sm:$0xff] %v7239
  %7255 = vst [vmem:[%s7244 + $0x50] sm:$0xff] %v7240
  %7256 = vst [vmem:[%s7244 + $0x58] sm:$0xff] %v7241
  %7257 = vst [vmem:[%s7244 + $0x60] sm:$0xff] %v7242
  %7258 = vst.msk [vmem:[%s7244 + $0x68] sm:$0xff] %vm23, %v7243
  %v7259 = vld [vmem:[#allocation3] sm:$0xff]
  %v7260 = vld [vmem:[#allocation3 + $0x8] sm:$0xff]
  %v7261 = vld [vmem:[#allocation3 + $0x10] sm:$0xff]
  %v7262 = vld [vmem:[#allocation3 + $0x18] sm:$0xff]
  %v7263 = vld [vmem:[#allocation3 + $0x20] sm:$0xff]
  %v7264 = vld [vmem:[#allocation3 + $0x28] sm:$0xff]
  %v7265 = vld [vmem:[#allocation3 + $0x30] sm:$0xff]
  %v7266 = vld [vmem:[#allocation3 + $0x38] sm:$0xff]
  %v7267 = vld [vmem:[#allocation3 + $0x40] sm:$0xff]
  %v7268 = vld [vmem:[#allocation3 + $0x48] sm:$0xff]
  %v7269 = vld [vmem:[#allocation3 + $0x50] sm:$0xff]
  %v7270 = vld [vmem:[#allocation3 + $0x58] sm:$0xff]
  %v7271 = vld [vmem:[#allocation3 + $0x60] sm:$0xff]
  %v7272 = vld [vmem:[#allocation3 + $0x68] sm:$0xff]
  %v7273 = vld [vmem:[#allocation3 + $0x70] sm:$0xff]
  %v7274 = vld [vmem:[#allocation3 + $0x78] sm:$0xff]
  %v7275 = vld [vmem:[#allocation3 + $0x80] sm:$0xff]
  %v7276 = vld [vmem:[#allocation3 + $0x88] sm:$0xff]
  %v7277 = vld [vmem:[#allocation3 + $0x90] sm:$0xff]
  %v7278 = vld [vmem:[#allocation3 + $0x98] sm:$0xff]
  %v7279 = vld [vmem:[#allocation3 + $0xa0] sm:$0xff]
  %v7280 = vld [vmem:[#allocation3 + $0xa8] sm:$0xff]
  %v7281 = vld [vmem:[#allocation3 + $0xb0] sm:$0xff]
  %v7282 = vld [vmem:[#allocation3 + $0xb8] sm:$0xff]
  %v7283 = vld [vmem:[#allocation3 + $0xc0] sm:$0xff]
  %v7284 = vld [vmem:[#allocation3 + $0xc8] sm:$0xff]
  %v7285 = vld [vmem:[#allocation3 + $0xd0] sm:$0xff]
  %v7286 = vld [vmem:[#allocation3 + $0xd8] sm:$0xff]
  %v7287 = vld [vmem:[#allocation3 + $0xe0] sm:$0xff]
  %v7288 = vld [vmem:[#allocation3 + $0xe8] sm:$0xff]
  %v7289 = vld [vmem:[#allocation3 + $0xf0] sm:$0xff]
  %v7290 = vld [vmem:[#allocation3 + $0xf8] sm:$0xff]
  %v7291 = vld [vmem:[#allocation3 + $0x100] sm:$0xff]
  %v7292 = vld [vmem:[#allocation3 + $0x108] sm:$0xff]
  %v7293 = vld [vmem:[#allocation3 + $0x110] sm:$0xff]
  %v7294 = vld [vmem:[#allocation3 + $0x118] sm:$0xff]
  %v7295 = vld [vmem:[#allocation3 + $0x120] sm:$0xff]
  %v7296 = vld [vmem:[#allocation3 + $0x128] sm:$0xff]
  %v7297 = vld [vmem:[#allocation3 + $0x130] sm:$0xff]
  %v7298 = vld [vmem:[#allocation3 + $0x138] sm:$0xff]
  %v7299 = vld [vmem:[#allocation3 + $0x140] sm:$0xff]
  %v7300 = vld [vmem:[#allocation3 + $0x148] sm:$0xff]
  %v7301 = vld [vmem:[#allocation3 + $0x150] sm:$0xff]
  %v7302 = vld [vmem:[#allocation3 + $0x158] sm:$0xff]
  %v7303 = vld [vmem:[#allocation3 + $0x160] sm:$0xff]
  %v7304 = vld [vmem:[#allocation3 + $0x168] sm:$0xff]
  %v7305 = vld [vmem:[#allocation3 + $0x170] sm:$0xff]
  %v7306 = vld [vmem:[#allocation3 + $0x178] sm:$0xff]
  %v7307 = vld [vmem:[#allocation3 + $0x180] sm:$0xff]
  %v7308 = vld [vmem:[#allocation3 + $0x188] sm:$0xff]
  %v7309 = vld [vmem:[#allocation3 + $0x190] sm:$0xff]
  %v7310 = vld [vmem:[#allocation3 + $0x198] sm:$0xff]
  %v7311 = vld [vmem:[#allocation3 + $0x1a0] sm:$0xff]
  %v7312 = vld [vmem:[#allocation3 + $0x1a8] sm:$0xff]
  %v7313 = vld [vmem:[#allocation3 + $0x1b0] sm:$0xff]
  %v7314 = vld [vmem:[#allocation3 + $0x1b8] sm:$0xff]
  %v7315 = vld [vmem:[#allocation3 + $0x1c0] sm:$0xff]
  %v7316 = vld [vmem:[#allocation3 + $0x1c8] sm:$0xff]
  %v7317 = vld [vmem:[#allocation3 + $0x1d0] sm:$0xff]
  %v7318 = vld [vmem:[#allocation3 + $0x1d8] sm:$0xff]
  %v7319 = vld [vmem:[#allocation3 + $0x1e0] sm:$0xff]
  %v7320 = vld [vmem:[#allocation3 + $0x1e8] sm:$0xff]
  %v7321 = vld [vmem:[#allocation3 + $0x1f0] sm:$0xff]
  %v7322 = vld [vmem:[#allocation3 + $0x1f8] sm:$0xff]
  %v7323 = vld [vmem:[#allocation3 + $0x200] sm:$0xff]
  %v7324 = vld [vmem:[#allocation3 + $0x208] sm:$0xff]
  %v7325 = vld [vmem:[#allocation3 + $0x210] sm:$0xff]
  %v7326 = vld [vmem:[#allocation3 + $0x218] sm:$0xff]
  %v7327 = vld [vmem:[#allocation3 + $0x220] sm:$0xff]
  %v7328 = vld [vmem:[#allocation3 + $0x228] sm:$0xff]
  %v7329 = vld [vmem:[#allocation3 + $0x230] sm:$0xff]
  %v7330 = vld [vmem:[#allocation3 + $0x238] sm:$0xff]
  %v7331 = vld [vmem:[#allocation3 + $0x240] sm:$0xff]
  %v7332 = vld [vmem:[#allocation3 + $0x248] sm:$0xff]
  %v7333 = vld [vmem:[#allocation3 + $0x250] sm:$0xff]
  %v7334 = vld [vmem:[#allocation3 + $0x258] sm:$0xff]
  %v7335 = vld [vmem:[#allocation3 + $0x260] sm:$0xff]
  %v7336 = vld [vmem:[#allocation3 + $0x268] sm:$0xff]
  %v7337 = vld [vmem:[#allocation3 + $0x270] sm:$0xff]
  %v7338 = vld [vmem:[#allocation3 + $0x278] sm:$0xff]
  %v7339 = vld [vmem:[#allocation3 + $0x280] sm:$0xff]
  %v7340 = vld [vmem:[#allocation3 + $0x288] sm:$0xff]
  %v7341 = vld [vmem:[#allocation3 + $0x290] sm:$0xff]
  %v7342 = vld [vmem:[#allocation3 + $0x298] sm:$0xff]
  %v7343 = vld [vmem:[#allocation3 + $0x2a0] sm:$0xff]
  %v7344 = vld [vmem:[#allocation3 + $0x2a8] sm:$0xff]
  %v7345 = vld [vmem:[#allocation3 + $0x2b0] sm:$0xff]
  %v7346 = vld [vmem:[#allocation3 + $0x2b8] sm:$0xff]
  %v7347 = vld [vmem:[#allocation3 + $0x2c0] sm:$0xff]
  %v7348 = vld [vmem:[#allocation3 + $0x2c8] sm:$0xff]
  %v7349 = vld [vmem:[#allocation3 + $0x2d0] sm:$0xff]
  %v7350 = vld [vmem:[#allocation3 + $0x2d8] sm:$0xff]
  %v7351 = vld [vmem:[#allocation3 + $0x2e0] sm:$0xff]
  %v7352 = vld [vmem:[#allocation3 + $0x2e8] sm:$0xff]
  %v7353 = vld [vmem:[#allocation3 + $0x2f0] sm:$0xff]
  %v7354 = vld [vmem:[#allocation3 + $0x2f8] sm:$0xff]
  %v7355 = vld [vmem:[#allocation3 + $0x300] sm:$0xff]
  %v7356 = vld [vmem:[#allocation3 + $0x308] sm:$0xff]
  %v7357 = vld [vmem:[#allocation3 + $0x310] sm:$0xff]
  %v7358 = vld [vmem:[#allocation3 + $0x318] sm:$0xff]
  %v7359 = vld [vmem:[#allocation3 + $0x320] sm:$0xff]
  %v7360 = vld [vmem:[#allocation3 + $0x328] sm:$0xff]
  %v7361 = vld [vmem:[#allocation3 + $0x330] sm:$0xff]
  %v7362 = vld [vmem:[#allocation3 + $0x338] sm:$0xff]
  %v7363 = vld [vmem:[#allocation3 + $0x340] sm:$0xff]
  %v7364 = vld [vmem:[#allocation3 + $0x348] sm:$0xff]
  %v7365 = vld [vmem:[#allocation3 + $0x350] sm:$0xff]
  %v7366 = vld [vmem:[#allocation3 + $0x358] sm:$0xff]
  %v7367 = vld [vmem:[#allocation3 + $0x360] sm:$0xff]
  %v7368 = vld [vmem:[#allocation3 + $0x368] sm:$0xff]
  %v7369 = vld [vmem:[#allocation3 + $0x370] sm:$0xff]
  %v7370 = vld [vmem:[#allocation3 + $0x378] sm:$0xff]
  %v7371 = vld [vmem:[#allocation3 + $0x380] sm:$0xff]
  %v7372 = vld [vmem:[#allocation3 + $0x388] sm:$0xff]
  %v7373 = vld [vmem:[#allocation3 + $0x390] sm:$0xff]
  %v7374 = vld [vmem:[#allocation3 + $0x398] sm:$0xff]
  %v7375 = vld [vmem:[#allocation3 + $0x3a0] sm:$0xff]
  %v7376 = vld [vmem:[#allocation3 + $0x3a8] sm:$0xff]
  %v7377 = vld [vmem:[#allocation3 + $0x3b0] sm:$0xff]
  %v7378 = vld [vmem:[#allocation3 + $0x3b8] sm:$0xff]
  %v7379 = vld [vmem:[#allocation3 + $0x3c0] sm:$0xff]
  %v7380 = vld [vmem:[#allocation3 + $0x3c8] sm:$0xff]
  %v7381 = vld [vmem:[#allocation3 + $0x3d0] sm:$0xff]
  %v7382 = vld [vmem:[#allocation3 + $0x3d8] sm:$0xff]
  %v7383 = vld [vmem:[#allocation3 + $0x3e0] sm:$0xff]
  %v7384 = vld [vmem:[#allocation3 + $0x3e8] sm:$0xff]
  %v7385 = vld [vmem:[#allocation3 + $0x3f0] sm:$0xff]
  %v7386 = vld [vmem:[#allocation3 + $0x3f8] sm:$0xff]
  %v7387 = vld [vmem:[#allocation3 + $0x400] sm:$0xff]
  %v7388 = vld [vmem:[#allocation3 + $0x408] sm:$0xff]
  %v7389 = vld [vmem:[#allocation3 + $0x410] sm:$0xff]
  %v7390 = vld [vmem:[#allocation3 + $0x418] sm:$0xff]
  %v7391 = vld [vmem:[#allocation3 + $0x420] sm:$0xff]
  %v7392 = vld [vmem:[#allocation3 + $0x428] sm:$0xff]
  %v7393 = vld [vmem:[#allocation3 + $0x430] sm:$0xff]
  %v7394 = vld [vmem:[#allocation3 + $0x438] sm:$0xff]
  %v7395 = vld [vmem:[#allocation3 + $0x440] sm:$0xff]
  %v7396 = vld [vmem:[#allocation3 + $0x448] sm:$0xff]
  %v7397 = vld [vmem:[#allocation3 + $0x450] sm:$0xff]
  %v7398 = vld [vmem:[#allocation3 + $0x458] sm:$0xff]
  %v7399 = vld [vmem:[#allocation3 + $0x460] sm:$0xff]
  %v7400 = vld [vmem:[#allocation3 + $0x468] sm:$0xff]
  %v7401 = vld [vmem:[#allocation3 + $0x470] sm:$0xff]
  %v7402 = vld [vmem:[#allocation3 + $0x478] sm:$0xff]
  %v7403 = vld [vmem:[#allocation3 + $0x480] sm:$0xff]
  %v7404 = vld [vmem:[#allocation3 + $0x488] sm:$0xff]
  %v7405 = vld [vmem:[#allocation3 + $0x490] sm:$0xff]
  %v7406 = vld [vmem:[#allocation3 + $0x498] sm:$0xff]
  %v7407 = vld [vmem:[#allocation3 + $0x4a0] sm:$0xff]
  %v7408 = vld [vmem:[#allocation3 + $0x4a8] sm:$0xff]
  %v7409 = vld [vmem:[#allocation3 + $0x4b0] sm:$0xff]
  %v7410 = vld [vmem:[#allocation3 + $0x4b8] sm:$0xff]
  %v7411 = vld [vmem:[#allocation3 + $0x4c0] sm:$0xff]
  %v7412 = vld [vmem:[#allocation3 + $0x4c8] sm:$0xff]
  %v7413 = vld [vmem:[#allocation3 + $0x4d0] sm:$0xff]
  %v7414 = vld [vmem:[#allocation3 + $0x4d8] sm:$0xff]
  %v7415 = vld [vmem:[#allocation3 + $0x4e0] sm:$0xff]
  %v7416 = vld [vmem:[#allocation3 + $0x4e8] sm:$0xff]
  %v7417 = vld [vmem:[#allocation3 + $0x4f0] sm:$0xff]
  %v7418 = vld [vmem:[#allocation3 + $0x4f8] sm:$0xff]
  %v7419 = vld [vmem:[#allocation3 + $0x500] sm:$0xff]
  %v7420 = vld [vmem:[#allocation3 + $0x508] sm:$0xff]
  %v7421 = vld [vmem:[#allocation3 + $0x510] sm:$0xff]
  %v7422 = vld [vmem:[#allocation3 + $0x518] sm:$0xff]
  %v7423 = vld [vmem:[#allocation3 + $0x520] sm:$0xff]
  %v7424 = vld [vmem:[#allocation3 + $0x528] sm:$0xff]
  %v7425 = vld [vmem:[#allocation3 + $0x530] sm:$0xff]
  %v7426 = vld [vmem:[#allocation3 + $0x538] sm:$0xff]
  %v7427 = vld [vmem:[#allocation3 + $0x540] sm:$0xff]
  %v7428 = vld [vmem:[#allocation3 + $0x548] sm:$0xff]
  %v7429 = vld [vmem:[#allocation3 + $0x550] sm:$0xff]
  %v7430 = vld [vmem:[#allocation3 + $0x558] sm:$0xff]
  %v7431 = vld [vmem:[#allocation3 + $0x560] sm:$0xff]
  %v7432 = vld [vmem:[#allocation3 + $0x568] sm:$0xff]
  %v7433 = vld [vmem:[#allocation3 + $0x570] sm:$0xff]
  %v7434 = vld [vmem:[#allocation3 + $0x578] sm:$0xff]
  %v7435 = vld [vmem:[#allocation3 + $0x580] sm:$0xff]
  %v7436 = vld [vmem:[#allocation3 + $0x588] sm:$0xff]
  %v7437 = vld [vmem:[#allocation3 + $0x590] sm:$0xff]
  %v7438 = vld [vmem:[#allocation3 + $0x598] sm:$0xff]
  %v7439 = vld [vmem:[#allocation3 + $0x5a0] sm:$0xff]
  %v7440 = vld [vmem:[#allocation3 + $0x5a8] sm:$0xff]
  %v7441 = vld [vmem:[#allocation3 + $0x5b0] sm:$0xff]
  %v7442 = vld [vmem:[#allocation3 + $0x5b8] sm:$0xff]
  %v7443 = vld [vmem:[#allocation3 + $0x5c0] sm:$0xff]
  %v7444 = vld [vmem:[#allocation3 + $0x5c8] sm:$0xff]
  %v7445 = vld [vmem:[#allocation3 + $0x5d0] sm:$0xff]
  %v7446 = vld [vmem:[#allocation3 + $0x5d8] sm:$0xff]
  %v7447 = vld [vmem:[#allocation3 + $0x5e0] sm:$0xff]
  %v7448 = vld [vmem:[#allocation3 + $0x5e8] sm:$0xff]
  %v7449 = vld [vmem:[#allocation3 + $0x5f0] sm:$0xff]
  %v7450 = vld [vmem:[#allocation3 + $0x5f8] sm:$0xff]
  %v7451 = vld [vmem:[#allocation3 + $0x600] sm:$0xff]
  %v7452 = vld [vmem:[#allocation3 + $0x608] sm:$0xff]
  %v7453 = vld [vmem:[#allocation3 + $0x610] sm:$0xff]
  %v7454 = vld [vmem:[#allocation3 + $0x618] sm:$0xff]
  %v7455 = vadd.s32 %v650, 8
  %vm7456 = vcmp.lt.s32.totalorder %v650, 14
  %vm7457 = vcmp.lt.s32.totalorder %v7455, 14
  %v7458 = vsel %vm7456, 1, 0
  %v7459 = vsel %vm7457, 1, 0
  %vm7460 = vcmp.eq.s32.totalorder %v7458, 1
  %vm7461 = vcmp.eq.s32.totalorder %v7459, 1
  %v7462 = vsel %vm7460, %v7259, 0.0
  %v7463 = vsel %vm7460, %v7260, 0.0
  %v7464 = vsel %vm7460, %v7261, 0.0
  %v7465 = vsel %vm7460, %v7262, 0.0
  %v7466 = vsel %vm7460, %v7263, 0.0
  %v7467 = vsel %vm7460, %v7264, 0.0
  %v7468 = vsel %vm7460, %v7265, 0.0
  %v7469 = vsel %vm7461, %v7266, 0.0
  %v7470 = vsel %vm7461, %v7267, 0.0
  %v7471 = vsel %vm7461, %v7268, 0.0
  %v7472 = vsel %vm7461, %v7269, 0.0
  %v7473 = vsel %vm7461, %v7270, 0.0
  %v7474 = vsel %vm7461, %v7271, 0.0
  %v7475 = vsel %vm7461, %v7272, 0.0
  %v7476 = vsel %vm7460, %v7273, 0.0
  %v7477 = vsel %vm7460, %v7274, 0.0
  %v7478 = vsel %vm7460, %v7275, 0.0
  %v7479 = vsel %vm7460, %v7276, 0.0
  %v7480 = vsel %vm7460, %v7277, 0.0
  %v7481 = vsel %vm7460, %v7278, 0.0
  %v7482 = vsel %vm7460, %v7279, 0.0
  %v7483 = vsel %vm7461, %v7280, 0.0
  %v7484 = vsel %vm7461, %v7281, 0.0
  %v7485 = vsel %vm7461, %v7282, 0.0
  %v7486 = vsel %vm7461, %v7283, 0.0
  %v7487 = vsel %vm7461, %v7284, 0.0
  %v7488 = vsel %vm7461, %v7285, 0.0
  %v7489 = vsel %vm7461, %v7286, 0.0
  %v7490 = vsel %vm7460, %v7287, 0.0
  %v7491 = vsel %vm7460, %v7288, 0.0
  %v7492 = vsel %vm7460, %v7289, 0.0
  %v7493 = vsel %vm7460, %v7290, 0.0
  %v7494 = vsel %vm7460, %v7291, 0.0
  %v7495 = vsel %vm7460, %v7292, 0.0
  %v7496 = vsel %vm7460, %v7293, 0.0
  %v7497 = vsel %vm7461, %v7294, 0.0
  %v7498 = vsel %vm7461, %v7295, 0.0
  %v7499 = vsel %vm7461, %v7296, 0.0
  %v7500 = vsel %vm7461, %v7297, 0.0
  %v7501 = vsel %vm7461, %v7298, 0.0
  %v7502 = vsel %vm7461, %v7299, 0.0
  %v7503 = vsel %vm7461, %v7300, 0.0
  %v7504 = vsel %vm7460, %v7301, 0.0
  %v7505 = vsel %vm7460, %v7302, 0.0
  %v7506 = vsel %vm7460, %v7303, 0.0
  %v7507 = vsel %vm7460, %v7304, 0.0
  %v7508 = vsel %vm7460, %v7305, 0.0
  %v7509 = vsel %vm7460, %v7306, 0.0
  %v7510 = vsel %vm7460, %v7307, 0.0
  %v7511 = vsel %vm7461, %v7308, 0.0
  %v7512 = vsel %vm7461, %v7309, 0.0
  %v7513 = vsel %vm7461, %v7310, 0.0
  %v7514 = vsel %vm7461, %v7311, 0.0
  %v7515 = vsel %vm7461, %v7312, 0.0
  %v7516 = vsel %vm7461, %v7313, 0.0
  %v7517 = vsel %vm7461, %v7314, 0.0
  %v7518 = vsel %vm7460, %v7315, 0.0
  %v7519 = vsel %vm7460, %v7316, 0.0
  %v7520 = vsel %vm7460, %v7317, 0.0
  %v7521 = vsel %vm7460, %v7318, 0.0
  %v7522 = vsel %vm7460, %v7319, 0.0
  %v7523 = vsel %vm7460, %v7320, 0.0
  %v7524 = vsel %vm7460, %v7321, 0.0
  %v7525 = vsel %vm7461, %v7322, 0.0
  %v7526 = vsel %vm7461, %v7323, 0.0
  %v7527 = vsel %vm7461, %v7324, 0.0
  %v7528 = vsel %vm7461, %v7325, 0.0
  %v7529 = vsel %vm7461, %v7326, 0.0
  %v7530 = vsel %vm7461, %v7327, 0.0
  %v7531 = vsel %vm7461, %v7328, 0.0
  %v7532 = vsel %vm7460, %v7329, 0.0
  %v7533 = vsel %vm7460, %v7330, 0.0
  %v7534 = vsel %vm7460, %v7331, 0.0
  %v7535 = vsel %vm7460, %v7332, 0.0
  %v7536 = vsel %vm7460, %v7333, 0.0
  %v7537 = vsel %vm7460, %v7334, 0.0
  %v7538 = vsel %vm7460, %v7335, 0.0
  %v7539 = vsel %vm7461, %v7336, 0.0
  %v7540 = vsel %vm7461, %v7337, 0.0
  %v7541 = vsel %vm7461, %v7338, 0.0
  %v7542 = vsel %vm7461, %v7339, 0.0
  %v7543 = vsel %vm7461, %v7340, 0.0
  %v7544 = vsel %vm7461, %v7341, 0.0
  %v7545 = vsel %vm7461, %v7342, 0.0
  %v7546 = vsel %vm7460, %v7343, 0.0
  %v7547 = vsel %vm7460, %v7344, 0.0
  %v7548 = vsel %vm7460, %v7345, 0.0
  %v7549 = vsel %vm7460, %v7346, 0.0
  %v7550 = vsel %vm7460, %v7347, 0.0
  %v7551 = vsel %vm7460, %v7348, 0.0
  %v7552 = vsel %vm7460, %v7349, 0.0
  %v7553 = vsel %vm7461, %v7350, 0.0
  %v7554 = vsel %vm7461, %v7351, 0.0
  %v7555 = vsel %vm7461, %v7352, 0.0
  %v7556 = vsel %vm7461, %v7353, 0.0
  %v7557 = vsel %vm7461, %v7354, 0.0
  %v7558 = vsel %vm7461, %v7355, 0.0
  %v7559 = vsel %vm7461, %v7356, 0.0
  %v7560 = vsel %vm7460, %v7357, 0.0
  %v7561 = vsel %vm7460, %v7358, 0.0
  %v7562 = vsel %vm7460, %v7359, 0.0
  %v7563 = vsel %vm7460, %v7360, 0.0
  %v7564 = vsel %vm7460, %v7361, 0.0
  %v7565 = vsel %vm7460, %v7362, 0.0
  %v7566 = vsel %vm7460, %v7363, 0.0
  %v7567 = vsel %vm7461, %v7364, 0.0
  %v7568 = vsel %vm7461, %v7365, 0.0
  %v7569 = vsel %vm7461, %v7366, 0.0
  %v7570 = vsel %vm7461, %v7367, 0.0
  %v7571 = vsel %vm7461, %v7368, 0.0
  %v7572 = vsel %vm7461, %v7369, 0.0
  %v7573 = vsel %vm7461, %v7370, 0.0
  %v7574 = vsel %vm7460, %v7371, 0.0
  %v7575 = vsel %vm7460, %v7372, 0.0
  %v7576 = vsel %vm7460, %v7373, 0.0
  %v7577 = vsel %vm7460, %v7374, 0.0
  %v7578 = vsel %vm7460, %v7375, 0.0
  %v7579 = vsel %vm7460, %v7376, 0.0
  %v7580 = vsel %vm7460, %v7377, 0.0
  %v7581 = vsel %vm7461, %v7378, 0.0
  %v7582 = vsel %vm7461, %v7379, 0.0
  %v7583 = vsel %vm7461, %v7380, 0.0
  %v7584 = vsel %vm7461, %v7381, 0.0
  %v7585 = vsel %vm7461, %v7382, 0.0
  %v7586 = vsel %vm7461, %v7383, 0.0
  %v7587 = vsel %vm7461, %v7384, 0.0
  %v7588 = vsel %vm7460, %v7385, 0.0
  %v7589 = vsel %vm7460, %v7386, 0.0
  %v7590 = vsel %vm7460, %v7387, 0.0
  %v7591 = vsel %vm7460, %v7388, 0.0
  %v7592 = vsel %vm7460, %v7389, 0.0
  %v7593 = vsel %vm7460, %v7390, 0.0
  %v7594 = vsel %vm7460, %v7391, 0.0
  %v7595 = vsel %vm7461, %v7392, 0.0
  %v7596 = vsel %vm7461, %v7393, 0.0
  %v7597 = vsel %vm7461, %v7394, 0.0
  %v7598 = vsel %vm7461, %v7395, 0.0
  %v7599 = vsel %vm7461, %v7396, 0.0
  %v7600 = vsel %vm7461, %v7397, 0.0
  %v7601 = vsel %vm7461, %v7398, 0.0
  %v7602 = vsel %vm7460, %v7399, 0.0
  %v7603 = vsel %vm7460, %v7400, 0.0
  %v7604 = vsel %vm7460, %v7401, 0.0
  %v7605 = vsel %vm7460, %v7402, 0.0
  %v7606 = vsel %vm7460, %v7403, 0.0
  %v7607 = vsel %vm7460, %v7404, 0.0
  %v7608 = vsel %vm7460, %v7405, 0.0
  %v7609 = vsel %vm7461, %v7406, 0.0
  %v7610 = vsel %vm7461, %v7407, 0.0
  %v7611 = vsel %vm7461, %v7408, 0.0
  %v7612 = vsel %vm7461, %v7409, 0.0
  %v7613 = vsel %vm7461, %v7410, 0.0
  %v7614 = vsel %vm7461, %v7411, 0.0
  %v7615 = vsel %vm7461, %v7412, 0.0
  %v7616 = vsel %vm7460, %v7413, 0.0
  %v7617 = vsel %vm7460, %v7414, 0.0
  %v7618 = vsel %vm7460, %v7415, 0.0
  %v7619 = vsel %vm7460, %v7416, 0.0
  %v7620 = vsel %vm7460, %v7417, 0.0
  %v7621 = vsel %vm7460, %v7418, 0.0
  %v7622 = vsel %vm7460, %v7419, 0.0
  %v7623 = vsel %vm7461, %v7420, 0.0
  %v7624 = vsel %vm7461, %v7421, 0.0
  %v7625 = vsel %vm7461, %v7422, 0.0
  %v7626 = vsel %vm7461, %v7423, 0.0
  %v7627 = vsel %vm7461, %v7424, 0.0
  %v7628 = vsel %vm7461, %v7425, 0.0
  %v7629 = vsel %vm7461, %v7426, 0.0
  %v7630 = vsel %vm7460, %v7427, 0.0
  %v7631 = vsel %vm7460, %v7428, 0.0
  %v7632 = vsel %vm7460, %v7429, 0.0
  %v7633 = vsel %vm7460, %v7430, 0.0
  %v7634 = vsel %vm7460, %v7431, 0.0
  %v7635 = vsel %vm7460, %v7432, 0.0
  %v7636 = vsel %vm7460, %v7433, 0.0
  %v7637 = vsel %vm7461, %v7434, 0.0
  %v7638 = vsel %vm7461, %v7435, 0.0
  %v7639 = vsel %vm7461, %v7436, 0.0
  %v7640 = vsel %vm7461, %v7437, 0.0
  %v7641 = vsel %vm7461, %v7438, 0.0
  %v7642 = vsel %vm7461, %v7439, 0.0
  %v7643 = vsel %vm7461, %v7440, 0.0
  %v7644 = vsel %vm7460, %v7441, 0.0
  %v7645 = vsel %vm7460, %v7442, 0.0
  %v7646 = vsel %vm7460, %v7443, 0.0
  %v7647 = vsel %vm7460, %v7444, 0.0
  %v7648 = vsel %vm7460, %v7445, 0.0
  %v7649 = vsel %vm7460, %v7446, 0.0
  %v7650 = vsel %vm7460, %v7447, 0.0
  %v7651 = vsel %vm7461, %v7448, 0.0
  %v7652 = vsel %vm7461, %v7449, 0.0
  %v7653 = vsel %vm7461, %v7450, 0.0
  %v7654 = vsel %vm7461, %v7451, 0.0
  %v7655 = vsel %vm7461, %v7452, 0.0
  %v7656 = vsel %vm7461, %v7453, 0.0
  %v7657 = vsel %vm7461, %v7454, 0.0
  %v7658 = vadd.f32 %v7462, %v7469
  %v7659 = vadd.f32 %v7658, %v7476
  %v7660 = vadd.f32 %v7659, %v7483
  %v7661 = vadd.f32 %v7660, %v7490
  %v7662 = vadd.f32 %v7661, %v7497
  %v7663 = vadd.f32 %v7662, %v7504
  %v7664 = vadd.f32 %v7663, %v7511
  %v7665 = vadd.f32 %v7664, %v7518
  %v7666 = vadd.f32 %v7665, %v7525
  %v7667 = vadd.f32 %v7666, %v7532
  %v7668 = vadd.f32 %v7667, %v7539
  %v7669 = vadd.f32 %v7668, %v7546
  %v7670 = vadd.f32 %v7669, %v7553
  %v7671 = vadd.f32 %v7670, %v7560
  %v7672 = vadd.f32 %v7671, %v7567
  %v7673 = vadd.f32 %v7672, %v7574
  %v7674 = vadd.f32 %v7673, %v7581
  %v7675 = vadd.f32 %v7674, %v7588
  %v7676 = vadd.f32 %v7675, %v7595
  %v7677 = vadd.f32 %v7676, %v7602
  %v7678 = vadd.f32 %v7677, %v7609
  %v7679 = vadd.f32 %v7678, %v7616
  %v7680 = vadd.f32 %v7679, %v7623
  %v7681 = vadd.f32 %v7680, %v7630
  %v7682 = vadd.f32 %v7681, %v7637
  %v7683 = vadd.f32 %v7682, %v7644
  %v7684 = vadd.f32 %v7683, %v7651
  %v7685 = vrot.slane %v7684, 4
  %v7686 = vadd.f32 %v7684, %v7685
  %v7687 = vrot.slane %v7686, 2
  %v7688 = vadd.f32 %v7686, %v7687
  %v7689 = vrot.slane %v7688, 1
  %v7690 = vadd.f32 %v7688, %v7689
  %v7691 = vadd.f32 %v7463, %v7470
  %v7692 = vadd.f32 %v7691, %v7477
  %v7693 = vadd.f32 %v7692, %v7484
  %v7694 = vadd.f32 %v7693, %v7491
  %v7695 = vadd.f32 %v7694, %v7498
  %v7696 = vadd.f32 %v7695, %v7505
  %v7697 = vadd.f32 %v7696, %v7512
  %v7698 = vadd.f32 %v7697, %v7519
  %v7699 = vadd.f32 %v7698, %v7526
  %v7700 = vadd.f32 %v7699, %v7533
  %v7701 = vadd.f32 %v7700, %v7540
  %v7702 = vadd.f32 %v7701, %v7547
  %v7703 = vadd.f32 %v7702, %v7554
  %v7704 = vadd.f32 %v7703, %v7561
  %v7705 = vadd.f32 %v7704, %v7568
  %v7706 = vadd.f32 %v7705, %v7575
  %v7707 = vadd.f32 %v7706, %v7582
  %v7708 = vadd.f32 %v7707, %v7589
  %v7709 = vadd.f32 %v7708, %v7596
  %v7710 = vadd.f32 %v7709, %v7603
  %v7711 = vadd.f32 %v7710, %v7610
  %v7712 = vadd.f32 %v7711, %v7617
  %v7713 = vadd.f32 %v7712, %v7624
  %v7714 = vadd.f32 %v7713, %v7631
  %v7715 = vadd.f32 %v7714, %v7638
  %v7716 = vadd.f32 %v7715, %v7645
  %v7717 = vadd.f32 %v7716, %v7652
  %v7718 = vrot.slane %v7717, 4
  %v7719 = vadd.f32 %v7717, %v7718
  %v7720 = vrot.slane %v7719, 2
  %v7721 = vadd.f32 %v7719, %v7720
  %v7722 = vrot.slane %v7721, 1
  %v7723 = vadd.f32 %v7721, %v7722
  %v7724 = vadd.f32 %v7464, %v7471
  %v7725 = vadd.f32 %v7724, %v7478
  %v7726 = vadd.f32 %v7725, %v7485
  %v7727 = vadd.f32 %v7726, %v7492
  %v7728 = vadd.f32 %v7727, %v7499
  %v7729 = vadd.f32 %v7728, %v7506
  %v7730 = vadd.f32 %v7729, %v7513
  %v7731 = vadd.f32 %v7730, %v7520
  %v7732 = vadd.f32 %v7731, %v7527
  %v7733 = vadd.f32 %v7732, %v7534
  %v7734 = vadd.f32 %v7733, %v7541
  %v7735 = vadd.f32 %v7734, %v7548
  %v7736 = vadd.f32 %v7735, %v7555
  %v7737 = vadd.f32 %v7736, %v7562
  %v7738 = vadd.f32 %v7737, %v7569
  %v7739 = vadd.f32 %v7738, %v7576
  %v7740 = vadd.f32 %v7739, %v7583
  %v7741 = vadd.f32 %v7740, %v7590
  %v7742 = vadd.f32 %v7741, %v7597
  %v7743 = vadd.f32 %v7742, %v7604
  %v7744 = vadd.f32 %v7743, %v7611
  %v7745 = vadd.f32 %v7744, %v7618
  %v7746 = vadd.f32 %v7745, %v7625
  %v7747 = vadd.f32 %v7746, %v7632
  %v7748 = vadd.f32 %v7747, %v7639
  %v7749 = vadd.f32 %v7748, %v7646
  %v7750 = vadd.f32 %v7749, %v7653
  %v7751 = vrot.slane %v7750, 4
  %v7752 = vadd.f32 %v7750, %v7751
  %v7753 = vrot.slane %v7752, 2
  %v7754 = vadd.f32 %v7752, %v7753
  %v7755 = vrot.slane %v7754, 1
  %v7756 = vadd.f32 %v7754, %v7755
  %v7757 = vadd.f32 %v7465, %v7472
  %v7758 = vadd.f32 %v7757, %v7479
  %v7759 = vadd.f32 %v7758, %v7486
  %v7760 = vadd.f32 %v7759, %v7493
  %v7761 = vadd.f32 %v7760, %v7500
  %v7762 = vadd.f32 %v7761, %v7507
  %v7763 = vadd.f32 %v7762, %v7514
  %v7764 = vadd.f32 %v7763, %v7521
  %v7765 = vadd.f32 %v7764, %v7528
  %v7766 = vadd.f32 %v7765, %v7535
  %v7767 = vadd.f32 %v7766, %v7542
  %v7768 = vadd.f32 %v7767, %v7549
  %v7769 = vadd.f32 %v7768, %v7556
  %v7770 = vadd.f32 %v7769, %v7563
  %v7771 = vadd.f32 %v7770, %v7570
  %v7772 = vadd.f32 %v7771, %v7577
  %v7773 = vadd.f32 %v7772, %v7584
  %v7774 = vadd.f32 %v7773, %v7591
  %v7775 = vadd.f32 %v7774, %v7598
  %v7776 = vadd.f32 %v7775, %v7605
  %v7777 = vadd.f32 %v7776, %v7612
  %v7778 = vadd.f32 %v7777, %v7619
  %v7779 = vadd.f32 %v7778, %v7626
  %v7780 = vadd.f32 %v7779, %v7633
  %v7781 = vadd.f32 %v7780, %v7640
  %v7782 = vadd.f32 %v7781, %v7647
  %v7783 = vadd.f32 %v7782, %v7654
  %v7784 = vrot.slane %v7783, 4
  %v7785 = vadd.f32 %v7783, %v7784
  %v7786 = vrot.slane %v7785, 2
  %v7787 = vadd.f32 %v7785, %v7786
  %v7788 = vrot.slane %v7787, 1
  %v7789 = vadd.f32 %v7787, %v7788
  %v7790 = vadd.f32 %v7466, %v7473
  %v7791 = vadd.f32 %v7790, %v7480
  %v7792 = vadd.f32 %v7791, %v7487
  %v7793 = vadd.f32 %v7792, %v7494
  %v7794 = vadd.f32 %v7793, %v7501
  %v7795 = vadd.f32 %v7794, %v7508
  %v7796 = vadd.f32 %v7795, %v7515
  %v7797 = vadd.f32 %v7796, %v7522
  %v7798 = vadd.f32 %v7797, %v7529
  %v7799 = vadd.f32 %v7798, %v7536
  %v7800 = vadd.f32 %v7799, %v7543
  %v7801 = vadd.f32 %v7800, %v7550
  %v7802 = vadd.f32 %v7801, %v7557
  %v7803 = vadd.f32 %v7802, %v7564
  %v7804 = vadd.f32 %v7803, %v7571
  %v7805 = vadd.f32 %v7804, %v7578
  %v7806 = vadd.f32 %v7805, %v7585
  %v7807 = vadd.f32 %v7806, %v7592
  %v7808 = vadd.f32 %v7807, %v7599
  %v7809 = vadd.f32 %v7808, %v7606
  %v7810 = vadd.f32 %v7809, %v7613
  %v7811 = vadd.f32 %v7810, %v7620
  %v7812 = vadd.f32 %v7811, %v7627
  %v7813 = vadd.f32 %v7812, %v7634
  %v7814 = vadd.f32 %v7813, %v7641
  %v7815 = vadd.f32 %v7814, %v7648
  %v7816 = vadd.f32 %v7815, %v7655
  %v7817 = vrot.slane %v7816, 4
  %v7818 = vadd.f32 %v7816, %v7817
  %v7819 = vrot.slane %v7818, 2
  %v7820 = vadd.f32 %v7818, %v7819
  %v7821 = vrot.slane %v7820, 1
  %v7822 = vadd.f32 %v7820, %v7821
  %v7823 = vadd.f32 %v7467, %v7474
  %v7824 = vadd.f32 %v7823, %v7481
  %v7825 = vadd.f32 %v7824, %v7488
  %v7826 = vadd.f32 %v7825, %v7495
  %v7827 = vadd.f32 %v7826, %v7502
  %v7828 = vadd.f32 %v7827, %v7509
  %v7829 = vadd.f32 %v7828, %v7516
  %v7830 = vadd.f32 %v7829, %v7523
  %v7831 = vadd.f32 %v7830, %v7530
  %v7832 = vadd.f32 %v7831, %v7537
  %v7833 = vadd.f32 %v7832, %v7544
  %v7834 = vadd.f32 %v7833, %v7551
  %v7835 = vadd.f32 %v7834, %v7558
  %v7836 = vadd.f32 %v7835, %v7565
  %v7837 = vadd.f32 %v7836, %v7572
  %v7838 = vadd.f32 %v7837, %v7579
  %v7839 = vadd.f32 %v7838, %v7586
  %v7840 = vadd.f32 %v7839, %v7593
  %v7841 = vadd.f32 %v7840, %v7600
  %v7842 = vadd.f32 %v7841, %v7607
  %v7843 = vadd.f32 %v7842, %v7614
  %v7844 = vadd.f32 %v7843, %v7621
  %v7845 = vadd.f32 %v7844, %v7628
  %v7846 = vadd.f32 %v7845, %v7635
  %v7847 = vadd.f32 %v7846, %v7642
  %v7848 = vadd.f32 %v7847, %v7649
  %v7849 = vadd.f32 %v7848, %v7656
  %v7850 = vrot.slane %v7849, 4
  %v7851 = vadd.f32 %v7849, %v7850
  %v7852 = vrot.slane %v7851, 2
  %v7853 = vadd.f32 %v7851, %v7852
  %v7854 = vrot.slane %v7853, 1
  %v7855 = vadd.f32 %v7853, %v7854
  %v7856 = vsel %vm23, %v7468, 0.0
  %v7857 = vsel %vm23, %v7475, 0.0
  %v7858 = vadd.f32 %v7856, %v7857
  %v7859 = vsel %vm23, %v7482, 0.0
  %v7860 = vadd.f32 %v7858, %v7859
  %v7861 = vsel %vm23, %v7489, 0.0
  %v7862 = vadd.f32 %v7860, %v7861
  %v7863 = vsel %vm23, %v7496, 0.0
  %v7864 = vadd.f32 %v7862, %v7863
  %v7865 = vsel %vm23, %v7503, 0.0
  %v7866 = vadd.f32 %v7864, %v7865
  %v7867 = vsel %vm23, %v7510, 0.0
  %v7868 = vadd.f32 %v7866, %v7867
  %v7869 = vsel %vm23, %v7517, 0.0
  %v7870 = vadd.f32 %v7868, %v7869
  %v7871 = vsel %vm23, %v7524, 0.0
  %v7872 = vadd.f32 %v7870, %v7871
  %v7873 = vsel %vm23, %v7531, 0.0
  %v7874 = vadd.f32 %v7872, %v7873
  %v7875 = vsel %vm23, %v7538, 0.0
  %v7876 = vadd.f32 %v7874, %v7875
  %v7877 = vsel %vm23, %v7545, 0.0
  %v7878 = vadd.f32 %v7876, %v7877
  %v7879 = vsel %vm23, %v7552, 0.0
  %v7880 = vadd.f32 %v7878, %v7879
  %v7881 = vsel %vm23, %v7559, 0.0
  %v7882 = vadd.f32 %v7880, %v7881
  %v7883 = vsel %vm23, %v7566, 0.0
  %v7884 = vadd.f32 %v7882, %v7883
  %v7885 = vsel %vm23, %v7573, 0.0
  %v7886 = vadd.f32 %v7884, %v7885
  %v7887 = vsel %vm23, %v7580, 0.0
  %v7888 = vadd.f32 %v7886, %v7887
  %v7889 = vsel %vm23, %v7587, 0.0
  %v7890 = vadd.f32 %v7888, %v7889
  %v7891 = vsel %vm23, %v7594, 0.0
  %v7892 = vadd.f32 %v7890, %v7891
  %v7893 = vsel %vm23, %v7601, 0.0
  %v7894 = vadd.f32 %v7892, %v7893
  %v7895 = vsel %vm23, %v7608, 0.0
  %v7896 = vadd.f32 %v7894, %v7895
  %v7897 = vsel %vm23, %v7615, 0.0
  %v7898 = vadd.f32 %v7896, %v7897
  %v7899 = vsel %vm23, %v7622, 0.0
  %v7900 = vadd.f32 %v7898, %v7899
  %v7901 = vsel %vm23, %v7629, 0.0
  %v7902 = vadd.f32 %v7900, %v7901
  %v7903 = vsel %vm23, %v7636, 0.0
  %v7904 = vadd.f32 %v7902, %v7903
  %v7905 = vsel %vm23, %v7643, 0.0
  %v7906 = vadd.f32 %v7904, %v7905
  %v7907 = vsel %vm23, %v7650, 0.0
  %v7908 = vadd.f32 %v7906, %v7907
  %v7909 = vsel %vm23, %v7657, 0.0
  %v7910 = vadd.f32 %v7908, %v7909
  %v7911 = vrot.slane %v7910, 4
  %v7912 = vadd.f32 %v7910, %v7911
  %v7913 = vrot.slane %v7912, 2
  %v7914 = vadd.f32 %v7912, %v7913
  %v7915 = vrot.slane %v7914, 1
  %v7916 = vadd.f32 %v7914, %v7915
  %v7917 = vmul.f32 %v7462, %v7462
  %v7918 = vmul.f32 %v7463, %v7463
  %v7919 = vmul.f32 %v7464, %v7464
  %v7920 = vmul.f32 %v7465, %v7465
  %v7921 = vmul.f32 %v7466, %v7466
  %v7922 = vmul.f32 %v7467, %v7467
  %v7923 = vmul.f32 %v7468, %v7468
  %v7924 = vmul.f32 %v7469, %v7469
  %v7925 = vmul.f32 %v7470, %v7470
  %v7926 = vmul.f32 %v7471, %v7471
  %v7927 = vmul.f32 %v7472, %v7472
  %v7928 = vmul.f32 %v7473, %v7473
  %v7929 = vmul.f32 %v7474, %v7474
  %v7930 = vmul.f32 %v7475, %v7475
  %v7931 = vmul.f32 %v7476, %v7476
  %v7932 = vmul.f32 %v7477, %v7477
  %v7933 = vmul.f32 %v7478, %v7478
  %v7934 = vmul.f32 %v7479, %v7479
  %v7935 = vmul.f32 %v7480, %v7480
  %v7936 = vmul.f32 %v7481, %v7481
  %v7937 = vmul.f32 %v7482, %v7482
  %v7938 = vmul.f32 %v7483, %v7483
  %v7939 = vmul.f32 %v7484, %v7484
  %v7940 = vmul.f32 %v7485, %v7485
  %v7941 = vmul.f32 %v7486, %v7486
  %v7942 = vmul.f32 %v7487, %v7487
  %v7943 = vmul.f32 %v7488, %v7488
  %v7944 = vmul.f32 %v7489, %v7489
  %v7945 = vmul.f32 %v7490, %v7490
  %v7946 = vmul.f32 %v7491, %v7491
  %v7947 = vmul.f32 %v7492, %v7492
  %v7948 = vmul.f32 %v7493, %v7493
  %v7949 = vmul.f32 %v7494, %v7494
  %v7950 = vmul.f32 %v7495, %v7495
  %v7951 = vmul.f32 %v7496, %v7496
  %v7952 = vmul.f32 %v7497, %v7497
  %v7953 = vmul.f32 %v7498, %v7498
  %v7954 = vmul.f32 %v7499, %v7499
  %v7955 = vmul.f32 %v7500, %v7500
  %v7956 = vmul.f32 %v7501, %v7501
  %v7957 = vmul.f32 %v7502, %v7502
  %v7958 = vmul.f32 %v7503, %v7503
  %v7959 = vmul.f32 %v7504, %v7504
  %v7960 = vmul.f32 %v7505, %v7505
  %v7961 = vmul.f32 %v7506, %v7506
  %v7962 = vmul.f32 %v7507, %v7507
  %v7963 = vmul.f32 %v7508, %v7508
  %v7964 = vmul.f32 %v7509, %v7509
  %v7965 = vmul.f32 %v7510, %v7510
  %v7966 = vmul.f32 %v7511, %v7511
  %v7967 = vmul.f32 %v7512, %v7512
  %v7968 = vmul.f32 %v7513, %v7513
  %v7969 = vmul.f32 %v7514, %v7514
  %v7970 = vmul.f32 %v7515, %v7515
  %v7971 = vmul.f32 %v7516, %v7516
  %v7972 = vmul.f32 %v7517, %v7517
  %v7973 = vmul.f32 %v7518, %v7518
  %v7974 = vmul.f32 %v7519, %v7519
  %v7975 = vmul.f32 %v7520, %v7520
  %v7976 = vmul.f32 %v7521, %v7521
  %v7977 = vmul.f32 %v7522, %v7522
  %v7978 = vmul.f32 %v7523, %v7523
  %v7979 = vmul.f32 %v7524, %v7524
  %v7980 = vmul.f32 %v7525, %v7525
  %v7981 = vmul.f32 %v7526, %v7526
  %v7982 = vmul.f32 %v7527, %v7527
  %v7983 = vmul.f32 %v7528, %v7528
  %v7984 = vmul.f32 %v7529, %v7529
  %v7985 = vmul.f32 %v7530, %v7530
  %v7986 = vmul.f32 %v7531, %v7531
  %v7987 = vmul.f32 %v7532, %v7532
  %v7988 = vmul.f32 %v7533, %v7533
  %v7989 = vmul.f32 %v7534, %v7534
  %v7990 = vmul.f32 %v7535, %v7535
  %v7991 = vmul.f32 %v7536, %v7536
  %v7992 = vmul.f32 %v7537, %v7537
  %v7993 = vmul.f32 %v7538, %v7538
  %v7994 = vmul.f32 %v7539, %v7539
  %v7995 = vmul.f32 %v7540, %v7540
  %v7996 = vmul.f32 %v7541, %v7541
  %v7997 = vmul.f32 %v7542, %v7542
  %v7998 = vmul.f32 %v7543, %v7543
  %v7999 = vmul.f32 %v7544, %v7544
  %v8000 = vmul.f32 %v7545, %v7545
  %v8001 = vmul.f32 %v7546, %v7546
  %v8002 = vmul.f32 %v7547, %v7547
  %v8003 = vmul.f32 %v7548, %v7548
  %v8004 = vmul.f32 %v7549, %v7549
  %v8005 = vmul.f32 %v7550, %v7550
  %v8006 = vmul.f32 %v7551, %v7551
  %v8007 = vmul.f32 %v7552, %v7552
  %v8008 = vmul.f32 %v7553, %v7553
  %v8009 = vmul.f32 %v7554, %v7554
  %v8010 = vmul.f32 %v7555, %v7555
  %v8011 = vmul.f32 %v7556, %v7556
  %v8012 = vmul.f32 %v7557, %v7557
  %v8013 = vmul.f32 %v7558, %v7558
  %v8014 = vmul.f32 %v7559, %v7559
  %v8015 = vmul.f32 %v7560, %v7560
  %v8016 = vmul.f32 %v7561, %v7561
  %v8017 = vmul.f32 %v7562, %v7562
  %v8018 = vmul.f32 %v7563, %v7563
  %v8019 = vmul.f32 %v7564, %v7564
  %v8020 = vmul.f32 %v7565, %v7565
  %v8021 = vmul.f32 %v7566, %v7566
  %v8022 = vmul.f32 %v7567, %v7567
  %v8023 = vmul.f32 %v7568, %v7568
  %v8024 = vmul.f32 %v7569, %v7569
  %v8025 = vmul.f32 %v7570, %v7570
  %v8026 = vmul.f32 %v7571, %v7571
  %v8027 = vmul.f32 %v7572, %v7572
  %v8028 = vmul.f32 %v7573, %v7573
  %v8029 = vmul.f32 %v7574, %v7574
  %v8030 = vmul.f32 %v7575, %v7575
  %v8031 = vmul.f32 %v7576, %v7576
  %v8032 = vmul.f32 %v7577, %v7577
  %v8033 = vmul.f32 %v7578, %v7578
  %v8034 = vmul.f32 %v7579, %v7579
  %v8035 = vmul.f32 %v7580, %v7580
  %v8036 = vmul.f32 %v7581, %v7581
  %v8037 = vmul.f32 %v7582, %v7582
  %v8038 = vmul.f32 %v7583, %v7583
  %v8039 = vmul.f32 %v7584, %v7584
  %v8040 = vmul.f32 %v7585, %v7585
  %v8041 = vmul.f32 %v7586, %v7586
  %v8042 = vmul.f32 %v7587, %v7587
  %v8043 = vmul.f32 %v7588, %v7588
  %v8044 = vmul.f32 %v7589, %v7589
  %v8045 = vmul.f32 %v7590, %v7590
  %v8046 = vmul.f32 %v7591, %v7591
  %v8047 = vmul.f32 %v7592, %v7592
  %v8048 = vmul.f32 %v7593, %v7593
  %v8049 = vmul.f32 %v7594, %v7594
  %v8050 = vmul.f32 %v7595, %v7595
  %v8051 = vmul.f32 %v7596, %v7596
  %v8052 = vmul.f32 %v7597, %v7597
  %v8053 = vmul.f32 %v7598, %v7598
  %v8054 = vmul.f32 %v7599, %v7599
  %v8055 = vmul.f32 %v7600, %v7600
  %v8056 = vmul.f32 %v7601, %v7601
  %v8057 = vmul.f32 %v7602, %v7602
  %v8058 = vmul.f32 %v7603, %v7603
  %v8059 = vmul.f32 %v7604, %v7604
  %v8060 = vmul.f32 %v7605, %v7605
  %v8061 = vmul.f32 %v7606, %v7606
  %v8062 = vmul.f32 %v7607, %v7607
  %v8063 = vmul.f32 %v7608, %v7608
  %v8064 = vmul.f32 %v7609, %v7609
  %v8065 = vmul.f32 %v7610, %v7610
  %v8066 = vmul.f32 %v7611, %v7611
  %v8067 = vmul.f32 %v7612, %v7612
  %v8068 = vmul.f32 %v7613, %v7613
  %v8069 = vmul.f32 %v7614, %v7614
  %v8070 = vmul.f32 %v7615, %v7615
  %v8071 = vmul.f32 %v7616, %v7616
  %v8072 = vmul.f32 %v7617, %v7617
  %v8073 = vmul.f32 %v7618, %v7618
  %v8074 = vmul.f32 %v7619, %v7619
  %v8075 = vmul.f32 %v7620, %v7620
  %v8076 = vmul.f32 %v7621, %v7621
  %v8077 = vmul.f32 %v7622, %v7622
  %v8078 = vmul.f32 %v7623, %v7623
  %v8079 = vmul.f32 %v7624, %v7624
  %v8080 = vmul.f32 %v7625, %v7625
  %v8081 = vmul.f32 %v7626, %v7626
  %v8082 = vmul.f32 %v7627, %v7627
  %v8083 = vmul.f32 %v7628, %v7628
  %v8084 = vmul.f32 %v7629, %v7629
  %v8085 = vmul.f32 %v7630, %v7630
  %v8086 = vmul.f32 %v7631, %v7631
  %v8087 = vmul.f32 %v7632, %v7632
  %v8088 = vmul.f32 %v7633, %v7633
  %v8089 = vmul.f32 %v7634, %v7634
  %v8090 = vmul.f32 %v7635, %v7635
  %v8091 = vmul.f32 %v7636, %v7636
  %v8092 = vmul.f32 %v7637, %v7637
  %v8093 = vmul.f32 %v7638, %v7638
  %v8094 = vmul.f32 %v7639, %v7639
  %v8095 = vmul.f32 %v7640, %v7640
  %v8096 = vmul.f32 %v7641, %v7641
  %v8097 = vmul.f32 %v7642, %v7642
  %v8098 = vmul.f32 %v7643, %v7643
  %v8099 = vmul.f32 %v7644, %v7644
  %v8100 = vmul.f32 %v7645, %v7645
  %v8101 = vmul.f32 %v7646, %v7646
  %v8102 = vmul.f32 %v7647, %v7647
  %v8103 = vmul.f32 %v7648, %v7648
  %v8104 = vmul.f32 %v7649, %v7649
  %v8105 = vmul.f32 %v7650, %v7650
  %v8106 = vmul.f32 %v7651, %v7651
  %v8107 = vmul.f32 %v7652, %v7652
  %v8108 = vmul.f32 %v7653, %v7653
  %v8109 = vmul.f32 %v7654, %v7654
  %v8110 = vmul.f32 %v7655, %v7655
  %v8111 = vmul.f32 %v7656, %v7656
  %v8112 = vmul.f32 %v7657, %v7657
  %v8113 = vadd.f32 %v7917, %v7924
  %v8114 = vadd.f32 %v8113, %v7931
  %v8115 = vadd.f32 %v8114, %v7938
  %v8116 = vadd.f32 %v8115, %v7945
  %v8117 = vadd.f32 %v8116, %v7952
  %v8118 = vadd.f32 %v8117, %v7959
  %v8119 = vadd.f32 %v8118, %v7966
  %v8120 = vadd.f32 %v8119, %v7973
  %v8121 = vadd.f32 %v8120, %v7980
  %v8122 = vadd.f32 %v8121, %v7987
  %v8123 = vadd.f32 %v8122, %v7994
  %v8124 = vadd.f32 %v8123, %v8001
  %v8125 = vadd.f32 %v8124, %v8008
  %v8126 = vadd.f32 %v8125, %v8015
  %v8127 = vadd.f32 %v8126, %v8022
  %v8128 = vadd.f32 %v8127, %v8029
  %v8129 = vadd.f32 %v8128, %v8036
  %v8130 = vadd.f32 %v8129, %v8043
  %v8131 = vadd.f32 %v8130, %v8050
  %v8132 = vadd.f32 %v8131, %v8057
  %v8133 = vadd.f32 %v8132, %v8064
  %v8134 = vadd.f32 %v8133, %v8071
  %v8135 = vadd.f32 %v8134, %v8078
  %v8136 = vadd.f32 %v8135, %v8085
  %v8137 = vadd.f32 %v8136, %v8092
  %v8138 = vadd.f32 %v8137, %v8099
  %v8139 = vadd.f32 %v8138, %v8106
  %v8140 = vrot.slane %v8139, 4
  %v8141 = vadd.f32 %v8139, %v8140
  %v8142 = vrot.slane %v8141, 2
  %v8143 = vadd.f32 %v8141, %v8142
  %v8144 = vrot.slane %v8143, 1
  %v8145 = vadd.f32 %v8143, %v8144
  %v8146 = vadd.f32 %v7918, %v7925
  %v8147 = vadd.f32 %v8146, %v7932
  %v8148 = vadd.f32 %v8147, %v7939
  %v8149 = vadd.f32 %v8148, %v7946
  %v8150 = vadd.f32 %v8149, %v7953
  %v8151 = vadd.f32 %v8150, %v7960
  %v8152 = vadd.f32 %v8151, %v7967
  %v8153 = vadd.f32 %v8152, %v7974
  %v8154 = vadd.f32 %v8153, %v7981
  %v8155 = vadd.f32 %v8154, %v7988
  %v8156 = vadd.f32 %v8155, %v7995
  %v8157 = vadd.f32 %v8156, %v8002
  %v8158 = vadd.f32 %v8157, %v8009
  %v8159 = vadd.f32 %v8158, %v8016
  %v8160 = vadd.f32 %v8159, %v8023
  %v8161 = vadd.f32 %v8160, %v8030
  %v8162 = vadd.f32 %v8161, %v8037
  %v8163 = vadd.f32 %v8162, %v8044
  %v8164 = vadd.f32 %v8163, %v8051
  %v8165 = vadd.f32 %v8164, %v8058
  %v8166 = vadd.f32 %v8165, %v8065
  %v8167 = vadd.f32 %v8166, %v8072
  %v8168 = vadd.f32 %v8167, %v8079
  %v8169 = vadd.f32 %v8168, %v8086
  %v8170 = vadd.f32 %v8169, %v8093
  %v8171 = vadd.f32 %v8170, %v8100
  %v8172 = vadd.f32 %v8171, %v8107
  %v8173 = vrot.slane %v8172, 4
  %v8174 = vadd.f32 %v8172, %v8173
  %v8175 = vrot.slane %v8174, 2
  %v8176 = vadd.f32 %v8174, %v8175
  %v8177 = vrot.slane %v8176, 1
  %v8178 = vadd.f32 %v8176, %v8177
  %v8179 = vadd.f32 %v7919, %v7926
  %v8180 = vadd.f32 %v8179, %v7933
  %v8181 = vadd.f32 %v8180, %v7940
  %v8182 = vadd.f32 %v8181, %v7947
  %v8183 = vadd.f32 %v8182, %v7954
  %v8184 = vadd.f32 %v8183, %v7961
  %v8185 = vadd.f32 %v8184, %v7968
  %v8186 = vadd.f32 %v8185, %v7975
  %v8187 = vadd.f32 %v8186, %v7982
  %v8188 = vadd.f32 %v8187, %v7989
  %v8189 = vadd.f32 %v8188, %v7996
  %v8190 = vadd.f32 %v8189, %v8003
  %v8191 = vadd.f32 %v8190, %v8010
  %v8192 = vadd.f32 %v8191, %v8017
  %v8193 = vadd.f32 %v8192, %v8024
  %v8194 = vadd.f32 %v8193, %v8031
  %v8195 = vadd.f32 %v8194, %v8038
  %v8196 = vadd.f32 %v8195, %v8045
  %v8197 = vadd.f32 %v8196, %v8052
  %v8198 = vadd.f32 %v8197, %v8059
  %v8199 = vadd.f32 %v8198, %v8066
  %v8200 = vadd.f32 %v8199, %v8073
  %v8201 = vadd.f32 %v8200, %v8080
  %v8202 = vadd.f32 %v8201, %v8087
  %v8203 = vadd.f32 %v8202, %v8094
  %v8204 = vadd.f32 %v8203, %v8101
  %v8205 = vadd.f32 %v8204, %v8108
  %v8206 = vrot.slane %v8205, 4
  %v8207 = vadd.f32 %v8205, %v8206
  %v8208 = vrot.slane %v8207, 2
  %v8209 = vadd.f32 %v8207, %v8208
  %v8210 = vrot.slane %v8209, 1
  %v8211 = vadd.f32 %v8209, %v8210
  %v8212 = vadd.f32 %v7920, %v7927
  %v8213 = vadd.f32 %v8212, %v7934
  %v8214 = vadd.f32 %v8213, %v7941
  %v8215 = vadd.f32 %v8214, %v7948
  %v8216 = vadd.f32 %v8215, %v7955
  %v8217 = vadd.f32 %v8216, %v7962
  %v8218 = vadd.f32 %v8217, %v7969
  %v8219 = vadd.f32 %v8218, %v7976
  %v8220 = vadd.f32 %v8219, %v7983
  %v8221 = vadd.f32 %v8220, %v7990
  %v8222 = vadd.f32 %v8221, %v7997
  %v8223 = vadd.f32 %v8222, %v8004
  %v8224 = vadd.f32 %v8223, %v8011
  %v8225 = vadd.f32 %v8224, %v8018
  %v8226 = vadd.f32 %v8225, %v8025
  %v8227 = vadd.f32 %v8226, %v8032
  %v8228 = vadd.f32 %v8227, %v8039
  %v8229 = vadd.f32 %v8228, %v8046
  %v8230 = vadd.f32 %v8229, %v8053
  %v8231 = vadd.f32 %v8230, %v8060
  %v8232 = vadd.f32 %v8231, %v8067
  %v8233 = vadd.f32 %v8232, %v8074
  %v8234 = vadd.f32 %v8233, %v8081
  %v8235 = vadd.f32 %v8234, %v8088
  %v8236 = vadd.f32 %v8235, %v8095
  %v8237 = vadd.f32 %v8236, %v8102
  %v8238 = vadd.f32 %v8237, %v8109
  %v8239 = vrot.slane %v8238, 4
  %v8240 = vadd.f32 %v8238, %v8239
  %v8241 = vrot.slane %v8240, 2
  %v8242 = vadd.f32 %v8240, %v8241
  %v8243 = vrot.slane %v8242, 1
  %v8244 = vadd.f32 %v8242, %v8243
  %v8245 = vadd.f32 %v7921, %v7928
  %v8246 = vadd.f32 %v8245, %v7935
  %v8247 = vadd.f32 %v8246, %v7942
  %v8248 = vadd.f32 %v8247, %v7949
  %v8249 = vadd.f32 %v8248, %v7956
  %v8250 = vadd.f32 %v8249, %v7963
  %v8251 = vadd.f32 %v8250, %v7970
  %v8252 = vadd.f32 %v8251, %v7977
  %v8253 = vadd.f32 %v8252, %v7984
  %v8254 = vadd.f32 %v8253, %v7991
  %v8255 = vadd.f32 %v8254, %v7998
  %v8256 = vadd.f32 %v8255, %v8005
  %v8257 = vadd.f32 %v8256, %v8012
  %v8258 = vadd.f32 %v8257, %v8019
  %v8259 = vadd.f32 %v8258, %v8026
  %v8260 = vadd.f32 %v8259, %v8033
  %v8261 = vadd.f32 %v8260, %v8040
  %v8262 = vadd.f32 %v8261, %v8047
  %v8263 = vadd.f32 %v8262, %v8054
  %v8264 = vadd.f32 %v8263, %v8061
  %v8265 = vadd.f32 %v8264, %v8068
  %v8266 = vadd.f32 %v8265, %v8075
  %v8267 = vadd.f32 %v8266, %v8082
  %v8268 = vadd.f32 %v8267, %v8089
  %v8269 = vadd.f32 %v8268, %v8096
  %v8270 = vadd.f32 %v8269, %v8103
  %v8271 = vadd.f32 %v8270, %v8110
  %v8272 = vrot.slane %v8271, 4
  %v8273 = vadd.f32 %v8271, %v8272
  %v8274 = vrot.slane %v8273, 2
  %v8275 = vadd.f32 %v8273, %v8274
  %v8276 = vrot.slane %v8275, 1
  %v8277 = vadd.f32 %v8275, %v8276
  %v8278 = vadd.f32 %v7922, %v7929
  %v8279 = vadd.f32 %v8278, %v7936
  %v8280 = vadd.f32 %v8279, %v7943
  %v8281 = vadd.f32 %v8280, %v7950
  %v8282 = vadd.f32 %v8281, %v7957
  %v8283 = vadd.f32 %v8282, %v7964
  %v8284 = vadd.f32 %v8283, %v7971
  %v8285 = vadd.f32 %v8284, %v7978
  %v8286 = vadd.f32 %v8285, %v7985
  %v8287 = vadd.f32 %v8286, %v7992
  %v8288 = vadd.f32 %v8287, %v7999
  %v8289 = vadd.f32 %v8288, %v8006
  %v8290 = vadd.f32 %v8289, %v8013
  %v8291 = vadd.f32 %v8290, %v8020
  %v8292 = vadd.f32 %v8291, %v8027
  %v8293 = vadd.f32 %v8292, %v8034
  %v8294 = vadd.f32 %v8293, %v8041
  %v8295 = vadd.f32 %v8294, %v8048
  %v8296 = vadd.f32 %v8295, %v8055
  %v8297 = vadd.f32 %v8296, %v8062
  %v8298 = vadd.f32 %v8297, %v8069
  %v8299 = vadd.f32 %v8298, %v8076
  %v8300 = vadd.f32 %v8299, %v8083
  %v8301 = vadd.f32 %v8300, %v8090
  %v8302 = vadd.f32 %v8301, %v8097
  %v8303 = vadd.f32 %v8302, %v8104
  %v8304 = vadd.f32 %v8303, %v8111
  %v8305 = vrot.slane %v8304, 4
  %v8306 = vadd.f32 %v8304, %v8305
  %v8307 = vrot.slane %v8306, 2
  %v8308 = vadd.f32 %v8306, %v8307
  %v8309 = vrot.slane %v8308, 1
  %v8310 = vadd.f32 %v8308, %v8309
  %v8311 = vsel %vm23, %v7923, 0.0
  %v8312 = vsel %vm23, %v7930, 0.0
  %v8313 = vadd.f32 %v8311, %v8312
  %v8314 = vsel %vm23, %v7937, 0.0
  %v8315 = vadd.f32 %v8313, %v8314
  %v8316 = vsel %vm23, %v7944, 0.0
  %v8317 = vadd.f32 %v8315, %v8316
  %v8318 = vsel %vm23, %v7951, 0.0
  %v8319 = vadd.f32 %v8317, %v8318
  %v8320 = vsel %vm23, %v7958, 0.0
  %v8321 = vadd.f32 %v8319, %v8320
  %v8322 = vsel %vm23, %v7965, 0.0
  %v8323 = vadd.f32 %v8321, %v8322
  %v8324 = vsel %vm23, %v7972, 0.0
  %v8325 = vadd.f32 %v8323, %v8324
  %v8326 = vsel %vm23, %v7979, 0.0
  %v8327 = vadd.f32 %v8325, %v8326
  %v8328 = vsel %vm23, %v7986, 0.0
  %v8329 = vadd.f32 %v8327, %v8328
  %v8330 = vsel %vm23, %v7993, 0.0
  %v8331 = vadd.f32 %v8329, %v8330
  %v8332 = vsel %vm23, %v8000, 0.0
  %v8333 = vadd.f32 %v8331, %v8332
  %v8334 = vsel %vm23, %v8007, 0.0
  %v8335 = vadd.f32 %v8333, %v8334
  %v8336 = vsel %vm23, %v8014, 0.0
  %v8337 = vadd.f32 %v8335, %v8336
  %v8338 = vsel %vm23, %v8021, 0.0
  %v8339 = vadd.f32 %v8337, %v8338
  %v8340 = vsel %vm23, %v8028, 0.0
  %v8341 = vadd.f32 %v8339, %v8340
  %v8342 = vsel %vm23, %v8035, 0.0
  %v8343 = vadd.f32 %v8341, %v8342
  %v8344 = vsel %vm23, %v8042, 0.0
  %v8345 = vadd.f32 %v8343, %v8344
  %v8346 = vsel %vm23, %v8049, 0.0
  %v8347 = vadd.f32 %v8345, %v8346
  %v8348 = vsel %vm23, %v8056, 0.0
  %v8349 = vadd.f32 %v8347, %v8348
  %v8350 = vsel %vm23, %v8063, 0.0
  %v8351 = vadd.f32 %v8349, %v8350
  %v8352 = vsel %vm23, %v8070, 0.0
  %v8353 = vadd.f32 %v8351, %v8352
  %v8354 = vsel %vm23, %v8077, 0.0
  %v8355 = vadd.f32 %v8353, %v8354
  %v8356 = vsel %vm23, %v8084, 0.0
  %v8357 = vadd.f32 %v8355, %v8356
  %v8358 = vsel %vm23, %v8091, 0.0
  %v8359 = vadd.f32 %v8357, %v8358
  %v8360 = vsel %vm23, %v8098, 0.0
  %v8361 = vadd.f32 %v8359, %v8360
  %v8362 = vsel %vm23, %v8105, 0.0
  %v8363 = vadd.f32 %v8361, %v8362
  %v8364 = vsel %vm23, %v8112, 0.0
  %v8365 = vadd.f32 %v8363, %v8364
  %v8366 = vrot.slane %v8365, 4
  %v8367 = vadd.f32 %v8365, %v8366
  %v8368 = vrot.slane %v8367, 2
  %v8369 = vadd.f32 %v8367, %v8368
  %v8370 = vrot.slane %v8369, 1
  %v8371 = vadd.f32 %v8369, %v8370
  %v8372 = vmul.f32 %v7690, 0.0051020407
  %v8373 = vmul.f32 %v7723, 0.0051020407
  %v8374 = vmul.f32 %v7756, 0.0051020407
  %v8375 = vmul.f32 %v7789, 0.0051020407
  %v8376 = vmul.f32 %v7822, 0.0051020407
  %v8377 = vmul.f32 %v7855, 0.0051020407
  %v8378 = vmul.f32 %v7916, 0.0051020407
  %v8379 = vmul.f32 %v8145, 0.0051020407
  %v8380 = vmul.f32 %v8178, 0.0051020407
  %v8381 = vmul.f32 %v8211, 0.0051020407
  %v8382 = vmul.f32 %v8244, 0.0051020407
  %v8383 = vmul.f32 %v8277, 0.0051020407
  %v8384 = vmul.f32 %v8310, 0.0051020407
  %v8385 = vmul.f32 %v8371, 0.0051020407
  %v8386 = vmul.f32 %v8372, %v8372
  %v8387 = vmul.f32 %v8373, %v8373
  %v8388 = vmul.f32 %v8374, %v8374
  %v8389 = vmul.f32 %v8375, %v8375
  %v8390 = vmul.f32 %v8376, %v8376
  %v8391 = vmul.f32 %v8377, %v8377
  %v8392 = vmul.f32 %v8378, %v8378
  %v8393 = vsub.f32 %v8379, %v8386
  %v8394 = vsub.f32 %v8380, %v8387
  %v8395 = vsub.f32 %v8381, %v8388
  %v8396 = vsub.f32 %v8382, %v8389
  %v8397 = vsub.f32 %v8383, %v8390
  %v8398 = vsub.f32 %v8384, %v8391
  %v8399 = vsub.f32 %v8385, %v8392
  %v8400 = vmax.f32 %v8393, 0.0
  %v8401 = vmax.f32 %v8394, 0.0
  %v8402 = vmax.f32 %v8395, 0.0
  %v8403 = vmax.f32 %v8396, 0.0
  %v8404 = vmax.f32 %v8397, 0.0
  %v8405 = vmax.f32 %v8398, 0.0
  %v8406 = vmax.f32 %v8399, 0.0
  %v8407 = vld [vmem:[%s2] sm:$0x7f]
  %v8408 = vld [vmem:[%s3] sm:$0x7f]
  %v8409 = vadd.f32 %v8400, 0.001
  %v8410 = vadd.f32 %v8401, 0.001
  %v8411 = vadd.f32 %v8402, 0.001
  %v8412 = vadd.f32 %v8403, 0.001
  %v8413 = vadd.f32 %v8404, 0.001
  %v8414 = vadd.f32 %v8405, 0.001
  %v8415 = vadd.f32 %v8406, 0.001
  %v8416 = vrsqrt.pop %v8409
  %v8417 = vrsqrt.pop %v8410
  %v8418 = vrsqrt.pop %v8411
  %v8419 = vrsqrt.pop %v8412
  %v8420 = vrsqrt.pop %v8413
  %v8421 = vrsqrt.pop %v8414
  %v8422 = vrsqrt.pop %v8415
  %v8424 = vlaneseq
  %v8425 = vshrl.u32 %v8424, 7
  %v8426 = vsub.s32 0, %v8425
  %v8427 = vrot.slane %v8407, %v8426
  %v8428 = vlaneseq
  %v8429 = vshrl.u32 %v8428, 7
  %v8430 = vsub.s32 1, %v8429
  %v8431 = vrot.slane %v8407, %v8430
  %v8432 = vlaneseq
  %v8433 = vshrl.u32 %v8432, 7
  %v8434 = vsub.s32 2, %v8433
  %v8435 = vrot.slane %v8407, %v8434
  %v8436 = vlaneseq
  %v8437 = vshrl.u32 %v8436, 7
  %v8438 = vsub.s32 3, %v8437
  %v8439 = vrot.slane %v8407, %v8438
  %v8440 = vlaneseq
  %v8441 = vshrl.u32 %v8440, 7
  %v8442 = vsub.s32 4, %v8441
  %v8443 = vrot.slane %v8407, %v8442
  %v8444 = vlaneseq
  %v8445 = vshrl.u32 %v8444, 7
  %v8446 = vsub.s32 5, %v8445
  %v8447 = vrot.slane %v8407, %v8446
  %v8448 = vlaneseq
  %v8449 = vshrl.u32 %v8448, 7
  %v8450 = vsub.s32 6, %v8449
  %v8451 = vrot.slane %v8407, %v8450
  %v8459 = vmul.f32 %v8416, %v8427
  %v8460 = vmul.f32 %v8417, %v8431
  %v8461 = vmul.f32 %v8418, %v8435
  %v8462 = vmul.f32 %v8419, %v8439
  %v8463 = vmul.f32 %v8420, %v8443
  %v8464 = vmul.f32 %v8421, %v8447
  %v8465 = vmul.f32 %v8422, %v8451
  %v8466 = vmul.f32 %v8372, %v8459
  %v8467 = vmul.f32 %v8373, %v8460
  %v8468 = vmul.f32 %v8374, %v8461
  %v8469 = vmul.f32 %v8375, %v8462
  %v8470 = vmul.f32 %v8376, %v8463
  %v8471 = vmul.f32 %v8377, %v8464
  %v8472 = vmul.f32 %v8378, %v8465
  %v8480 = vcombine.low %v8466, %v8467
  %v8481 = vcombine.low %v8468, %v8469
  %v8482 = vcombine.low %v8470, %v8471
  %v8484 = vunpack.c.l.s4 1966171168
  %v8485 = vunpack.c.0.s8 %v8484
  %v8486 = vlaneseq
  %v8487 = vshrl.u32 %v8486, 7
  %v8488 = vsub.s32 %v8485, %v8487
  %v8489 = vrot.slane %v8480, %v8488
  %v8491 = vunpack.c.l.s4 1966171168
  %v8492 = vunpack.c.0.s8 %v8491
  %v8493 = vlaneseq
  %v8494 = vshrl.u32 %v8493, 7
  %v8495 = vsub.s32 %v8492, %v8494
  %v8496 = vrot.slane %v8481, %v8495
  %v8498 = vunpack.c.l.s4 1966171168
  %v8499 = vunpack.c.0.s8 %v8498
  %v8500 = vlaneseq
  %v8501 = vshrl.u32 %v8500, 7
  %v8502 = vsub.s32 %v8499, %v8501
  %v8503 = vrot.slane %v8482, %v8502
  %v8505 = vunpack.c.l.s4 1966171168
  %v8506 = vunpack.c.0.s8 %v8505
  %v8507 = vlaneseq
  %v8508 = vshrl.u32 %v8507, 7
  %v8509 = vsub.s32 %v8506, %v8508
  %v8510 = vrot.slane %v8472, %v8509
  %v8511 = vcombine.low %v8489, %v8496
  %v8512 = vcombine.low %v8503, %v8510
  %v8514 = vunpack.c.l.s4 1966171168
  %v8515 = vunpack.c.0.s8 %v8514
  %v8516 = vlaneseq
  %v8517 = vshrl.u32 %v8516, 7
  %v8518 = vsub.s32 %v8515, %v8517
  %v8519 = vrot.slane %v8511, %v8518
  %v8521 = vunpack.c.l.s4 1966171168
  %v8522 = vunpack.c.0.s8 %v8521
  %v8523 = vlaneseq
  %v8524 = vshrl.u32 %v8523, 7
  %v8525 = vsub.s32 %v8522, %v8524
  %v8526 = vrot.slane %v8512, %v8525
  %v8527 = vcombine.low %v8519, %v8526
  %v8529 = vsub.f32 %v8408, %v8527
  %v8530 = vlaneseq
  %v8531 = vshrl.u32 %v8530, 7
  %v8532 = vsub.s32 0, %v8531
  %v8533 = vrot.slane %v8459, %v8532
  %v8534 = vlaneseq
  %v8535 = vshrl.u32 %v8534, 7
  %v8536 = vsub.s32 0, %v8535
  %v8537 = vrot.slane %v8460, %v8536
  %v8538 = vlaneseq
  %v8539 = vshrl.u32 %v8538, 7
  %v8540 = vsub.s32 0, %v8539
  %v8541 = vrot.slane %v8461, %v8540
  %v8542 = vlaneseq
  %v8543 = vshrl.u32 %v8542, 7
  %v8544 = vsub.s32 0, %v8543
  %v8545 = vrot.slane %v8462, %v8544
  %v8546 = vlaneseq
  %v8547 = vshrl.u32 %v8546, 7
  %v8548 = vsub.s32 0, %v8547
  %v8549 = vrot.slane %v8463, %v8548
  %v8550 = vlaneseq
  %v8551 = vshrl.u32 %v8550, 7
  %v8552 = vsub.s32 0, %v8551
  %v8553 = vrot.slane %v8464, %v8552
  %v8554 = vlaneseq
  %v8555 = vshrl.u32 %v8554, 7
  %v8556 = vsub.s32 0, %v8555
  %v8557 = vrot.slane %v8465, %v8556
  %v8558 = vmul.f32 %v7259, %v8533
  %v8559 = vmul.f32 %v7260, %v8537
  %v8560 = vmul.f32 %v7261, %v8541
  %v8561 = vmul.f32 %v7262, %v8545
  %v8562 = vmul.f32 %v7263, %v8549
  %v8563 = vmul.f32 %v7264, %v8553
  %v8564 = vmul.f32 %v7265, %v8557
  %v8565 = vmul.f32 %v7266, %v8533
  %v8566 = vmul.f32 %v7267, %v8537
  %v8567 = vmul.f32 %v7268, %v8541
  %v8568 = vmul.f32 %v7269, %v8545
  %v8569 = vmul.f32 %v7270, %v8549
  %v8570 = vmul.f32 %v7271, %v8553
  %v8571 = vmul.f32 %v7272, %v8557
  %v8572 = vmul.f32 %v7273, %v8533
  %v8573 = vmul.f32 %v7274, %v8537
  %v8574 = vmul.f32 %v7275, %v8541
  %v8575 = vmul.f32 %v7276, %v8545
  %v8576 = vmul.f32 %v7277, %v8549
  %v8577 = vmul.f32 %v7278, %v8553
  %v8578 = vmul.f32 %v7279, %v8557
  %v8579 = vmul.f32 %v7280, %v8533
  %v8580 = vmul.f32 %v7281, %v8537
  %v8581 = vmul.f32 %v7282, %v8541
  %v8582 = vmul.f32 %v7283, %v8545
  %v8583 = vmul.f32 %v7284, %v8549
  %v8584 = vmul.f32 %v7285, %v8553
  %v8585 = vmul.f32 %v7286, %v8557
  %v8586 = vmul.f32 %v7287, %v8533
  %v8587 = vmul.f32 %v7288, %v8537
  %v8588 = vmul.f32 %v7289, %v8541
  %v8589 = vmul.f32 %v7290, %v8545
  %v8590 = vmul.f32 %v7291, %v8549
  %v8591 = vmul.f32 %v7292, %v8553
  %v8592 = vmul.f32 %v7293, %v8557
  %v8593 = vmul.f32 %v7294, %v8533
  %v8594 = vmul.f32 %v7295, %v8537
  %v8595 = vmul.f32 %v7296, %v8541
  %v8596 = vmul.f32 %v7297, %v8545
  %v8597 = vmul.f32 %v7298, %v8549
  %v8598 = vmul.f32 %v7299, %v8553
  %v8599 = vmul.f32 %v7300, %v8557
  %v8600 = vmul.f32 %v7301, %v8533
  %v8601 = vmul.f32 %v7302, %v8537
  %v8602 = vmul.f32 %v7303, %v8541
  %v8603 = vmul.f32 %v7304, %v8545
  %v8604 = vmul.f32 %v7305, %v8549
  %v8605 = vmul.f32 %v7306, %v8553
  %v8606 = vmul.f32 %v7307, %v8557
  %v8607 = vmul.f32 %v7308, %v8533
  %v8608 = vmul.f32 %v7309, %v8537
  %v8609 = vmul.f32 %v7310, %v8541
  %v8610 = vmul.f32 %v7311, %v8545
  %v8611 = vmul.f32 %v7312, %v8549
  %v8612 = vmul.f32 %v7313, %v8553
  %v8613 = vmul.f32 %v7314, %v8557
  %v8614 = vmul.f32 %v7315, %v8533
  %v8615 = vmul.f32 %v7316, %v8537
  %v8616 = vmul.f32 %v7317, %v8541
  %v8617 = vmul.f32 %v7318, %v8545
  %v8618 = vmul.f32 %v7319, %v8549
  %v8619 = vmul.f32 %v7320, %v8553
  %v8620 = vmul.f32 %v7321, %v8557
  %v8621 = vmul.f32 %v7322, %v8533
  %v8622 = vmul.f32 %v7323, %v8537
  %v8623 = vmul.f32 %v7324, %v8541
  %v8624 = vmul.f32 %v7325, %v8545
  %v8625 = vmul.f32 %v7326, %v8549
  %v8626 = vmul.f32 %v7327, %v8553
  %v8627 = vmul.f32 %v7328, %v8557
  %v8628 = vmul.f32 %v7329, %v8533
  %v8629 = vmul.f32 %v7330, %v8537
  %v8630 = vmul.f32 %v7331, %v8541
  %v8631 = vmul.f32 %v7332, %v8545
  %v8632 = vmul.f32 %v7333, %v8549
  %v8633 = vmul.f32 %v7334, %v8553
  %v8634 = vmul.f32 %v7335, %v8557
  %v8635 = vmul.f32 %v7336, %v8533
  %v8636 = vmul.f32 %v7337, %v8537
  %v8637 = vmul.f32 %v7338, %v8541
  %v8638 = vmul.f32 %v7339, %v8545
  %v8639 = vmul.f32 %v7340, %v8549
  %v8640 = vmul.f32 %v7341, %v8553
  %v8641 = vmul.f32 %v7342, %v8557
  %v8642 = vmul.f32 %v7343, %v8533
  %v8643 = vmul.f32 %v7344, %v8537
  %v8644 = vmul.f32 %v7345, %v8541
  %v8645 = vmul.f32 %v7346, %v8545
  %v8646 = vmul.f32 %v7347, %v8549
  %v8647 = vmul.f32 %v7348, %v8553
  %v8648 = vmul.f32 %v7349, %v8557
  %v8649 = vmul.f32 %v7350, %v8533
  %v8650 = vmul.f32 %v7351, %v8537
  %v8651 = vmul.f32 %v7352, %v8541
  %v8652 = vmul.f32 %v7353, %v8545
  %v8653 = vmul.f32 %v7354, %v8549
  %v8654 = vmul.f32 %v7355, %v8553
  %v8655 = vmul.f32 %v7356, %v8557
  %v8656 = vmul.f32 %v7357, %v8533
  %v8657 = vmul.f32 %v7358, %v8537
  %v8658 = vmul.f32 %v7359, %v8541
  %v8659 = vmul.f32 %v7360, %v8545
  %v8660 = vmul.f32 %v7361, %v8549
  %v8661 = vmul.f32 %v7362, %v8553
  %v8662 = vmul.f32 %v7363, %v8557
  %v8663 = vmul.f32 %v7364, %v8533
  %v8664 = vmul.f32 %v7365, %v8537
  %v8665 = vmul.f32 %v7366, %v8541
  %v8666 = vmul.f32 %v7367, %v8545
  %v8667 = vmul.f32 %v7368, %v8549
  %v8668 = vmul.f32 %v7369, %v8553
  %v8669 = vmul.f32 %v7370, %v8557
  %v8670 = vmul.f32 %v7371, %v8533
  %v8671 = vmul.f32 %v7372, %v8537
  %v8672 = vmul.f32 %v7373, %v8541
  %v8673 = vmul.f32 %v7374, %v8545
  %v8674 = vmul.f32 %v7375, %v8549
  %v8675 = vmul.f32 %v7376, %v8553
  %v8676 = vmul.f32 %v7377, %v8557
  %v8677 = vmul.f32 %v7378, %v8533
  %v8678 = vmul.f32 %v7379, %v8537
  %v8679 = vmul.f32 %v7380, %v8541
  %v8680 = vmul.f32 %v7381, %v8545
  %v8681 = vmul.f32 %v7382, %v8549
  %v8682 = vmul.f32 %v7383, %v8553
  %v8683 = vmul.f32 %v7384, %v8557
  %v8684 = vmul.f32 %v7385, %v8533
  %v8685 = vmul.f32 %v7386, %v8537
  %v8686 = vmul.f32 %v7387, %v8541
  %v8687 = vmul.f32 %v7388, %v8545
  %v8688 = vmul.f32 %v7389, %v8549
  %v8689 = vmul.f32 %v7390, %v8553
  %v8690 = vmul.f32 %v7391, %v8557
  %v8691 = vmul.f32 %v7392, %v8533
  %v8692 = vmul.f32 %v7393, %v8537
  %v8693 = vmul.f32 %v7394, %v8541
  %v8694 = vmul.f32 %v7395, %v8545
  %v8695 = vmul.f32 %v7396, %v8549
  %v8696 = vmul.f32 %v7397, %v8553
  %v8697 = vmul.f32 %v7398, %v8557
  %v8698 = vmul.f32 %v7399, %v8533
  %v8699 = vmul.f32 %v7400, %v8537
  %v8700 = vmul.f32 %v7401, %v8541
  %v8701 = vmul.f32 %v7402, %v8545
  %v8702 = vmul.f32 %v7403, %v8549
  %v8703 = vmul.f32 %v7404, %v8553
  %v8704 = vmul.f32 %v7405, %v8557
  %v8705 = vmul.f32 %v7406, %v8533
  %v8706 = vmul.f32 %v7407, %v8537
  %v8707 = vmul.f32 %v7408, %v8541
  %v8708 = vmul.f32 %v7409, %v8545
  %v8709 = vmul.f32 %v7410, %v8549
  %v8710 = vmul.f32 %v7411, %v8553
  %v8711 = vmul.f32 %v7412, %v8557
  %v8712 = vmul.f32 %v7413, %v8533
  %v8713 = vmul.f32 %v7414, %v8537
  %v8714 = vmul.f32 %v7415, %v8541
  %v8715 = vmul.f32 %v7416, %v8545
  %v8716 = vmul.f32 %v7417, %v8549
  %v8717 = vmul.f32 %v7418, %v8553
  %v8718 = vmul.f32 %v7419, %v8557
  %v8719 = vmul.f32 %v7420, %v8533
  %v8720 = vmul.f32 %v7421, %v8537
  %v8721 = vmul.f32 %v7422, %v8541
  %v8722 = vmul.f32 %v7423, %v8545
  %v8723 = vmul.f32 %v7424, %v8549
  %v8724 = vmul.f32 %v7425, %v8553
  %v8725 = vmul.f32 %v7426, %v8557
  %v8726 = vmul.f32 %v7427, %v8533
  %v8727 = vmul.f32 %v7428, %v8537
  %v8728 = vmul.f32 %v7429, %v8541
  %v8729 = vmul.f32 %v7430, %v8545
  %v8730 = vmul.f32 %v7431, %v8549
  %v8731 = vmul.f32 %v7432, %v8553
  %v8732 = vmul.f32 %v7433, %v8557
  %v8733 = vmul.f32 %v7434, %v8533
  %v8734 = vmul.f32 %v7435, %v8537
  %v8735 = vmul.f32 %v7436, %v8541
  %v8736 = vmul.f32 %v7437, %v8545
  %v8737 = vmul.f32 %v7438, %v8549
  %v8738 = vmul.f32 %v7439, %v8553
  %v8739 = vmul.f32 %v7440, %v8557
  %v8740 = vmul.f32 %v7441, %v8533
  %v8741 = vmul.f32 %v7442, %v8537
  %v8742 = vmul.f32 %v7443, %v8541
  %v8743 = vmul.f32 %v7444, %v8545
  %v8744 = vmul.f32 %v7445, %v8549
  %v8745 = vmul.f32 %v7446, %v8553
  %v8746 = vmul.f32 %v7447, %v8557
  %v8747 = vmul.f32 %v7448, %v8533
  %v8748 = vmul.f32 %v7449, %v8537
  %v8749 = vmul.f32 %v7450, %v8541
  %v8750 = vmul.f32 %v7451, %v8545
  %v8751 = vmul.f32 %v7452, %v8549
  %v8752 = vmul.f32 %v7453, %v8553
  %v8753 = vmul.f32 %v7454, %v8557
  %v8755 = vlaneseq
  %v8756 = vshrl.u32 %v8755, 7
  %v8757 = vsub.s32 0, %v8756
  %v8758 = vrot.slane %v8529, %v8757
  %v8759 = vlaneseq
  %v8760 = vshrl.u32 %v8759, 7
  %v8761 = vsub.s32 1, %v8760
  %v8762 = vrot.slane %v8529, %v8761
  %v8763 = vlaneseq
  %v8764 = vshrl.u32 %v8763, 7
  %v8765 = vsub.s32 2, %v8764
  %v8766 = vrot.slane %v8529, %v8765
  %v8767 = vlaneseq
  %v8768 = vshrl.u32 %v8767, 7
  %v8769 = vsub.s32 3, %v8768
  %v8770 = vrot.slane %v8529, %v8769
  %v8771 = vlaneseq
  %v8772 = vshrl.u32 %v8771, 7
  %v8773 = vsub.s32 4, %v8772
  %v8774 = vrot.slane %v8529, %v8773
  %v8775 = vlaneseq
  %v8776 = vshrl.u32 %v8775, 7
  %v8777 = vsub.s32 5, %v8776
  %v8778 = vrot.slane %v8529, %v8777
  %v8779 = vlaneseq
  %v8780 = vshrl.u32 %v8779, 7
  %v8781 = vsub.s32 6, %v8780
  %v8782 = vrot.slane %v8529, %v8781
  %v8790 = vadd.f32 %v8558, %v8758
  %v8791 = vadd.f32 %v8559, %v8762
  %v8792 = vadd.f32 %v8560, %v8766
  %v8793 = vadd.f32 %v8561, %v8770
  %v8794 = vadd.f32 %v8562, %v8774
  %v8795 = vadd.f32 %v8563, %v8778
  %v8796 = vadd.f32 %v8564, %v8782
  %v8797 = vadd.f32 %v8565, %v8758
  %v8798 = vadd.f32 %v8566, %v8762
  %v8799 = vadd.f32 %v8567, %v8766
  %v8800 = vadd.f32 %v8568, %v8770
  %v8801 = vadd.f32 %v8569, %v8774
  %v8802 = vadd.f32 %v8570, %v8778
  %v8803 = vadd.f32 %v8571, %v8782
  %v8804 = vadd.f32 %v8572, %v8758
  %v8805 = vadd.f32 %v8573, %v8762
  %v8806 = vadd.f32 %v8574, %v8766
  %v8807 = vadd.f32 %v8575, %v8770
  %v8808 = vadd.f32 %v8576, %v8774
  %v8809 = vadd.f32 %v8577, %v8778
  %v8810 = vadd.f32 %v8578, %v8782
  %v8811 = vadd.f32 %v8579, %v8758
  %v8812 = vadd.f32 %v8580, %v8762
  %v8813 = vadd.f32 %v8581, %v8766
  %v8814 = vadd.f32 %v8582, %v8770
  %v8815 = vadd.f32 %v8583, %v8774
  %v8816 = vadd.f32 %v8584, %v8778
  %v8817 = vadd.f32 %v8585, %v8782
  %v8818 = vadd.f32 %v8586, %v8758
  %v8819 = vadd.f32 %v8587, %v8762
  %v8820 = vadd.f32 %v8588, %v8766
  %v8821 = vadd.f32 %v8589, %v8770
  %v8822 = vadd.f32 %v8590, %v8774
  %v8823 = vadd.f32 %v8591, %v8778
  %v8824 = vadd.f32 %v8592, %v8782
  %v8825 = vadd.f32 %v8593, %v8758
  %v8826 = vadd.f32 %v8594, %v8762
  %v8827 = vadd.f32 %v8595, %v8766
  %v8828 = vadd.f32 %v8596, %v8770
  %v8829 = vadd.f32 %v8597, %v8774
  %v8830 = vadd.f32 %v8598, %v8778
  %v8831 = vadd.f32 %v8599, %v8782
  %v8832 = vadd.f32 %v8600, %v8758
  %v8833 = vadd.f32 %v8601, %v8762
  %v8834 = vadd.f32 %v8602, %v8766
  %v8835 = vadd.f32 %v8603, %v8770
  %v8836 = vadd.f32 %v8604, %v8774
  %v8837 = vadd.f32 %v8605, %v8778
  %v8838 = vadd.f32 %v8606, %v8782
  %v8839 = vadd.f32 %v8607, %v8758
  %v8840 = vadd.f32 %v8608, %v8762
  %v8841 = vadd.f32 %v8609, %v8766
  %v8842 = vadd.f32 %v8610, %v8770
  %v8843 = vadd.f32 %v8611, %v8774
  %v8844 = vadd.f32 %v8612, %v8778
  %v8845 = vadd.f32 %v8613, %v8782
  %v8846 = vadd.f32 %v8614, %v8758
  %v8847 = vadd.f32 %v8615, %v8762
  %v8848 = vadd.f32 %v8616, %v8766
  %v8849 = vadd.f32 %v8617, %v8770
  %v8850 = vadd.f32 %v8618, %v8774
  %v8851 = vadd.f32 %v8619, %v8778
  %v8852 = vadd.f32 %v8620, %v8782
  %v8853 = vadd.f32 %v8621, %v8758
  %v8854 = vadd.f32 %v8622, %v8762
  %v8855 = vadd.f32 %v8623, %v8766
  %v8856 = vadd.f32 %v8624, %v8770
  %v8857 = vadd.f32 %v8625, %v8774
  %v8858 = vadd.f32 %v8626, %v8778
  %v8859 = vadd.f32 %v8627, %v8782
  %v8860 = vadd.f32 %v8628, %v8758
  %v8861 = vadd.f32 %v8629, %v8762
  %v8862 = vadd.f32 %v8630, %v8766
  %v8863 = vadd.f32 %v8631, %v8770
  %v8864 = vadd.f32 %v8632, %v8774
  %v8865 = vadd.f32 %v8633, %v8778
  %v8866 = vadd.f32 %v8634, %v8782
  %v8867 = vadd.f32 %v8635, %v8758
  %v8868 = vadd.f32 %v8636, %v8762
  %v8869 = vadd.f32 %v8637, %v8766
  %v8870 = vadd.f32 %v8638, %v8770
  %v8871 = vadd.f32 %v8639, %v8774
  %v8872 = vadd.f32 %v8640, %v8778
  %v8873 = vadd.f32 %v8641, %v8782
  %v8874 = vadd.f32 %v8642, %v8758
  %v8875 = vadd.f32 %v8643, %v8762
  %v8876 = vadd.f32 %v8644, %v8766
  %v8877 = vadd.f32 %v8645, %v8770
  %v8878 = vadd.f32 %v8646, %v8774
  %v8879 = vadd.f32 %v8647, %v8778
  %v8880 = vadd.f32 %v8648, %v8782
  %v8881 = vadd.f32 %v8649, %v8758
  %v8882 = vadd.f32 %v8650, %v8762
  %v8883 = vadd.f32 %v8651, %v8766
  %v8884 = vadd.f32 %v8652, %v8770
  %v8885 = vadd.f32 %v8653, %v8774
  %v8886 = vadd.f32 %v8654, %v8778
  %v8887 = vadd.f32 %v8655, %v8782
  %v8888 = vadd.f32 %v8656, %v8758
  %v8889 = vadd.f32 %v8657, %v8762
  %v8890 = vadd.f32 %v8658, %v8766
  %v8891 = vadd.f32 %v8659, %v8770
  %v8892 = vadd.f32 %v8660, %v8774
  %v8893 = vadd.f32 %v8661, %v8778
  %v8894 = vadd.f32 %v8662, %v8782
  %v8895 = vadd.f32 %v8663, %v8758
  %v8896 = vadd.f32 %v8664, %v8762
  %v8897 = vadd.f32 %v8665, %v8766
  %v8898 = vadd.f32 %v8666, %v8770
  %v8899 = vadd.f32 %v8667, %v8774
  %v8900 = vadd.f32 %v8668, %v8778
  %v8901 = vadd.f32 %v8669, %v8782
  %v8902 = vadd.f32 %v8670, %v8758
  %v8903 = vadd.f32 %v8671, %v8762
  %v8904 = vadd.f32 %v8672, %v8766
  %v8905 = vadd.f32 %v8673, %v8770
  %v8906 = vadd.f32 %v8674, %v8774
  %v8907 = vadd.f32 %v8675, %v8778
  %v8908 = vadd.f32 %v8676, %v8782
  %v8909 = vadd.f32 %v8677, %v8758
  %v8910 = vadd.f32 %v8678, %v8762
  %v8911 = vadd.f32 %v8679, %v8766
  %v8912 = vadd.f32 %v8680, %v8770
  %v8913 = vadd.f32 %v8681, %v8774
  %v8914 = vadd.f32 %v8682, %v8778
  %v8915 = vadd.f32 %v8683, %v8782
  %v8916 = vadd.f32 %v8684, %v8758
  %v8917 = vadd.f32 %v8685, %v8762
  %v8918 = vadd.f32 %v8686, %v8766
  %v8919 = vadd.f32 %v8687, %v8770
  %v8920 = vadd.f32 %v8688, %v8774
  %v8921 = vadd.f32 %v8689, %v8778
  %v8922 = vadd.f32 %v8690, %v8782
  %v8923 = vadd.f32 %v8691, %v8758
  %v8924 = vadd.f32 %v8692, %v8762
  %v8925 = vadd.f32 %v8693, %v8766
  %v8926 = vadd.f32 %v8694, %v8770
  %v8927 = vadd.f32 %v8695, %v8774
  %v8928 = vadd.f32 %v8696, %v8778
  %v8929 = vadd.f32 %v8697, %v8782
  %v8930 = vadd.f32 %v8698, %v8758
  %v8931 = vadd.f32 %v8699, %v8762
  %v8932 = vadd.f32 %v8700, %v8766
  %v8933 = vadd.f32 %v8701, %v8770
  %v8934 = vadd.f32 %v8702, %v8774
  %v8935 = vadd.f32 %v8703, %v8778
  %v8936 = vadd.f32 %v8704, %v8782
  %v8937 = vadd.f32 %v8705, %v8758
  %v8938 = vadd.f32 %v8706, %v8762
  %v8939 = vadd.f32 %v8707, %v8766
  %v8940 = vadd.f32 %v8708, %v8770
  %v8941 = vadd.f32 %v8709, %v8774
  %v8942 = vadd.f32 %v8710, %v8778
  %v8943 = vadd.f32 %v8711, %v8782
  %v8944 = vadd.f32 %v8712, %v8758
  %v8945 = vadd.f32 %v8713, %v8762
  %v8946 = vadd.f32 %v8714, %v8766
  %v8947 = vadd.f32 %v8715, %v8770
  %v8948 = vadd.f32 %v8716, %v8774
  %v8949 = vadd.f32 %v8717, %v8778
  %v8950 = vadd.f32 %v8718, %v8782
  %v8951 = vadd.f32 %v8719, %v8758
  %v8952 = vadd.f32 %v8720, %v8762
  %v8953 = vadd.f32 %v8721, %v8766
  %v8954 = vadd.f32 %v8722, %v8770
  %v8955 = vadd.f32 %v8723, %v8774
  %v8956 = vadd.f32 %v8724, %v8778
  %v8957 = vadd.f32 %v8725, %v8782
  %v8958 = vadd.f32 %v8726, %v8758
  %v8959 = vadd.f32 %v8727, %v8762
  %v8960 = vadd.f32 %v8728, %v8766
  %v8961 = vadd.f32 %v8729, %v8770
  %v8962 = vadd.f32 %v8730, %v8774
  %v8963 = vadd.f32 %v8731, %v8778
  %v8964 = vadd.f32 %v8732, %v8782
  %v8965 = vadd.f32 %v8733, %v8758
  %v8966 = vadd.f32 %v8734, %v8762
  %v8967 = vadd.f32 %v8735, %v8766
  %v8968 = vadd.f32 %v8736, %v8770
  %v8969 = vadd.f32 %v8737, %v8774
  %v8970 = vadd.f32 %v8738, %v8778
  %v8971 = vadd.f32 %v8739, %v8782
  %v8972 = vadd.f32 %v8740, %v8758
  %v8973 = vadd.f32 %v8741, %v8762
  %v8974 = vadd.f32 %v8742, %v8766
  %v8975 = vadd.f32 %v8743, %v8770
  %v8976 = vadd.f32 %v8744, %v8774
  %v8977 = vadd.f32 %v8745, %v8778
  %v8978 = vadd.f32 %v8746, %v8782
  %v8979 = vadd.f32 %v8747, %v8758
  %v8980 = vadd.f32 %v8748, %v8762
  %v8981 = vadd.f32 %v8749, %v8766
  %v8982 = vadd.f32 %v8750, %v8770
  %v8983 = vadd.f32 %v8751, %v8774
  %v8984 = vadd.f32 %v8752, %v8778
  %v8985 = vadd.f32 %v8753, %v8782
  %8986 = vst [vmem:[%s4] sm:$0xff] %v8790
  %8987 = vst [vmem:[%s4 + $0x8] sm:$0xff] %v8791
  %8988 = vst [vmem:[%s4 + $0x10] sm:$0xff] %v8792
  %8989 = vst [vmem:[%s4 + $0x18] sm:$0xff] %v8793
  %8990 = vst [vmem:[%s4 + $0x20] sm:$0xff] %v8794
  %8991 = vst [vmem:[%s4 + $0x28] sm:$0xff] %v8795
  %8992 = vst.msk [vmem:[%s4 + $0x30] sm:$0xff] %vm23, %v8796
  %8993 = vst [vmem:[%s4 + $0x38] sm:$0x3f] %v8797
  %8994 = vst [vmem:[%s4 + $0x40] sm:$0x3f] %v8798
  %8995 = vst [vmem:[%s4 + $0x48] sm:$0x3f] %v8799
  %8996 = vst [vmem:[%s4 + $0x50] sm:$0x3f] %v8800
  %8997 = vst [vmem:[%s4 + $0x58] sm:$0x3f] %v8801
  %8998 = vst [vmem:[%s4 + $0x60] sm:$0x3f] %v8802
  %8999 = vst.msk [vmem:[%s4 + $0x68] sm:$0x3f] %vm423, %v8803
  %9000 = vst [vmem:[%s4 + $0x70] sm:$0xff] %v8804
  %9001 = vst [vmem:[%s4 + $0x78] sm:$0xff] %v8805
  %9002 = vst [vmem:[%s4 + $0x80] sm:$0xff] %v8806
  %9003 = vst [vmem:[%s4 + $0x88] sm:$0xff] %v8807
  %9004 = vst [vmem:[%s4 + $0x90] sm:$0xff] %v8808
  %9005 = vst [vmem:[%s4 + $0x98] sm:$0xff] %v8809
  %9006 = vst.msk [vmem:[%s4 + $0xa0] sm:$0xff] %vm23, %v8810
  %9007 = vst [vmem:[%s4 + $0xa8] sm:$0x3f] %v8811
  %9008 = vst [vmem:[%s4 + $0xb0] sm:$0x3f] %v8812
  %9009 = vst [vmem:[%s4 + $0xb8] sm:$0x3f] %v8813
  %9010 = vst [vmem:[%s4 + $0xc0] sm:$0x3f] %v8814
  %9011 = vst [vmem:[%s4 + $0xc8] sm:$0x3f] %v8815
  %9012 = vst [vmem:[%s4 + $0xd0] sm:$0x3f] %v8816
  %9013 = vst.msk [vmem:[%s4 + $0xd8] sm:$0x3f] %vm423, %v8817
  %9014 = vst [vmem:[%s4 + $0xe0] sm:$0xff] %v8818
  %9015 = vst [vmem:[%s4 + $0xe8] sm:$0xff] %v8819
  %9016 = vst [vmem:[%s4 + $0xf0] sm:$0xff] %v8820
  %9017 = vst [vmem:[%s4 + $0xf8] sm:$0xff] %v8821
  %9018 = vst [vmem:[%s4 + $0x100] sm:$0xff] %v8822
  %9019 = vst [vmem:[%s4 + $0x108] sm:$0xff] %v8823
  %9020 = vst.msk [vmem:[%s4 + $0x110] sm:$0xff] %vm23, %v8824
  %9021 = vst [vmem:[%s4 + $0x118] sm:$0x3f] %v8825
  %9022 = vst [vmem:[%s4 + $0x120] sm:$0x3f] %v8826
  %9023 = vst [vmem:[%s4 + $0x128] sm:$0x3f] %v8827
  %9024 = vst [vmem:[%s4 + $0x130] sm:$0x3f] %v8828
  %9025 = vst [vmem:[%s4 + $0x138] sm:$0x3f] %v8829
  %9026 = vst [vmem:[%s4 + $0x140] sm:$0x3f] %v8830
  %9027 = vst.msk [vmem:[%s4 + $0x148] sm:$0x3f] %vm423, %v8831
  %9028 = vst [vmem:[%s4 + $0x150] sm:$0xff] %v8832
  %9029 = vst [vmem:[%s4 + $0x158] sm:$0xff] %v8833
  %9030 = vst [vmem:[%s4 + $0x160] sm:$0xff] %v8834
  %9031 = vst [vmem:[%s4 + $0x168] sm:$0xff] %v8835
  %9032 = vst [vmem:[%s4 + $0x170] sm:$0xff] %v8836
  %9033 = vst [vmem:[%s4 + $0x178] sm:$0xff] %v8837
  %9034 = vst.msk [vmem:[%s4 + $0x180] sm:$0xff] %vm23, %v8838
  %9035 = vst [vmem:[%s4 + $0x188] sm:$0x3f] %v8839
  %9036 = vst [vmem:[%s4 + $0x190] sm:$0x3f] %v8840
  %9037 = vst [vmem:[%s4 + $0x198] sm:$0x3f] %v8841
  %9038 = vst [vmem:[%s4 + $0x1a0] sm:$0x3f] %v8842
  %9039 = vst [vmem:[%s4 + $0x1a8] sm:$0x3f] %v8843
  %9040 = vst [vmem:[%s4 + $0x1b0] sm:$0x3f] %v8844
  %9041 = vst.msk [vmem:[%s4 + $0x1b8] sm:$0x3f] %vm423, %v8845
  %9042 = vst [vmem:[%s4 + $0x1c0] sm:$0xff] %v8846
  %9043 = vst [vmem:[%s4 + $0x1c8] sm:$0xff] %v8847
  %9044 = vst [vmem:[%s4 + $0x1d0] sm:$0xff] %v8848
  %9045 = vst [vmem:[%s4 + $0x1d8] sm:$0xff] %v8849
  %9046 = vst [vmem:[%s4 + $0x1e0] sm:$0xff] %v8850
  %9047 = vst [vmem:[%s4 + $0x1e8] sm:$0xff] %v8851
  %9048 = vst.msk [vmem:[%s4 + $0x1f0] sm:$0xff] %vm23, %v8852
  %9049 = vst [vmem:[%s4 + $0x1f8] sm:$0x3f] %v8853
  %9050 = vst [vmem:[%s4 + $0x200] sm:$0x3f] %v8854
  %9051 = vst [vmem:[%s4 + $0x208] sm:$0x3f] %v8855
  %9052 = vst [vmem:[%s4 + $0x210] sm:$0x3f] %v8856
  %9053 = vst [vmem:[%s4 + $0x218] sm:$0x3f] %v8857
  %9054 = vst [vmem:[%s4 + $0x220] sm:$0x3f] %v8858
  %9055 = vst.msk [vmem:[%s4 + $0x228] sm:$0x3f] %vm423, %v8859
  %9056 = vst [vmem:[%s4 + $0x230] sm:$0xff] %v8860
  %9057 = vst [vmem:[%s4 + $0x238] sm:$0xff] %v8861
  %9058 = vst [vmem:[%s4 + $0x240] sm:$0xff] %v8862
  %9059 = vst [vmem:[%s4 + $0x248] sm:$0xff] %v8863
  %9060 = vst [vmem:[%s4 + $0x250] sm:$0xff] %v8864
  %9061 = vst [vmem:[%s4 + $0x258] sm:$0xff] %v8865
  %9062 = vst.msk [vmem:[%s4 + $0x260] sm:$0xff] %vm23, %v8866
  %9063 = vst [vmem:[%s4 + $0x268] sm:$0x3f] %v8867
  %9064 = vst [vmem:[%s4 + $0x270] sm:$0x3f] %v8868
  %9065 = vst [vmem:[%s4 + $0x278] sm:$0x3f] %v8869
  %9066 = vst [vmem:[%s4 + $0x280] sm:$0x3f] %v8870
  %9067 = vst [vmem:[%s4 + $0x288] sm:$0x3f] %v8871
  %9068 = vst [vmem:[%s4 + $0x290] sm:$0x3f] %v8872
  %9069 = vst.msk [vmem:[%s4 + $0x298] sm:$0x3f] %vm423, %v8873
  %9070 = vst [vmem:[%s4 + $0x2a0] sm:$0xff] %v8874
  %9071 = vst [vmem:[%s4 + $0x2a8] sm:$0xff] %v8875
  %9072 = vst [vmem:[%s4 + $0x2b0] sm:$0xff] %v8876
  %9073 = vst [vmem:[%s4 + $0x2b8] sm:$0xff] %v8877
  %9074 = vst [vmem:[%s4 + $0x2c0] sm:$0xff] %v8878
  %9075 = vst [vmem:[%s4 + $0x2c8] sm:$0xff] %v8879
  %9076 = vst.msk [vmem:[%s4 + $0x2d0] sm:$0xff] %vm23, %v8880
  %9077 = vst [vmem:[%s4 + $0x2d8] sm:$0x3f] %v8881
  %9078 = vst [vmem:[%s4 + $0x2e0] sm:$0x3f] %v8882
  %9079 = vst [vmem:[%s4 + $0x2e8] sm:$0x3f] %v8883
  %9080 = vst [vmem:[%s4 + $0x2f0] sm:$0x3f] %v8884
  %9081 = vst [vmem:[%s4 + $0x2f8] sm:$0x3f] %v8885
  %9082 = vst [vmem:[%s4 + $0x300] sm:$0x3f] %v8886
  %9083 = vst.msk [vmem:[%s4 + $0x308] sm:$0x3f] %vm423, %v8887
  %9084 = vst [vmem:[%s4 + $0x310] sm:$0xff] %v8888
  %9085 = vst [vmem:[%s4 + $0x318] sm:$0xff] %v8889
  %9086 = vst [vmem:[%s4 + $0x320] sm:$0xff] %v8890
  %9087 = vst [vmem:[%s4 + $0x328] sm:$0xff] %v8891
  %9088 = vst [vmem:[%s4 + $0x330] sm:$0xff] %v8892
  %9089 = vst [vmem:[%s4 + $0x338] sm:$0xff] %v8893
  %9090 = vst.msk [vmem:[%s4 + $0x340] sm:$0xff] %vm23, %v8894
  %9091 = vst [vmem:[%s4 + $0x348] sm:$0x3f] %v8895
  %9092 = vst [vmem:[%s4 + $0x350] sm:$0x3f] %v8896
  %9093 = vst [vmem:[%s4 + $0x358] sm:$0x3f] %v8897
  %9094 = vst [vmem:[%s4 + $0x360] sm:$0x3f] %v8898
  %9095 = vst [vmem:[%s4 + $0x368] sm:$0x3f] %v8899
  %9096 = vst [vmem:[%s4 + $0x370] sm:$0x3f] %v8900
  %9097 = vst.msk [vmem:[%s4 + $0x378] sm:$0x3f] %vm423, %v8901
  %9098 = vst [vmem:[%s4 + $0x380] sm:$0xff] %v8902
  %9099 = vst [vmem:[%s4 + $0x388] sm:$0xff] %v8903
  %9100 = vst [vmem:[%s4 + $0x390] sm:$0xff] %v8904
  %9101 = vst [vmem:[%s4 + $0x398] sm:$0xff] %v8905
  %9102 = vst [vmem:[%s4 + $0x3a0] sm:$0xff] %v8906
  %9103 = vst [vmem:[%s4 + $0x3a8] sm:$0xff] %v8907
  %9104 = vst.msk [vmem:[%s4 + $0x3b0] sm:$0xff] %vm23, %v8908
  %9105 = vst [vmem:[%s4 + $0x3b8] sm:$0x3f] %v8909
  %9106 = vst [vmem:[%s4 + $0x3c0] sm:$0x3f] %v8910
  %9107 = vst [vmem:[%s4 + $0x3c8] sm:$0x3f] %v8911
  %9108 = vst [vmem:[%s4 + $0x3d0] sm:$0x3f] %v8912
  %9109 = vst [vmem:[%s4 + $0x3d8] sm:$0x3f] %v8913
  %9110 = vst [vmem:[%s4 + $0x3e0] sm:$0x3f] %v8914
  %9111 = vst.msk [vmem:[%s4 + $0x3e8] sm:$0x3f] %vm423, %v8915
  %9112 = vst [vmem:[%s4 + $0x3f0] sm:$0xff] %v8916
  %9113 = vst [vmem:[%s4 + $0x3f8] sm:$0xff] %v8917
  %9114 = vst [vmem:[%s4 + $0x400] sm:$0xff] %v8918
  %9115 = vst [vmem:[%s4 + $0x408] sm:$0xff] %v8919
  %9116 = vst [vmem:[%s4 + $0x410] sm:$0xff] %v8920
  %9117 = vst [vmem:[%s4 + $0x418] sm:$0xff] %v8921
  %9118 = vst.msk [vmem:[%s4 + $0x420] sm:$0xff] %vm23, %v8922
  %9119 = vst [vmem:[%s4 + $0x428] sm:$0x3f] %v8923
  %9120 = vst [vmem:[%s4 + $0x430] sm:$0x3f] %v8924
  %9121 = vst [vmem:[%s4 + $0x438] sm:$0x3f] %v8925
  %9122 = vst [vmem:[%s4 + $0x440] sm:$0x3f] %v8926
  %9123 = vst [vmem:[%s4 + $0x448] sm:$0x3f] %v8927
  %9124 = vst [vmem:[%s4 + $0x450] sm:$0x3f] %v8928
  %9125 = vst.msk [vmem:[%s4 + $0x458] sm:$0x3f] %vm423, %v8929
  %9126 = vst [vmem:[%s4 + $0x460] sm:$0xff] %v8930
  %9127 = vst [vmem:[%s4 + $0x468] sm:$0xff] %v8931
  %9128 = vst [vmem:[%s4 + $0x470] sm:$0xff] %v8932
  %9129 = vst [vmem:[%s4 + $0x478] sm:$0xff] %v8933
  %9130 = vst [vmem:[%s4 + $0x480] sm:$0xff] %v8934
  %9131 = vst [vmem:[%s4 + $0x488] sm:$0xff] %v8935
  %9132 = vst.msk [vmem:[%s4 + $0x490] sm:$0xff] %vm23, %v8936
  %9133 = vst [vmem:[%s4 + $0x498] sm:$0x3f] %v8937
  %9134 = vst [vmem:[%s4 + $0x4a0] sm:$0x3f] %v8938
  %9135 = vst [vmem:[%s4 + $0x4a8] sm:$0x3f] %v8939
  %9136 = vst [vmem:[%s4 + $0x4b0] sm:$0x3f] %v8940
  %9137 = vst [vmem:[%s4 + $0x4b8] sm:$0x3f] %v8941
  %9138 = vst [vmem:[%s4 + $0x4c0] sm:$0x3f] %v8942
  %9139 = vst.msk [vmem:[%s4 + $0x4c8] sm:$0x3f] %vm423, %v8943
  %9140 = vst [vmem:[%s4 + $0x4d0] sm:$0xff] %v8944
  %9141 = vst [vmem:[%s4 + $0x4d8] sm:$0xff] %v8945
  %9142 = vst [vmem:[%s4 + $0x4e0] sm:$0xff] %v8946
  %9143 = vst [vmem:[%s4 + $0x4e8] sm:$0xff] %v8947
  %9144 = vst [vmem:[%s4 + $0x4f0] sm:$0xff] %v8948
  %9145 = vst [vmem:[%s4 + $0x4f8] sm:$0xff] %v8949
  %9146 = vst.msk [vmem:[%s4 + $0x500] sm:$0xff] %vm23, %v8950
  %9147 = vst [vmem:[%s4 + $0x508] sm:$0x3f] %v8951
  %9148 = vst [vmem:[%s4 + $0x510] sm:$0x3f] %v8952
  %9149 = vst [vmem:[%s4 + $0x518] sm:$0x3f] %v8953
  %9150 = vst [vmem:[%s4 + $0x520] sm:$0x3f] %v8954
  %9151 = vst [vmem:[%s4 + $0x528] sm:$0x3f] %v8955
  %9152 = vst [vmem:[%s4 + $0x530] sm:$0x3f] %v8956
  %9153 = vst.msk [vmem:[%s4 + $0x538] sm:$0x3f] %vm423, %v8957
  %9154 = vst [vmem:[%s4 + $0x540] sm:$0xff] %v8958
  %9155 = vst [vmem:[%s4 + $0x548] sm:$0xff] %v8959
  %9156 = vst [vmem:[%s4 + $0x550] sm:$0xff] %v8960
  %9157 = vst [vmem:[%s4 + $0x558] sm:$0xff] %v8961
  %9158 = vst [vmem:[%s4 + $0x560] sm:$0xff] %v8962
  %9159 = vst [vmem:[%s4 + $0x568] sm:$0xff] %v8963
  %9160 = vst.msk [vmem:[%s4 + $0x570] sm:$0xff] %vm23, %v8964
  %9161 = vst [vmem:[%s4 + $0x578] sm:$0x3f] %v8965
  %9162 = vst [vmem:[%s4 + $0x580] sm:$0x3f] %v8966
  %9163 = vst [vmem:[%s4 + $0x588] sm:$0x3f] %v8967
  %9164 = vst [vmem:[%s4 + $0x590] sm:$0x3f] %v8968
  %9165 = vst [vmem:[%s4 + $0x598] sm:$0x3f] %v8969
  %9166 = vst [vmem:[%s4 + $0x5a0] sm:$0x3f] %v8970
  %9167 = vst.msk [vmem:[%s4 + $0x5a8] sm:$0x3f] %vm423, %v8971
  %9168 = vst [vmem:[%s4 + $0x5b0] sm:$0xff] %v8972
  %9169 = vst [vmem:[%s4 + $0x5b8] sm:$0xff] %v8973
  %9170 = vst [vmem:[%s4 + $0x5c0] sm:$0xff] %v8974
  %9171 = vst [vmem:[%s4 + $0x5c8] sm:$0xff] %v8975
  %9172 = vst [vmem:[%s4 + $0x5d0] sm:$0xff] %v8976
  %9173 = vst [vmem:[%s4 + $0x5d8] sm:$0xff] %v8977
  %9174 = vst.msk [vmem:[%s4 + $0x5e0] sm:$0xff] %vm23, %v8978
  %9175 = vst [vmem:[%s4 + $0x5e8] sm:$0x3f] %v8979
  %9176 = vst [vmem:[%s4 + $0x5f0] sm:$0x3f] %v8980
  %9177 = vst [vmem:[%s4 + $0x5f8] sm:$0x3f] %v8981
  %9178 = vst [vmem:[%s4 + $0x600] sm:$0x3f] %v8982
  %9179 = vst [vmem:[%s4 + $0x608] sm:$0x3f] %v8983
  %9180 = vst [vmem:[%s4 + $0x610] sm:$0x3f] %v8984
  %9181 = vst.msk [vmem:[%s4 + $0x618] sm:$0x3f] %vm423, %v8985
  // Predicated region
  $region18: #{_lambda_.1} parent=0 // pred_check
    _
  $region19: #{_lambda_.1} parent=0 // pred_check_branch
    %9183 = sbr.rel (0) target = $region21
  $region20: #{_lambda_.1} parent=0 // pred_region
    _
  $region21: #{_lambda_.1} parent=0 // pred_fallthru
    _
  // Predicated region
  $region22: #{_lambda_.1} parent=0 // pred_check
    _
  $region23: #{_lambda_.1} parent=0 // pred_check_branch
    %9185 = sbr.rel (0) target = $region25
  $region24: #{_lambda_.1} parent=0 // pred_region
    _
  $region25: #{_lambda_.1} parent=0 // pred_fallthru
    _

</llo_original>
